<compile_context>
chip_gen: v5e
topology: v5e:2x2
jax: 0.10.0
libtpu: 0.0.40
codegen_flags: <defaults>
</compile_context>

<pallas_src>
import jax
import jax.numpy as jnp
from jax.experimental import pallas as pl
from jax.experimental.pallas import tpu as pltpu


# ----------------------------------------------------------------------------
# Fused Pallas kernel
# ----------------------------------------------------------------------------
def make_bigru_kernel(num_layers, hidden_size, seq_len, batch):
    """Builds the fused BiGRU+head kernel for static (L, H, T, B)."""
    n_w = 8 * num_layers  # (wih, whh, bih, bhh) x 2 directions per layer

    def kernel(*refs):
        # inputs
        x_ref = refs[0]                    # (T*B, I0)  flattened time-major x
        h0_ref = refs[1]                   # (2L, B, H)
        w_refs = refs[2:2 + n_w]           # per layer/dir: wih,whh,bih,bhh
        fc_w_ref = refs[2 + n_w]           # (2H, O)
        fc_b_ref = refs[3 + n_w]           # (1, O)
        # outputs
        logp_ref = refs[4 + n_w]           # (T, O)
        hn_ref = refs[5 + n_w]             # (2L, B, H)

        T, B, H = seq_len, batch, hidden_size

        def gru_direction(x2d, wih, whh, bih, bhh, h0, reverse):
            """One direction of one layer. x2d: (T*B, Iin) value.
            wih/whh/bih/bhh are refs shaped (3, Iin, H)/(3, H, H)/(3, 1, H).
            Returns (list of T (B, H) outputs indexed by original time, hT)."""
            # Hoisted input projections: one whole-sequence matmul per gate,
            # bias folded in, off the serial recurrence path.
            xr = jnp.dot(x2d, wih[0], preferred_element_type=jnp.float32) + bih[0]
            xz = jnp.dot(x2d, wih[1], preferred_element_type=jnp.float32) + bih[1]
            xn = jnp.dot(x2d, wih[2], preferred_element_type=jnp.float32) + bih[2]
            # Per-gate hidden weights loaded once (no 32/64-lane slicing later).
            whh_r, whh_z, whh_n = whh[0], whh[1], whh[2]
            bhh_r, bhh_z, bhh_n = bhh[0], bhh[1], bhh[2]

            h = h0
            outs = [None] * T
            for s in range(T):                      # static -> fully unrolled
                t = (T - 1 - s) if reverse else s   # index math, no jnp.flip
                lo = t * B
                hr = jnp.dot(h, whh_r, preferred_element_type=jnp.float32) + bhh_r
                hz = jnp.dot(h, whh_z, preferred_element_type=jnp.float32) + bhh_z
                hn = jnp.dot(h, whh_n, preferred_element_type=jnp.float32) + bhh_n
                r = jax.nn.sigmoid(xr[lo:lo + B, :] + hr)
                z = jax.nn.sigmoid(xz[lo:lo + B, :] + hz)
                n = jnp.tanh(xn[lo:lo + B, :] + r * hn)
                h = (1.0 - z) * n + z * h
                outs[t] = h
            return outs, h

        layer_in = x_ref[...]                        # (T*B, I0)
        last_fwd = last_bwd = None
        for l in range(num_layers):
            base = 8 * l
            fwd_outs, h_fwd = gru_direction(
                layer_in, w_refs[base + 0], w_refs[base + 1],
                w_refs[base + 2], w_refs[base + 3],
                h0_ref[2 * l + 0], reverse=False)
            bwd_outs, h_bwd = gru_direction(
                layer_in, w_refs[base + 4], w_refs[base + 5],
                w_refs[base + 6], w_refs[base + 7],
                h0_ref[2 * l + 1], reverse=True)
            hn_ref[2 * l + 0] = h_fwd
            hn_ref[2 * l + 1] = h_bwd
            last_fwd, last_bwd = fwd_outs, bwd_outs
            if l + 1 < num_layers:
                # Next layer's input: per-timestep [fwd | bwd] lane concat,
                # stacked back into the flattened (T*B, 2H) time-major layout.
                layer_in = jnp.concatenate(
                    [jnp.concatenate([fwd_outs[t], bwd_outs[t]], axis=-1)
                     for t in range(T)], axis=0)
            # TODO(synk): nn.GRU inter-layer dropout (p=0.2) is training-only;
            # eval forward omits it intentionally.

        # Faithful to the PyTorch module's indexing:
        # torch.cat((out[:, -1, :H], out[:, 0, H:]), dim=1) indexes dim 1,
        # which is the *batch* dim of the time-major output (likely an
        # upstream bug, reproduced verbatim).  feat: (T, 2H)
        feat = jnp.concatenate(
            [jnp.concatenate([last_fwd[t][B - 1:B, :], last_bwd[t][0:1, :]],
                             axis=-1)
             for t in range(T)], axis=0)

        act = jnp.maximum(feat, 0.0)
        logits = jnp.dot(act, fc_w_ref[...],
                         preferred_element_type=jnp.float32) + fc_b_ref[...]
        m = jnp.max(logits, axis=1, keepdims=True)
        lse = jnp.log(jnp.sum(jnp.exp(logits - m), axis=1, keepdims=True)) + m
        logp_ref[...] = logits - lse

    return kernel


# ----------------------------------------------------------------------------
# Wrapper
# ----------------------------------------------------------------------------
_VMEM = pl.BlockSpec(memory_space=pltpu.MemorySpace.VMEM)


def bigru_forward(params, x, h0, hidden_size, num_layers):
    """Mirrors BiGRUnet.forward(x, h).

    x : (T, B, input_size)   h0: (2*num_layers, B, hidden_size)
    Returns (log_probs (T, output_size), h_n (2*num_layers, B, hidden_size)).
    """
    T, B, _ = x.shape
    H = hidden_size
    O = params["fc_w"].shape[1]

    x2d = x.reshape(T * B, x.shape[2])   # metadata-only reshape (row-major)
    flat_w = []
    for l in range(num_layers):
        for d in range(2):
            flat_w.extend(params["gru"][l][d])
    n_in = 2 + len(flat_w) + 2

    kernel = make_bigru_kernel(num_layers=num_layers, hidden_size=H,
                               seq_len=T, batch=B)
    log_probs, h_n = pl.pallas_call(
        kernel,
        out_shape=(jax.ShapeDtypeStruct((T, O), jnp.float32),
                   jax.ShapeDtypeStruct((2 * num_layers, B, H), jnp.float32)),
        in_specs=[_VMEM] * n_in,
        out_specs=(_VMEM, _VMEM),
    )(x2d, h0, *flat_w, params["fc_w"], params["fc_b"])
    return log_probs, h_n


# ----------------------------------------------------------------------------
# Parameter init (uniform(-1/sqrt(H), 1/sqrt(H)), like PyTorch), per-gate blocks
# ----------------------------------------------------------------------------
def init_params(key, input_size, hidden_size, output_size, num_layers):
    bound = 1.0 / (hidden_size ** 0.5)
    params = {"gru": []}
    for l in range(num_layers):
        in_size = input_size if l == 0 else 2 * hidden_size
        layer = []
        for _ in range(2):  # forward, backward directions
            key, k1, k2, k3, k4 = jax.random.split(key, 5)
            wih = jax.random.uniform(k1, (3, in_size, hidden_size),
                                     jnp.float32, -bound, bound)
            whh = jax.random.uniform(k2, (3, hidden_size, hidden_size),
                                     jnp.float32, -bound, bound)
            bih = jax.random.uniform(k3, (3, 1, hidden_size),
                                     jnp.float32, -bound, bound)
            bhh = jax.random.uniform(k4, (3, 1, hidden_size),
                                     jnp.float32, -bound, bound)
            layer.append((wih, whh, bih, bhh))
        params["gru"].append(layer)
    key, k1, k2 = jax.random.split(key, 3)
    fb = 1.0 / ((2 * hidden_size) ** 0.5)
    params["fc_w"] = jax.random.uniform(k1, (2 * hidden_size, output_size),
                                        jnp.float32, -fb, fb)
    params["fc_b"] = jax.random.uniform(k2, (1, output_size),
                                        jnp.float32, -fb, fb)
    return params


# ----------------------------------------------------------------------------
# Pure-JAX reference (for correctness check only)
# ----------------------------------------------------------------------------
def bigru_reference(params, x, h0, hidden_size, num_layers):
    T, _, _ = x.shape
    H = hidden_size
    hi = jax.lax.Precision.HIGHEST
    layer_in = x
    h_finals = []
    for l in range(num_layers):
        dir_outs = []
        for d in range(2):
            wih, whh, bih, bhh = params["gru"][l][d]
            h = h0[2 * l + d]
            xi = layer_in if d == 0 else jnp.flip(layer_in, axis=0)
            outs = []
            for t in range(T):
                xt = xi[t]
                r = jax.nn.sigmoid(jnp.dot(xt, wih[0], precision=hi) + bih[0]
                                   + jnp.dot(h, whh[0], precision=hi) + bhh[0])
                z = jax.nn.sigmoid(jnp.dot(xt, wih[1], precision=hi) + bih[1]
                                   + jnp.dot(h, whh[1], precision=hi) + bhh[1])
                n = jnp.tanh(jnp.dot(xt, wih[2], precision=hi) + bih[2]
                             + r * (jnp.dot(h, whh[2], precision=hi) + bhh[2]))
                h = (1.0 - z) * n + z * h
                outs.append(h)
            out = jnp.stack(outs, axis=0)
            if d == 1:
                out = jnp.flip(out, axis=0)
            dir_outs.append(out)
            h_finals.append(h)
        layer_in = jnp.concatenate(dir_outs, axis=-1)
    out = layer_in
    feat = jnp.concatenate([out[:, -1, :H], out[:, 0, H:]], axis=1)
    act = jnp.maximum(feat, 0.0)
    logits = jnp.dot(act, params["fc_w"], precision=hi) + params["fc_b"]
    return jax.nn.log_softmax(logits, axis=1), jnp.stack(h_finals, axis=0)


# ----------------------------------------------------------------------------
if __name__ == "__main__":
    INPUT_SIZE = 32
    HIDDEN_SIZE = 32
    OUTPUT_SIZE = 3
    NUM_LAYERS = 3
    SEQ_LEN = 8
    BATCH = 2

    key = jax.random.PRNGKey(0)
    key, kx = jax.random.split(key)
    params = init_params(key, INPUT_SIZE, HIDDEN_SIZE, OUTPUT_SIZE, NUM_LAYERS)

    x = jax.random.normal(kx, (SEQ_LEN, BATCH, INPUT_SIZE), jnp.float32)
    h0 = jnp.zeros((2 * NUM_LAYERS, BATCH, HIDDEN_SIZE), jnp.float32)  # init_hidden

    log_probs, h_n = bigru_forward(params, x, h0, HIDDEN_SIZE, NUM_LAYERS)
    log_probs = jax.block_until_ready(log_probs)
    h_n = jax.block_until_ready(h_n)

    assert log_probs.shape == (SEQ_LEN, OUTPUT_SIZE)
    assert h_n.shape == (2 * NUM_LAYERS, BATCH, HIDDEN_SIZE)
    assert bool(jnp.all(jnp.isfinite(log_probs)))
    # log-softmax rows should (exp-)sum to ~1
    assert bool(jnp.allclose(jnp.sum(jnp.exp(log_probs), axis=1), 1.0, atol=1e-4))

    # Compare against a pure-JAX reference of the same forward pass.
    ref_logp, ref_hn = bigru_reference(params, x, h0, HIDDEN_SIZE, NUM_LAYERS)
    assert bool(jnp.allclose(log_probs, ref_logp, atol=2e-3, rtol=2e-3))
    assert bool(jnp.allclose(h_n, ref_hn, atol=2e-3, rtol=2e-3))

    print("KERNEL_OK")
</pallas_src>

<mosaic_0001>
module attributes {stable_mosaic.version = 11 : i64} {
  func.func @kernel(%arg0: memref<16x32xf32, #tpu.memory_space<vmem>>, %arg1: memref<6x2x32xf32, #tpu.memory_space<vmem>>, %arg2: memref<3x32x32xf32, #tpu.memory_space<vmem>>, %arg3: memref<3x32x32xf32, #tpu.memory_space<vmem>>, %arg4: memref<3x1x32xf32, #tpu.memory_space<vmem>>, %arg5: memref<3x1x32xf32, #tpu.memory_space<vmem>>, %arg6: memref<3x32x32xf32, #tpu.memory_space<vmem>>, %arg7: memref<3x32x32xf32, #tpu.memory_space<vmem>>, %arg8: memref<3x1x32xf32, #tpu.memory_space<vmem>>, %arg9: memref<3x1x32xf32, #tpu.memory_space<vmem>>, %arg10: memref<3x64x32xf32, #tpu.memory_space<vmem>>, %arg11: memref<3x32x32xf32, #tpu.memory_space<vmem>>, %arg12: memref<3x1x32xf32, #tpu.memory_space<vmem>>, %arg13: memref<3x1x32xf32, #tpu.memory_space<vmem>>, %arg14: memref<3x64x32xf32, #tpu.memory_space<vmem>>, %arg15: memref<3x32x32xf32, #tpu.memory_space<vmem>>, %arg16: memref<3x1x32xf32, #tpu.memory_space<vmem>>, %arg17: memref<3x1x32xf32, #tpu.memory_space<vmem>>, %arg18: memref<3x64x32xf32, #tpu.memory_space<vmem>>, %arg19: memref<3x32x32xf32, #tpu.memory_space<vmem>>, %arg20: memref<3x1x32xf32, #tpu.memory_space<vmem>>, %arg21: memref<3x1x32xf32, #tpu.memory_space<vmem>>, %arg22: memref<3x64x32xf32, #tpu.memory_space<vmem>>, %arg23: memref<3x32x32xf32, #tpu.memory_space<vmem>>, %arg24: memref<3x1x32xf32, #tpu.memory_space<vmem>>, %arg25: memref<3x1x32xf32, #tpu.memory_space<vmem>>, %arg26: memref<64x3xf32, #tpu.memory_space<vmem>>, %arg27: memref<1x3xf32, #tpu.memory_space<vmem>>, %arg28: memref<8x3xf32, #tpu.memory_space<vmem>>, %arg29: memref<6x2x32xf32, #tpu.memory_space<vmem>>) attributes {dimension_semantics = [], scalar_prefetch = 0 : i64, scratch_operands = 0 : i64, tpu.core_type = #tpu.core_type<tc>} {
    %c0 = arith.constant 0 : index
    %c0_0 = arith.constant 0 : index
    %0 = vector.load %arg0[%c0, %c0_0] : memref<16x32xf32, #tpu.memory_space<vmem>>, vector<16x32xf32>
    %c0_1 = arith.constant 0 : index
    %c0_2 = arith.constant 0 : index
    %c0_3 = arith.constant 0 : index
    %1 = vector.load %arg1[%c0_1, %c0_2, %c0_3] : memref<6x2x32xf32, #tpu.memory_space<vmem>>, vector<1x2x32xf32>
    %2 = vector.shape_cast %1 : vector<1x2x32xf32> to vector<2x32xf32>
    %c0_4 = arith.constant 0 : index
    %c0_5 = arith.constant 0 : index
    %c0_6 = arith.constant 0 : index
    %3 = vector.load %arg2[%c0_4, %c0_5, %c0_6] : memref<3x32x32xf32, #tpu.memory_space<vmem>>, vector<1x32x32xf32>
    %4 = vector.shape_cast %3 : vector<1x32x32xf32> to vector<32x32xf32>
    %cst = arith.constant dense<0.000000e+00> : vector<16x32xf32>
    %5 = tpu.matmul %0, %4, %cst {dimension_numbers = #tpu.dot_dimension_numbers<[1], [0], [0], [1], [0, 0, 1, 1], [], []>} : vector<16x32xf32>, vector<32x32xf32>, vector<16x32xf32> -> vector<16x32xf32>
    %c0_7 = arith.constant 0 : index
    %c0_8 = arith.constant 0 : index
    %c0_9 = arith.constant 0 : index
    %6 = vector.load %arg4[%c0_7, %c0_8, %c0_9] : memref<3x1x32xf32, #tpu.memory_space<vmem>>, vector<1x1x32xf32>
    %7 = vector.shape_cast %6 : vector<1x1x32xf32> to vector<1x32xf32>
    %8 = vector.broadcast %7 : vector<1x32xf32> to vector<16x32xf32>
    %9 = arith.addf %5, %8 : vector<16x32xf32>
    %c1 = arith.constant 1 : index
    %c0_10 = arith.constant 0 : index
    %c0_11 = arith.constant 0 : index
    %10 = vector.load %arg2[%c1, %c0_10, %c0_11] : memref<3x32x32xf32, #tpu.memory_space<vmem>>, vector<1x32x32xf32>
    %11 = vector.shape_cast %10 : vector<1x32x32xf32> to vector<32x32xf32>
    %cst_12 = arith.constant dense<0.000000e+00> : vector<16x32xf32>
    %12 = tpu.matmul %0, %11, %cst_12 {dimension_numbers = #tpu.dot_dimension_numbers<[1], [0], [0], [1], [0, 0, 1, 1], [], []>} : vector<16x32xf32>, vector<32x32xf32>, vector<16x32xf32> -> vector<16x32xf32>
    %c1_13 = arith.constant 1 : index
    %c0_14 = arith.constant 0 : index
    %c0_15 = arith.constant 0 : index
    %13 = vector.load %arg4[%c1_13, %c0_14, %c0_15] : memref<3x1x32xf32, #tpu.memory_space<vmem>>, vector<1x1x32xf32>
    %14 = vector.shape_cast %13 : vector<1x1x32xf32> to vector<1x32xf32>
    %15 = vector.broadcast %14 : vector<1x32xf32> to vector<16x32xf32>
    %16 = arith.addf %12, %15 : vector<16x32xf32>
    %c2 = arith.constant 2 : index
    %c0_16 = arith.constant 0 : index
    %c0_17 = arith.constant 0 : index
    %17 = vector.load %arg2[%c2, %c0_16, %c0_17] : memref<3x32x32xf32, #tpu.memory_space<vmem>>, vector<1x32x32xf32>
    %18 = vector.shape_cast %17 : vector<1x32x32xf32> to vector<32x32xf32>
    %cst_18 = arith.constant dense<0.000000e+00> : vector<16x32xf32>
    %19 = tpu.matmul %0, %18, %cst_18 {dimension_numbers = #tpu.dot_dimension_numbers<[1], [0], [0], [1], [0, 0, 1, 1], [], []>} : vector<16x32xf32>, vector<32x32xf32>, vector<16x32xf32> -> vector<16x32xf32>
    %c2_19 = arith.constant 2 : index
    %c0_20 = arith.constant 0 : index
    %c0_21 = arith.constant 0 : index
    %20 = vector.load %arg4[%c2_19, %c0_20, %c0_21] : memref<3x1x32xf32, #tpu.memory_space<vmem>>, vector<1x1x32xf32>
    %21 = vector.shape_cast %20 : vector<1x1x32xf32> to vector<1x32xf32>
    %22 = vector.broadcast %21 : vector<1x32xf32> to vector<16x32xf32>
    %23 = arith.addf %19, %22 : vector<16x32xf32>
    %c0_22 = arith.constant 0 : index
    %c0_23 = arith.constant 0 : index
    %c0_24 = arith.constant 0 : index
    %24 = vector.load %arg3[%c0_22, %c0_23, %c0_24] : memref<3x32x32xf32, #tpu.memory_space<vmem>>, vector<1x32x32xf32>
    %25 = vector.shape_cast %24 : vector<1x32x32xf32> to vector<32x32xf32>
    %c1_25 = arith.constant 1 : index
    %c0_26 = arith.constant 0 : index
    %c0_27 = arith.constant 0 : index
    %26 = vector.load %arg3[%c1_25, %c0_26, %c0_27] : memref<3x32x32xf32, #tpu.memory_space<vmem>>, vector<1x32x32xf32>
    %27 = vector.shape_cast %26 : vector<1x32x32xf32> to vector<32x32xf32>
    %c2_28 = arith.constant 2 : index
    %c0_29 = arith.constant 0 : index
    %c0_30 = arith.constant 0 : index
    %28 = vector.load %arg3[%c2_28, %c0_29, %c0_30] : memref<3x32x32xf32, #tpu.memory_space<vmem>>, vector<1x32x32xf32>
    %29 = vector.shape_cast %28 : vector<1x32x32xf32> to vector<32x32xf32>
    %c0_31 = arith.constant 0 : index
    %c0_32 = arith.constant 0 : index
    %c0_33 = arith.constant 0 : index
    %30 = vector.load %arg5[%c0_31, %c0_32, %c0_33] : memref<3x1x32xf32, #tpu.memory_space<vmem>>, vector<1x1x32xf32>
    %31 = vector.shape_cast %30 : vector<1x1x32xf32> to vector<1x32xf32>
    %c1_34 = arith.constant 1 : index
    %c0_35 = arith.constant 0 : index
    %c0_36 = arith.constant 0 : index
    %32 = vector.load %arg5[%c1_34, %c0_35, %c0_36] : memref<3x1x32xf32, #tpu.memory_space<vmem>>, vector<1x1x32xf32>
    %33 = vector.shape_cast %32 : vector<1x1x32xf32> to vector<1x32xf32>
    %c2_37 = arith.constant 2 : index
    %c0_38 = arith.constant 0 : index
    %c0_39 = arith.constant 0 : index
    %34 = vector.load %arg5[%c2_37, %c0_38, %c0_39] : memref<3x1x32xf32, #tpu.memory_space<vmem>>, vector<1x1x32xf32>
    %35 = vector.shape_cast %34 : vector<1x1x32xf32> to vector<1x32xf32>
    %cst_40 = arith.constant dense<0.000000e+00> : vector<2x32xf32>
    %36 = tpu.matmul %2, %25, %cst_40 {dimension_numbers = #tpu.dot_dimension_numbers<[1], [0], [0], [1], [0, 0, 1, 1], [], []>} : vector<2x32xf32>, vector<32x32xf32>, vector<2x32xf32> -> vector<2x32xf32>
    %37 = vector.broadcast %31 : vector<1x32xf32> to vector<2x32xf32>
    %38 = arith.addf %36, %37 : vector<2x32xf32>
    %cst_41 = arith.constant dense<0.000000e+00> : vector<2x32xf32>
    %39 = tpu.matmul %2, %27, %cst_41 {dimension_numbers = #tpu.dot_dimension_numbers<[1], [0], [0], [1], [0, 0, 1, 1], [], []>} : vector<2x32xf32>, vector<32x32xf32>, vector<2x32xf32> -> vector<2x32xf32>
    %40 = vector.broadcast %33 : vector<1x32xf32> to vector<2x32xf32>
    %41 = arith.addf %39, %40 : vector<2x32xf32>
    %cst_42 = arith.constant dense<0.000000e+00> : vector<2x32xf32>
    %42 = tpu.matmul %2, %29, %cst_42 {dimension_numbers = #tpu.dot_dimension_numbers<[1], [0], [0], [1], [0, 0, 1, 1], [], []>} : vector<2x32xf32>, vector<32x32xf32>, vector<2x32xf32> -> vector<2x32xf32>
    %43 = vector.broadcast %35 : vector<1x32xf32> to vector<2x32xf32>
    %44 = arith.addf %42, %43 : vector<2x32xf32>
    %45 = vector.extract_strided_slice %9 {offsets = [0, 0], sizes = [2, 32], strides = [1, 1]} : vector<16x32xf32> to vector<2x32xf32>
    %46 = arith.addf %45, %38 : vector<2x32xf32>
    %47 = arith.negf %46 : vector<2x32xf32>
    %48 = math.exp %47 : vector<2x32xf32>
    %cst_43 = arith.constant 1.000000e+00 : f32
    %49 = vector.broadcast %cst_43 : f32 to vector<2x32xf32>
    %50 = arith.addf %49, %48 : vector<2x32xf32>
    %51 = arith.divf %49, %50 : vector<2x32xf32>
    %52 = vector.extract_strided_slice %16 {offsets = [0, 0], sizes = [2, 32], strides = [1, 1]} : vector<16x32xf32> to vector<2x32xf32>
    %53 = arith.addf %52, %41 : vector<2x32xf32>
    %54 = arith.negf %53 : vector<2x32xf32>
    %55 = math.exp %54 : vector<2x32xf32>
    %cst_44 = arith.constant 1.000000e+00 : f32
    %56 = vector.broadcast %cst_44 : f32 to vector<2x32xf32>
    %57 = arith.addf %56, %55 : vector<2x32xf32>
    %58 = arith.divf %56, %57 : vector<2x32xf32>
    %59 = vector.extract_strided_slice %23 {offsets = [0, 0], sizes = [2, 32], strides = [1, 1]} : vector<16x32xf32> to vector<2x32xf32>
    %60 = arith.mulf %51, %44 : vector<2x32xf32>
    %61 = arith.addf %59, %60 : vector<2x32xf32>
    %62 = math.tanh %61 : vector<2x32xf32>
    %cst_45 = arith.constant 1.000000e+00 : f32
    %63 = vector.broadcast %cst_45 : f32 to vector<2x32xf32>
    %64 = arith.subf %63, %58 : vector<2x32xf32>
    %65 = arith.mulf %64, %62 : vector<2x32xf32>
    %66 = arith.mulf %58, %2 : vector<2x32xf32>
    %67 = arith.addf %65, %66 : vector<2x32xf32>
    %cst_46 = arith.constant dense<0.000000e+00> : vector<2x32xf32>
    %68 = tpu.matmul %67, %25, %cst_46 {dimension_numbers = #tpu.dot_dimension_numbers<[1], [0], [0], [1], [0, 0, 1, 1], [], []>} : vector<2x32xf32>, vector<32x32xf32>, vector<2x32xf32> -> vector<2x32xf32>
    %69 = vector.broadcast %31 : vector<1x32xf32> to vector<2x32xf32>
    %70 = arith.addf %68, %69 : vector<2x32xf32>
    %cst_47 = arith.constant dense<0.000000e+00> : vector<2x32xf32>
    %71 = tpu.matmul %67, %27, %cst_47 {dimension_numbers = #tpu.dot_dimension_numbers<[1], [0], [0], [1], [0, 0, 1, 1], [], []>} : vector<2x32xf32>, vector<32x32xf32>, vector<2x32xf32> -> vector<2x32xf32>
    %72 = vector.broadcast %33 : vector<1x32xf32> to vector<2x32xf32>
    %73 = arith.addf %71, %72 : vector<2x32xf32>
    %cst_48 = arith.constant dense<0.000000e+00> : vector<2x32xf32>
    %74 = tpu.matmul %67, %29, %cst_48 {dimension_numbers = #tpu.dot_dimension_numbers<[1], [0], [0], [1], [0, 0, 1, 1], [], []>} : vector<2x32xf32>, vector<32x32xf32>, vector<2x32xf32> -> vector<2x32xf32>
    %75 = vector.broadcast %35 : vector<1x32xf32> to vector<2x32xf32>
    %76 = arith.addf %74, %75 : vector<2x32xf32>
    %77 = vector.extract_strided_slice %9 {offsets = [2, 0], sizes = [2, 32], strides = [1, 1]} : vector<16x32xf32> to vector<2x32xf32>
    %78 = arith.addf %77, %70 : vector<2x32xf32>
    %79 = arith.negf %78 : vector<2x32xf32>
    %80 = math.exp %79 : vector<2x32xf32>
    %cst_49 = arith.constant 1.000000e+00 : f32
    %81 = vector.broadcast %cst_49 : f32 to vector<2x32xf32>
    %82 = arith.addf %81, %80 : vector<2x32xf32>
    %83 = arith.divf %81, %82 : vector<2x32xf32>
    %84 = vector.extract_strided_slice %16 {offsets = [2, 0], sizes = [2, 32], strides = [1, 1]} : vector<16x32xf32> to vector<2x32xf32>
    %85 = arith.addf %84, %73 : vector<2x32xf32>
    %86 = arith.negf %85 : vector<2x32xf32>
    %87 = math.exp %86 : vector<2x32xf32>
    %cst_50 = arith.constant 1.000000e+00 : f32
    %88 = vector.broadcast %cst_50 : f32 to vector<2x32xf32>
    %89 = arith.addf %88, %87 : vector<2x32xf32>
    %90 = arith.divf %88, %89 : vector<2x32xf32>
    %91 = vector.extract_strided_slice %23 {offsets = [2, 0], sizes = [2, 32], strides = [1, 1]} : vector<16x32xf32> to vector<2x32xf32>
    %92 = arith.mulf %83, %76 : vector<2x32xf32>
    %93 = arith.addf %91, %92 : vector<2x32xf32>
    %94 = math.tanh %93 : vector<2x32xf32>
    %cst_51 = arith.constant 1.000000e+00 : f32
    %95 = vector.broadcast %cst_51 : f32 to vector<2x32xf32>
    %96 = arith.subf %95, %90 : vector<2x32xf32>
    %97 = arith.mulf %96, %94 : vector<2x32xf32>
    %98 = arith.mulf %90, %67 : vector<2x32xf32>
    %99 = arith.addf %97, %98 : vector<2x32xf32>
    %cst_52 = arith.constant dense<0.000000e+00> : vector<2x32xf32>
    %100 = tpu.matmul %99, %25, %cst_52 {dimension_numbers = #tpu.dot_dimension_numbers<[1], [0], [0], [1], [0, 0, 1, 1], [], []>} : vector<2x32xf32>, vector<32x32xf32>, vector<2x32xf32> -> vector<2x32xf32>
    %101 = vector.broadcast %31 : vector<1x32xf32> to vector<2x32xf32>
    %102 = arith.addf %100, %101 : vector<2x32xf32>
    %cst_53 = arith.constant dense<0.000000e+00> : vector<2x32xf32>
    %103 = tpu.matmul %99, %27, %cst_53 {dimension_numbers = #tpu.dot_dimension_numbers<[1], [0], [0], [1], [0, 0, 1, 1], [], []>} : vector<2x32xf32>, vector<32x32xf32>, vector<2x32xf32> -> vector<2x32xf32>
    %104 = vector.broadcast %33 : vector<1x32xf32> to vector<2x32xf32>
    %105 = arith.addf %103, %104 : vector<2x32xf32>
    %cst_54 = arith.constant dense<0.000000e+00> : vector<2x32xf32>
    %106 = tpu.matmul %99, %29, %cst_54 {dimension_numbers = #tpu.dot_dimension_numbers<[1], [0], [0], [1], [0, 0, 1, 1], [], []>} : vector<2x32xf32>, vector<32x32xf32>, vector<2x32xf32> -> vector<2x32xf32>
    %107 = vector.broadcast %35 : vector<1x32xf32> to vector<2x32xf32>
    %108 = arith.addf %106, %107 : vector<2x32xf32>
    %109 = vector.extract_strided_slice %9 {offsets = [4, 0], sizes = [2, 32], strides = [1, 1]} : vector<16x32xf32> to vector<2x32xf32>
    %110 = arith.addf %109, %102 : vector<2x32xf32>
    %111 = arith.negf %110 : vector<2x32xf32>
    %112 = math.exp %111 : vector<2x32xf32>
    %cst_55 = arith.constant 1.000000e+00 : f32
    %113 = vector.broadcast %cst_55 : f32 to vector<2x32xf32>
    %114 = arith.addf %113, %112 : vector<2x32xf32>
    %115 = arith.divf %113, %114 : vector<2x32xf32>
    %116 = vector.extract_strided_slice %16 {offsets = [4, 0], sizes = [2, 32], strides = [1, 1]} : vector<16x32xf32> to vector<2x32xf32>
    %117 = arith.addf %116, %105 : vector<2x32xf32>
    %118 = arith.negf %117 : vector<2x32xf32>
    %119 = math.exp %118 : vector<2x32xf32>
    %cst_56 = arith.constant 1.000000e+00 : f32
    %120 = vector.broadcast %cst_56 : f32 to vector<2x32xf32>
    %121 = arith.addf %120, %119 : vector<2x32xf32>
    %122 = arith.divf %120, %121 : vector<2x32xf32>
    %123 = vector.extract_strided_slice %23 {offsets = [4, 0], sizes = [2, 32], strides = [1, 1]} : vector<16x32xf32> to vector<2x32xf32>
    %124 = arith.mulf %115, %108 : vector<2x32xf32>
    %125 = arith.addf %123, %124 : vector<2x32xf32>
    %126 = math.tanh %125 : vector<2x32xf32>
    %cst_57 = arith.constant 1.000000e+00 : f32
    %127 = vector.broadcast %cst_57 : f32 to vector<2x32xf32>
    %128 = arith.subf %127, %122 : vector<2x32xf32>
    %129 = arith.mulf %128, %126 : vector<2x32xf32>
    %130 = arith.mulf %122, %99 : vector<2x32xf32>
    %131 = arith.addf %129, %130 : vector<2x32xf32>
    %cst_58 = arith.constant dense<0.000000e+00> : vector<2x32xf32>
    %132 = tpu.matmul %131, %25, %cst_58 {dimension_numbers = #tpu.dot_dimension_numbers<[1], [0], [0], [1], [0, 0, 1, 1], [], []>} : vector<2x32xf32>, vector<32x32xf32>, vector<2x32xf32> -> vector<2x32xf32>
    %133 = vector.broadcast %31 : vector<1x32xf32> to vector<2x32xf32>
    %134 = arith.addf %132, %133 : vector<2x32xf32>
    %cst_59 = arith.constant dense<0.000000e+00> : vector<2x32xf32>
    %135 = tpu.matmul %131, %27, %cst_59 {dimension_numbers = #tpu.dot_dimension_numbers<[1], [0], [0], [1], [0, 0, 1, 1], [], []>} : vector<2x32xf32>, vector<32x32xf32>, vector<2x32xf32> -> vector<2x32xf32>
    %136 = vector.broadcast %33 : vector<1x32xf32> to vector<2x32xf32>
    %137 = arith.addf %135, %136 : vector<2x32xf32>
    %cst_60 = arith.constant dense<0.000000e+00> : vector<2x32xf32>
    %138 = tpu.matmul %131, %29, %cst_60 {dimension_numbers = #tpu.dot_dimension_numbers<[1], [0], [0], [1], [0, 0, 1, 1], [], []>} : vector<2x32xf32>, vector<32x32xf32>, vector<2x32xf32> -> vector<2x32xf32>
    %139 = vector.broadcast %35 : vector<1x32xf32> to vector<2x32xf32>
    %140 = arith.addf %138, %139 : vector<2x32xf32>
    %141 = vector.extract_strided_slice %9 {offsets = [6, 0], sizes = [2, 32], strides = [1, 1]} : vector<16x32xf32> to vector<2x32xf32>
    %142 = arith.addf %141, %134 : vector<2x32xf32>
    %143 = arith.negf %142 : vector<2x32xf32>
    %144 = math.exp %143 : vector<2x32xf32>
    %cst_61 = arith.constant 1.000000e+00 : f32
    %145 = vector.broadcast %cst_61 : f32 to vector<2x32xf32>
    %146 = arith.addf %145, %144 : vector<2x32xf32>
    %147 = arith.divf %145, %146 : vector<2x32xf32>
    %148 = vector.extract_strided_slice %16 {offsets = [6, 0], sizes = [2, 32], strides = [1, 1]} : vector<16x32xf32> to vector<2x32xf32>
    %149 = arith.addf %148, %137 : vector<2x32xf32>
    %150 = arith.negf %149 : vector<2x32xf32>
    %151 = math.exp %150 : vector<2x32xf32>
    %cst_62 = arith.constant 1.000000e+00 : f32
    %152 = vector.broadcast %cst_62 : f32 to vector<2x32xf32>
    %153 = arith.addf %152, %151 : vector<2x32xf32>
    %154 = arith.divf %152, %153 : vector<2x32xf32>
    %155 = vector.extract_strided_slice %23 {offsets = [6, 0], sizes = [2, 32], strides = [1, 1]} : vector<16x32xf32> to vector<2x32xf32>
    %156 = arith.mulf %147, %140 : vector<2x32xf32>
    %157 = arith.addf %155, %156 : vector<2x32xf32>
    %158 = math.tanh %157 : vector<2x32xf32>
    %cst_63 = arith.constant 1.000000e+00 : f32
    %159 = vector.broadcast %cst_63 : f32 to vector<2x32xf32>
    %160 = arith.subf %159, %154 : vector<2x32xf32>
    %161 = arith.mulf %160, %158 : vector<2x32xf32>
    %162 = arith.mulf %154, %131 : vector<2x32xf32>
    %163 = arith.addf %161, %162 : vector<2x32xf32>
    %cst_64 = arith.constant dense<0.000000e+00> : vector<2x32xf32>
    %164 = tpu.matmul %163, %25, %cst_64 {dimension_numbers = #tpu.dot_dimension_numbers<[1], [0], [0], [1], [0, 0, 1, 1], [], []>} : vector<2x32xf32>, vector<32x32xf32>, vector<2x32xf32> -> vector<2x32xf32>
    %165 = vector.broadcast %31 : vector<1x32xf32> to vector<2x32xf32>
    %166 = arith.addf %164, %165 : vector<2x32xf32>
    %cst_65 = arith.constant dense<0.000000e+00> : vector<2x32xf32>
    %167 = tpu.matmul %163, %27, %cst_65 {dimension_numbers = #tpu.dot_dimension_numbers<[1], [0], [0], [1], [0, 0, 1, 1], [], []>} : vector<2x32xf32>, vector<32x32xf32>, vector<2x32xf32> -> vector<2x32xf32>
    %168 = vector.broadcast %33 : vector<1x32xf32> to vector<2x32xf32>
    %169 = arith.addf %167, %168 : vector<2x32xf32>
    %cst_66 = arith.constant dense<0.000000e+00> : vector<2x32xf32>
    %170 = tpu.matmul %163, %29, %cst_66 {dimension_numbers = #tpu.dot_dimension_numbers<[1], [0], [0], [1], [0, 0, 1, 1], [], []>} : vector<2x32xf32>, vector<32x32xf32>, vector<2x32xf32> -> vector<2x32xf32>
    %171 = vector.broadcast %35 : vector<1x32xf32> to vector<2x32xf32>
    %172 = arith.addf %170, %171 : vector<2x32xf32>
    %173 = vector.extract_strided_slice %9 {offsets = [8, 0], sizes = [2, 32], strides = [1, 1]} : vector<16x32xf32> to vector<2x32xf32>
    %174 = arith.addf %173, %166 : vector<2x32xf32>
    %175 = arith.negf %174 : vector<2x32xf32>
    %176 = math.exp %175 : vector<2x32xf32>
    %cst_67 = arith.constant 1.000000e+00 : f32
    %177 = vector.broadcast %cst_67 : f32 to vector<2x32xf32>
    %178 = arith.addf %177, %176 : vector<2x32xf32>
    %179 = arith.divf %177, %178 : vector<2x32xf32>
    %180 = vector.extract_strided_slice %16 {offsets = [8, 0], sizes = [2, 32], strides = [1, 1]} : vector<16x32xf32> to vector<2x32xf32>
    %181 = arith.addf %180, %169 : vector<2x32xf32>
    %182 = arith.negf %181 : vector<2x32xf32>
    %183 = math.exp %182 : vector<2x32xf32>
    %cst_68 = arith.constant 1.000000e+00 : f32
    %184 = vector.broadcast %cst_68 : f32 to vector<2x32xf32>
    %185 = arith.addf %184, %183 : vector<2x32xf32>
    %186 = arith.divf %184, %185 : vector<2x32xf32>
    %187 = vector.extract_strided_slice %23 {offsets = [8, 0], sizes = [2, 32], strides = [1, 1]} : vector<16x32xf32> to vector<2x32xf32>
    %188 = arith.mulf %179, %172 : vector<2x32xf32>
    %189 = arith.addf %187, %188 : vector<2x32xf32>
    %190 = math.tanh %189 : vector<2x32xf32>
    %cst_69 = arith.constant 1.000000e+00 : f32
    %191 = vector.broadcast %cst_69 : f32 to vector<2x32xf32>
    %192 = arith.subf %191, %186 : vector<2x32xf32>
    %193 = arith.mulf %192, %190 : vector<2x32xf32>
    %194 = arith.mulf %186, %163 : vector<2x32xf32>
    %195 = arith.addf %193, %194 : vector<2x32xf32>
    %cst_70 = arith.constant dense<0.000000e+00> : vector<2x32xf32>
    %196 = tpu.matmul %195, %25, %cst_70 {dimension_numbers = #tpu.dot_dimension_numbers<[1], [0], [0], [1], [0, 0, 1, 1], [], []>} : vector<2x32xf32>, vector<32x32xf32>, vector<2x32xf32> -> vector<2x32xf32>
    %197 = vector.broadcast %31 : vector<1x32xf32> to vector<2x32xf32>
    %198 = arith.addf %196, %197 : vector<2x32xf32>
    %cst_71 = arith.constant dense<0.000000e+00> : vector<2x32xf32>
    %199 = tpu.matmul %195, %27, %cst_71 {dimension_numbers = #tpu.dot_dimension_numbers<[1], [0], [0], [1], [0, 0, 1, 1], [], []>} : vector<2x32xf32>, vector<32x32xf32>, vector<2x32xf32> -> vector<2x32xf32>
    %200 = vector.broadcast %33 : vector<1x32xf32> to vector<2x32xf32>
    %201 = arith.addf %199, %200 : vector<2x32xf32>
    %cst_72 = arith.constant dense<0.000000e+00> : vector<2x32xf32>
    %202 = tpu.matmul %195, %29, %cst_72 {dimension_numbers = #tpu.dot_dimension_numbers<[1], [0], [0], [1], [0, 0, 1, 1], [], []>} : vector<2x32xf32>, vector<32x32xf32>, vector<2x32xf32> -> vector<2x32xf32>
    %203 = vector.broadcast %35 : vector<1x32xf32> to vector<2x32xf32>
    %204 = arith.addf %202, %203 : vector<2x32xf32>
    %205 = vector.extract_strided_slice %9 {offsets = [10, 0], sizes = [2, 32], strides = [1, 1]} : vector<16x32xf32> to vector<2x32xf32>
    %206 = arith.addf %205, %198 : vector<2x32xf32>
    %207 = arith.negf %206 : vector<2x32xf32>
    %208 = math.exp %207 : vector<2x32xf32>
    %cst_73 = arith.constant 1.000000e+00 : f32
    %209 = vector.broadcast %cst_73 : f32 to vector<2x32xf32>
    %210 = arith.addf %209, %208 : vector<2x32xf32>
    %211 = arith.divf %209, %210 : vector<2x32xf32>
    %212 = vector.extract_strided_slice %16 {offsets = [10, 0], sizes = [2, 32], strides = [1, 1]} : vector<16x32xf32> to vector<2x32xf32>
    %213 = arith.addf %212, %201 : vector<2x32xf32>
    %214 = arith.negf %213 : vector<2x32xf32>
    %215 = math.exp %214 : vector<2x32xf32>
    %cst_74 = arith.constant 1.000000e+00 : f32
    %216 = vector.broadcast %cst_74 : f32 to vector<2x32xf32>
    %217 = arith.addf %216, %215 : vector<2x32xf32>
    %218 = arith.divf %216, %217 : vector<2x32xf32>
    %219 = vector.extract_strided_slice %23 {offsets = [10, 0], sizes = [2, 32], strides = [1, 1]} : vector<16x32xf32> to vector<2x32xf32>
    %220 = arith.mulf %211, %204 : vector<2x32xf32>
    %221 = arith.addf %219, %220 : vector<2x32xf32>
    %222 = math.tanh %221 : vector<2x32xf32>
    %cst_75 = arith.constant 1.000000e+00 : f32
    %223 = vector.broadcast %cst_75 : f32 to vector<2x32xf32>
    %224 = arith.subf %223, %218 : vector<2x32xf32>
    %225 = arith.mulf %224, %222 : vector<2x32xf32>
    %226 = arith.mulf %218, %195 : vector<2x32xf32>
    %227 = arith.addf %225, %226 : vector<2x32xf32>
    %cst_76 = arith.constant dense<0.000000e+00> : vector<2x32xf32>
    %228 = tpu.matmul %227, %25, %cst_76 {dimension_numbers = #tpu.dot_dimension_numbers<[1], [0], [0], [1], [0, 0, 1, 1], [], []>} : vector<2x32xf32>, vector<32x32xf32>, vector<2x32xf32> -> vector<2x32xf32>
    %229 = vector.broadcast %31 : vector<1x32xf32> to vector<2x32xf32>
    %230 = arith.addf %228, %229 : vector<2x32xf32>
    %cst_77 = arith.constant dense<0.000000e+00> : vector<2x32xf32>
    %231 = tpu.matmul %227, %27, %cst_77 {dimension_numbers = #tpu.dot_dimension_numbers<[1], [0], [0], [1], [0, 0, 1, 1], [], []>} : vector<2x32xf32>, vector<32x32xf32>, vector<2x32xf32> -> vector<2x32xf32>
    %232 = vector.broadcast %33 : vector<1x32xf32> to vector<2x32xf32>
    %233 = arith.addf %231, %232 : vector<2x32xf32>
    %cst_78 = arith.constant dense<0.000000e+00> : vector<2x32xf32>
    %234 = tpu.matmul %227, %29, %cst_78 {dimension_numbers = #tpu.dot_dimension_numbers<[1], [0], [0], [1], [0, 0, 1, 1], [], []>} : vector<2x32xf32>, vector<32x32xf32>, vector<2x32xf32> -> vector<2x32xf32>
    %235 = vector.broadcast %35 : vector<1x32xf32> to vector<2x32xf32>
    %236 = arith.addf %234, %235 : vector<2x32xf32>
    %237 = vector.extract_strided_slice %9 {offsets = [12, 0], sizes = [2, 32], strides = [1, 1]} : vector<16x32xf32> to vector<2x32xf32>
    %238 = arith.addf %237, %230 : vector<2x32xf32>
    %239 = arith.negf %238 : vector<2x32xf32>
    %240 = math.exp %239 : vector<2x32xf32>
    %cst_79 = arith.constant 1.000000e+00 : f32
    %241 = vector.broadcast %cst_79 : f32 to vector<2x32xf32>
    %242 = arith.addf %241, %240 : vector<2x32xf32>
    %243 = arith.divf %241, %242 : vector<2x32xf32>
    %244 = vector.extract_strided_slice %16 {offsets = [12, 0], sizes = [2, 32], strides = [1, 1]} : vector<16x32xf32> to vector<2x32xf32>
    %245 = arith.addf %244, %233 : vector<2x32xf32>
    %246 = arith.negf %245 : vector<2x32xf32>
    %247 = math.exp %246 : vector<2x32xf32>
    %cst_80 = arith.constant 1.000000e+00 : f32
    %248 = vector.broadcast %cst_80 : f32 to vector<2x32xf32>
    %249 = arith.addf %248, %247 : vector<2x32xf32>
    %250 = arith.divf %248, %249 : vector<2x32xf32>
    %251 = vector.extract_strided_slice %23 {offsets = [12, 0], sizes = [2, 32], strides = [1, 1]} : vector<16x32xf32> to vector<2x32xf32>
    %252 = arith.mulf %243, %236 : vector<2x32xf32>
    %253 = arith.addf %251, %252 : vector<2x32xf32>
    %254 = math.tanh %253 : vector<2x32xf32>
    %cst_81 = arith.constant 1.000000e+00 : f32
    %255 = vector.broadcast %cst_81 : f32 to vector<2x32xf32>
    %256 = arith.subf %255, %250 : vector<2x32xf32>
    %257 = arith.mulf %256, %254 : vector<2x32xf32>
    %258 = arith.mulf %250, %227 : vector<2x32xf32>
    %259 = arith.addf %257, %258 : vector<2x32xf32>
    %cst_82 = arith.constant dense<0.000000e+00> : vector<2x32xf32>
    %260 = tpu.matmul %259, %25, %cst_82 {dimension_numbers = #tpu.dot_dimension_numbers<[1], [0], [0], [1], [0, 0, 1, 1], [], []>} : vector<2x32xf32>, vector<32x32xf32>, vector<2x32xf32> -> vector<2x32xf32>
    %261 = vector.broadcast %31 : vector<1x32xf32> to vector<2x32xf32>
    %262 = arith.addf %260, %261 : vector<2x32xf32>
    %cst_83 = arith.constant dense<0.000000e+00> : vector<2x32xf32>
    %263 = tpu.matmul %259, %27, %cst_83 {dimension_numbers = #tpu.dot_dimension_numbers<[1], [0], [0], [1], [0, 0, 1, 1], [], []>} : vector<2x32xf32>, vector<32x32xf32>, vector<2x32xf32> -> vector<2x32xf32>
    %264 = vector.broadcast %33 : vector<1x32xf32> to vector<2x32xf32>
    %265 = arith.addf %263, %264 : vector<2x32xf32>
    %cst_84 = arith.constant dense<0.000000e+00> : vector<2x32xf32>
    %266 = tpu.matmul %259, %29, %cst_84 {dimension_numbers = #tpu.dot_dimension_numbers<[1], [0], [0], [1], [0, 0, 1, 1], [], []>} : vector<2x32xf32>, vector<32x32xf32>, vector<2x32xf32> -> vector<2x32xf32>
    %267 = vector.broadcast %35 : vector<1x32xf32> to vector<2x32xf32>
    %268 = arith.addf %266, %267 : vector<2x32xf32>
    %269 = vector.extract_strided_slice %9 {offsets = [14, 0], sizes = [2, 32], strides = [1, 1]} : vector<16x32xf32> to vector<2x32xf32>
    %270 = arith.addf %269, %262 : vector<2x32xf32>
    %271 = arith.negf %270 : vector<2x32xf32>
    %272 = math.exp %271 : vector<2x32xf32>
    %cst_85 = arith.constant 1.000000e+00 : f32
    %273 = vector.broadcast %cst_85 : f32 to vector<2x32xf32>
    %274 = arith.addf %273, %272 : vector<2x32xf32>
    %275 = arith.divf %273, %274 : vector<2x32xf32>
    %276 = vector.extract_strided_slice %16 {offsets = [14, 0], sizes = [2, 32], strides = [1, 1]} : vector<16x32xf32> to vector<2x32xf32>
    %277 = arith.addf %276, %265 : vector<2x32xf32>
    %278 = arith.negf %277 : vector<2x32xf32>
    %279 = math.exp %278 : vector<2x32xf32>
    %cst_86 = arith.constant 1.000000e+00 : f32
    %280 = vector.broadcast %cst_86 : f32 to vector<2x32xf32>
    %281 = arith.addf %280, %279 : vector<2x32xf32>
    %282 = arith.divf %280, %281 : vector<2x32xf32>
    %283 = vector.extract_strided_slice %23 {offsets = [14, 0], sizes = [2, 32], strides = [1, 1]} : vector<16x32xf32> to vector<2x32xf32>
    %284 = arith.mulf %275, %268 : vector<2x32xf32>
    %285 = arith.addf %283, %284 : vector<2x32xf32>
    %286 = math.tanh %285 : vector<2x32xf32>
    %cst_87 = arith.constant 1.000000e+00 : f32
    %287 = vector.broadcast %cst_87 : f32 to vector<2x32xf32>
    %288 = arith.subf %287, %282 : vector<2x32xf32>
    %289 = arith.mulf %288, %286 : vector<2x32xf32>
    %290 = arith.mulf %282, %259 : vector<2x32xf32>
    %291 = arith.addf %289, %290 : vector<2x32xf32>
    %c1_88 = arith.constant 1 : index
    %c0_89 = arith.constant 0 : index
    %c0_90 = arith.constant 0 : index
    %292 = vector.load %arg1[%c1_88, %c0_89, %c0_90] : memref<6x2x32xf32, #tpu.memory_space<vmem>>, vector<1x2x32xf32>
    %293 = vector.shape_cast %292 : vector<1x2x32xf32> to vector<2x32xf32>
    %c0_91 = arith.constant 0 : index
    %c0_92 = arith.constant 0 : index
    %c0_93 = arith.constant 0 : index
    %294 = vector.load %arg6[%c0_91, %c0_92, %c0_93] : memref<3x32x32xf32, #tpu.memory_space<vmem>>, vector<1x32x32xf32>
    %295 = vector.shape_cast %294 : vector<1x32x32xf32> to vector<32x32xf32>
    %cst_94 = arith.constant dense<0.000000e+00> : vector<16x32xf32>
    %296 = tpu.matmul %0, %295, %cst_94 {dimension_numbers = #tpu.dot_dimension_numbers<[1], [0], [0], [1], [0, 0, 1, 1], [], []>} : vector<16x32xf32>, vector<32x32xf32>, vector<16x32xf32> -> vector<16x32xf32>
    %c0_95 = arith.constant 0 : index
    %c0_96 = arith.constant 0 : index
    %c0_97 = arith.constant 0 : index
    %297 = vector.load %arg8[%c0_95, %c0_96, %c0_97] : memref<3x1x32xf32, #tpu.memory_space<vmem>>, vector<1x1x32xf32>
    %298 = vector.shape_cast %297 : vector<1x1x32xf32> to vector<1x32xf32>
    %299 = vector.broadcast %298 : vector<1x32xf32> to vector<16x32xf32>
    %300 = arith.addf %296, %299 : vector<16x32xf32>
    %c1_98 = arith.constant 1 : index
    %c0_99 = arith.constant 0 : index
    %c0_100 = arith.constant 0 : index
    %301 = vector.load %arg6[%c1_98, %c0_99, %c0_100] : memref<3x32x32xf32, #tpu.memory_space<vmem>>, vector<1x32x32xf32>
    %302 = vector.shape_cast %301 : vector<1x32x32xf32> to vector<32x32xf32>
    %cst_101 = arith.constant dense<0.000000e+00> : vector<16x32xf32>
    %303 = tpu.matmul %0, %302, %cst_101 {dimension_numbers = #tpu.dot_dimension_numbers<[1], [0], [0], [1], [0, 0, 1, 1], [], []>} : vector<16x32xf32>, vector<32x32xf32>, vector<16x32xf32> -> vector<16x32xf32>
    %c1_102 = arith.constant 1 : index
    %c0_103 = arith.constant 0 : index
    %c0_104 = arith.constant 0 : index
    %304 = vector.load %arg8[%c1_102, %c0_103, %c0_104] : memref<3x1x32xf32, #tpu.memory_space<vmem>>, vector<1x1x32xf32>
    %305 = vector.shape_cast %304 : vector<1x1x32xf32> to vector<1x32xf32>
    %306 = vector.broadcast %305 : vector<1x32xf32> to vector<16x32xf32>
    %307 = arith.addf %303, %306 : vector<16x32xf32>
    %c2_105 = arith.constant 2 : index
    %c0_106 = arith.constant 0 : index
    %c0_107 = arith.constant 0 : index
    %308 = vector.load %arg6[%c2_105, %c0_106, %c0_107] : memref<3x32x32xf32, #tpu.memory_space<vmem>>, vector<1x32x32xf32>
    %309 = vector.shape_cast %308 : vector<1x32x32xf32> to vector<32x32xf32>
    %cst_108 = arith.constant dense<0.000000e+00> : vector<16x32xf32>
    %310 = tpu.matmul %0, %309, %cst_108 {dimension_numbers = #tpu.dot_dimension_numbers<[1], [0], [0], [1], [0, 0, 1, 1], [], []>} : vector<16x32xf32>, vector<32x32xf32>, vector<16x32xf32> -> vector<16x32xf32>
    %c2_109 = arith.constant 2 : index
    %c0_110 = arith.constant 0 : index
    %c0_111 = arith.constant 0 : index
    %311 = vector.load %arg8[%c2_109, %c0_110, %c0_111] : memref<3x1x32xf32, #tpu.memory_space<vmem>>, vector<1x1x32xf32>
    %312 = vector.shape_cast %311 : vector<1x1x32xf32> to vector<1x32xf32>
    %313 = vector.broadcast %312 : vector<1x32xf32> to vector<16x32xf32>
    %314 = arith.addf %310, %313 : vector<16x32xf32>
    %c0_112 = arith.constant 0 : index
    %c0_113 = arith.constant 0 : index
    %c0_114 = arith.constant 0 : index
    %315 = vector.load %arg7[%c0_112, %c0_113, %c0_114] : memref<3x32x32xf32, #tpu.memory_space<vmem>>, vector<1x32x32xf32>
    %316 = vector.shape_cast %315 : vector<1x32x32xf32> to vector<32x32xf32>
    %c1_115 = arith.constant 1 : index
    %c0_116 = arith.constant 0 : index
    %c0_117 = arith.constant 0 : index
    %317 = vector.load %arg7[%c1_115, %c0_116, %c0_117] : memref<3x32x32xf32, #tpu.memory_space<vmem>>, vector<1x32x32xf32>
    %318 = vector.shape_cast %317 : vector<1x32x32xf32> to vector<32x32xf32>
    %c2_118 = arith.constant 2 : index
    %c0_119 = arith.constant 0 : index
    %c0_120 = arith.constant 0 : index
    %319 = vector.load %arg7[%c2_118, %c0_119, %c0_120] : memref<3x32x32xf32, #tpu.memory_space<vmem>>, vector<1x32x32xf32>
    %320 = vector.shape_cast %319 : vector<1x32x32xf32> to vector<32x32xf32>
    %c0_121 = arith.constant 0 : index
    %c0_122 = arith.constant 0 : index
    %c0_123 = arith.constant 0 : index
    %321 = vector.load %arg9[%c0_121, %c0_122, %c0_123] : memref<3x1x32xf32, #tpu.memory_space<vmem>>, vector<1x1x32xf32>
    %322 = vector.shape_cast %321 : vector<1x1x32xf32> to vector<1x32xf32>
    %c1_124 = arith.constant 1 : index
    %c0_125 = arith.constant 0 : index
    %c0_126 = arith.constant 0 : index
    %323 = vector.load %arg9[%c1_124, %c0_125, %c0_126] : memref<3x1x32xf32, #tpu.memory_space<vmem>>, vector<1x1x32xf32>
    %324 = vector.shape_cast %323 : vector<1x1x32xf32> to vector<1x32xf32>
    %c2_127 = arith.constant 2 : index
    %c0_128 = arith.constant 0 : index
    %c0_129 = arith.constant 0 : index
    %325 = vector.load %arg9[%c2_127, %c0_128, %c0_129] : memref<3x1x32xf32, #tpu.memory_space<vmem>>, vector<1x1x32xf32>
    %326 = vector.shape_cast %325 : vector<1x1x32xf32> to vector<1x32xf32>
    %cst_130 = arith.constant dense<0.000000e+00> : vector<2x32xf32>
    %327 = tpu.matmul %293, %316, %cst_130 {dimension_numbers = #tpu.dot_dimension_numbers<[1], [0], [0], [1], [0, 0, 1, 1], [], []>} : vector<2x32xf32>, vector<32x32xf32>, vector<2x32xf32> -> vector<2x32xf32>
    %328 = vector.broadcast %322 : vector<1x32xf32> to vector<2x32xf32>
    %329 = arith.addf %327, %328 : vector<2x32xf32>
    %cst_131 = arith.constant dense<0.000000e+00> : vector<2x32xf32>
    %330 = tpu.matmul %293, %318, %cst_131 {dimension_numbers = #tpu.dot_dimension_numbers<[1], [0], [0], [1], [0, 0, 1, 1], [], []>} : vector<2x32xf32>, vector<32x32xf32>, vector<2x32xf32> -> vector<2x32xf32>
    %331 = vector.broadcast %324 : vector<1x32xf32> to vector<2x32xf32>
    %332 = arith.addf %330, %331 : vector<2x32xf32>
    %cst_132 = arith.constant dense<0.000000e+00> : vector<2x32xf32>
    %333 = tpu.matmul %293, %320, %cst_132 {dimension_numbers = #tpu.dot_dimension_numbers<[1], [0], [0], [1], [0, 0, 1, 1], [], []>} : vector<2x32xf32>, vector<32x32xf32>, vector<2x32xf32> -> vector<2x32xf32>
    %334 = vector.broadcast %326 : vector<1x32xf32> to vector<2x32xf32>
    %335 = arith.addf %333, %334 : vector<2x32xf32>
    %336 = vector.extract_strided_slice %300 {offsets = [14, 0], sizes = [2, 32], strides = [1, 1]} : vector<16x32xf32> to vector<2x32xf32>
    %337 = arith.addf %336, %329 : vector<2x32xf32>
    %338 = arith.negf %337 : vector<2x32xf32>
    %339 = math.exp %338 : vector<2x32xf32>
    %cst_133 = arith.constant 1.000000e+00 : f32
    %340 = vector.broadcast %cst_133 : f32 to vector<2x32xf32>
    %341 = arith.addf %340, %339 : vector<2x32xf32>
    %342 = arith.divf %340, %341 : vector<2x32xf32>
    %343 = vector.extract_strided_slice %307 {offsets = [14, 0], sizes = [2, 32], strides = [1, 1]} : vector<16x32xf32> to vector<2x32xf32>
    %344 = arith.addf %343, %332 : vector<2x32xf32>
    %345 = arith.negf %344 : vector<2x32xf32>
    %346 = math.exp %345 : vector<2x32xf32>
    %cst_134 = arith.constant 1.000000e+00 : f32
    %347 = vector.broadcast %cst_134 : f32 to vector<2x32xf32>
    %348 = arith.addf %347, %346 : vector<2x32xf32>
    %349 = arith.divf %347, %348 : vector<2x32xf32>
    %350 = vector.extract_strided_slice %314 {offsets = [14, 0], sizes = [2, 32], strides = [1, 1]} : vector<16x32xf32> to vector<2x32xf32>
    %351 = arith.mulf %342, %335 : vector<2x32xf32>
    %352 = arith.addf %350, %351 : vector<2x32xf32>
    %353 = math.tanh %352 : vector<2x32xf32>
    %cst_135 = arith.constant 1.000000e+00 : f32
    %354 = vector.broadcast %cst_135 : f32 to vector<2x32xf32>
    %355 = arith.subf %354, %349 : vector<2x32xf32>
    %356 = arith.mulf %355, %353 : vector<2x32xf32>
    %357 = arith.mulf %349, %293 : vector<2x32xf32>
    %358 = arith.addf %356, %357 : vector<2x32xf32>
    %cst_136 = arith.constant dense<0.000000e+00> : vector<2x32xf32>
    %359 = tpu.matmul %358, %316, %cst_136 {dimension_numbers = #tpu.dot_dimension_numbers<[1], [0], [0], [1], [0, 0, 1, 1], [], []>} : vector<2x32xf32>, vector<32x32xf32>, vector<2x32xf32> -> vector<2x32xf32>
    %360 = vector.broadcast %322 : vector<1x32xf32> to vector<2x32xf32>
    %361 = arith.addf %359, %360 : vector<2x32xf32>
    %cst_137 = arith.constant dense<0.000000e+00> : vector<2x32xf32>
    %362 = tpu.matmul %358, %318, %cst_137 {dimension_numbers = #tpu.dot_dimension_numbers<[1], [0], [0], [1], [0, 0, 1, 1], [], []>} : vector<2x32xf32>, vector<32x32xf32>, vector<2x32xf32> -> vector<2x32xf32>
    %363 = vector.broadcast %324 : vector<1x32xf32> to vector<2x32xf32>
    %364 = arith.addf %362, %363 : vector<2x32xf32>
    %cst_138 = arith.constant dense<0.000000e+00> : vector<2x32xf32>
    %365 = tpu.matmul %358, %320, %cst_138 {dimension_numbers = #tpu.dot_dimension_numbers<[1], [0], [0], [1], [0, 0, 1, 1], [], []>} : vector<2x32xf32>, vector<32x32xf32>, vector<2x32xf32> -> vector<2x32xf32>
    %366 = vector.broadcast %326 : vector<1x32xf32> to vector<2x32xf32>
    %367 = arith.addf %365, %366 : vector<2x32xf32>
    %368 = vector.extract_strided_slice %300 {offsets = [12, 0], sizes = [2, 32], strides = [1, 1]} : vector<16x32xf32> to vector<2x32xf32>
    %369 = arith.addf %368, %361 : vector<2x32xf32>
    %370 = arith.negf %369 : vector<2x32xf32>
    %371 = math.exp %370 : vector<2x32xf32>
    %cst_139 = arith.constant 1.000000e+00 : f32
    %372 = vector.broadcast %cst_139 : f32 to vector<2x32xf32>
    %373 = arith.addf %372, %371 : vector<2x32xf32>
    %374 = arith.divf %372, %373 : vector<2x32xf32>
    %375 = vector.extract_strided_slice %307 {offsets = [12, 0], sizes = [2, 32], strides = [1, 1]} : vector<16x32xf32> to vector<2x32xf32>
    %376 = arith.addf %375, %364 : vector<2x32xf32>
    %377 = arith.negf %376 : vector<2x32xf32>
    %378 = math.exp %377 : vector<2x32xf32>
    %cst_140 = arith.constant 1.000000e+00 : f32
    %379 = vector.broadcast %cst_140 : f32 to vector<2x32xf32>
    %380 = arith.addf %379, %378 : vector<2x32xf32>
    %381 = arith.divf %379, %380 : vector<2x32xf32>
    %382 = vector.extract_strided_slice %314 {offsets = [12, 0], sizes = [2, 32], strides = [1, 1]} : vector<16x32xf32> to vector<2x32xf32>
    %383 = arith.mulf %374, %367 : vector<2x32xf32>
    %384 = arith.addf %382, %383 : vector<2x32xf32>
    %385 = math.tanh %384 : vector<2x32xf32>
    %cst_141 = arith.constant 1.000000e+00 : f32
    %386 = vector.broadcast %cst_141 : f32 to vector<2x32xf32>
    %387 = arith.subf %386, %381 : vector<2x32xf32>
    %388 = arith.mulf %387, %385 : vector<2x32xf32>
    %389 = arith.mulf %381, %358 : vector<2x32xf32>
    %390 = arith.addf %388, %389 : vector<2x32xf32>
    %cst_142 = arith.constant dense<0.000000e+00> : vector<2x32xf32>
    %391 = tpu.matmul %390, %316, %cst_142 {dimension_numbers = #tpu.dot_dimension_numbers<[1], [0], [0], [1], [0, 0, 1, 1], [], []>} : vector<2x32xf32>, vector<32x32xf32>, vector<2x32xf32> -> vector<2x32xf32>
    %392 = vector.broadcast %322 : vector<1x32xf32> to vector<2x32xf32>
    %393 = arith.addf %391, %392 : vector<2x32xf32>
    %cst_143 = arith.constant dense<0.000000e+00> : vector<2x32xf32>
    %394 = tpu.matmul %390, %318, %cst_143 {dimension_numbers = #tpu.dot_dimension_numbers<[1], [0], [0], [1], [0, 0, 1, 1], [], []>} : vector<2x32xf32>, vector<32x32xf32>, vector<2x32xf32> -> vector<2x32xf32>
    %395 = vector.broadcast %324 : vector<1x32xf32> to vector<2x32xf32>
    %396 = arith.addf %394, %395 : vector<2x32xf32>
    %cst_144 = arith.constant dense<0.000000e+00> : vector<2x32xf32>
    %397 = tpu.matmul %390, %320, %cst_144 {dimension_numbers = #tpu.dot_dimension_numbers<[1], [0], [0], [1], [0, 0, 1, 1], [], []>} : vector<2x32xf32>, vector<32x32xf32>, vector<2x32xf32> -> vector<2x32xf32>
    %398 = vector.broadcast %326 : vector<1x32xf32> to vector<2x32xf32>
    %399 = arith.addf %397, %398 : vector<2x32xf32>
    %400 = vector.extract_strided_slice %300 {offsets = [10, 0], sizes = [2, 32], strides = [1, 1]} : vector<16x32xf32> to vector<2x32xf32>
    %401 = arith.addf %400, %393 : vector<2x32xf32>
    %402 = arith.negf %401 : vector<2x32xf32>
    %403 = math.exp %402 : vector<2x32xf32>
    %cst_145 = arith.constant 1.000000e+00 : f32
    %404 = vector.broadcast %cst_145 : f32 to vector<2x32xf32>
    %405 = arith.addf %404, %403 : vector<2x32xf32>
    %406 = arith.divf %404, %405 : vector<2x32xf32>
    %407 = vector.extract_strided_slice %307 {offsets = [10, 0], sizes = [2, 32], strides = [1, 1]} : vector<16x32xf32> to vector<2x32xf32>
    %408 = arith.addf %407, %396 : vector<2x32xf32>
    %409 = arith.negf %408 : vector<2x32xf32>
    %410 = math.exp %409 : vector<2x32xf32>
    %cst_146 = arith.constant 1.000000e+00 : f32
    %411 = vector.broadcast %cst_146 : f32 to vector<2x32xf32>
    %412 = arith.addf %411, %410 : vector<2x32xf32>
    %413 = arith.divf %411, %412 : vector<2x32xf32>
    %414 = vector.extract_strided_slice %314 {offsets = [10, 0], sizes = [2, 32], strides = [1, 1]} : vector<16x32xf32> to vector<2x32xf32>
    %415 = arith.mulf %406, %399 : vector<2x32xf32>
    %416 = arith.addf %414, %415 : vector<2x32xf32>
    %417 = math.tanh %416 : vector<2x32xf32>
    %cst_147 = arith.constant 1.000000e+00 : f32
    %418 = vector.broadcast %cst_147 : f32 to vector<2x32xf32>
    %419 = arith.subf %418, %413 : vector<2x32xf32>
    %420 = arith.mulf %419, %417 : vector<2x32xf32>
    %421 = arith.mulf %413, %390 : vector<2x32xf32>
    %422 = arith.addf %420, %421 : vector<2x32xf32>
    %cst_148 = arith.constant dense<0.000000e+00> : vector<2x32xf32>
    %423 = tpu.matmul %422, %316, %cst_148 {dimension_numbers = #tpu.dot_dimension_numbers<[1], [0], [0], [1], [0, 0, 1, 1], [], []>} : vector<2x32xf32>, vector<32x32xf32>, vector<2x32xf32> -> vector<2x32xf32>
    %424 = vector.broadcast %322 : vector<1x32xf32> to vector<2x32xf32>
    %425 = arith.addf %423, %424 : vector<2x32xf32>
    %cst_149 = arith.constant dense<0.000000e+00> : vector<2x32xf32>
    %426 = tpu.matmul %422, %318, %cst_149 {dimension_numbers = #tpu.dot_dimension_numbers<[1], [0], [0], [1], [0, 0, 1, 1], [], []>} : vector<2x32xf32>, vector<32x32xf32>, vector<2x32xf32> -> vector<2x32xf32>
    %427 = vector.broadcast %324 : vector<1x32xf32> to vector<2x32xf32>
    %428 = arith.addf %426, %427 : vector<2x32xf32>
    %cst_150 = arith.constant dense<0.000000e+00> : vector<2x32xf32>
    %429 = tpu.matmul %422, %320, %cst_150 {dimension_numbers = #tpu.dot_dimension_numbers<[1], [0], [0], [1], [0, 0, 1, 1], [], []>} : vector<2x32xf32>, vector<32x32xf32>, vector<2x32xf32> -> vector<2x32xf32>
    %430 = vector.broadcast %326 : vector<1x32xf32> to vector<2x32xf32>
    %431 = arith.addf %429, %430 : vector<2x32xf32>
    %432 = vector.extract_strided_slice %300 {offsets = [8, 0], sizes = [2, 32], strides = [1, 1]} : vector<16x32xf32> to vector<2x32xf32>
    %433 = arith.addf %432, %425 : vector<2x32xf32>
    %434 = arith.negf %433 : vector<2x32xf32>
    %435 = math.exp %434 : vector<2x32xf32>
    %cst_151 = arith.constant 1.000000e+00 : f32
    %436 = vector.broadcast %cst_151 : f32 to vector<2x32xf32>
    %437 = arith.addf %436, %435 : vector<2x32xf32>
    %438 = arith.divf %436, %437 : vector<2x32xf32>
    %439 = vector.extract_strided_slice %307 {offsets = [8, 0], sizes = [2, 32], strides = [1, 1]} : vector<16x32xf32> to vector<2x32xf32>
    %440 = arith.addf %439, %428 : vector<2x32xf32>
    %441 = arith.negf %440 : vector<2x32xf32>
    %442 = math.exp %441 : vector<2x32xf32>
    %cst_152 = arith.constant 1.000000e+00 : f32
    %443 = vector.broadcast %cst_152 : f32 to vector<2x32xf32>
    %444 = arith.addf %443, %442 : vector<2x32xf32>
    %445 = arith.divf %443, %444 : vector<2x32xf32>
    %446 = vector.extract_strided_slice %314 {offsets = [8, 0], sizes = [2, 32], strides = [1, 1]} : vector<16x32xf32> to vector<2x32xf32>
    %447 = arith.mulf %438, %431 : vector<2x32xf32>
    %448 = arith.addf %446, %447 : vector<2x32xf32>
    %449 = math.tanh %448 : vector<2x32xf32>
    %cst_153 = arith.constant 1.000000e+00 : f32
    %450 = vector.broadcast %cst_153 : f32 to vector<2x32xf32>
    %451 = arith.subf %450, %445 : vector<2x32xf32>
    %452 = arith.mulf %451, %449 : vector<2x32xf32>
    %453 = arith.mulf %445, %422 : vector<2x32xf32>
    %454 = arith.addf %452, %453 : vector<2x32xf32>
    %cst_154 = arith.constant dense<0.000000e+00> : vector<2x32xf32>
    %455 = tpu.matmul %454, %316, %cst_154 {dimension_numbers = #tpu.dot_dimension_numbers<[1], [0], [0], [1], [0, 0, 1, 1], [], []>} : vector<2x32xf32>, vector<32x32xf32>, vector<2x32xf32> -> vector<2x32xf32>
    %456 = vector.broadcast %322 : vector<1x32xf32> to vector<2x32xf32>
    %457 = arith.addf %455, %456 : vector<2x32xf32>
    %cst_155 = arith.constant dense<0.000000e+00> : vector<2x32xf32>
    %458 = tpu.matmul %454, %318, %cst_155 {dimension_numbers = #tpu.dot_dimension_numbers<[1], [0], [0], [1], [0, 0, 1, 1], [], []>} : vector<2x32xf32>, vector<32x32xf32>, vector<2x32xf32> -> vector<2x32xf32>
    %459 = vector.broadcast %324 : vector<1x32xf32> to vector<2x32xf32>
    %460 = arith.addf %458, %459 : vector<2x32xf32>
    %cst_156 = arith.constant dense<0.000000e+00> : vector<2x32xf32>
    %461 = tpu.matmul %454, %320, %cst_156 {dimension_numbers = #tpu.dot_dimension_numbers<[1], [0], [0], [1], [0, 0, 1, 1], [], []>} : vector<2x32xf32>, vector<32x32xf32>, vector<2x32xf32> -> vector<2x32xf32>
    %462 = vector.broadcast %326 : vector<1x32xf32> to vector<2x32xf32>
    %463 = arith.addf %461, %462 : vector<2x32xf32>
    %464 = vector.extract_strided_slice %300 {offsets = [6, 0], sizes = [2, 32], strides = [1, 1]} : vector<16x32xf32> to vector<2x32xf32>
    %465 = arith.addf %464, %457 : vector<2x32xf32>
    %466 = arith.negf %465 : vector<2x32xf32>
    %467 = math.exp %466 : vector<2x32xf32>
    %cst_157 = arith.constant 1.000000e+00 : f32
    %468 = vector.broadcast %cst_157 : f32 to vector<2x32xf32>
    %469 = arith.addf %468, %467 : vector<2x32xf32>
    %470 = arith.divf %468, %469 : vector<2x32xf32>
    %471 = vector.extract_strided_slice %307 {offsets = [6, 0], sizes = [2, 32], strides = [1, 1]} : vector<16x32xf32> to vector<2x32xf32>
    %472 = arith.addf %471, %460 : vector<2x32xf32>
    %473 = arith.negf %472 : vector<2x32xf32>
    %474 = math.exp %473 : vector<2x32xf32>
    %cst_158 = arith.constant 1.000000e+00 : f32
    %475 = vector.broadcast %cst_158 : f32 to vector<2x32xf32>
    %476 = arith.addf %475, %474 : vector<2x32xf32>
    %477 = arith.divf %475, %476 : vector<2x32xf32>
    %478 = vector.extract_strided_slice %314 {offsets = [6, 0], sizes = [2, 32], strides = [1, 1]} : vector<16x32xf32> to vector<2x32xf32>
    %479 = arith.mulf %470, %463 : vector<2x32xf32>
    %480 = arith.addf %478, %479 : vector<2x32xf32>
    %481 = math.tanh %480 : vector<2x32xf32>
    %cst_159 = arith.constant 1.000000e+00 : f32
    %482 = vector.broadcast %cst_159 : f32 to vector<2x32xf32>
    %483 = arith.subf %482, %477 : vector<2x32xf32>
    %484 = arith.mulf %483, %481 : vector<2x32xf32>
    %485 = arith.mulf %477, %454 : vector<2x32xf32>
    %486 = arith.addf %484, %485 : vector<2x32xf32>
    %cst_160 = arith.constant dense<0.000000e+00> : vector<2x32xf32>
    %487 = tpu.matmul %486, %316, %cst_160 {dimension_numbers = #tpu.dot_dimension_numbers<[1], [0], [0], [1], [0, 0, 1, 1], [], []>} : vector<2x32xf32>, vector<32x32xf32>, vector<2x32xf32> -> vector<2x32xf32>
    %488 = vector.broadcast %322 : vector<1x32xf32> to vector<2x32xf32>
    %489 = arith.addf %487, %488 : vector<2x32xf32>
    %cst_161 = arith.constant dense<0.000000e+00> : vector<2x32xf32>
    %490 = tpu.matmul %486, %318, %cst_161 {dimension_numbers = #tpu.dot_dimension_numbers<[1], [0], [0], [1], [0, 0, 1, 1], [], []>} : vector<2x32xf32>, vector<32x32xf32>, vector<2x32xf32> -> vector<2x32xf32>
    %491 = vector.broadcast %324 : vector<1x32xf32> to vector<2x32xf32>
    %492 = arith.addf %490, %491 : vector<2x32xf32>
    %cst_162 = arith.constant dense<0.000000e+00> : vector<2x32xf32>
    %493 = tpu.matmul %486, %320, %cst_162 {dimension_numbers = #tpu.dot_dimension_numbers<[1], [0], [0], [1], [0, 0, 1, 1], [], []>} : vector<2x32xf32>, vector<32x32xf32>, vector<2x32xf32> -> vector<2x32xf32>
    %494 = vector.broadcast %326 : vector<1x32xf32> to vector<2x32xf32>
    %495 = arith.addf %493, %494 : vector<2x32xf32>
    %496 = vector.extract_strided_slice %300 {offsets = [4, 0], sizes = [2, 32], strides = [1, 1]} : vector<16x32xf32> to vector<2x32xf32>
    %497 = arith.addf %496, %489 : vector<2x32xf32>
    %498 = arith.negf %497 : vector<2x32xf32>
    %499 = math.exp %498 : vector<2x32xf32>
    %cst_163 = arith.constant 1.000000e+00 : f32
    %500 = vector.broadcast %cst_163 : f32 to vector<2x32xf32>
    %501 = arith.addf %500, %499 : vector<2x32xf32>
    %502 = arith.divf %500, %501 : vector<2x32xf32>
    %503 = vector.extract_strided_slice %307 {offsets = [4, 0], sizes = [2, 32], strides = [1, 1]} : vector<16x32xf32> to vector<2x32xf32>
    %504 = arith.addf %503, %492 : vector<2x32xf32>
    %505 = arith.negf %504 : vector<2x32xf32>
    %506 = math.exp %505 : vector<2x32xf32>
    %cst_164 = arith.constant 1.000000e+00 : f32
    %507 = vector.broadcast %cst_164 : f32 to vector<2x32xf32>
    %508 = arith.addf %507, %506 : vector<2x32xf32>
    %509 = arith.divf %507, %508 : vector<2x32xf32>
    %510 = vector.extract_strided_slice %314 {offsets = [4, 0], sizes = [2, 32], strides = [1, 1]} : vector<16x32xf32> to vector<2x32xf32>
    %511 = arith.mulf %502, %495 : vector<2x32xf32>
    %512 = arith.addf %510, %511 : vector<2x32xf32>
    %513 = math.tanh %512 : vector<2x32xf32>
    %cst_165 = arith.constant 1.000000e+00 : f32
    %514 = vector.broadcast %cst_165 : f32 to vector<2x32xf32>
    %515 = arith.subf %514, %509 : vector<2x32xf32>
    %516 = arith.mulf %515, %513 : vector<2x32xf32>
    %517 = arith.mulf %509, %486 : vector<2x32xf32>
    %518 = arith.addf %516, %517 : vector<2x32xf32>
    %cst_166 = arith.constant dense<0.000000e+00> : vector<2x32xf32>
    %519 = tpu.matmul %518, %316, %cst_166 {dimension_numbers = #tpu.dot_dimension_numbers<[1], [0], [0], [1], [0, 0, 1, 1], [], []>} : vector<2x32xf32>, vector<32x32xf32>, vector<2x32xf32> -> vector<2x32xf32>
    %520 = vector.broadcast %322 : vector<1x32xf32> to vector<2x32xf32>
    %521 = arith.addf %519, %520 : vector<2x32xf32>
    %cst_167 = arith.constant dense<0.000000e+00> : vector<2x32xf32>
    %522 = tpu.matmul %518, %318, %cst_167 {dimension_numbers = #tpu.dot_dimension_numbers<[1], [0], [0], [1], [0, 0, 1, 1], [], []>} : vector<2x32xf32>, vector<32x32xf32>, vector<2x32xf32> -> vector<2x32xf32>
    %523 = vector.broadcast %324 : vector<1x32xf32> to vector<2x32xf32>
    %524 = arith.addf %522, %523 : vector<2x32xf32>
    %cst_168 = arith.constant dense<0.000000e+00> : vector<2x32xf32>
    %525 = tpu.matmul %518, %320, %cst_168 {dimension_numbers = #tpu.dot_dimension_numbers<[1], [0], [0], [1], [0, 0, 1, 1], [], []>} : vector<2x32xf32>, vector<32x32xf32>, vector<2x32xf32> -> vector<2x32xf32>
    %526 = vector.broadcast %326 : vector<1x32xf32> to vector<2x32xf32>
    %527 = arith.addf %525, %526 : vector<2x32xf32>
    %528 = vector.extract_strided_slice %300 {offsets = [2, 0], sizes = [2, 32], strides = [1, 1]} : vector<16x32xf32> to vector<2x32xf32>
    %529 = arith.addf %528, %521 : vector<2x32xf32>
    %530 = arith.negf %529 : vector<2x32xf32>
    %531 = math.exp %530 : vector<2x32xf32>
    %cst_169 = arith.constant 1.000000e+00 : f32
    %532 = vector.broadcast %cst_169 : f32 to vector<2x32xf32>
    %533 = arith.addf %532, %531 : vector<2x32xf32>
    %534 = arith.divf %532, %533 : vector<2x32xf32>
    %535 = vector.extract_strided_slice %307 {offsets = [2, 0], sizes = [2, 32], strides = [1, 1]} : vector<16x32xf32> to vector<2x32xf32>
    %536 = arith.addf %535, %524 : vector<2x32xf32>
    %537 = arith.negf %536 : vector<2x32xf32>
    %538 = math.exp %537 : vector<2x32xf32>
    %cst_170 = arith.constant 1.000000e+00 : f32
    %539 = vector.broadcast %cst_170 : f32 to vector<2x32xf32>
    %540 = arith.addf %539, %538 : vector<2x32xf32>
    %541 = arith.divf %539, %540 : vector<2x32xf32>
    %542 = vector.extract_strided_slice %314 {offsets = [2, 0], sizes = [2, 32], strides = [1, 1]} : vector<16x32xf32> to vector<2x32xf32>
    %543 = arith.mulf %534, %527 : vector<2x32xf32>
    %544 = arith.addf %542, %543 : vector<2x32xf32>
    %545 = math.tanh %544 : vector<2x32xf32>
    %cst_171 = arith.constant 1.000000e+00 : f32
    %546 = vector.broadcast %cst_171 : f32 to vector<2x32xf32>
    %547 = arith.subf %546, %541 : vector<2x32xf32>
    %548 = arith.mulf %547, %545 : vector<2x32xf32>
    %549 = arith.mulf %541, %518 : vector<2x32xf32>
    %550 = arith.addf %548, %549 : vector<2x32xf32>
    %cst_172 = arith.constant dense<0.000000e+00> : vector<2x32xf32>
    %551 = tpu.matmul %550, %316, %cst_172 {dimension_numbers = #tpu.dot_dimension_numbers<[1], [0], [0], [1], [0, 0, 1, 1], [], []>} : vector<2x32xf32>, vector<32x32xf32>, vector<2x32xf32> -> vector<2x32xf32>
    %552 = vector.broadcast %322 : vector<1x32xf32> to vector<2x32xf32>
    %553 = arith.addf %551, %552 : vector<2x32xf32>
    %cst_173 = arith.constant dense<0.000000e+00> : vector<2x32xf32>
    %554 = tpu.matmul %550, %318, %cst_173 {dimension_numbers = #tpu.dot_dimension_numbers<[1], [0], [0], [1], [0, 0, 1, 1], [], []>} : vector<2x32xf32>, vector<32x32xf32>, vector<2x32xf32> -> vector<2x32xf32>
    %555 = vector.broadcast %324 : vector<1x32xf32> to vector<2x32xf32>
    %556 = arith.addf %554, %555 : vector<2x32xf32>
    %cst_174 = arith.constant dense<0.000000e+00> : vector<2x32xf32>
    %557 = tpu.matmul %550, %320, %cst_174 {dimension_numbers = #tpu.dot_dimension_numbers<[1], [0], [0], [1], [0, 0, 1, 1], [], []>} : vector<2x32xf32>, vector<32x32xf32>, vector<2x32xf32> -> vector<2x32xf32>
    %558 = vector.broadcast %326 : vector<1x32xf32> to vector<2x32xf32>
    %559 = arith.addf %557, %558 : vector<2x32xf32>
    %560 = vector.extract_strided_slice %300 {offsets = [0, 0], sizes = [2, 32], strides = [1, 1]} : vector<16x32xf32> to vector<2x32xf32>
    %561 = arith.addf %560, %553 : vector<2x32xf32>
    %562 = arith.negf %561 : vector<2x32xf32>
    %563 = math.exp %562 : vector<2x32xf32>
    %cst_175 = arith.constant 1.000000e+00 : f32
    %564 = vector.broadcast %cst_175 : f32 to vector<2x32xf32>
    %565 = arith.addf %564, %563 : vector<2x32xf32>
    %566 = arith.divf %564, %565 : vector<2x32xf32>
    %567 = vector.extract_strided_slice %307 {offsets = [0, 0], sizes = [2, 32], strides = [1, 1]} : vector<16x32xf32> to vector<2x32xf32>
    %568 = arith.addf %567, %556 : vector<2x32xf32>
    %569 = arith.negf %568 : vector<2x32xf32>
    %570 = math.exp %569 : vector<2x32xf32>
    %cst_176 = arith.constant 1.000000e+00 : f32
    %571 = vector.broadcast %cst_176 : f32 to vector<2x32xf32>
    %572 = arith.addf %571, %570 : vector<2x32xf32>
    %573 = arith.divf %571, %572 : vector<2x32xf32>
    %574 = vector.extract_strided_slice %314 {offsets = [0, 0], sizes = [2, 32], strides = [1, 1]} : vector<16x32xf32> to vector<2x32xf32>
    %575 = arith.mulf %566, %559 : vector<2x32xf32>
    %576 = arith.addf %574, %575 : vector<2x32xf32>
    %577 = math.tanh %576 : vector<2x32xf32>
    %cst_177 = arith.constant 1.000000e+00 : f32
    %578 = vector.broadcast %cst_177 : f32 to vector<2x32xf32>
    %579 = arith.subf %578, %573 : vector<2x32xf32>
    %580 = arith.mulf %579, %577 : vector<2x32xf32>
    %581 = arith.mulf %573, %550 : vector<2x32xf32>
    %582 = arith.addf %580, %581 : vector<2x32xf32>
    %c0_178 = arith.constant 0 : index
    %c0_179 = arith.constant 0 : index
    %c0_180 = arith.constant 0 : index
    %583 = vector.load %arg29[%c0_178, %c0_179, %c0_180] : memref<6x2x32xf32, #tpu.memory_space<vmem>>, vector<1x2x32xf32>
    %584 = vector.shape_cast %583 : vector<1x2x32xf32> to vector<2x32xf32>
    %585 = vector.shape_cast %291 : vector<2x32xf32> to vector<1x2x32xf32>
    tpu.vector_store %arg29[%c0_178, %c0_179, %c0_180], %585 {strides = array<i32>} : memref<6x2x32xf32, #tpu.memory_space<vmem>>, vector<1x2x32xf32>,
    %c1_181 = arith.constant 1 : index
    %c0_182 = arith.constant 0 : index
    %c0_183 = arith.constant 0 : index
    %586 = vector.load %arg29[%c1_181, %c0_182, %c0_183] : memref<6x2x32xf32, #tpu.memory_space<vmem>>, vector<1x2x32xf32>
    %587 = vector.shape_cast %586 : vector<1x2x32xf32> to vector<2x32xf32>
    %588 = vector.shape_cast %582 : vector<2x32xf32> to vector<1x2x32xf32>
    tpu.vector_store %arg29[%c1_181, %c0_182, %c0_183], %588 {strides = array<i32>} : memref<6x2x32xf32, #tpu.memory_space<vmem>>, vector<1x2x32xf32>,
    %589 = tpu.concatenate %67, %582 in 1 : vector<2x32xf32>, vector<2x32xf32> -> vector<2x64xf32>
    %590 = tpu.concatenate %99, %550 in 1 : vector<2x32xf32>, vector<2x32xf32> -> vector<2x64xf32>
    %591 = tpu.concatenate %131, %518 in 1 : vector<2x32xf32>, vector<2x32xf32> -> vector<2x64xf32>
    %592 = tpu.concatenate %163, %486 in 1 : vector<2x32xf32>, vector<2x32xf32> -> vector<2x64xf32>
    %593 = tpu.concatenate %195, %454 in 1 : vector<2x32xf32>, vector<2x32xf32> -> vector<2x64xf32>
    %594 = tpu.concatenate %227, %422 in 1 : vector<2x32xf32>, vector<2x32xf32> -> vector<2x64xf32>
    %595 = tpu.concatenate %259, %390 in 1 : vector<2x32xf32>, vector<2x32xf32> -> vector<2x64xf32>
    %596 = tpu.concatenate %291, %358 in 1 : vector<2x32xf32>, vector<2x32xf32> -> vector<2x64xf32>
    %597 = tpu.concatenate %589, %590, %591, %592, %593, %594, %595, %596 in 0 : vector<2x64xf32>, vector<2x64xf32>, vector<2x64xf32>, vector<2x64xf32>, vector<2x64xf32>, vector<2x64xf32>, vector<2x64xf32>, vector<2x64xf32> -> vector<16x64xf32>
    %c2_184 = arith.constant 2 : index
    %c0_185 = arith.constant 0 : index
    %c0_186 = arith.constant 0 : index
    %598 = vector.load %arg1[%c2_184, %c0_185, %c0_186] : memref<6x2x32xf32, #tpu.memory_space<vmem>>, vector<1x2x32xf32>
    %599 = vector.shape_cast %598 : vector<1x2x32xf32> to vector<2x32xf32>
    %c0_187 = arith.constant 0 : index
    %c0_188 = arith.constant 0 : index
    %c0_189 = arith.constant 0 : index
    %600 = vector.load %arg10[%c0_187, %c0_188, %c0_189] : memref<3x64x32xf32, #tpu.memory_space<vmem>>, vector<1x64x32xf32>
    %601 = vector.shape_cast %600 : vector<1x64x32xf32> to vector<64x32xf32>
    %cst_190 = arith.constant dense<0.000000e+00> : vector<16x32xf32>
    %602 = tpu.matmul %597, %601, %cst_190 {dimension_numbers = #tpu.dot_dimension_numbers<[1], [0], [0], [1], [0, 0, 1, 1], [], []>} : vector<16x64xf32>, vector<64x32xf32>, vector<16x32xf32> -> vector<16x32xf32>
    %c0_191 = arith.constant 0 : index
    %c0_192 = arith.constant 0 : index
    %c0_193 = arith.constant 0 : index
    %603 = vector.load %arg12[%c0_191, %c0_192, %c0_193] : memref<3x1x32xf32, #tpu.memory_space<vmem>>, vector<1x1x32xf32>
    %604 = vector.shape_cast %603 : vector<1x1x32xf32> to vector<1x32xf32>
    %605 = vector.broadcast %604 : vector<1x32xf32> to vector<16x32xf32>
    %606 = arith.addf %602, %605 : vector<16x32xf32>
    %c1_194 = arith.constant 1 : index
    %c0_195 = arith.constant 0 : index
    %c0_196 = arith.constant 0 : index
    %607 = vector.load %arg10[%c1_194, %c0_195, %c0_196] : memref<3x64x32xf32, #tpu.memory_space<vmem>>, vector<1x64x32xf32>
    %608 = vector.shape_cast %607 : vector<1x64x32xf32> to vector<64x32xf32>
    %cst_197 = arith.constant dense<0.000000e+00> : vector<16x32xf32>
    %609 = tpu.matmul %597, %608, %cst_197 {dimension_numbers = #tpu.dot_dimension_numbers<[1], [0], [0], [1], [0, 0, 1, 1], [], []>} : vector<16x64xf32>, vector<64x32xf32>, vector<16x32xf32> -> vector<16x32xf32>
    %c1_198 = arith.constant 1 : index
    %c0_199 = arith.constant 0 : index
    %c0_200 = arith.constant 0 : index
    %610 = vector.load %arg12[%c1_198, %c0_199, %c0_200] : memref<3x1x32xf32, #tpu.memory_space<vmem>>, vector<1x1x32xf32>
    %611 = vector.shape_cast %610 : vector<1x1x32xf32> to vector<1x32xf32>
    %612 = vector.broadcast %611 : vector<1x32xf32> to vector<16x32xf32>
    %613 = arith.addf %609, %612 : vector<16x32xf32>
    %c2_201 = arith.constant 2 : index
    %c0_202 = arith.constant 0 : index
    %c0_203 = arith.constant 0 : index
    %614 = vector.load %arg10[%c2_201, %c0_202, %c0_203] : memref<3x64x32xf32, #tpu.memory_space<vmem>>, vector<1x64x32xf32>
    %615 = vector.shape_cast %614 : vector<1x64x32xf32> to vector<64x32xf32>
    %cst_204 = arith.constant dense<0.000000e+00> : vector<16x32xf32>
    %616 = tpu.matmul %597, %615, %cst_204 {dimension_numbers = #tpu.dot_dimension_numbers<[1], [0], [0], [1], [0, 0, 1, 1], [], []>} : vector<16x64xf32>, vector<64x32xf32>, vector<16x32xf32> -> vector<16x32xf32>
    %c2_205 = arith.constant 2 : index
    %c0_206 = arith.constant 0 : index
    %c0_207 = arith.constant 0 : index
    %617 = vector.load %arg12[%c2_205, %c0_206, %c0_207] : memref<3x1x32xf32, #tpu.memory_space<vmem>>, vector<1x1x32xf32>
    %618 = vector.shape_cast %617 : vector<1x1x32xf32> to vector<1x32xf32>
    %619 = vector.broadcast %618 : vector<1x32xf32> to vector<16x32xf32>
    %620 = arith.addf %616, %619 : vector<16x32xf32>
    %c0_208 = arith.constant 0 : index
    %c0_209 = arith.constant 0 : index
    %c0_210 = arith.constant 0 : index
    %621 = vector.load %arg11[%c0_208, %c0_209, %c0_210] : memref<3x32x32xf32, #tpu.memory_space<vmem>>, vector<1x32x32xf32>
    %622 = vector.shape_cast %621 : vector<1x32x32xf32> to vector<32x32xf32>
    %c1_211 = arith.constant 1 : index
    %c0_212 = arith.constant 0 : index
    %c0_213 = arith.constant 0 : index
    %623 = vector.load %arg11[%c1_211, %c0_212, %c0_213] : memref<3x32x32xf32, #tpu.memory_space<vmem>>, vector<1x32x32xf32>
    %624 = vector.shape_cast %623 : vector<1x32x32xf32> to vector<32x32xf32>
    %c2_214 = arith.constant 2 : index
    %c0_215 = arith.constant 0 : index
    %c0_216 = arith.constant 0 : index
    %625 = vector.load %arg11[%c2_214, %c0_215, %c0_216] : memref<3x32x32xf32, #tpu.memory_space<vmem>>, vector<1x32x32xf32>
    %626 = vector.shape_cast %625 : vector<1x32x32xf32> to vector<32x32xf32>
    %c0_217 = arith.constant 0 : index
    %c0_218 = arith.constant 0 : index
    %c0_219 = arith.constant 0 : index
    %627 = vector.load %arg13[%c0_217, %c0_218, %c0_219] : memref<3x1x32xf32, #tpu.memory_space<vmem>>, vector<1x1x32xf32>
    %628 = vector.shape_cast %627 : vector<1x1x32xf32> to vector<1x32xf32>
    %c1_220 = arith.constant 1 : index
    %c0_221 = arith.constant 0 : index
    %c0_222 = arith.constant 0 : index
    %629 = vector.load %arg13[%c1_220, %c0_221, %c0_222] : memref<3x1x32xf32, #tpu.memory_space<vmem>>, vector<1x1x32xf32>
    %630 = vector.shape_cast %629 : vector<1x1x32xf32> to vector<1x32xf32>
    %c2_223 = arith.constant 2 : index
    %c0_224 = arith.constant 0 : index
    %c0_225 = arith.constant 0 : index
    %631 = vector.load %arg13[%c2_223, %c0_224, %c0_225] : memref<3x1x32xf32, #tpu.memory_space<vmem>>, vector<1x1x32xf32>
    %632 = vector.shape_cast %631 : vector<1x1x32xf32> to vector<1x32xf32>
    %cst_226 = arith.constant dense<0.000000e+00> : vector<2x32xf32>
    %633 = tpu.matmul %599, %622, %cst_226 {dimension_numbers = #tpu.dot_dimension_numbers<[1], [0], [0], [1], [0, 0, 1, 1], [], []>} : vector<2x32xf32>, vector<32x32xf32>, vector<2x32xf32> -> vector<2x32xf32>
    %634 = vector.broadcast %628 : vector<1x32xf32> to vector<2x32xf32>
    %635 = arith.addf %633, %634 : vector<2x32xf32>
    %cst_227 = arith.constant dense<0.000000e+00> : vector<2x32xf32>
    %636 = tpu.matmul %599, %624, %cst_227 {dimension_numbers = #tpu.dot_dimension_numbers<[1], [0], [0], [1], [0, 0, 1, 1], [], []>} : vector<2x32xf32>, vector<32x32xf32>, vector<2x32xf32> -> vector<2x32xf32>
    %637 = vector.broadcast %630 : vector<1x32xf32> to vector<2x32xf32>
    %638 = arith.addf %636, %637 : vector<2x32xf32>
    %cst_228 = arith.constant dense<0.000000e+00> : vector<2x32xf32>
    %639 = tpu.matmul %599, %626, %cst_228 {dimension_numbers = #tpu.dot_dimension_numbers<[1], [0], [0], [1], [0, 0, 1, 1], [], []>} : vector<2x32xf32>, vector<32x32xf32>, vector<2x32xf32> -> vector<2x32xf32>
    %640 = vector.broadcast %632 : vector<1x32xf32> to vector<2x32xf32>
    %641 = arith.addf %639, %640 : vector<2x32xf32>
    %642 = vector.extract_strided_slice %606 {offsets = [0, 0], sizes = [2, 32], strides = [1, 1]} : vector<16x32xf32> to vector<2x32xf32>
    %643 = arith.addf %642, %635 : vector<2x32xf32>
    %644 = arith.negf %643 : vector<2x32xf32>
    %645 = math.exp %644 : vector<2x32xf32>
    %cst_229 = arith.constant 1.000000e+00 : f32
    %646 = vector.broadcast %cst_229 : f32 to vector<2x32xf32>
    %647 = arith.addf %646, %645 : vector<2x32xf32>
    %648 = arith.divf %646, %647 : vector<2x32xf32>
    %649 = vector.extract_strided_slice %613 {offsets = [0, 0], sizes = [2, 32], strides = [1, 1]} : vector<16x32xf32> to vector<2x32xf32>
    %650 = arith.addf %649, %638 : vector<2x32xf32>
    %651 = arith.negf %650 : vector<2x32xf32>
    %652 = math.exp %651 : vector<2x32xf32>
    %cst_230 = arith.constant 1.000000e+00 : f32
    %653 = vector.broadcast %cst_230 : f32 to vector<2x32xf32>
    %654 = arith.addf %653, %652 : vector<2x32xf32>
    %655 = arith.divf %653, %654 : vector<2x32xf32>
    %656 = vector.extract_strided_slice %620 {offsets = [0, 0], sizes = [2, 32], strides = [1, 1]} : vector<16x32xf32> to vector<2x32xf32>
    %657 = arith.mulf %648, %641 : vector<2x32xf32>
    %658 = arith.addf %656, %657 : vector<2x32xf32>
    %659 = math.tanh %658 : vector<2x32xf32>
    %cst_231 = arith.constant 1.000000e+00 : f32
    %660 = vector.broadcast %cst_231 : f32 to vector<2x32xf32>
    %661 = arith.subf %660, %655 : vector<2x32xf32>
    %662 = arith.mulf %661, %659 : vector<2x32xf32>
    %663 = arith.mulf %655, %599 : vector<2x32xf32>
    %664 = arith.addf %662, %663 : vector<2x32xf32>
    %cst_232 = arith.constant dense<0.000000e+00> : vector<2x32xf32>
    %665 = tpu.matmul %664, %622, %cst_232 {dimension_numbers = #tpu.dot_dimension_numbers<[1], [0], [0], [1], [0, 0, 1, 1], [], []>} : vector<2x32xf32>, vector<32x32xf32>, vector<2x32xf32> -> vector<2x32xf32>
    %666 = vector.broadcast %628 : vector<1x32xf32> to vector<2x32xf32>
    %667 = arith.addf %665, %666 : vector<2x32xf32>
    %cst_233 = arith.constant dense<0.000000e+00> : vector<2x32xf32>
    %668 = tpu.matmul %664, %624, %cst_233 {dimension_numbers = #tpu.dot_dimension_numbers<[1], [0], [0], [1], [0, 0, 1, 1], [], []>} : vector<2x32xf32>, vector<32x32xf32>, vector<2x32xf32> -> vector<2x32xf32>
    %669 = vector.broadcast %630 : vector<1x32xf32> to vector<2x32xf32>
    %670 = arith.addf %668, %669 : vector<2x32xf32>
    %cst_234 = arith.constant dense<0.000000e+00> : vector<2x32xf32>
    %671 = tpu.matmul %664, %626, %cst_234 {dimension_numbers = #tpu.dot_dimension_numbers<[1], [0], [0], [1], [0, 0, 1, 1], [], []>} : vector<2x32xf32>, vector<32x32xf32>, vector<2x32xf32> -> vector<2x32xf32>
    %672 = vector.broadcast %632 : vector<1x32xf32> to vector<2x32xf32>
    %673 = arith.addf %671, %672 : vector<2x32xf32>
    %674 = vector.extract_strided_slice %606 {offsets = [2, 0], sizes = [2, 32], strides = [1, 1]} : vector<16x32xf32> to vector<2x32xf32>
    %675 = arith.addf %674, %667 : vector<2x32xf32>
    %676 = arith.negf %675 : vector<2x32xf32>
    %677 = math.exp %676 : vector<2x32xf32>
    %cst_235 = arith.constant 1.000000e+00 : f32
    %678 = vector.broadcast %cst_235 : f32 to vector<2x32xf32>
    %679 = arith.addf %678, %677 : vector<2x32xf32>
    %680 = arith.divf %678, %679 : vector<2x32xf32>
    %681 = vector.extract_strided_slice %613 {offsets = [2, 0], sizes = [2, 32], strides = [1, 1]} : vector<16x32xf32> to vector<2x32xf32>
    %682 = arith.addf %681, %670 : vector<2x32xf32>
    %683 = arith.negf %682 : vector<2x32xf32>
    %684 = math.exp %683 : vector<2x32xf32>
    %cst_236 = arith.constant 1.000000e+00 : f32
    %685 = vector.broadcast %cst_236 : f32 to vector<2x32xf32>
    %686 = arith.addf %685, %684 : vector<2x32xf32>
    %687 = arith.divf %685, %686 : vector<2x32xf32>
    %688 = vector.extract_strided_slice %620 {offsets = [2, 0], sizes = [2, 32], strides = [1, 1]} : vector<16x32xf32> to vector<2x32xf32>
    %689 = arith.mulf %680, %673 : vector<2x32xf32>
    %690 = arith.addf %688, %689 : vector<2x32xf32>
    %691 = math.tanh %690 : vector<2x32xf32>
    %cst_237 = arith.constant 1.000000e+00 : f32
    %692 = vector.broadcast %cst_237 : f32 to vector<2x32xf32>
    %693 = arith.subf %692, %687 : vector<2x32xf32>
    %694 = arith.mulf %693, %691 : vector<2x32xf32>
    %695 = arith.mulf %687, %664 : vector<2x32xf32>
    %696 = arith.addf %694, %695 : vector<2x32xf32>
    %cst_238 = arith.constant dense<0.000000e+00> : vector<2x32xf32>
    %697 = tpu.matmul %696, %622, %cst_238 {dimension_numbers = #tpu.dot_dimension_numbers<[1], [0], [0], [1], [0, 0, 1, 1], [], []>} : vector<2x32xf32>, vector<32x32xf32>, vector<2x32xf32> -> vector<2x32xf32>
    %698 = vector.broadcast %628 : vector<1x32xf32> to vector<2x32xf32>
    %699 = arith.addf %697, %698 : vector<2x32xf32>
    %cst_239 = arith.constant dense<0.000000e+00> : vector<2x32xf32>
    %700 = tpu.matmul %696, %624, %cst_239 {dimension_numbers = #tpu.dot_dimension_numbers<[1], [0], [0], [1], [0, 0, 1, 1], [], []>} : vector<2x32xf32>, vector<32x32xf32>, vector<2x32xf32> -> vector<2x32xf32>
    %701 = vector.broadcast %630 : vector<1x32xf32> to vector<2x32xf32>
    %702 = arith.addf %700, %701 : vector<2x32xf32>
    %cst_240 = arith.constant dense<0.000000e+00> : vector<2x32xf32>
    %703 = tpu.matmul %696, %626, %cst_240 {dimension_numbers = #tpu.dot_dimension_numbers<[1], [0], [0], [1], [0, 0, 1, 1], [], []>} : vector<2x32xf32>, vector<32x32xf32>, vector<2x32xf32> -> vector<2x32xf32>
    %704 = vector.broadcast %632 : vector<1x32xf32> to vector<2x32xf32>
    %705 = arith.addf %703, %704 : vector<2x32xf32>
    %706 = vector.extract_strided_slice %606 {offsets = [4, 0], sizes = [2, 32], strides = [1, 1]} : vector<16x32xf32> to vector<2x32xf32>
    %707 = arith.addf %706, %699 : vector<2x32xf32>
    %708 = arith.negf %707 : vector<2x32xf32>
    %709 = math.exp %708 : vector<2x32xf32>
    %cst_241 = arith.constant 1.000000e+00 : f32
    %710 = vector.broadcast %cst_241 : f32 to vector<2x32xf32>
    %711 = arith.addf %710, %709 : vector<2x32xf32>
    %712 = arith.divf %710, %711 : vector<2x32xf32>
    %713 = vector.extract_strided_slice %613 {offsets = [4, 0], sizes = [2, 32], strides = [1, 1]} : vector<16x32xf32> to vector<2x32xf32>
    %714 = arith.addf %713, %702 : vector<2x32xf32>
    %715 = arith.negf %714 : vector<2x32xf32>
    %716 = math.exp %715 : vector<2x32xf32>
    %cst_242 = arith.constant 1.000000e+00 : f32
    %717 = vector.broadcast %cst_242 : f32 to vector<2x32xf32>
    %718 = arith.addf %717, %716 : vector<2x32xf32>
    %719 = arith.divf %717, %718 : vector<2x32xf32>
    %720 = vector.extract_strided_slice %620 {offsets = [4, 0], sizes = [2, 32], strides = [1, 1]} : vector<16x32xf32> to vector<2x32xf32>
    %721 = arith.mulf %712, %705 : vector<2x32xf32>
    %722 = arith.addf %720, %721 : vector<2x32xf32>
    %723 = math.tanh %722 : vector<2x32xf32>
    %cst_243 = arith.constant 1.000000e+00 : f32
    %724 = vector.broadcast %cst_243 : f32 to vector<2x32xf32>
    %725 = arith.subf %724, %719 : vector<2x32xf32>
    %726 = arith.mulf %725, %723 : vector<2x32xf32>
    %727 = arith.mulf %719, %696 : vector<2x32xf32>
    %728 = arith.addf %726, %727 : vector<2x32xf32>
    %cst_244 = arith.constant dense<0.000000e+00> : vector<2x32xf32>
    %729 = tpu.matmul %728, %622, %cst_244 {dimension_numbers = #tpu.dot_dimension_numbers<[1], [0], [0], [1], [0, 0, 1, 1], [], []>} : vector<2x32xf32>, vector<32x32xf32>, vector<2x32xf32> -> vector<2x32xf32>
    %730 = vector.broadcast %628 : vector<1x32xf32> to vector<2x32xf32>
    %731 = arith.addf %729, %730 : vector<2x32xf32>
    %cst_245 = arith.constant dense<0.000000e+00> : vector<2x32xf32>
    %732 = tpu.matmul %728, %624, %cst_245 {dimension_numbers = #tpu.dot_dimension_numbers<[1], [0], [0], [1], [0, 0, 1, 1], [], []>} : vector<2x32xf32>, vector<32x32xf32>, vector<2x32xf32> -> vector<2x32xf32>
    %733 = vector.broadcast %630 : vector<1x32xf32> to vector<2x32xf32>
    %734 = arith.addf %732, %733 : vector<2x32xf32>
    %cst_246 = arith.constant dense<0.000000e+00> : vector<2x32xf32>
    %735 = tpu.matmul %728, %626, %cst_246 {dimension_numbers = #tpu.dot_dimension_numbers<[1], [0], [0], [1], [0, 0, 1, 1], [], []>} : vector<2x32xf32>, vector<32x32xf32>, vector<2x32xf32> -> vector<2x32xf32>
    %736 = vector.broadcast %632 : vector<1x32xf32> to vector<2x32xf32>
    %737 = arith.addf %735, %736 : vector<2x32xf32>
    %738 = vector.extract_strided_slice %606 {offsets = [6, 0], sizes = [2, 32], strides = [1, 1]} : vector<16x32xf32> to vector<2x32xf32>
    %739 = arith.addf %738, %731 : vector<2x32xf32>
    %740 = arith.negf %739 : vector<2x32xf32>
    %741 = math.exp %740 : vector<2x32xf32>
    %cst_247 = arith.constant 1.000000e+00 : f32
    %742 = vector.broadcast %cst_247 : f32 to vector<2x32xf32>
    %743 = arith.addf %742, %741 : vector<2x32xf32>
    %744 = arith.divf %742, %743 : vector<2x32xf32>
    %745 = vector.extract_strided_slice %613 {offsets = [6, 0], sizes = [2, 32], strides = [1, 1]} : vector<16x32xf32> to vector<2x32xf32>
    %746 = arith.addf %745, %734 : vector<2x32xf32>
    %747 = arith.negf %746 : vector<2x32xf32>
    %748 = math.exp %747 : vector<2x32xf32>
    %cst_248 = arith.constant 1.000000e+00 : f32
    %749 = vector.broadcast %cst_248 : f32 to vector<2x32xf32>
    %750 = arith.addf %749, %748 : vector<2x32xf32>
    %751 = arith.divf %749, %750 : vector<2x32xf32>
    %752 = vector.extract_strided_slice %620 {offsets = [6, 0], sizes = [2, 32], strides = [1, 1]} : vector<16x32xf32> to vector<2x32xf32>
    %753 = arith.mulf %744, %737 : vector<2x32xf32>
    %754 = arith.addf %752, %753 : vector<2x32xf32>
    %755 = math.tanh %754 : vector<2x32xf32>
    %cst_249 = arith.constant 1.000000e+00 : f32
    %756 = vector.broadcast %cst_249 : f32 to vector<2x32xf32>
    %757 = arith.subf %756, %751 : vector<2x32xf32>
    %758 = arith.mulf %757, %755 : vector<2x32xf32>
    %759 = arith.mulf %751, %728 : vector<2x32xf32>
    %760 = arith.addf %758, %759 : vector<2x32xf32>
    %cst_250 = arith.constant dense<0.000000e+00> : vector<2x32xf32>
    %761 = tpu.matmul %760, %622, %cst_250 {dimension_numbers = #tpu.dot_dimension_numbers<[1], [0], [0], [1], [0, 0, 1, 1], [], []>} : vector<2x32xf32>, vector<32x32xf32>, vector<2x32xf32> -> vector<2x32xf32>
    %762 = vector.broadcast %628 : vector<1x32xf32> to vector<2x32xf32>
    %763 = arith.addf %761, %762 : vector<2x32xf32>
    %cst_251 = arith.constant dense<0.000000e+00> : vector<2x32xf32>
    %764 = tpu.matmul %760, %624, %cst_251 {dimension_numbers = #tpu.dot_dimension_numbers<[1], [0], [0], [1], [0, 0, 1, 1], [], []>} : vector<2x32xf32>, vector<32x32xf32>, vector<2x32xf32> -> vector<2x32xf32>
    %765 = vector.broadcast %630 : vector<1x32xf32> to vector<2x32xf32>
    %766 = arith.addf %764, %765 : vector<2x32xf32>
    %cst_252 = arith.constant dense<0.000000e+00> : vector<2x32xf32>
    %767 = tpu.matmul %760, %626, %cst_252 {dimension_numbers = #tpu.dot_dimension_numbers<[1], [0], [0], [1], [0, 0, 1, 1], [], []>} : vector<2x32xf32>, vector<32x32xf32>, vector<2x32xf32> -> vector<2x32xf32>
    %768 = vector.broadcast %632 : vector<1x32xf32> to vector<2x32xf32>
    %769 = arith.addf %767, %768 : vector<2x32xf32>
    %770 = vector.extract_strided_slice %606 {offsets = [8, 0], sizes = [2, 32], strides = [1, 1]} : vector<16x32xf32> to vector<2x32xf32>
    %771 = arith.addf %770, %763 : vector<2x32xf32>
    %772 = arith.negf %771 : vector<2x32xf32>
    %773 = math.exp %772 : vector<2x32xf32>
    %cst_253 = arith.constant 1.000000e+00 : f32
    %774 = vector.broadcast %cst_253 : f32 to vector<2x32xf32>
    %775 = arith.addf %774, %773 : vector<2x32xf32>
    %776 = arith.divf %774, %775 : vector<2x32xf32>
    %777 = vector.extract_strided_slice %613 {offsets = [8, 0], sizes = [2, 32], strides = [1, 1]} : vector<16x32xf32> to vector<2x32xf32>
    %778 = arith.addf %777, %766 : vector<2x32xf32>
    %779 = arith.negf %778 : vector<2x32xf32>
    %780 = math.exp %779 : vector<2x32xf32>
    %cst_254 = arith.constant 1.000000e+00 : f32
    %781 = vector.broadcast %cst_254 : f32 to vector<2x32xf32>
    %782 = arith.addf %781, %780 : vector<2x32xf32>
    %783 = arith.divf %781, %782 : vector<2x32xf32>
    %784 = vector.extract_strided_slice %620 {offsets = [8, 0], sizes = [2, 32], strides = [1, 1]} : vector<16x32xf32> to vector<2x32xf32>
    %785 = arith.mulf %776, %769 : vector<2x32xf32>
    %786 = arith.addf %784, %785 : vector<2x32xf32>
    %787 = math.tanh %786 : vector<2x32xf32>
    %cst_255 = arith.constant 1.000000e+00 : f32
    %788 = vector.broadcast %cst_255 : f32 to vector<2x32xf32>
    %789 = arith.subf %788, %783 : vector<2x32xf32>
    %790 = arith.mulf %789, %787 : vector<2x32xf32>
    %791 = arith.mulf %783, %760 : vector<2x32xf32>
    %792 = arith.addf %790, %791 : vector<2x32xf32>
    %cst_256 = arith.constant dense<0.000000e+00> : vector<2x32xf32>
    %793 = tpu.matmul %792, %622, %cst_256 {dimension_numbers = #tpu.dot_dimension_numbers<[1], [0], [0], [1], [0, 0, 1, 1], [], []>} : vector<2x32xf32>, vector<32x32xf32>, vector<2x32xf32> -> vector<2x32xf32>
    %794 = vector.broadcast %628 : vector<1x32xf32> to vector<2x32xf32>
    %795 = arith.addf %793, %794 : vector<2x32xf32>
    %cst_257 = arith.constant dense<0.000000e+00> : vector<2x32xf32>
    %796 = tpu.matmul %792, %624, %cst_257 {dimension_numbers = #tpu.dot_dimension_numbers<[1], [0], [0], [1], [0, 0, 1, 1], [], []>} : vector<2x32xf32>, vector<32x32xf32>, vector<2x32xf32> -> vector<2x32xf32>
    %797 = vector.broadcast %630 : vector<1x32xf32> to vector<2x32xf32>
    %798 = arith.addf %796, %797 : vector<2x32xf32>
    %cst_258 = arith.constant dense<0.000000e+00> : vector<2x32xf32>
    %799 = tpu.matmul %792, %626, %cst_258 {dimension_numbers = #tpu.dot_dimension_numbers<[1], [0], [0], [1], [0, 0, 1, 1], [], []>} : vector<2x32xf32>, vector<32x32xf32>, vector<2x32xf32> -> vector<2x32xf32>
    %800 = vector.broadcast %632 : vector<1x32xf32> to vector<2x32xf32>
    %801 = arith.addf %799, %800 : vector<2x32xf32>
    %802 = vector.extract_strided_slice %606 {offsets = [10, 0], sizes = [2, 32], strides = [1, 1]} : vector<16x32xf32> to vector<2x32xf32>
    %803 = arith.addf %802, %795 : vector<2x32xf32>
    %804 = arith.negf %803 : vector<2x32xf32>
    %805 = math.exp %804 : vector<2x32xf32>
    %cst_259 = arith.constant 1.000000e+00 : f32
    %806 = vector.broadcast %cst_259 : f32 to vector<2x32xf32>
    %807 = arith.addf %806, %805 : vector<2x32xf32>
    %808 = arith.divf %806, %807 : vector<2x32xf32>
    %809 = vector.extract_strided_slice %613 {offsets = [10, 0], sizes = [2, 32], strides = [1, 1]} : vector<16x32xf32> to vector<2x32xf32>
    %810 = arith.addf %809, %798 : vector<2x32xf32>
    %811 = arith.negf %810 : vector<2x32xf32>
    %812 = math.exp %811 : vector<2x32xf32>
    %cst_260 = arith.constant 1.000000e+00 : f32
    %813 = vector.broadcast %cst_260 : f32 to vector<2x32xf32>
    %814 = arith.addf %813, %812 : vector<2x32xf32>
    %815 = arith.divf %813, %814 : vector<2x32xf32>
    %816 = vector.extract_strided_slice %620 {offsets = [10, 0], sizes = [2, 32], strides = [1, 1]} : vector<16x32xf32> to vector<2x32xf32>
    %817 = arith.mulf %808, %801 : vector<2x32xf32>
    %818 = arith.addf %816, %817 : vector<2x32xf32>
    %819 = math.tanh %818 : vector<2x32xf32>
    %cst_261 = arith.constant 1.000000e+00 : f32
    %820 = vector.broadcast %cst_261 : f32 to vector<2x32xf32>
    %821 = arith.subf %820, %815 : vector<2x32xf32>
    %822 = arith.mulf %821, %819 : vector<2x32xf32>
    %823 = arith.mulf %815, %792 : vector<2x32xf32>
    %824 = arith.addf %822, %823 : vector<2x32xf32>
    %cst_262 = arith.constant dense<0.000000e+00> : vector<2x32xf32>
    %825 = tpu.matmul %824, %622, %cst_262 {dimension_numbers = #tpu.dot_dimension_numbers<[1], [0], [0], [1], [0, 0, 1, 1], [], []>} : vector<2x32xf32>, vector<32x32xf32>, vector<2x32xf32> -> vector<2x32xf32>
    %826 = vector.broadcast %628 : vector<1x32xf32> to vector<2x32xf32>
    %827 = arith.addf %825, %826 : vector<2x32xf32>
    %cst_263 = arith.constant dense<0.000000e+00> : vector<2x32xf32>
    %828 = tpu.matmul %824, %624, %cst_263 {dimension_numbers = #tpu.dot_dimension_numbers<[1], [0], [0], [1], [0, 0, 1, 1], [], []>} : vector<2x32xf32>, vector<32x32xf32>, vector<2x32xf32> -> vector<2x32xf32>
    %829 = vector.broadcast %630 : vector<1x32xf32> to vector<2x32xf32>
    %830 = arith.addf %828, %829 : vector<2x32xf32>
    %cst_264 = arith.constant dense<0.000000e+00> : vector<2x32xf32>
    %831 = tpu.matmul %824, %626, %cst_264 {dimension_numbers = #tpu.dot_dimension_numbers<[1], [0], [0], [1], [0, 0, 1, 1], [], []>} : vector<2x32xf32>, vector<32x32xf32>, vector<2x32xf32> -> vector<2x32xf32>
    %832 = vector.broadcast %632 : vector<1x32xf32> to vector<2x32xf32>
    %833 = arith.addf %831, %832 : vector<2x32xf32>
    %834 = vector.extract_strided_slice %606 {offsets = [12, 0], sizes = [2, 32], strides = [1, 1]} : vector<16x32xf32> to vector<2x32xf32>
    %835 = arith.addf %834, %827 : vector<2x32xf32>
    %836 = arith.negf %835 : vector<2x32xf32>
    %837 = math.exp %836 : vector<2x32xf32>
    %cst_265 = arith.constant 1.000000e+00 : f32
    %838 = vector.broadcast %cst_265 : f32 to vector<2x32xf32>
    %839 = arith.addf %838, %837 : vector<2x32xf32>
    %840 = arith.divf %838, %839 : vector<2x32xf32>
    %841 = vector.extract_strided_slice %613 {offsets = [12, 0], sizes = [2, 32], strides = [1, 1]} : vector<16x32xf32> to vector<2x32xf32>
    %842 = arith.addf %841, %830 : vector<2x32xf32>
    %843 = arith.negf %842 : vector<2x32xf32>
    %844 = math.exp %843 : vector<2x32xf32>
    %cst_266 = arith.constant 1.000000e+00 : f32
    %845 = vector.broadcast %cst_266 : f32 to vector<2x32xf32>
    %846 = arith.addf %845, %844 : vector<2x32xf32>
    %847 = arith.divf %845, %846 : vector<2x32xf32>
    %848 = vector.extract_strided_slice %620 {offsets = [12, 0], sizes = [2, 32], strides = [1, 1]} : vector<16x32xf32> to vector<2x32xf32>
    %849 = arith.mulf %840, %833 : vector<2x32xf32>
    %850 = arith.addf %848, %849 : vector<2x32xf32>
    %851 = math.tanh %850 : vector<2x32xf32>
    %cst_267 = arith.constant 1.000000e+00 : f32
    %852 = vector.broadcast %cst_267 : f32 to vector<2x32xf32>
    %853 = arith.subf %852, %847 : vector<2x32xf32>
    %854 = arith.mulf %853, %851 : vector<2x32xf32>
    %855 = arith.mulf %847, %824 : vector<2x32xf32>
    %856 = arith.addf %854, %855 : vector<2x32xf32>
    %cst_268 = arith.constant dense<0.000000e+00> : vector<2x32xf32>
    %857 = tpu.matmul %856, %622, %cst_268 {dimension_numbers = #tpu.dot_dimension_numbers<[1], [0], [0], [1], [0, 0, 1, 1], [], []>} : vector<2x32xf32>, vector<32x32xf32>, vector<2x32xf32> -> vector<2x32xf32>
    %858 = vector.broadcast %628 : vector<1x32xf32> to vector<2x32xf32>
    %859 = arith.addf %857, %858 : vector<2x32xf32>
    %cst_269 = arith.constant dense<0.000000e+00> : vector<2x32xf32>
    %860 = tpu.matmul %856, %624, %cst_269 {dimension_numbers = #tpu.dot_dimension_numbers<[1], [0], [0], [1], [0, 0, 1, 1], [], []>} : vector<2x32xf32>, vector<32x32xf32>, vector<2x32xf32> -> vector<2x32xf32>
    %861 = vector.broadcast %630 : vector<1x32xf32> to vector<2x32xf32>
    %862 = arith.addf %860, %861 : vector<2x32xf32>
    %cst_270 = arith.constant dense<0.000000e+00> : vector<2x32xf32>
    %863 = tpu.matmul %856, %626, %cst_270 {dimension_numbers = #tpu.dot_dimension_numbers<[1], [0], [0], [1], [0, 0, 1, 1], [], []>} : vector<2x32xf32>, vector<32x32xf32>, vector<2x32xf32> -> vector<2x32xf32>
    %864 = vector.broadcast %632 : vector<1x32xf32> to vector<2x32xf32>
    %865 = arith.addf %863, %864 : vector<2x32xf32>
    %866 = vector.extract_strided_slice %606 {offsets = [14, 0], sizes = [2, 32], strides = [1, 1]} : vector<16x32xf32> to vector<2x32xf32>
    %867 = arith.addf %866, %859 : vector<2x32xf32>
    %868 = arith.negf %867 : vector<2x32xf32>
    %869 = math.exp %868 : vector<2x32xf32>
    %cst_271 = arith.constant 1.000000e+00 : f32
    %870 = vector.broadcast %cst_271 : f32 to vector<2x32xf32>
    %871 = arith.addf %870, %869 : vector<2x32xf32>
    %872 = arith.divf %870, %871 : vector<2x32xf32>
    %873 = vector.extract_strided_slice %613 {offsets = [14, 0], sizes = [2, 32], strides = [1, 1]} : vector<16x32xf32> to vector<2x32xf32>
    %874 = arith.addf %873, %862 : vector<2x32xf32>
    %875 = arith.negf %874 : vector<2x32xf32>
    %876 = math.exp %875 : vector<2x32xf32>
    %cst_272 = arith.constant 1.000000e+00 : f32
    %877 = vector.broadcast %cst_272 : f32 to vector<2x32xf32>
    %878 = arith.addf %877, %876 : vector<2x32xf32>
    %879 = arith.divf %877, %878 : vector<2x32xf32>
    %880 = vector.extract_strided_slice %620 {offsets = [14, 0], sizes = [2, 32], strides = [1, 1]} : vector<16x32xf32> to vector<2x32xf32>
    %881 = arith.mulf %872, %865 : vector<2x32xf32>
    %882 = arith.addf %880, %881 : vector<2x32xf32>
    %883 = math.tanh %882 : vector<2x32xf32>
    %cst_273 = arith.constant 1.000000e+00 : f32
    %884 = vector.broadcast %cst_273 : f32 to vector<2x32xf32>
    %885 = arith.subf %884, %879 : vector<2x32xf32>
    %886 = arith.mulf %885, %883 : vector<2x32xf32>
    %887 = arith.mulf %879, %856 : vector<2x32xf32>
    %888 = arith.addf %886, %887 : vector<2x32xf32>
    %c3 = arith.constant 3 : index
    %c0_274 = arith.constant 0 : index
    %c0_275 = arith.constant 0 : index
    %889 = vector.load %arg1[%c3, %c0_274, %c0_275] : memref<6x2x32xf32, #tpu.memory_space<vmem>>, vector<1x2x32xf32>
    %890 = vector.shape_cast %889 : vector<1x2x32xf32> to vector<2x32xf32>
    %c0_276 = arith.constant 0 : index
    %c0_277 = arith.constant 0 : index
    %c0_278 = arith.constant 0 : index
    %891 = vector.load %arg14[%c0_276, %c0_277, %c0_278] : memref<3x64x32xf32, #tpu.memory_space<vmem>>, vector<1x64x32xf32>
    %892 = vector.shape_cast %891 : vector<1x64x32xf32> to vector<64x32xf32>
    %cst_279 = arith.constant dense<0.000000e+00> : vector<16x32xf32>
    %893 = tpu.matmul %597, %892, %cst_279 {dimension_numbers = #tpu.dot_dimension_numbers<[1], [0], [0], [1], [0, 0, 1, 1], [], []>} : vector<16x64xf32>, vector<64x32xf32>, vector<16x32xf32> -> vector<16x32xf32>
    %c0_280 = arith.constant 0 : index
    %c0_281 = arith.constant 0 : index
    %c0_282 = arith.constant 0 : index
    %894 = vector.load %arg16[%c0_280, %c0_281, %c0_282] : memref<3x1x32xf32, #tpu.memory_space<vmem>>, vector<1x1x32xf32>
    %895 = vector.shape_cast %894 : vector<1x1x32xf32> to vector<1x32xf32>
    %896 = vector.broadcast %895 : vector<1x32xf32> to vector<16x32xf32>
    %897 = arith.addf %893, %896 : vector<16x32xf32>
    %c1_283 = arith.constant 1 : index
    %c0_284 = arith.constant 0 : index
    %c0_285 = arith.constant 0 : index
    %898 = vector.load %arg14[%c1_283, %c0_284, %c0_285] : memref<3x64x32xf32, #tpu.memory_space<vmem>>, vector<1x64x32xf32>
    %899 = vector.shape_cast %898 : vector<1x64x32xf32> to vector<64x32xf32>
    %cst_286 = arith.constant dense<0.000000e+00> : vector<16x32xf32>
    %900 = tpu.matmul %597, %899, %cst_286 {dimension_numbers = #tpu.dot_dimension_numbers<[1], [0], [0], [1], [0, 0, 1, 1], [], []>} : vector<16x64xf32>, vector<64x32xf32>, vector<16x32xf32> -> vector<16x32xf32>
    %c1_287 = arith.constant 1 : index
    %c0_288 = arith.constant 0 : index
    %c0_289 = arith.constant 0 : index
    %901 = vector.load %arg16[%c1_287, %c0_288, %c0_289] : memref<3x1x32xf32, #tpu.memory_space<vmem>>, vector<1x1x32xf32>
    %902 = vector.shape_cast %901 : vector<1x1x32xf32> to vector<1x32xf32>
    %903 = vector.broadcast %902 : vector<1x32xf32> to vector<16x32xf32>
    %904 = arith.addf %900, %903 : vector<16x32xf32>
    %c2_290 = arith.constant 2 : index
    %c0_291 = arith.constant 0 : index
    %c0_292 = arith.constant 0 : index
    %905 = vector.load %arg14[%c2_290, %c0_291, %c0_292] : memref<3x64x32xf32, #tpu.memory_space<vmem>>, vector<1x64x32xf32>
    %906 = vector.shape_cast %905 : vector<1x64x32xf32> to vector<64x32xf32>
    %cst_293 = arith.constant dense<0.000000e+00> : vector<16x32xf32>
    %907 = tpu.matmul %597, %906, %cst_293 {dimension_numbers = #tpu.dot_dimension_numbers<[1], [0], [0], [1], [0, 0, 1, 1], [], []>} : vector<16x64xf32>, vector<64x32xf32>, vector<16x32xf32> -> vector<16x32xf32>
    %c2_294 = arith.constant 2 : index
    %c0_295 = arith.constant 0 : index
    %c0_296 = arith.constant 0 : index
    %908 = vector.load %arg16[%c2_294, %c0_295, %c0_296] : memref<3x1x32xf32, #tpu.memory_space<vmem>>, vector<1x1x32xf32>
    %909 = vector.shape_cast %908 : vector<1x1x32xf32> to vector<1x32xf32>
    %910 = vector.broadcast %909 : vector<1x32xf32> to vector<16x32xf32>
    %911 = arith.addf %907, %910 : vector<16x32xf32>
    %c0_297 = arith.constant 0 : index
    %c0_298 = arith.constant 0 : index
    %c0_299 = arith.constant 0 : index
    %912 = vector.load %arg15[%c0_297, %c0_298, %c0_299] : memref<3x32x32xf32, #tpu.memory_space<vmem>>, vector<1x32x32xf32>
    %913 = vector.shape_cast %912 : vector<1x32x32xf32> to vector<32x32xf32>
    %c1_300 = arith.constant 1 : index
    %c0_301 = arith.constant 0 : index
    %c0_302 = arith.constant 0 : index
    %914 = vector.load %arg15[%c1_300, %c0_301, %c0_302] : memref<3x32x32xf32, #tpu.memory_space<vmem>>, vector<1x32x32xf32>
    %915 = vector.shape_cast %914 : vector<1x32x32xf32> to vector<32x32xf32>
    %c2_303 = arith.constant 2 : index
    %c0_304 = arith.constant 0 : index
    %c0_305 = arith.constant 0 : index
    %916 = vector.load %arg15[%c2_303, %c0_304, %c0_305] : memref<3x32x32xf32, #tpu.memory_space<vmem>>, vector<1x32x32xf32>
    %917 = vector.shape_cast %916 : vector<1x32x32xf32> to vector<32x32xf32>
    %c0_306 = arith.constant 0 : index
    %c0_307 = arith.constant 0 : index
    %c0_308 = arith.constant 0 : index
    %918 = vector.load %arg17[%c0_306, %c0_307, %c0_308] : memref<3x1x32xf32, #tpu.memory_space<vmem>>, vector<1x1x32xf32>
    %919 = vector.shape_cast %918 : vector<1x1x32xf32> to vector<1x32xf32>
    %c1_309 = arith.constant 1 : index
    %c0_310 = arith.constant 0 : index
    %c0_311 = arith.constant 0 : index
    %920 = vector.load %arg17[%c1_309, %c0_310, %c0_311] : memref<3x1x32xf32, #tpu.memory_space<vmem>>, vector<1x1x32xf32>
    %921 = vector.shape_cast %920 : vector<1x1x32xf32> to vector<1x32xf32>
    %c2_312 = arith.constant 2 : index
    %c0_313 = arith.constant 0 : index
    %c0_314 = arith.constant 0 : index
    %922 = vector.load %arg17[%c2_312, %c0_313, %c0_314] : memref<3x1x32xf32, #tpu.memory_space<vmem>>, vector<1x1x32xf32>
    %923 = vector.shape_cast %922 : vector<1x1x32xf32> to vector<1x32xf32>
    %cst_315 = arith.constant dense<0.000000e+00> : vector<2x32xf32>
    %924 = tpu.matmul %890, %913, %cst_315 {dimension_numbers = #tpu.dot_dimension_numbers<[1], [0], [0], [1], [0, 0, 1, 1], [], []>} : vector<2x32xf32>, vector<32x32xf32>, vector<2x32xf32> -> vector<2x32xf32>
    %925 = vector.broadcast %919 : vector<1x32xf32> to vector<2x32xf32>
    %926 = arith.addf %924, %925 : vector<2x32xf32>
    %cst_316 = arith.constant dense<0.000000e+00> : vector<2x32xf32>
    %927 = tpu.matmul %890, %915, %cst_316 {dimension_numbers = #tpu.dot_dimension_numbers<[1], [0], [0], [1], [0, 0, 1, 1], [], []>} : vector<2x32xf32>, vector<32x32xf32>, vector<2x32xf32> -> vector<2x32xf32>
    %928 = vector.broadcast %921 : vector<1x32xf32> to vector<2x32xf32>
    %929 = arith.addf %927, %928 : vector<2x32xf32>
    %cst_317 = arith.constant dense<0.000000e+00> : vector<2x32xf32>
    %930 = tpu.matmul %890, %917, %cst_317 {dimension_numbers = #tpu.dot_dimension_numbers<[1], [0], [0], [1], [0, 0, 1, 1], [], []>} : vector<2x32xf32>, vector<32x32xf32>, vector<2x32xf32> -> vector<2x32xf32>
    %931 = vector.broadcast %923 : vector<1x32xf32> to vector<2x32xf32>
    %932 = arith.addf %930, %931 : vector<2x32xf32>
    %933 = vector.extract_strided_slice %897 {offsets = [14, 0], sizes = [2, 32], strides = [1, 1]} : vector<16x32xf32> to vector<2x32xf32>
    %934 = arith.addf %933, %926 : vector<2x32xf32>
    %935 = arith.negf %934 : vector<2x32xf32>
    %936 = math.exp %935 : vector<2x32xf32>
    %cst_318 = arith.constant 1.000000e+00 : f32
    %937 = vector.broadcast %cst_318 : f32 to vector<2x32xf32>
    %938 = arith.addf %937, %936 : vector<2x32xf32>
    %939 = arith.divf %937, %938 : vector<2x32xf32>
    %940 = vector.extract_strided_slice %904 {offsets = [14, 0], sizes = [2, 32], strides = [1, 1]} : vector<16x32xf32> to vector<2x32xf32>
    %941 = arith.addf %940, %929 : vector<2x32xf32>
    %942 = arith.negf %941 : vector<2x32xf32>
    %943 = math.exp %942 : vector<2x32xf32>
    %cst_319 = arith.constant 1.000000e+00 : f32
    %944 = vector.broadcast %cst_319 : f32 to vector<2x32xf32>
    %945 = arith.addf %944, %943 : vector<2x32xf32>
    %946 = arith.divf %944, %945 : vector<2x32xf32>
    %947 = vector.extract_strided_slice %911 {offsets = [14, 0], sizes = [2, 32], strides = [1, 1]} : vector<16x32xf32> to vector<2x32xf32>
    %948 = arith.mulf %939, %932 : vector<2x32xf32>
    %949 = arith.addf %947, %948 : vector<2x32xf32>
    %950 = math.tanh %949 : vector<2x32xf32>
    %cst_320 = arith.constant 1.000000e+00 : f32
    %951 = vector.broadcast %cst_320 : f32 to vector<2x32xf32>
    %952 = arith.subf %951, %946 : vector<2x32xf32>
    %953 = arith.mulf %952, %950 : vector<2x32xf32>
    %954 = arith.mulf %946, %890 : vector<2x32xf32>
    %955 = arith.addf %953, %954 : vector<2x32xf32>
    %cst_321 = arith.constant dense<0.000000e+00> : vector<2x32xf32>
    %956 = tpu.matmul %955, %913, %cst_321 {dimension_numbers = #tpu.dot_dimension_numbers<[1], [0], [0], [1], [0, 0, 1, 1], [], []>} : vector<2x32xf32>, vector<32x32xf32>, vector<2x32xf32> -> vector<2x32xf32>
    %957 = vector.broadcast %919 : vector<1x32xf32> to vector<2x32xf32>
    %958 = arith.addf %956, %957 : vector<2x32xf32>
    %cst_322 = arith.constant dense<0.000000e+00> : vector<2x32xf32>
    %959 = tpu.matmul %955, %915, %cst_322 {dimension_numbers = #tpu.dot_dimension_numbers<[1], [0], [0], [1], [0, 0, 1, 1], [], []>} : vector<2x32xf32>, vector<32x32xf32>, vector<2x32xf32> -> vector<2x32xf32>
    %960 = vector.broadcast %921 : vector<1x32xf32> to vector<2x32xf32>
    %961 = arith.addf %959, %960 : vector<2x32xf32>
    %cst_323 = arith.constant dense<0.000000e+00> : vector<2x32xf32>
    %962 = tpu.matmul %955, %917, %cst_323 {dimension_numbers = #tpu.dot_dimension_numbers<[1], [0], [0], [1], [0, 0, 1, 1], [], []>} : vector<2x32xf32>, vector<32x32xf32>, vector<2x32xf32> -> vector<2x32xf32>
    %963 = vector.broadcast %923 : vector<1x32xf32> to vector<2x32xf32>
    %964 = arith.addf %962, %963 : vector<2x32xf32>
    %965 = vector.extract_strided_slice %897 {offsets = [12, 0], sizes = [2, 32], strides = [1, 1]} : vector<16x32xf32> to vector<2x32xf32>
    %966 = arith.addf %965, %958 : vector<2x32xf32>
    %967 = arith.negf %966 : vector<2x32xf32>
    %968 = math.exp %967 : vector<2x32xf32>
    %cst_324 = arith.constant 1.000000e+00 : f32
    %969 = vector.broadcast %cst_324 : f32 to vector<2x32xf32>
    %970 = arith.addf %969, %968 : vector<2x32xf32>
    %971 = arith.divf %969, %970 : vector<2x32xf32>
    %972 = vector.extract_strided_slice %904 {offsets = [12, 0], sizes = [2, 32], strides = [1, 1]} : vector<16x32xf32> to vector<2x32xf32>
    %973 = arith.addf %972, %961 : vector<2x32xf32>
    %974 = arith.negf %973 : vector<2x32xf32>
    %975 = math.exp %974 : vector<2x32xf32>
    %cst_325 = arith.constant 1.000000e+00 : f32
    %976 = vector.broadcast %cst_325 : f32 to vector<2x32xf32>
    %977 = arith.addf %976, %975 : vector<2x32xf32>
    %978 = arith.divf %976, %977 : vector<2x32xf32>
    %979 = vector.extract_strided_slice %911 {offsets = [12, 0], sizes = [2, 32], strides = [1, 1]} : vector<16x32xf32> to vector<2x32xf32>
    %980 = arith.mulf %971, %964 : vector<2x32xf32>
    %981 = arith.addf %979, %980 : vector<2x32xf32>
    %982 = math.tanh %981 : vector<2x32xf32>
    %cst_326 = arith.constant 1.000000e+00 : f32
    %983 = vector.broadcast %cst_326 : f32 to vector<2x32xf32>
    %984 = arith.subf %983, %978 : vector<2x32xf32>
    %985 = arith.mulf %984, %982 : vector<2x32xf32>
    %986 = arith.mulf %978, %955 : vector<2x32xf32>
    %987 = arith.addf %985, %986 : vector<2x32xf32>
    %cst_327 = arith.constant dense<0.000000e+00> : vector<2x32xf32>
    %988 = tpu.matmul %987, %913, %cst_327 {dimension_numbers = #tpu.dot_dimension_numbers<[1], [0], [0], [1], [0, 0, 1, 1], [], []>} : vector<2x32xf32>, vector<32x32xf32>, vector<2x32xf32> -> vector<2x32xf32>
    %989 = vector.broadcast %919 : vector<1x32xf32> to vector<2x32xf32>
    %990 = arith.addf %988, %989 : vector<2x32xf32>
    %cst_328 = arith.constant dense<0.000000e+00> : vector<2x32xf32>
    %991 = tpu.matmul %987, %915, %cst_328 {dimension_numbers = #tpu.dot_dimension_numbers<[1], [0], [0], [1], [0, 0, 1, 1], [], []>} : vector<2x32xf32>, vector<32x32xf32>, vector<2x32xf32> -> vector<2x32xf32>
    %992 = vector.broadcast %921 : vector<1x32xf32> to vector<2x32xf32>
    %993 = arith.addf %991, %992 : vector<2x32xf32>
    %cst_329 = arith.constant dense<0.000000e+00> : vector<2x32xf32>
    %994 = tpu.matmul %987, %917, %cst_329 {dimension_numbers = #tpu.dot_dimension_numbers<[1], [0], [0], [1], [0, 0, 1, 1], [], []>} : vector<2x32xf32>, vector<32x32xf32>, vector<2x32xf32> -> vector<2x32xf32>
    %995 = vector.broadcast %923 : vector<1x32xf32> to vector<2x32xf32>
    %996 = arith.addf %994, %995 : vector<2x32xf32>
    %997 = vector.extract_strided_slice %897 {offsets = [10, 0], sizes = [2, 32], strides = [1, 1]} : vector<16x32xf32> to vector<2x32xf32>
    %998 = arith.addf %997, %990 : vector<2x32xf32>
    %999 = arith.negf %998 : vector<2x32xf32>
    %1000 = math.exp %999 : vector<2x32xf32>
    %cst_330 = arith.constant 1.000000e+00 : f32
    %1001 = vector.broadcast %cst_330 : f32 to vector<2x32xf32>
    %1002 = arith.addf %1001, %1000 : vector<2x32xf32>
    %1003 = arith.divf %1001, %1002 : vector<2x32xf32>
    %1004 = vector.extract_strided_slice %904 {offsets = [10, 0], sizes = [2, 32], strides = [1, 1]} : vector<16x32xf32> to vector<2x32xf32>
    %1005 = arith.addf %1004, %993 : vector<2x32xf32>
    %1006 = arith.negf %1005 : vector<2x32xf32>
    %1007 = math.exp %1006 : vector<2x32xf32>
    %cst_331 = arith.constant 1.000000e+00 : f32
    %1008 = vector.broadcast %cst_331 : f32 to vector<2x32xf32>
    %1009 = arith.addf %1008, %1007 : vector<2x32xf32>
    %1010 = arith.divf %1008, %1009 : vector<2x32xf32>
    %1011 = vector.extract_strided_slice %911 {offsets = [10, 0], sizes = [2, 32], strides = [1, 1]} : vector<16x32xf32> to vector<2x32xf32>
    %1012 = arith.mulf %1003, %996 : vector<2x32xf32>
    %1013 = arith.addf %1011, %1012 : vector<2x32xf32>
    %1014 = math.tanh %1013 : vector<2x32xf32>
    %cst_332 = arith.constant 1.000000e+00 : f32
    %1015 = vector.broadcast %cst_332 : f32 to vector<2x32xf32>
    %1016 = arith.subf %1015, %1010 : vector<2x32xf32>
    %1017 = arith.mulf %1016, %1014 : vector<2x32xf32>
    %1018 = arith.mulf %1010, %987 : vector<2x32xf32>
    %1019 = arith.addf %1017, %1018 : vector<2x32xf32>
    %cst_333 = arith.constant dense<0.000000e+00> : vector<2x32xf32>
    %1020 = tpu.matmul %1019, %913, %cst_333 {dimension_numbers = #tpu.dot_dimension_numbers<[1], [0], [0], [1], [0, 0, 1, 1], [], []>} : vector<2x32xf32>, vector<32x32xf32>, vector<2x32xf32> -> vector<2x32xf32>
    %1021 = vector.broadcast %919 : vector<1x32xf32> to vector<2x32xf32>
    %1022 = arith.addf %1020, %1021 : vector<2x32xf32>
    %cst_334 = arith.constant dense<0.000000e+00> : vector<2x32xf32>
    %1023 = tpu.matmul %1019, %915, %cst_334 {dimension_numbers = #tpu.dot_dimension_numbers<[1], [0], [0], [1], [0, 0, 1, 1], [], []>} : vector<2x32xf32>, vector<32x32xf32>, vector<2x32xf32> -> vector<2x32xf32>
    %1024 = vector.broadcast %921 : vector<1x32xf32> to vector<2x32xf32>
    %1025 = arith.addf %1023, %1024 : vector<2x32xf32>
    %cst_335 = arith.constant dense<0.000000e+00> : vector<2x32xf32>
    %1026 = tpu.matmul %1019, %917, %cst_335 {dimension_numbers = #tpu.dot_dimension_numbers<[1], [0], [0], [1], [0, 0, 1, 1], [], []>} : vector<2x32xf32>, vector<32x32xf32>, vector<2x32xf32> -> vector<2x32xf32>
    %1027 = vector.broadcast %923 : vector<1x32xf32> to vector<2x32xf32>
    %1028 = arith.addf %1026, %1027 : vector<2x32xf32>
    %1029 = vector.extract_strided_slice %897 {offsets = [8, 0], sizes = [2, 32], strides = [1, 1]} : vector<16x32xf32> to vector<2x32xf32>
    %1030 = arith.addf %1029, %1022 : vector<2x32xf32>
    %1031 = arith.negf %1030 : vector<2x32xf32>
    %1032 = math.exp %1031 : vector<2x32xf32>
    %cst_336 = arith.constant 1.000000e+00 : f32
    %1033 = vector.broadcast %cst_336 : f32 to vector<2x32xf32>
    %1034 = arith.addf %1033, %1032 : vector<2x32xf32>
    %1035 = arith.divf %1033, %1034 : vector<2x32xf32>
    %1036 = vector.extract_strided_slice %904 {offsets = [8, 0], sizes = [2, 32], strides = [1, 1]} : vector<16x32xf32> to vector<2x32xf32>
    %1037 = arith.addf %1036, %1025 : vector<2x32xf32>
    %1038 = arith.negf %1037 : vector<2x32xf32>
    %1039 = math.exp %1038 : vector<2x32xf32>
    %cst_337 = arith.constant 1.000000e+00 : f32
    %1040 = vector.broadcast %cst_337 : f32 to vector<2x32xf32>
    %1041 = arith.addf %1040, %1039 : vector<2x32xf32>
    %1042 = arith.divf %1040, %1041 : vector<2x32xf32>
    %1043 = vector.extract_strided_slice %911 {offsets = [8, 0], sizes = [2, 32], strides = [1, 1]} : vector<16x32xf32> to vector<2x32xf32>
    %1044 = arith.mulf %1035, %1028 : vector<2x32xf32>
    %1045 = arith.addf %1043, %1044 : vector<2x32xf32>
    %1046 = math.tanh %1045 : vector<2x32xf32>
    %cst_338 = arith.constant 1.000000e+00 : f32
    %1047 = vector.broadcast %cst_338 : f32 to vector<2x32xf32>
    %1048 = arith.subf %1047, %1042 : vector<2x32xf32>
    %1049 = arith.mulf %1048, %1046 : vector<2x32xf32>
    %1050 = arith.mulf %1042, %1019 : vector<2x32xf32>
    %1051 = arith.addf %1049, %1050 : vector<2x32xf32>
    %cst_339 = arith.constant dense<0.000000e+00> : vector<2x32xf32>
    %1052 = tpu.matmul %1051, %913, %cst_339 {dimension_numbers = #tpu.dot_dimension_numbers<[1], [0], [0], [1], [0, 0, 1, 1], [], []>} : vector<2x32xf32>, vector<32x32xf32>, vector<2x32xf32> -> vector<2x32xf32>
    %1053 = vector.broadcast %919 : vector<1x32xf32> to vector<2x32xf32>
    %1054 = arith.addf %1052, %1053 : vector<2x32xf32>
    %cst_340 = arith.constant dense<0.000000e+00> : vector<2x32xf32>
    %1055 = tpu.matmul %1051, %915, %cst_340 {dimension_numbers = #tpu.dot_dimension_numbers<[1], [0], [0], [1], [0, 0, 1, 1], [], []>} : vector<2x32xf32>, vector<32x32xf32>, vector<2x32xf32> -> vector<2x32xf32>
    %1056 = vector.broadcast %921 : vector<1x32xf32> to vector<2x32xf32>
    %1057 = arith.addf %1055, %1056 : vector<2x32xf32>
    %cst_341 = arith.constant dense<0.000000e+00> : vector<2x32xf32>
    %1058 = tpu.matmul %1051, %917, %cst_341 {dimension_numbers = #tpu.dot_dimension_numbers<[1], [0], [0], [1], [0, 0, 1, 1], [], []>} : vector<2x32xf32>, vector<32x32xf32>, vector<2x32xf32> -> vector<2x32xf32>
    %1059 = vector.broadcast %923 : vector<1x32xf32> to vector<2x32xf32>
    %1060 = arith.addf %1058, %1059 : vector<2x32xf32>
    %1061 = vector.extract_strided_slice %897 {offsets = [6, 0], sizes = [2, 32], strides = [1, 1]} : vector<16x32xf32> to vector<2x32xf32>
    %1062 = arith.addf %1061, %1054 : vector<2x32xf32>
    %1063 = arith.negf %1062 : vector<2x32xf32>
    %1064 = math.exp %1063 : vector<2x32xf32>
    %cst_342 = arith.constant 1.000000e+00 : f32
    %1065 = vector.broadcast %cst_342 : f32 to vector<2x32xf32>
    %1066 = arith.addf %1065, %1064 : vector<2x32xf32>
    %1067 = arith.divf %1065, %1066 : vector<2x32xf32>
    %1068 = vector.extract_strided_slice %904 {offsets = [6, 0], sizes = [2, 32], strides = [1, 1]} : vector<16x32xf32> to vector<2x32xf32>
    %1069 = arith.addf %1068, %1057 : vector<2x32xf32>
    %1070 = arith.negf %1069 : vector<2x32xf32>
    %1071 = math.exp %1070 : vector<2x32xf32>
    %cst_343 = arith.constant 1.000000e+00 : f32
    %1072 = vector.broadcast %cst_343 : f32 to vector<2x32xf32>
    %1073 = arith.addf %1072, %1071 : vector<2x32xf32>
    %1074 = arith.divf %1072, %1073 : vector<2x32xf32>
    %1075 = vector.extract_strided_slice %911 {offsets = [6, 0], sizes = [2, 32], strides = [1, 1]} : vector<16x32xf32> to vector<2x32xf32>
    %1076 = arith.mulf %1067, %1060 : vector<2x32xf32>
    %1077 = arith.addf %1075, %1076 : vector<2x32xf32>
    %1078 = math.tanh %1077 : vector<2x32xf32>
    %cst_344 = arith.constant 1.000000e+00 : f32
    %1079 = vector.broadcast %cst_344 : f32 to vector<2x32xf32>
    %1080 = arith.subf %1079, %1074 : vector<2x32xf32>
    %1081 = arith.mulf %1080, %1078 : vector<2x32xf32>
    %1082 = arith.mulf %1074, %1051 : vector<2x32xf32>
    %1083 = arith.addf %1081, %1082 : vector<2x32xf32>
    %cst_345 = arith.constant dense<0.000000e+00> : vector<2x32xf32>
    %1084 = tpu.matmul %1083, %913, %cst_345 {dimension_numbers = #tpu.dot_dimension_numbers<[1], [0], [0], [1], [0, 0, 1, 1], [], []>} : vector<2x32xf32>, vector<32x32xf32>, vector<2x32xf32> -> vector<2x32xf32>
    %1085 = vector.broadcast %919 : vector<1x32xf32> to vector<2x32xf32>
    %1086 = arith.addf %1084, %1085 : vector<2x32xf32>
    %cst_346 = arith.constant dense<0.000000e+00> : vector<2x32xf32>
    %1087 = tpu.matmul %1083, %915, %cst_346 {dimension_numbers = #tpu.dot_dimension_numbers<[1], [0], [0], [1], [0, 0, 1, 1], [], []>} : vector<2x32xf32>, vector<32x32xf32>, vector<2x32xf32> -> vector<2x32xf32>
    %1088 = vector.broadcast %921 : vector<1x32xf32> to vector<2x32xf32>
    %1089 = arith.addf %1087, %1088 : vector<2x32xf32>
    %cst_347 = arith.constant dense<0.000000e+00> : vector<2x32xf32>
    %1090 = tpu.matmul %1083, %917, %cst_347 {dimension_numbers = #tpu.dot_dimension_numbers<[1], [0], [0], [1], [0, 0, 1, 1], [], []>} : vector<2x32xf32>, vector<32x32xf32>, vector<2x32xf32> -> vector<2x32xf32>
    %1091 = vector.broadcast %923 : vector<1x32xf32> to vector<2x32xf32>
    %1092 = arith.addf %1090, %1091 : vector<2x32xf32>
    %1093 = vector.extract_strided_slice %897 {offsets = [4, 0], sizes = [2, 32], strides = [1, 1]} : vector<16x32xf32> to vector<2x32xf32>
    %1094 = arith.addf %1093, %1086 : vector<2x32xf32>
    %1095 = arith.negf %1094 : vector<2x32xf32>
    %1096 = math.exp %1095 : vector<2x32xf32>
    %cst_348 = arith.constant 1.000000e+00 : f32
    %1097 = vector.broadcast %cst_348 : f32 to vector<2x32xf32>
    %1098 = arith.addf %1097, %1096 : vector<2x32xf32>
    %1099 = arith.divf %1097, %1098 : vector<2x32xf32>
    %1100 = vector.extract_strided_slice %904 {offsets = [4, 0], sizes = [2, 32], strides = [1, 1]} : vector<16x32xf32> to vector<2x32xf32>
    %1101 = arith.addf %1100, %1089 : vector<2x32xf32>
    %1102 = arith.negf %1101 : vector<2x32xf32>
    %1103 = math.exp %1102 : vector<2x32xf32>
    %cst_349 = arith.constant 1.000000e+00 : f32
    %1104 = vector.broadcast %cst_349 : f32 to vector<2x32xf32>
    %1105 = arith.addf %1104, %1103 : vector<2x32xf32>
    %1106 = arith.divf %1104, %1105 : vector<2x32xf32>
    %1107 = vector.extract_strided_slice %911 {offsets = [4, 0], sizes = [2, 32], strides = [1, 1]} : vector<16x32xf32> to vector<2x32xf32>
    %1108 = arith.mulf %1099, %1092 : vector<2x32xf32>
    %1109 = arith.addf %1107, %1108 : vector<2x32xf32>
    %1110 = math.tanh %1109 : vector<2x32xf32>
    %cst_350 = arith.constant 1.000000e+00 : f32
    %1111 = vector.broadcast %cst_350 : f32 to vector<2x32xf32>
    %1112 = arith.subf %1111, %1106 : vector<2x32xf32>
    %1113 = arith.mulf %1112, %1110 : vector<2x32xf32>
    %1114 = arith.mulf %1106, %1083 : vector<2x32xf32>
    %1115 = arith.addf %1113, %1114 : vector<2x32xf32>
    %cst_351 = arith.constant dense<0.000000e+00> : vector<2x32xf32>
    %1116 = tpu.matmul %1115, %913, %cst_351 {dimension_numbers = #tpu.dot_dimension_numbers<[1], [0], [0], [1], [0, 0, 1, 1], [], []>} : vector<2x32xf32>, vector<32x32xf32>, vector<2x32xf32> -> vector<2x32xf32>
    %1117 = vector.broadcast %919 : vector<1x32xf32> to vector<2x32xf32>
    %1118 = arith.addf %1116, %1117 : vector<2x32xf32>
    %cst_352 = arith.constant dense<0.000000e+00> : vector<2x32xf32>
    %1119 = tpu.matmul %1115, %915, %cst_352 {dimension_numbers = #tpu.dot_dimension_numbers<[1], [0], [0], [1], [0, 0, 1, 1], [], []>} : vector<2x32xf32>, vector<32x32xf32>, vector<2x32xf32> -> vector<2x32xf32>
    %1120 = vector.broadcast %921 : vector<1x32xf32> to vector<2x32xf32>
    %1121 = arith.addf %1119, %1120 : vector<2x32xf32>
    %cst_353 = arith.constant dense<0.000000e+00> : vector<2x32xf32>
    %1122 = tpu.matmul %1115, %917, %cst_353 {dimension_numbers = #tpu.dot_dimension_numbers<[1], [0], [0], [1], [0, 0, 1, 1], [], []>} : vector<2x32xf32>, vector<32x32xf32>, vector<2x32xf32> -> vector<2x32xf32>
    %1123 = vector.broadcast %923 : vector<1x32xf32> to vector<2x32xf32>
    %1124 = arith.addf %1122, %1123 : vector<2x32xf32>
    %1125 = vector.extract_strided_slice %897 {offsets = [2, 0], sizes = [2, 32], strides = [1, 1]} : vector<16x32xf32> to vector<2x32xf32>
    %1126 = arith.addf %1125, %1118 : vector<2x32xf32>
    %1127 = arith.negf %1126 : vector<2x32xf32>
    %1128 = math.exp %1127 : vector<2x32xf32>
    %cst_354 = arith.constant 1.000000e+00 : f32
    %1129 = vector.broadcast %cst_354 : f32 to vector<2x32xf32>
    %1130 = arith.addf %1129, %1128 : vector<2x32xf32>
    %1131 = arith.divf %1129, %1130 : vector<2x32xf32>
    %1132 = vector.extract_strided_slice %904 {offsets = [2, 0], sizes = [2, 32], strides = [1, 1]} : vector<16x32xf32> to vector<2x32xf32>
    %1133 = arith.addf %1132, %1121 : vector<2x32xf32>
    %1134 = arith.negf %1133 : vector<2x32xf32>
    %1135 = math.exp %1134 : vector<2x32xf32>
    %cst_355 = arith.constant 1.000000e+00 : f32
    %1136 = vector.broadcast %cst_355 : f32 to vector<2x32xf32>
    %1137 = arith.addf %1136, %1135 : vector<2x32xf32>
    %1138 = arith.divf %1136, %1137 : vector<2x32xf32>
    %1139 = vector.extract_strided_slice %911 {offsets = [2, 0], sizes = [2, 32], strides = [1, 1]} : vector<16x32xf32> to vector<2x32xf32>
    %1140 = arith.mulf %1131, %1124 : vector<2x32xf32>
    %1141 = arith.addf %1139, %1140 : vector<2x32xf32>
    %1142 = math.tanh %1141 : vector<2x32xf32>
    %cst_356 = arith.constant 1.000000e+00 : f32
    %1143 = vector.broadcast %cst_356 : f32 to vector<2x32xf32>
    %1144 = arith.subf %1143, %1138 : vector<2x32xf32>
    %1145 = arith.mulf %1144, %1142 : vector<2x32xf32>
    %1146 = arith.mulf %1138, %1115 : vector<2x32xf32>
    %1147 = arith.addf %1145, %1146 : vector<2x32xf32>
    %cst_357 = arith.constant dense<0.000000e+00> : vector<2x32xf32>
    %1148 = tpu.matmul %1147, %913, %cst_357 {dimension_numbers = #tpu.dot_dimension_numbers<[1], [0], [0], [1], [0, 0, 1, 1], [], []>} : vector<2x32xf32>, vector<32x32xf32>, vector<2x32xf32> -> vector<2x32xf32>
    %1149 = vector.broadcast %919 : vector<1x32xf32> to vector<2x32xf32>
    %1150 = arith.addf %1148, %1149 : vector<2x32xf32>
    %cst_358 = arith.constant dense<0.000000e+00> : vector<2x32xf32>
    %1151 = tpu.matmul %1147, %915, %cst_358 {dimension_numbers = #tpu.dot_dimension_numbers<[1], [0], [0], [1], [0, 0, 1, 1], [], []>} : vector<2x32xf32>, vector<32x32xf32>, vector<2x32xf32> -> vector<2x32xf32>
    %1152 = vector.broadcast %921 : vector<1x32xf32> to vector<2x32xf32>
    %1153 = arith.addf %1151, %1152 : vector<2x32xf32>
    %cst_359 = arith.constant dense<0.000000e+00> : vector<2x32xf32>
    %1154 = tpu.matmul %1147, %917, %cst_359 {dimension_numbers = #tpu.dot_dimension_numbers<[1], [0], [0], [1], [0, 0, 1, 1], [], []>} : vector<2x32xf32>, vector<32x32xf32>, vector<2x32xf32> -> vector<2x32xf32>
    %1155 = vector.broadcast %923 : vector<1x32xf32> to vector<2x32xf32>
    %1156 = arith.addf %1154, %1155 : vector<2x32xf32>
    %1157 = vector.extract_strided_slice %897 {offsets = [0, 0], sizes = [2, 32], strides = [1, 1]} : vector<16x32xf32> to vector<2x32xf32>
    %1158 = arith.addf %1157, %1150 : vector<2x32xf32>
    %1159 = arith.negf %1158 : vector<2x32xf32>
    %1160 = math.exp %1159 : vector<2x32xf32>
    %cst_360 = arith.constant 1.000000e+00 : f32
    %1161 = vector.broadcast %cst_360 : f32 to vector<2x32xf32>
    %1162 = arith.addf %1161, %1160 : vector<2x32xf32>
    %1163 = arith.divf %1161, %1162 : vector<2x32xf32>
    %1164 = vector.extract_strided_slice %904 {offsets = [0, 0], sizes = [2, 32], strides = [1, 1]} : vector<16x32xf32> to vector<2x32xf32>
    %1165 = arith.addf %1164, %1153 : vector<2x32xf32>
    %1166 = arith.negf %1165 : vector<2x32xf32>
    %1167 = math.exp %1166 : vector<2x32xf32>
    %cst_361 = arith.constant 1.000000e+00 : f32
    %1168 = vector.broadcast %cst_361 : f32 to vector<2x32xf32>
    %1169 = arith.addf %1168, %1167 : vector<2x32xf32>
    %1170 = arith.divf %1168, %1169 : vector<2x32xf32>
    %1171 = vector.extract_strided_slice %911 {offsets = [0, 0], sizes = [2, 32], strides = [1, 1]} : vector<16x32xf32> to vector<2x32xf32>
    %1172 = arith.mulf %1163, %1156 : vector<2x32xf32>
    %1173 = arith.addf %1171, %1172 : vector<2x32xf32>
    %1174 = math.tanh %1173 : vector<2x32xf32>
    %cst_362 = arith.constant 1.000000e+00 : f32
    %1175 = vector.broadcast %cst_362 : f32 to vector<2x32xf32>
    %1176 = arith.subf %1175, %1170 : vector<2x32xf32>
    %1177 = arith.mulf %1176, %1174 : vector<2x32xf32>
    %1178 = arith.mulf %1170, %1147 : vector<2x32xf32>
    %1179 = arith.addf %1177, %1178 : vector<2x32xf32>
    %c2_363 = arith.constant 2 : index
    %c0_364 = arith.constant 0 : index
    %c0_365 = arith.constant 0 : index
    %1180 = vector.load %arg29[%c2_363, %c0_364, %c0_365] : memref<6x2x32xf32, #tpu.memory_space<vmem>>, vector<1x2x32xf32>
    %1181 = vector.shape_cast %1180 : vector<1x2x32xf32> to vector<2x32xf32>
    %1182 = vector.shape_cast %888 : vector<2x32xf32> to vector<1x2x32xf32>
    tpu.vector_store %arg29[%c2_363, %c0_364, %c0_365], %1182 {strides = array<i32>} : memref<6x2x32xf32, #tpu.memory_space<vmem>>, vector<1x2x32xf32>,
    %c3_366 = arith.constant 3 : index
    %c0_367 = arith.constant 0 : index
    %c0_368 = arith.constant 0 : index
    %1183 = vector.load %arg29[%c3_366, %c0_367, %c0_368] : memref<6x2x32xf32, #tpu.memory_space<vmem>>, vector<1x2x32xf32>
    %1184 = vector.shape_cast %1183 : vector<1x2x32xf32> to vector<2x32xf32>
    %1185 = vector.shape_cast %1179 : vector<2x32xf32> to vector<1x2x32xf32>
    tpu.vector_store %arg29[%c3_366, %c0_367, %c0_368], %1185 {strides = array<i32>} : memref<6x2x32xf32, #tpu.memory_space<vmem>>, vector<1x2x32xf32>,
    %1186 = tpu.concatenate %664, %1179 in 1 : vector<2x32xf32>, vector<2x32xf32> -> vector<2x64xf32>
    %1187 = tpu.concatenate %696, %1147 in 1 : vector<2x32xf32>, vector<2x32xf32> -> vector<2x64xf32>
    %1188 = tpu.concatenate %728, %1115 in 1 : vector<2x32xf32>, vector<2x32xf32> -> vector<2x64xf32>
    %1189 = tpu.concatenate %760, %1083 in 1 : vector<2x32xf32>, vector<2x32xf32> -> vector<2x64xf32>
    %1190 = tpu.concatenate %792, %1051 in 1 : vector<2x32xf32>, vector<2x32xf32> -> vector<2x64xf32>
    %1191 = tpu.concatenate %824, %1019 in 1 : vector<2x32xf32>, vector<2x32xf32> -> vector<2x64xf32>
    %1192 = tpu.concatenate %856, %987 in 1 : vector<2x32xf32>, vector<2x32xf32> -> vector<2x64xf32>
    %1193 = tpu.concatenate %888, %955 in 1 : vector<2x32xf32>, vector<2x32xf32> -> vector<2x64xf32>
    %1194 = tpu.concatenate %1186, %1187, %1188, %1189, %1190, %1191, %1192, %1193 in 0 : vector<2x64xf32>, vector<2x64xf32>, vector<2x64xf32>, vector<2x64xf32>, vector<2x64xf32>, vector<2x64xf32>, vector<2x64xf32>, vector<2x64xf32> -> vector<16x64xf32>
    %c4 = arith.constant 4 : index
    %c0_369 = arith.constant 0 : index
    %c0_370 = arith.constant 0 : index
    %1195 = vector.load %arg1[%c4, %c0_369, %c0_370] : memref<6x2x32xf32, #tpu.memory_space<vmem>>, vector<1x2x32xf32>
    %1196 = vector.shape_cast %1195 : vector<1x2x32xf32> to vector<2x32xf32>
    %c0_371 = arith.constant 0 : index
    %c0_372 = arith.constant 0 : index
    %c0_373 = arith.constant 0 : index
    %1197 = vector.load %arg18[%c0_371, %c0_372, %c0_373] : memref<3x64x32xf32, #tpu.memory_space<vmem>>, vector<1x64x32xf32>
    %1198 = vector.shape_cast %1197 : vector<1x64x32xf32> to vector<64x32xf32>
    %cst_374 = arith.constant dense<0.000000e+00> : vector<16x32xf32>
    %1199 = tpu.matmul %1194, %1198, %cst_374 {dimension_numbers = #tpu.dot_dimension_numbers<[1], [0], [0], [1], [0, 0, 1, 1], [], []>} : vector<16x64xf32>, vector<64x32xf32>, vector<16x32xf32> -> vector<16x32xf32>
    %c0_375 = arith.constant 0 : index
    %c0_376 = arith.constant 0 : index
    %c0_377 = arith.constant 0 : index
    %1200 = vector.load %arg20[%c0_375, %c0_376, %c0_377] : memref<3x1x32xf32, #tpu.memory_space<vmem>>, vector<1x1x32xf32>
    %1201 = vector.shape_cast %1200 : vector<1x1x32xf32> to vector<1x32xf32>
    %1202 = vector.broadcast %1201 : vector<1x32xf32> to vector<16x32xf32>
    %1203 = arith.addf %1199, %1202 : vector<16x32xf32>
    %c1_378 = arith.constant 1 : index
    %c0_379 = arith.constant 0 : index
    %c0_380 = arith.constant 0 : index
    %1204 = vector.load %arg18[%c1_378, %c0_379, %c0_380] : memref<3x64x32xf32, #tpu.memory_space<vmem>>, vector<1x64x32xf32>
    %1205 = vector.shape_cast %1204 : vector<1x64x32xf32> to vector<64x32xf32>
    %cst_381 = arith.constant dense<0.000000e+00> : vector<16x32xf32>
    %1206 = tpu.matmul %1194, %1205, %cst_381 {dimension_numbers = #tpu.dot_dimension_numbers<[1], [0], [0], [1], [0, 0, 1, 1], [], []>} : vector<16x64xf32>, vector<64x32xf32>, vector<16x32xf32> -> vector<16x32xf32>
    %c1_382 = arith.constant 1 : index
    %c0_383 = arith.constant 0 : index
    %c0_384 = arith.constant 0 : index
    %1207 = vector.load %arg20[%c1_382, %c0_383, %c0_384] : memref<3x1x32xf32, #tpu.memory_space<vmem>>, vector<1x1x32xf32>
    %1208 = vector.shape_cast %1207 : vector<1x1x32xf32> to vector<1x32xf32>
    %1209 = vector.broadcast %1208 : vector<1x32xf32> to vector<16x32xf32>
    %1210 = arith.addf %1206, %1209 : vector<16x32xf32>
    %c2_385 = arith.constant 2 : index
    %c0_386 = arith.constant 0 : index
    %c0_387 = arith.constant 0 : index
    %1211 = vector.load %arg18[%c2_385, %c0_386, %c0_387] : memref<3x64x32xf32, #tpu.memory_space<vmem>>, vector<1x64x32xf32>
    %1212 = vector.shape_cast %1211 : vector<1x64x32xf32> to vector<64x32xf32>
    %cst_388 = arith.constant dense<0.000000e+00> : vector<16x32xf32>
    %1213 = tpu.matmul %1194, %1212, %cst_388 {dimension_numbers = #tpu.dot_dimension_numbers<[1], [0], [0], [1], [0, 0, 1, 1], [], []>} : vector<16x64xf32>, vector<64x32xf32>, vector<16x32xf32> -> vector<16x32xf32>
    %c2_389 = arith.constant 2 : index
    %c0_390 = arith.constant 0 : index
    %c0_391 = arith.constant 0 : index
    %1214 = vector.load %arg20[%c2_389, %c0_390, %c0_391] : memref<3x1x32xf32, #tpu.memory_space<vmem>>, vector<1x1x32xf32>
    %1215 = vector.shape_cast %1214 : vector<1x1x32xf32> to vector<1x32xf32>
    %1216 = vector.broadcast %1215 : vector<1x32xf32> to vector<16x32xf32>
    %1217 = arith.addf %1213, %1216 : vector<16x32xf32>
    %c0_392 = arith.constant 0 : index
    %c0_393 = arith.constant 0 : index
    %c0_394 = arith.constant 0 : index
    %1218 = vector.load %arg19[%c0_392, %c0_393, %c0_394] : memref<3x32x32xf32, #tpu.memory_space<vmem>>, vector<1x32x32xf32>
    %1219 = vector.shape_cast %1218 : vector<1x32x32xf32> to vector<32x32xf32>
    %c1_395 = arith.constant 1 : index
    %c0_396 = arith.constant 0 : index
    %c0_397 = arith.constant 0 : index
    %1220 = vector.load %arg19[%c1_395, %c0_396, %c0_397] : memref<3x32x32xf32, #tpu.memory_space<vmem>>, vector<1x32x32xf32>
    %1221 = vector.shape_cast %1220 : vector<1x32x32xf32> to vector<32x32xf32>
    %c2_398 = arith.constant 2 : index
    %c0_399 = arith.constant 0 : index
    %c0_400 = arith.constant 0 : index
    %1222 = vector.load %arg19[%c2_398, %c0_399, %c0_400] : memref<3x32x32xf32, #tpu.memory_space<vmem>>, vector<1x32x32xf32>
    %1223 = vector.shape_cast %1222 : vector<1x32x32xf32> to vector<32x32xf32>
    %c0_401 = arith.constant 0 : index
    %c0_402 = arith.constant 0 : index
    %c0_403 = arith.constant 0 : index
    %1224 = vector.load %arg21[%c0_401, %c0_402, %c0_403] : memref<3x1x32xf32, #tpu.memory_space<vmem>>, vector<1x1x32xf32>
    %1225 = vector.shape_cast %1224 : vector<1x1x32xf32> to vector<1x32xf32>
    %c1_404 = arith.constant 1 : index
    %c0_405 = arith.constant 0 : index
    %c0_406 = arith.constant 0 : index
    %1226 = vector.load %arg21[%c1_404, %c0_405, %c0_406] : memref<3x1x32xf32, #tpu.memory_space<vmem>>, vector<1x1x32xf32>
    %1227 = vector.shape_cast %1226 : vector<1x1x32xf32> to vector<1x32xf32>
    %c2_407 = arith.constant 2 : index
    %c0_408 = arith.constant 0 : index
    %c0_409 = arith.constant 0 : index
    %1228 = vector.load %arg21[%c2_407, %c0_408, %c0_409] : memref<3x1x32xf32, #tpu.memory_space<vmem>>, vector<1x1x32xf32>
    %1229 = vector.shape_cast %1228 : vector<1x1x32xf32> to vector<1x32xf32>
    %cst_410 = arith.constant dense<0.000000e+00> : vector<2x32xf32>
    %1230 = tpu.matmul %1196, %1219, %cst_410 {dimension_numbers = #tpu.dot_dimension_numbers<[1], [0], [0], [1], [0, 0, 1, 1], [], []>} : vector<2x32xf32>, vector<32x32xf32>, vector<2x32xf32> -> vector<2x32xf32>
    %1231 = vector.broadcast %1225 : vector<1x32xf32> to vector<2x32xf32>
    %1232 = arith.addf %1230, %1231 : vector<2x32xf32>
    %cst_411 = arith.constant dense<0.000000e+00> : vector<2x32xf32>
    %1233 = tpu.matmul %1196, %1221, %cst_411 {dimension_numbers = #tpu.dot_dimension_numbers<[1], [0], [0], [1], [0, 0, 1, 1], [], []>} : vector<2x32xf32>, vector<32x32xf32>, vector<2x32xf32> -> vector<2x32xf32>
    %1234 = vector.broadcast %1227 : vector<1x32xf32> to vector<2x32xf32>
    %1235 = arith.addf %1233, %1234 : vector<2x32xf32>
    %cst_412 = arith.constant dense<0.000000e+00> : vector<2x32xf32>
    %1236 = tpu.matmul %1196, %1223, %cst_412 {dimension_numbers = #tpu.dot_dimension_numbers<[1], [0], [0], [1], [0, 0, 1, 1], [], []>} : vector<2x32xf32>, vector<32x32xf32>, vector<2x32xf32> -> vector<2x32xf32>
    %1237 = vector.broadcast %1229 : vector<1x32xf32> to vector<2x32xf32>
    %1238 = arith.addf %1236, %1237 : vector<2x32xf32>
    %1239 = vector.extract_strided_slice %1203 {offsets = [0, 0], sizes = [2, 32], strides = [1, 1]} : vector<16x32xf32> to vector<2x32xf32>
    %1240 = arith.addf %1239, %1232 : vector<2x32xf32>
    %1241 = arith.negf %1240 : vector<2x32xf32>
    %1242 = math.exp %1241 : vector<2x32xf32>
    %cst_413 = arith.constant 1.000000e+00 : f32
    %1243 = vector.broadcast %cst_413 : f32 to vector<2x32xf32>
    %1244 = arith.addf %1243, %1242 : vector<2x32xf32>
    %1245 = arith.divf %1243, %1244 : vector<2x32xf32>
    %1246 = vector.extract_strided_slice %1210 {offsets = [0, 0], sizes = [2, 32], strides = [1, 1]} : vector<16x32xf32> to vector<2x32xf32>
    %1247 = arith.addf %1246, %1235 : vector<2x32xf32>
    %1248 = arith.negf %1247 : vector<2x32xf32>
    %1249 = math.exp %1248 : vector<2x32xf32>
    %cst_414 = arith.constant 1.000000e+00 : f32
    %1250 = vector.broadcast %cst_414 : f32 to vector<2x32xf32>
    %1251 = arith.addf %1250, %1249 : vector<2x32xf32>
    %1252 = arith.divf %1250, %1251 : vector<2x32xf32>
    %1253 = vector.extract_strided_slice %1217 {offsets = [0, 0], sizes = [2, 32], strides = [1, 1]} : vector<16x32xf32> to vector<2x32xf32>
    %1254 = arith.mulf %1245, %1238 : vector<2x32xf32>
    %1255 = arith.addf %1253, %1254 : vector<2x32xf32>
    %1256 = math.tanh %1255 : vector<2x32xf32>
    %cst_415 = arith.constant 1.000000e+00 : f32
    %1257 = vector.broadcast %cst_415 : f32 to vector<2x32xf32>
    %1258 = arith.subf %1257, %1252 : vector<2x32xf32>
    %1259 = arith.mulf %1258, %1256 : vector<2x32xf32>
    %1260 = arith.mulf %1252, %1196 : vector<2x32xf32>
    %1261 = arith.addf %1259, %1260 : vector<2x32xf32>
    %cst_416 = arith.constant dense<0.000000e+00> : vector<2x32xf32>
    %1262 = tpu.matmul %1261, %1219, %cst_416 {dimension_numbers = #tpu.dot_dimension_numbers<[1], [0], [0], [1], [0, 0, 1, 1], [], []>} : vector<2x32xf32>, vector<32x32xf32>, vector<2x32xf32> -> vector<2x32xf32>
    %1263 = vector.broadcast %1225 : vector<1x32xf32> to vector<2x32xf32>
    %1264 = arith.addf %1262, %1263 : vector<2x32xf32>
    %cst_417 = arith.constant dense<0.000000e+00> : vector<2x32xf32>
    %1265 = tpu.matmul %1261, %1221, %cst_417 {dimension_numbers = #tpu.dot_dimension_numbers<[1], [0], [0], [1], [0, 0, 1, 1], [], []>} : vector<2x32xf32>, vector<32x32xf32>, vector<2x32xf32> -> vector<2x32xf32>
    %1266 = vector.broadcast %1227 : vector<1x32xf32> to vector<2x32xf32>
    %1267 = arith.addf %1265, %1266 : vector<2x32xf32>
    %cst_418 = arith.constant dense<0.000000e+00> : vector<2x32xf32>
    %1268 = tpu.matmul %1261, %1223, %cst_418 {dimension_numbers = #tpu.dot_dimension_numbers<[1], [0], [0], [1], [0, 0, 1, 1], [], []>} : vector<2x32xf32>, vector<32x32xf32>, vector<2x32xf32> -> vector<2x32xf32>
    %1269 = vector.broadcast %1229 : vector<1x32xf32> to vector<2x32xf32>
    %1270 = arith.addf %1268, %1269 : vector<2x32xf32>
    %1271 = vector.extract_strided_slice %1203 {offsets = [2, 0], sizes = [2, 32], strides = [1, 1]} : vector<16x32xf32> to vector<2x32xf32>
    %1272 = arith.addf %1271, %1264 : vector<2x32xf32>
    %1273 = arith.negf %1272 : vector<2x32xf32>
    %1274 = math.exp %1273 : vector<2x32xf32>
    %cst_419 = arith.constant 1.000000e+00 : f32
    %1275 = vector.broadcast %cst_419 : f32 to vector<2x32xf32>
    %1276 = arith.addf %1275, %1274 : vector<2x32xf32>
    %1277 = arith.divf %1275, %1276 : vector<2x32xf32>
    %1278 = vector.extract_strided_slice %1210 {offsets = [2, 0], sizes = [2, 32], strides = [1, 1]} : vector<16x32xf32> to vector<2x32xf32>
    %1279 = arith.addf %1278, %1267 : vector<2x32xf32>
    %1280 = arith.negf %1279 : vector<2x32xf32>
    %1281 = math.exp %1280 : vector<2x32xf32>
    %cst_420 = arith.constant 1.000000e+00 : f32
    %1282 = vector.broadcast %cst_420 : f32 to vector<2x32xf32>
    %1283 = arith.addf %1282, %1281 : vector<2x32xf32>
    %1284 = arith.divf %1282, %1283 : vector<2x32xf32>
    %1285 = vector.extract_strided_slice %1217 {offsets = [2, 0], sizes = [2, 32], strides = [1, 1]} : vector<16x32xf32> to vector<2x32xf32>
    %1286 = arith.mulf %1277, %1270 : vector<2x32xf32>
    %1287 = arith.addf %1285, %1286 : vector<2x32xf32>
    %1288 = math.tanh %1287 : vector<2x32xf32>
    %cst_421 = arith.constant 1.000000e+00 : f32
    %1289 = vector.broadcast %cst_421 : f32 to vector<2x32xf32>
    %1290 = arith.subf %1289, %1284 : vector<2x32xf32>
    %1291 = arith.mulf %1290, %1288 : vector<2x32xf32>
    %1292 = arith.mulf %1284, %1261 : vector<2x32xf32>
    %1293 = arith.addf %1291, %1292 : vector<2x32xf32>
    %cst_422 = arith.constant dense<0.000000e+00> : vector<2x32xf32>
    %1294 = tpu.matmul %1293, %1219, %cst_422 {dimension_numbers = #tpu.dot_dimension_numbers<[1], [0], [0], [1], [0, 0, 1, 1], [], []>} : vector<2x32xf32>, vector<32x32xf32>, vector<2x32xf32> -> vector<2x32xf32>
    %1295 = vector.broadcast %1225 : vector<1x32xf32> to vector<2x32xf32>
    %1296 = arith.addf %1294, %1295 : vector<2x32xf32>
    %cst_423 = arith.constant dense<0.000000e+00> : vector<2x32xf32>
    %1297 = tpu.matmul %1293, %1221, %cst_423 {dimension_numbers = #tpu.dot_dimension_numbers<[1], [0], [0], [1], [0, 0, 1, 1], [], []>} : vector<2x32xf32>, vector<32x32xf32>, vector<2x32xf32> -> vector<2x32xf32>
    %1298 = vector.broadcast %1227 : vector<1x32xf32> to vector<2x32xf32>
    %1299 = arith.addf %1297, %1298 : vector<2x32xf32>
    %cst_424 = arith.constant dense<0.000000e+00> : vector<2x32xf32>
    %1300 = tpu.matmul %1293, %1223, %cst_424 {dimension_numbers = #tpu.dot_dimension_numbers<[1], [0], [0], [1], [0, 0, 1, 1], [], []>} : vector<2x32xf32>, vector<32x32xf32>, vector<2x32xf32> -> vector<2x32xf32>
    %1301 = vector.broadcast %1229 : vector<1x32xf32> to vector<2x32xf32>
    %1302 = arith.addf %1300, %1301 : vector<2x32xf32>
    %1303 = vector.extract_strided_slice %1203 {offsets = [4, 0], sizes = [2, 32], strides = [1, 1]} : vector<16x32xf32> to vector<2x32xf32>
    %1304 = arith.addf %1303, %1296 : vector<2x32xf32>
    %1305 = arith.negf %1304 : vector<2x32xf32>
    %1306 = math.exp %1305 : vector<2x32xf32>
    %cst_425 = arith.constant 1.000000e+00 : f32
    %1307 = vector.broadcast %cst_425 : f32 to vector<2x32xf32>
    %1308 = arith.addf %1307, %1306 : vector<2x32xf32>
    %1309 = arith.divf %1307, %1308 : vector<2x32xf32>
    %1310 = vector.extract_strided_slice %1210 {offsets = [4, 0], sizes = [2, 32], strides = [1, 1]} : vector<16x32xf32> to vector<2x32xf32>
    %1311 = arith.addf %1310, %1299 : vector<2x32xf32>
    %1312 = arith.negf %1311 : vector<2x32xf32>
    %1313 = math.exp %1312 : vector<2x32xf32>
    %cst_426 = arith.constant 1.000000e+00 : f32
    %1314 = vector.broadcast %cst_426 : f32 to vector<2x32xf32>
    %1315 = arith.addf %1314, %1313 : vector<2x32xf32>
    %1316 = arith.divf %1314, %1315 : vector<2x32xf32>
    %1317 = vector.extract_strided_slice %1217 {offsets = [4, 0], sizes = [2, 32], strides = [1, 1]} : vector<16x32xf32> to vector<2x32xf32>
    %1318 = arith.mulf %1309, %1302 : vector<2x32xf32>
    %1319 = arith.addf %1317, %1318 : vector<2x32xf32>
    %1320 = math.tanh %1319 : vector<2x32xf32>
    %cst_427 = arith.constant 1.000000e+00 : f32
    %1321 = vector.broadcast %cst_427 : f32 to vector<2x32xf32>
    %1322 = arith.subf %1321, %1316 : vector<2x32xf32>
    %1323 = arith.mulf %1322, %1320 : vector<2x32xf32>
    %1324 = arith.mulf %1316, %1293 : vector<2x32xf32>
    %1325 = arith.addf %1323, %1324 : vector<2x32xf32>
    %cst_428 = arith.constant dense<0.000000e+00> : vector<2x32xf32>
    %1326 = tpu.matmul %1325, %1219, %cst_428 {dimension_numbers = #tpu.dot_dimension_numbers<[1], [0], [0], [1], [0, 0, 1, 1], [], []>} : vector<2x32xf32>, vector<32x32xf32>, vector<2x32xf32> -> vector<2x32xf32>
    %1327 = vector.broadcast %1225 : vector<1x32xf32> to vector<2x32xf32>
    %1328 = arith.addf %1326, %1327 : vector<2x32xf32>
    %cst_429 = arith.constant dense<0.000000e+00> : vector<2x32xf32>
    %1329 = tpu.matmul %1325, %1221, %cst_429 {dimension_numbers = #tpu.dot_dimension_numbers<[1], [0], [0], [1], [0, 0, 1, 1], [], []>} : vector<2x32xf32>, vector<32x32xf32>, vector<2x32xf32> -> vector<2x32xf32>
    %1330 = vector.broadcast %1227 : vector<1x32xf32> to vector<2x32xf32>
    %1331 = arith.addf %1329, %1330 : vector<2x32xf32>
    %cst_430 = arith.constant dense<0.000000e+00> : vector<2x32xf32>
    %1332 = tpu.matmul %1325, %1223, %cst_430 {dimension_numbers = #tpu.dot_dimension_numbers<[1], [0], [0], [1], [0, 0, 1, 1], [], []>} : vector<2x32xf32>, vector<32x32xf32>, vector<2x32xf32> -> vector<2x32xf32>
    %1333 = vector.broadcast %1229 : vector<1x32xf32> to vector<2x32xf32>
    %1334 = arith.addf %1332, %1333 : vector<2x32xf32>
    %1335 = vector.extract_strided_slice %1203 {offsets = [6, 0], sizes = [2, 32], strides = [1, 1]} : vector<16x32xf32> to vector<2x32xf32>
    %1336 = arith.addf %1335, %1328 : vector<2x32xf32>
    %1337 = arith.negf %1336 : vector<2x32xf32>
    %1338 = math.exp %1337 : vector<2x32xf32>
    %cst_431 = arith.constant 1.000000e+00 : f32
    %1339 = vector.broadcast %cst_431 : f32 to vector<2x32xf32>
    %1340 = arith.addf %1339, %1338 : vector<2x32xf32>
    %1341 = arith.divf %1339, %1340 : vector<2x32xf32>
    %1342 = vector.extract_strided_slice %1210 {offsets = [6, 0], sizes = [2, 32], strides = [1, 1]} : vector<16x32xf32> to vector<2x32xf32>
    %1343 = arith.addf %1342, %1331 : vector<2x32xf32>
    %1344 = arith.negf %1343 : vector<2x32xf32>
    %1345 = math.exp %1344 : vector<2x32xf32>
    %cst_432 = arith.constant 1.000000e+00 : f32
    %1346 = vector.broadcast %cst_432 : f32 to vector<2x32xf32>
    %1347 = arith.addf %1346, %1345 : vector<2x32xf32>
    %1348 = arith.divf %1346, %1347 : vector<2x32xf32>
    %1349 = vector.extract_strided_slice %1217 {offsets = [6, 0], sizes = [2, 32], strides = [1, 1]} : vector<16x32xf32> to vector<2x32xf32>
    %1350 = arith.mulf %1341, %1334 : vector<2x32xf32>
    %1351 = arith.addf %1349, %1350 : vector<2x32xf32>
    %1352 = math.tanh %1351 : vector<2x32xf32>
    %cst_433 = arith.constant 1.000000e+00 : f32
    %1353 = vector.broadcast %cst_433 : f32 to vector<2x32xf32>
    %1354 = arith.subf %1353, %1348 : vector<2x32xf32>
    %1355 = arith.mulf %1354, %1352 : vector<2x32xf32>
    %1356 = arith.mulf %1348, %1325 : vector<2x32xf32>
    %1357 = arith.addf %1355, %1356 : vector<2x32xf32>
    %cst_434 = arith.constant dense<0.000000e+00> : vector<2x32xf32>
    %1358 = tpu.matmul %1357, %1219, %cst_434 {dimension_numbers = #tpu.dot_dimension_numbers<[1], [0], [0], [1], [0, 0, 1, 1], [], []>} : vector<2x32xf32>, vector<32x32xf32>, vector<2x32xf32> -> vector<2x32xf32>
    %1359 = vector.broadcast %1225 : vector<1x32xf32> to vector<2x32xf32>
    %1360 = arith.addf %1358, %1359 : vector<2x32xf32>
    %cst_435 = arith.constant dense<0.000000e+00> : vector<2x32xf32>
    %1361 = tpu.matmul %1357, %1221, %cst_435 {dimension_numbers = #tpu.dot_dimension_numbers<[1], [0], [0], [1], [0, 0, 1, 1], [], []>} : vector<2x32xf32>, vector<32x32xf32>, vector<2x32xf32> -> vector<2x32xf32>
    %1362 = vector.broadcast %1227 : vector<1x32xf32> to vector<2x32xf32>
    %1363 = arith.addf %1361, %1362 : vector<2x32xf32>
    %cst_436 = arith.constant dense<0.000000e+00> : vector<2x32xf32>
    %1364 = tpu.matmul %1357, %1223, %cst_436 {dimension_numbers = #tpu.dot_dimension_numbers<[1], [0], [0], [1], [0, 0, 1, 1], [], []>} : vector<2x32xf32>, vector<32x32xf32>, vector<2x32xf32> -> vector<2x32xf32>
    %1365 = vector.broadcast %1229 : vector<1x32xf32> to vector<2x32xf32>
    %1366 = arith.addf %1364, %1365 : vector<2x32xf32>
    %1367 = vector.extract_strided_slice %1203 {offsets = [8, 0], sizes = [2, 32], strides = [1, 1]} : vector<16x32xf32> to vector<2x32xf32>
    %1368 = arith.addf %1367, %1360 : vector<2x32xf32>
    %1369 = arith.negf %1368 : vector<2x32xf32>
    %1370 = math.exp %1369 : vector<2x32xf32>
    %cst_437 = arith.constant 1.000000e+00 : f32
    %1371 = vector.broadcast %cst_437 : f32 to vector<2x32xf32>
    %1372 = arith.addf %1371, %1370 : vector<2x32xf32>
    %1373 = arith.divf %1371, %1372 : vector<2x32xf32>
    %1374 = vector.extract_strided_slice %1210 {offsets = [8, 0], sizes = [2, 32], strides = [1, 1]} : vector<16x32xf32> to vector<2x32xf32>
    %1375 = arith.addf %1374, %1363 : vector<2x32xf32>
    %1376 = arith.negf %1375 : vector<2x32xf32>
    %1377 = math.exp %1376 : vector<2x32xf32>
    %cst_438 = arith.constant 1.000000e+00 : f32
    %1378 = vector.broadcast %cst_438 : f32 to vector<2x32xf32>
    %1379 = arith.addf %1378, %1377 : vector<2x32xf32>
    %1380 = arith.divf %1378, %1379 : vector<2x32xf32>
    %1381 = vector.extract_strided_slice %1217 {offsets = [8, 0], sizes = [2, 32], strides = [1, 1]} : vector<16x32xf32> to vector<2x32xf32>
    %1382 = arith.mulf %1373, %1366 : vector<2x32xf32>
    %1383 = arith.addf %1381, %1382 : vector<2x32xf32>
    %1384 = math.tanh %1383 : vector<2x32xf32>
    %cst_439 = arith.constant 1.000000e+00 : f32
    %1385 = vector.broadcast %cst_439 : f32 to vector<2x32xf32>
    %1386 = arith.subf %1385, %1380 : vector<2x32xf32>
    %1387 = arith.mulf %1386, %1384 : vector<2x32xf32>
    %1388 = arith.mulf %1380, %1357 : vector<2x32xf32>
    %1389 = arith.addf %1387, %1388 : vector<2x32xf32>
    %cst_440 = arith.constant dense<0.000000e+00> : vector<2x32xf32>
    %1390 = tpu.matmul %1389, %1219, %cst_440 {dimension_numbers = #tpu.dot_dimension_numbers<[1], [0], [0], [1], [0, 0, 1, 1], [], []>} : vector<2x32xf32>, vector<32x32xf32>, vector<2x32xf32> -> vector<2x32xf32>
    %1391 = vector.broadcast %1225 : vector<1x32xf32> to vector<2x32xf32>
    %1392 = arith.addf %1390, %1391 : vector<2x32xf32>
    %cst_441 = arith.constant dense<0.000000e+00> : vector<2x32xf32>
    %1393 = tpu.matmul %1389, %1221, %cst_441 {dimension_numbers = #tpu.dot_dimension_numbers<[1], [0], [0], [1], [0, 0, 1, 1], [], []>} : vector<2x32xf32>, vector<32x32xf32>, vector<2x32xf32> -> vector<2x32xf32>
    %1394 = vector.broadcast %1227 : vector<1x32xf32> to vector<2x32xf32>
    %1395 = arith.addf %1393, %1394 : vector<2x32xf32>
    %cst_442 = arith.constant dense<0.000000e+00> : vector<2x32xf32>
    %1396 = tpu.matmul %1389, %1223, %cst_442 {dimension_numbers = #tpu.dot_dimension_numbers<[1], [0], [0], [1], [0, 0, 1, 1], [], []>} : vector<2x32xf32>, vector<32x32xf32>, vector<2x32xf32> -> vector<2x32xf32>
    %1397 = vector.broadcast %1229 : vector<1x32xf32> to vector<2x32xf32>
    %1398 = arith.addf %1396, %1397 : vector<2x32xf32>
    %1399 = vector.extract_strided_slice %1203 {offsets = [10, 0], sizes = [2, 32], strides = [1, 1]} : vector<16x32xf32> to vector<2x32xf32>
    %1400 = arith.addf %1399, %1392 : vector<2x32xf32>
    %1401 = arith.negf %1400 : vector<2x32xf32>
    %1402 = math.exp %1401 : vector<2x32xf32>
    %cst_443 = arith.constant 1.000000e+00 : f32
    %1403 = vector.broadcast %cst_443 : f32 to vector<2x32xf32>
    %1404 = arith.addf %1403, %1402 : vector<2x32xf32>
    %1405 = arith.divf %1403, %1404 : vector<2x32xf32>
    %1406 = vector.extract_strided_slice %1210 {offsets = [10, 0], sizes = [2, 32], strides = [1, 1]} : vector<16x32xf32> to vector<2x32xf32>
    %1407 = arith.addf %1406, %1395 : vector<2x32xf32>
    %1408 = arith.negf %1407 : vector<2x32xf32>
    %1409 = math.exp %1408 : vector<2x32xf32>
    %cst_444 = arith.constant 1.000000e+00 : f32
    %1410 = vector.broadcast %cst_444 : f32 to vector<2x32xf32>
    %1411 = arith.addf %1410, %1409 : vector<2x32xf32>
    %1412 = arith.divf %1410, %1411 : vector<2x32xf32>
    %1413 = vector.extract_strided_slice %1217 {offsets = [10, 0], sizes = [2, 32], strides = [1, 1]} : vector<16x32xf32> to vector<2x32xf32>
    %1414 = arith.mulf %1405, %1398 : vector<2x32xf32>
    %1415 = arith.addf %1413, %1414 : vector<2x32xf32>
    %1416 = math.tanh %1415 : vector<2x32xf32>
    %cst_445 = arith.constant 1.000000e+00 : f32
    %1417 = vector.broadcast %cst_445 : f32 to vector<2x32xf32>
    %1418 = arith.subf %1417, %1412 : vector<2x32xf32>
    %1419 = arith.mulf %1418, %1416 : vector<2x32xf32>
    %1420 = arith.mulf %1412, %1389 : vector<2x32xf32>
    %1421 = arith.addf %1419, %1420 : vector<2x32xf32>
    %cst_446 = arith.constant dense<0.000000e+00> : vector<2x32xf32>
    %1422 = tpu.matmul %1421, %1219, %cst_446 {dimension_numbers = #tpu.dot_dimension_numbers<[1], [0], [0], [1], [0, 0, 1, 1], [], []>} : vector<2x32xf32>, vector<32x32xf32>, vector<2x32xf32> -> vector<2x32xf32>
    %1423 = vector.broadcast %1225 : vector<1x32xf32> to vector<2x32xf32>
    %1424 = arith.addf %1422, %1423 : vector<2x32xf32>
    %cst_447 = arith.constant dense<0.000000e+00> : vector<2x32xf32>
    %1425 = tpu.matmul %1421, %1221, %cst_447 {dimension_numbers = #tpu.dot_dimension_numbers<[1], [0], [0], [1], [0, 0, 1, 1], [], []>} : vector<2x32xf32>, vector<32x32xf32>, vector<2x32xf32> -> vector<2x32xf32>
    %1426 = vector.broadcast %1227 : vector<1x32xf32> to vector<2x32xf32>
    %1427 = arith.addf %1425, %1426 : vector<2x32xf32>
    %cst_448 = arith.constant dense<0.000000e+00> : vector<2x32xf32>
    %1428 = tpu.matmul %1421, %1223, %cst_448 {dimension_numbers = #tpu.dot_dimension_numbers<[1], [0], [0], [1], [0, 0, 1, 1], [], []>} : vector<2x32xf32>, vector<32x32xf32>, vector<2x32xf32> -> vector<2x32xf32>
    %1429 = vector.broadcast %1229 : vector<1x32xf32> to vector<2x32xf32>
    %1430 = arith.addf %1428, %1429 : vector<2x32xf32>
    %1431 = vector.extract_strided_slice %1203 {offsets = [12, 0], sizes = [2, 32], strides = [1, 1]} : vector<16x32xf32> to vector<2x32xf32>
    %1432 = arith.addf %1431, %1424 : vector<2x32xf32>
    %1433 = arith.negf %1432 : vector<2x32xf32>
    %1434 = math.exp %1433 : vector<2x32xf32>
    %cst_449 = arith.constant 1.000000e+00 : f32
    %1435 = vector.broadcast %cst_449 : f32 to vector<2x32xf32>
    %1436 = arith.addf %1435, %1434 : vector<2x32xf32>
    %1437 = arith.divf %1435, %1436 : vector<2x32xf32>
    %1438 = vector.extract_strided_slice %1210 {offsets = [12, 0], sizes = [2, 32], strides = [1, 1]} : vector<16x32xf32> to vector<2x32xf32>
    %1439 = arith.addf %1438, %1427 : vector<2x32xf32>
    %1440 = arith.negf %1439 : vector<2x32xf32>
    %1441 = math.exp %1440 : vector<2x32xf32>
    %cst_450 = arith.constant 1.000000e+00 : f32
    %1442 = vector.broadcast %cst_450 : f32 to vector<2x32xf32>
    %1443 = arith.addf %1442, %1441 : vector<2x32xf32>
    %1444 = arith.divf %1442, %1443 : vector<2x32xf32>
    %1445 = vector.extract_strided_slice %1217 {offsets = [12, 0], sizes = [2, 32], strides = [1, 1]} : vector<16x32xf32> to vector<2x32xf32>
    %1446 = arith.mulf %1437, %1430 : vector<2x32xf32>
    %1447 = arith.addf %1445, %1446 : vector<2x32xf32>
    %1448 = math.tanh %1447 : vector<2x32xf32>
    %cst_451 = arith.constant 1.000000e+00 : f32
    %1449 = vector.broadcast %cst_451 : f32 to vector<2x32xf32>
    %1450 = arith.subf %1449, %1444 : vector<2x32xf32>
    %1451 = arith.mulf %1450, %1448 : vector<2x32xf32>
    %1452 = arith.mulf %1444, %1421 : vector<2x32xf32>
    %1453 = arith.addf %1451, %1452 : vector<2x32xf32>
    %cst_452 = arith.constant dense<0.000000e+00> : vector<2x32xf32>
    %1454 = tpu.matmul %1453, %1219, %cst_452 {dimension_numbers = #tpu.dot_dimension_numbers<[1], [0], [0], [1], [0, 0, 1, 1], [], []>} : vector<2x32xf32>, vector<32x32xf32>, vector<2x32xf32> -> vector<2x32xf32>
    %1455 = vector.broadcast %1225 : vector<1x32xf32> to vector<2x32xf32>
    %1456 = arith.addf %1454, %1455 : vector<2x32xf32>
    %cst_453 = arith.constant dense<0.000000e+00> : vector<2x32xf32>
    %1457 = tpu.matmul %1453, %1221, %cst_453 {dimension_numbers = #tpu.dot_dimension_numbers<[1], [0], [0], [1], [0, 0, 1, 1], [], []>} : vector<2x32xf32>, vector<32x32xf32>, vector<2x32xf32> -> vector<2x32xf32>
    %1458 = vector.broadcast %1227 : vector<1x32xf32> to vector<2x32xf32>
    %1459 = arith.addf %1457, %1458 : vector<2x32xf32>
    %cst_454 = arith.constant dense<0.000000e+00> : vector<2x32xf32>
    %1460 = tpu.matmul %1453, %1223, %cst_454 {dimension_numbers = #tpu.dot_dimension_numbers<[1], [0], [0], [1], [0, 0, 1, 1], [], []>} : vector<2x32xf32>, vector<32x32xf32>, vector<2x32xf32> -> vector<2x32xf32>
    %1461 = vector.broadcast %1229 : vector<1x32xf32> to vector<2x32xf32>
    %1462 = arith.addf %1460, %1461 : vector<2x32xf32>
    %1463 = vector.extract_strided_slice %1203 {offsets = [14, 0], sizes = [2, 32], strides = [1, 1]} : vector<16x32xf32> to vector<2x32xf32>
    %1464 = arith.addf %1463, %1456 : vector<2x32xf32>
    %1465 = arith.negf %1464 : vector<2x32xf32>
    %1466 = math.exp %1465 : vector<2x32xf32>
    %cst_455 = arith.constant 1.000000e+00 : f32
    %1467 = vector.broadcast %cst_455 : f32 to vector<2x32xf32>
    %1468 = arith.addf %1467, %1466 : vector<2x32xf32>
    %1469 = arith.divf %1467, %1468 : vector<2x32xf32>
    %1470 = vector.extract_strided_slice %1210 {offsets = [14, 0], sizes = [2, 32], strides = [1, 1]} : vector<16x32xf32> to vector<2x32xf32>
    %1471 = arith.addf %1470, %1459 : vector<2x32xf32>
    %1472 = arith.negf %1471 : vector<2x32xf32>
    %1473 = math.exp %1472 : vector<2x32xf32>
    %cst_456 = arith.constant 1.000000e+00 : f32
    %1474 = vector.broadcast %cst_456 : f32 to vector<2x32xf32>
    %1475 = arith.addf %1474, %1473 : vector<2x32xf32>
    %1476 = arith.divf %1474, %1475 : vector<2x32xf32>
    %1477 = vector.extract_strided_slice %1217 {offsets = [14, 0], sizes = [2, 32], strides = [1, 1]} : vector<16x32xf32> to vector<2x32xf32>
    %1478 = arith.mulf %1469, %1462 : vector<2x32xf32>
    %1479 = arith.addf %1477, %1478 : vector<2x32xf32>
    %1480 = math.tanh %1479 : vector<2x32xf32>
    %cst_457 = arith.constant 1.000000e+00 : f32
    %1481 = vector.broadcast %cst_457 : f32 to vector<2x32xf32>
    %1482 = arith.subf %1481, %1476 : vector<2x32xf32>
    %1483 = arith.mulf %1482, %1480 : vector<2x32xf32>
    %1484 = arith.mulf %1476, %1453 : vector<2x32xf32>
    %1485 = arith.addf %1483, %1484 : vector<2x32xf32>
    %c5 = arith.constant 5 : index
    %c0_458 = arith.constant 0 : index
    %c0_459 = arith.constant 0 : index
    %1486 = vector.load %arg1[%c5, %c0_458, %c0_459] : memref<6x2x32xf32, #tpu.memory_space<vmem>>, vector<1x2x32xf32>
    %1487 = vector.shape_cast %1486 : vector<1x2x32xf32> to vector<2x32xf32>
    %c0_460 = arith.constant 0 : index
    %c0_461 = arith.constant 0 : index
    %c0_462 = arith.constant 0 : index
    %1488 = vector.load %arg22[%c0_460, %c0_461, %c0_462] : memref<3x64x32xf32, #tpu.memory_space<vmem>>, vector<1x64x32xf32>
    %1489 = vector.shape_cast %1488 : vector<1x64x32xf32> to vector<64x32xf32>
    %cst_463 = arith.constant dense<0.000000e+00> : vector<16x32xf32>
    %1490 = tpu.matmul %1194, %1489, %cst_463 {dimension_numbers = #tpu.dot_dimension_numbers<[1], [0], [0], [1], [0, 0, 1, 1], [], []>} : vector<16x64xf32>, vector<64x32xf32>, vector<16x32xf32> -> vector<16x32xf32>
    %c0_464 = arith.constant 0 : index
    %c0_465 = arith.constant 0 : index
    %c0_466 = arith.constant 0 : index
    %1491 = vector.load %arg24[%c0_464, %c0_465, %c0_466] : memref<3x1x32xf32, #tpu.memory_space<vmem>>, vector<1x1x32xf32>
    %1492 = vector.shape_cast %1491 : vector<1x1x32xf32> to vector<1x32xf32>
    %1493 = vector.broadcast %1492 : vector<1x32xf32> to vector<16x32xf32>
    %1494 = arith.addf %1490, %1493 : vector<16x32xf32>
    %c1_467 = arith.constant 1 : index
    %c0_468 = arith.constant 0 : index
    %c0_469 = arith.constant 0 : index
    %1495 = vector.load %arg22[%c1_467, %c0_468, %c0_469] : memref<3x64x32xf32, #tpu.memory_space<vmem>>, vector<1x64x32xf32>
    %1496 = vector.shape_cast %1495 : vector<1x64x32xf32> to vector<64x32xf32>
    %cst_470 = arith.constant dense<0.000000e+00> : vector<16x32xf32>
    %1497 = tpu.matmul %1194, %1496, %cst_470 {dimension_numbers = #tpu.dot_dimension_numbers<[1], [0], [0], [1], [0, 0, 1, 1], [], []>} : vector<16x64xf32>, vector<64x32xf32>, vector<16x32xf32> -> vector<16x32xf32>
    %c1_471 = arith.constant 1 : index
    %c0_472 = arith.constant 0 : index
    %c0_473 = arith.constant 0 : index
    %1498 = vector.load %arg24[%c1_471, %c0_472, %c0_473] : memref<3x1x32xf32, #tpu.memory_space<vmem>>, vector<1x1x32xf32>
    %1499 = vector.shape_cast %1498 : vector<1x1x32xf32> to vector<1x32xf32>
    %1500 = vector.broadcast %1499 : vector<1x32xf32> to vector<16x32xf32>
    %1501 = arith.addf %1497, %1500 : vector<16x32xf32>
    %c2_474 = arith.constant 2 : index
    %c0_475 = arith.constant 0 : index
    %c0_476 = arith.constant 0 : index
    %1502 = vector.load %arg22[%c2_474, %c0_475, %c0_476] : memref<3x64x32xf32, #tpu.memory_space<vmem>>, vector<1x64x32xf32>
    %1503 = vector.shape_cast %1502 : vector<1x64x32xf32> to vector<64x32xf32>
    %cst_477 = arith.constant dense<0.000000e+00> : vector<16x32xf32>
    %1504 = tpu.matmul %1194, %1503, %cst_477 {dimension_numbers = #tpu.dot_dimension_numbers<[1], [0], [0], [1], [0, 0, 1, 1], [], []>} : vector<16x64xf32>, vector<64x32xf32>, vector<16x32xf32> -> vector<16x32xf32>
    %c2_478 = arith.constant 2 : index
    %c0_479 = arith.constant 0 : index
    %c0_480 = arith.constant 0 : index
    %1505 = vector.load %arg24[%c2_478, %c0_479, %c0_480] : memref<3x1x32xf32, #tpu.memory_space<vmem>>, vector<1x1x32xf32>
    %1506 = vector.shape_cast %1505 : vector<1x1x32xf32> to vector<1x32xf32>
    %1507 = vector.broadcast %1506 : vector<1x32xf32> to vector<16x32xf32>
    %1508 = arith.addf %1504, %1507 : vector<16x32xf32>
    %c0_481 = arith.constant 0 : index
    %c0_482 = arith.constant 0 : index
    %c0_483 = arith.constant 0 : index
    %1509 = vector.load %arg23[%c0_481, %c0_482, %c0_483] : memref<3x32x32xf32, #tpu.memory_space<vmem>>, vector<1x32x32xf32>
    %1510 = vector.shape_cast %1509 : vector<1x32x32xf32> to vector<32x32xf32>
    %c1_484 = arith.constant 1 : index
    %c0_485 = arith.constant 0 : index
    %c0_486 = arith.constant 0 : index
    %1511 = vector.load %arg23[%c1_484, %c0_485, %c0_486] : memref<3x32x32xf32, #tpu.memory_space<vmem>>, vector<1x32x32xf32>
    %1512 = vector.shape_cast %1511 : vector<1x32x32xf32> to vector<32x32xf32>
    %c2_487 = arith.constant 2 : index
    %c0_488 = arith.constant 0 : index
    %c0_489 = arith.constant 0 : index
    %1513 = vector.load %arg23[%c2_487, %c0_488, %c0_489] : memref<3x32x32xf32, #tpu.memory_space<vmem>>, vector<1x32x32xf32>
    %1514 = vector.shape_cast %1513 : vector<1x32x32xf32> to vector<32x32xf32>
    %c0_490 = arith.constant 0 : index
    %c0_491 = arith.constant 0 : index
    %c0_492 = arith.constant 0 : index
    %1515 = vector.load %arg25[%c0_490, %c0_491, %c0_492] : memref<3x1x32xf32, #tpu.memory_space<vmem>>, vector<1x1x32xf32>
    %1516 = vector.shape_cast %1515 : vector<1x1x32xf32> to vector<1x32xf32>
    %c1_493 = arith.constant 1 : index
    %c0_494 = arith.constant 0 : index
    %c0_495 = arith.constant 0 : index
    %1517 = vector.load %arg25[%c1_493, %c0_494, %c0_495] : memref<3x1x32xf32, #tpu.memory_space<vmem>>, vector<1x1x32xf32>
    %1518 = vector.shape_cast %1517 : vector<1x1x32xf32> to vector<1x32xf32>
    %c2_496 = arith.constant 2 : index
    %c0_497 = arith.constant 0 : index
    %c0_498 = arith.constant 0 : index
    %1519 = vector.load %arg25[%c2_496, %c0_497, %c0_498] : memref<3x1x32xf32, #tpu.memory_space<vmem>>, vector<1x1x32xf32>
    %1520 = vector.shape_cast %1519 : vector<1x1x32xf32> to vector<1x32xf32>
    %cst_499 = arith.constant dense<0.000000e+00> : vector<2x32xf32>
    %1521 = tpu.matmul %1487, %1510, %cst_499 {dimension_numbers = #tpu.dot_dimension_numbers<[1], [0], [0], [1], [0, 0, 1, 1], [], []>} : vector<2x32xf32>, vector<32x32xf32>, vector<2x32xf32> -> vector<2x32xf32>
    %1522 = vector.broadcast %1516 : vector<1x32xf32> to vector<2x32xf32>
    %1523 = arith.addf %1521, %1522 : vector<2x32xf32>
    %cst_500 = arith.constant dense<0.000000e+00> : vector<2x32xf32>
    %1524 = tpu.matmul %1487, %1512, %cst_500 {dimension_numbers = #tpu.dot_dimension_numbers<[1], [0], [0], [1], [0, 0, 1, 1], [], []>} : vector<2x32xf32>, vector<32x32xf32>, vector<2x32xf32> -> vector<2x32xf32>
    %1525 = vector.broadcast %1518 : vector<1x32xf32> to vector<2x32xf32>
    %1526 = arith.addf %1524, %1525 : vector<2x32xf32>
    %cst_501 = arith.constant dense<0.000000e+00> : vector<2x32xf32>
    %1527 = tpu.matmul %1487, %1514, %cst_501 {dimension_numbers = #tpu.dot_dimension_numbers<[1], [0], [0], [1], [0, 0, 1, 1], [], []>} : vector<2x32xf32>, vector<32x32xf32>, vector<2x32xf32> -> vector<2x32xf32>
    %1528 = vector.broadcast %1520 : vector<1x32xf32> to vector<2x32xf32>
    %1529 = arith.addf %1527, %1528 : vector<2x32xf32>
    %1530 = vector.extract_strided_slice %1494 {offsets = [14, 0], sizes = [2, 32], strides = [1, 1]} : vector<16x32xf32> to vector<2x32xf32>
    %1531 = arith.addf %1530, %1523 : vector<2x32xf32>
    %1532 = arith.negf %1531 : vector<2x32xf32>
    %1533 = math.exp %1532 : vector<2x32xf32>
    %cst_502 = arith.constant 1.000000e+00 : f32
    %1534 = vector.broadcast %cst_502 : f32 to vector<2x32xf32>
    %1535 = arith.addf %1534, %1533 : vector<2x32xf32>
    %1536 = arith.divf %1534, %1535 : vector<2x32xf32>
    %1537 = vector.extract_strided_slice %1501 {offsets = [14, 0], sizes = [2, 32], strides = [1, 1]} : vector<16x32xf32> to vector<2x32xf32>
    %1538 = arith.addf %1537, %1526 : vector<2x32xf32>
    %1539 = arith.negf %1538 : vector<2x32xf32>
    %1540 = math.exp %1539 : vector<2x32xf32>
    %cst_503 = arith.constant 1.000000e+00 : f32
    %1541 = vector.broadcast %cst_503 : f32 to vector<2x32xf32>
    %1542 = arith.addf %1541, %1540 : vector<2x32xf32>
    %1543 = arith.divf %1541, %1542 : vector<2x32xf32>
    %1544 = vector.extract_strided_slice %1508 {offsets = [14, 0], sizes = [2, 32], strides = [1, 1]} : vector<16x32xf32> to vector<2x32xf32>
    %1545 = arith.mulf %1536, %1529 : vector<2x32xf32>
    %1546 = arith.addf %1544, %1545 : vector<2x32xf32>
    %1547 = math.tanh %1546 : vector<2x32xf32>
    %cst_504 = arith.constant 1.000000e+00 : f32
    %1548 = vector.broadcast %cst_504 : f32 to vector<2x32xf32>
    %1549 = arith.subf %1548, %1543 : vector<2x32xf32>
    %1550 = arith.mulf %1549, %1547 : vector<2x32xf32>
    %1551 = arith.mulf %1543, %1487 : vector<2x32xf32>
    %1552 = arith.addf %1550, %1551 : vector<2x32xf32>
    %cst_505 = arith.constant dense<0.000000e+00> : vector<2x32xf32>
    %1553 = tpu.matmul %1552, %1510, %cst_505 {dimension_numbers = #tpu.dot_dimension_numbers<[1], [0], [0], [1], [0, 0, 1, 1], [], []>} : vector<2x32xf32>, vector<32x32xf32>, vector<2x32xf32> -> vector<2x32xf32>
    %1554 = vector.broadcast %1516 : vector<1x32xf32> to vector<2x32xf32>
    %1555 = arith.addf %1553, %1554 : vector<2x32xf32>
    %cst_506 = arith.constant dense<0.000000e+00> : vector<2x32xf32>
    %1556 = tpu.matmul %1552, %1512, %cst_506 {dimension_numbers = #tpu.dot_dimension_numbers<[1], [0], [0], [1], [0, 0, 1, 1], [], []>} : vector<2x32xf32>, vector<32x32xf32>, vector<2x32xf32> -> vector<2x32xf32>
    %1557 = vector.broadcast %1518 : vector<1x32xf32> to vector<2x32xf32>
    %1558 = arith.addf %1556, %1557 : vector<2x32xf32>
    %cst_507 = arith.constant dense<0.000000e+00> : vector<2x32xf32>
    %1559 = tpu.matmul %1552, %1514, %cst_507 {dimension_numbers = #tpu.dot_dimension_numbers<[1], [0], [0], [1], [0, 0, 1, 1], [], []>} : vector<2x32xf32>, vector<32x32xf32>, vector<2x32xf32> -> vector<2x32xf32>
    %1560 = vector.broadcast %1520 : vector<1x32xf32> to vector<2x32xf32>
    %1561 = arith.addf %1559, %1560 : vector<2x32xf32>
    %1562 = vector.extract_strided_slice %1494 {offsets = [12, 0], sizes = [2, 32], strides = [1, 1]} : vector<16x32xf32> to vector<2x32xf32>
    %1563 = arith.addf %1562, %1555 : vector<2x32xf32>
    %1564 = arith.negf %1563 : vector<2x32xf32>
    %1565 = math.exp %1564 : vector<2x32xf32>
    %cst_508 = arith.constant 1.000000e+00 : f32
    %1566 = vector.broadcast %cst_508 : f32 to vector<2x32xf32>
    %1567 = arith.addf %1566, %1565 : vector<2x32xf32>
    %1568 = arith.divf %1566, %1567 : vector<2x32xf32>
    %1569 = vector.extract_strided_slice %1501 {offsets = [12, 0], sizes = [2, 32], strides = [1, 1]} : vector<16x32xf32> to vector<2x32xf32>
    %1570 = arith.addf %1569, %1558 : vector<2x32xf32>
    %1571 = arith.negf %1570 : vector<2x32xf32>
    %1572 = math.exp %1571 : vector<2x32xf32>
    %cst_509 = arith.constant 1.000000e+00 : f32
    %1573 = vector.broadcast %cst_509 : f32 to vector<2x32xf32>
    %1574 = arith.addf %1573, %1572 : vector<2x32xf32>
    %1575 = arith.divf %1573, %1574 : vector<2x32xf32>
    %1576 = vector.extract_strided_slice %1508 {offsets = [12, 0], sizes = [2, 32], strides = [1, 1]} : vector<16x32xf32> to vector<2x32xf32>
    %1577 = arith.mulf %1568, %1561 : vector<2x32xf32>
    %1578 = arith.addf %1576, %1577 : vector<2x32xf32>
    %1579 = math.tanh %1578 : vector<2x32xf32>
    %cst_510 = arith.constant 1.000000e+00 : f32
    %1580 = vector.broadcast %cst_510 : f32 to vector<2x32xf32>
    %1581 = arith.subf %1580, %1575 : vector<2x32xf32>
    %1582 = arith.mulf %1581, %1579 : vector<2x32xf32>
    %1583 = arith.mulf %1575, %1552 : vector<2x32xf32>
    %1584 = arith.addf %1582, %1583 : vector<2x32xf32>
    %cst_511 = arith.constant dense<0.000000e+00> : vector<2x32xf32>
    %1585 = tpu.matmul %1584, %1510, %cst_511 {dimension_numbers = #tpu.dot_dimension_numbers<[1], [0], [0], [1], [0, 0, 1, 1], [], []>} : vector<2x32xf32>, vector<32x32xf32>, vector<2x32xf32> -> vector<2x32xf32>
    %1586 = vector.broadcast %1516 : vector<1x32xf32> to vector<2x32xf32>
    %1587 = arith.addf %1585, %1586 : vector<2x32xf32>
    %cst_512 = arith.constant dense<0.000000e+00> : vector<2x32xf32>
    %1588 = tpu.matmul %1584, %1512, %cst_512 {dimension_numbers = #tpu.dot_dimension_numbers<[1], [0], [0], [1], [0, 0, 1, 1], [], []>} : vector<2x32xf32>, vector<32x32xf32>, vector<2x32xf32> -> vector<2x32xf32>
    %1589 = vector.broadcast %1518 : vector<1x32xf32> to vector<2x32xf32>
    %1590 = arith.addf %1588, %1589 : vector<2x32xf32>
    %cst_513 = arith.constant dense<0.000000e+00> : vector<2x32xf32>
    %1591 = tpu.matmul %1584, %1514, %cst_513 {dimension_numbers = #tpu.dot_dimension_numbers<[1], [0], [0], [1], [0, 0, 1, 1], [], []>} : vector<2x32xf32>, vector<32x32xf32>, vector<2x32xf32> -> vector<2x32xf32>
    %1592 = vector.broadcast %1520 : vector<1x32xf32> to vector<2x32xf32>
    %1593 = arith.addf %1591, %1592 : vector<2x32xf32>
    %1594 = vector.extract_strided_slice %1494 {offsets = [10, 0], sizes = [2, 32], strides = [1, 1]} : vector<16x32xf32> to vector<2x32xf32>
    %1595 = arith.addf %1594, %1587 : vector<2x32xf32>
    %1596 = arith.negf %1595 : vector<2x32xf32>
    %1597 = math.exp %1596 : vector<2x32xf32>
    %cst_514 = arith.constant 1.000000e+00 : f32
    %1598 = vector.broadcast %cst_514 : f32 to vector<2x32xf32>
    %1599 = arith.addf %1598, %1597 : vector<2x32xf32>
    %1600 = arith.divf %1598, %1599 : vector<2x32xf32>
    %1601 = vector.extract_strided_slice %1501 {offsets = [10, 0], sizes = [2, 32], strides = [1, 1]} : vector<16x32xf32> to vector<2x32xf32>
    %1602 = arith.addf %1601, %1590 : vector<2x32xf32>
    %1603 = arith.negf %1602 : vector<2x32xf32>
    %1604 = math.exp %1603 : vector<2x32xf32>
    %cst_515 = arith.constant 1.000000e+00 : f32
    %1605 = vector.broadcast %cst_515 : f32 to vector<2x32xf32>
    %1606 = arith.addf %1605, %1604 : vector<2x32xf32>
    %1607 = arith.divf %1605, %1606 : vector<2x32xf32>
    %1608 = vector.extract_strided_slice %1508 {offsets = [10, 0], sizes = [2, 32], strides = [1, 1]} : vector<16x32xf32> to vector<2x32xf32>
    %1609 = arith.mulf %1600, %1593 : vector<2x32xf32>
    %1610 = arith.addf %1608, %1609 : vector<2x32xf32>
    %1611 = math.tanh %1610 : vector<2x32xf32>
    %cst_516 = arith.constant 1.000000e+00 : f32
    %1612 = vector.broadcast %cst_516 : f32 to vector<2x32xf32>
    %1613 = arith.subf %1612, %1607 : vector<2x32xf32>
    %1614 = arith.mulf %1613, %1611 : vector<2x32xf32>
    %1615 = arith.mulf %1607, %1584 : vector<2x32xf32>
    %1616 = arith.addf %1614, %1615 : vector<2x32xf32>
    %cst_517 = arith.constant dense<0.000000e+00> : vector<2x32xf32>
    %1617 = tpu.matmul %1616, %1510, %cst_517 {dimension_numbers = #tpu.dot_dimension_numbers<[1], [0], [0], [1], [0, 0, 1, 1], [], []>} : vector<2x32xf32>, vector<32x32xf32>, vector<2x32xf32> -> vector<2x32xf32>
    %1618 = vector.broadcast %1516 : vector<1x32xf32> to vector<2x32xf32>
    %1619 = arith.addf %1617, %1618 : vector<2x32xf32>
    %cst_518 = arith.constant dense<0.000000e+00> : vector<2x32xf32>
    %1620 = tpu.matmul %1616, %1512, %cst_518 {dimension_numbers = #tpu.dot_dimension_numbers<[1], [0], [0], [1], [0, 0, 1, 1], [], []>} : vector<2x32xf32>, vector<32x32xf32>, vector<2x32xf32> -> vector<2x32xf32>
    %1621 = vector.broadcast %1518 : vector<1x32xf32> to vector<2x32xf32>
    %1622 = arith.addf %1620, %1621 : vector<2x32xf32>
    %cst_519 = arith.constant dense<0.000000e+00> : vector<2x32xf32>
    %1623 = tpu.matmul %1616, %1514, %cst_519 {dimension_numbers = #tpu.dot_dimension_numbers<[1], [0], [0], [1], [0, 0, 1, 1], [], []>} : vector<2x32xf32>, vector<32x32xf32>, vector<2x32xf32> -> vector<2x32xf32>
    %1624 = vector.broadcast %1520 : vector<1x32xf32> to vector<2x32xf32>
    %1625 = arith.addf %1623, %1624 : vector<2x32xf32>
    %1626 = vector.extract_strided_slice %1494 {offsets = [8, 0], sizes = [2, 32], strides = [1, 1]} : vector<16x32xf32> to vector<2x32xf32>
    %1627 = arith.addf %1626, %1619 : vector<2x32xf32>
    %1628 = arith.negf %1627 : vector<2x32xf32>
    %1629 = math.exp %1628 : vector<2x32xf32>
    %cst_520 = arith.constant 1.000000e+00 : f32
    %1630 = vector.broadcast %cst_520 : f32 to vector<2x32xf32>
    %1631 = arith.addf %1630, %1629 : vector<2x32xf32>
    %1632 = arith.divf %1630, %1631 : vector<2x32xf32>
    %1633 = vector.extract_strided_slice %1501 {offsets = [8, 0], sizes = [2, 32], strides = [1, 1]} : vector<16x32xf32> to vector<2x32xf32>
    %1634 = arith.addf %1633, %1622 : vector<2x32xf32>
    %1635 = arith.negf %1634 : vector<2x32xf32>
    %1636 = math.exp %1635 : vector<2x32xf32>
    %cst_521 = arith.constant 1.000000e+00 : f32
    %1637 = vector.broadcast %cst_521 : f32 to vector<2x32xf32>
    %1638 = arith.addf %1637, %1636 : vector<2x32xf32>
    %1639 = arith.divf %1637, %1638 : vector<2x32xf32>
    %1640 = vector.extract_strided_slice %1508 {offsets = [8, 0], sizes = [2, 32], strides = [1, 1]} : vector<16x32xf32> to vector<2x32xf32>
    %1641 = arith.mulf %1632, %1625 : vector<2x32xf32>
    %1642 = arith.addf %1640, %1641 : vector<2x32xf32>
    %1643 = math.tanh %1642 : vector<2x32xf32>
    %cst_522 = arith.constant 1.000000e+00 : f32
    %1644 = vector.broadcast %cst_522 : f32 to vector<2x32xf32>
    %1645 = arith.subf %1644, %1639 : vector<2x32xf32>
    %1646 = arith.mulf %1645, %1643 : vector<2x32xf32>
    %1647 = arith.mulf %1639, %1616 : vector<2x32xf32>
    %1648 = arith.addf %1646, %1647 : vector<2x32xf32>
    %cst_523 = arith.constant dense<0.000000e+00> : vector<2x32xf32>
    %1649 = tpu.matmul %1648, %1510, %cst_523 {dimension_numbers = #tpu.dot_dimension_numbers<[1], [0], [0], [1], [0, 0, 1, 1], [], []>} : vector<2x32xf32>, vector<32x32xf32>, vector<2x32xf32> -> vector<2x32xf32>
    %1650 = vector.broadcast %1516 : vector<1x32xf32> to vector<2x32xf32>
    %1651 = arith.addf %1649, %1650 : vector<2x32xf32>
    %cst_524 = arith.constant dense<0.000000e+00> : vector<2x32xf32>
    %1652 = tpu.matmul %1648, %1512, %cst_524 {dimension_numbers = #tpu.dot_dimension_numbers<[1], [0], [0], [1], [0, 0, 1, 1], [], []>} : vector<2x32xf32>, vector<32x32xf32>, vector<2x32xf32> -> vector<2x32xf32>
    %1653 = vector.broadcast %1518 : vector<1x32xf32> to vector<2x32xf32>
    %1654 = arith.addf %1652, %1653 : vector<2x32xf32>
    %cst_525 = arith.constant dense<0.000000e+00> : vector<2x32xf32>
    %1655 = tpu.matmul %1648, %1514, %cst_525 {dimension_numbers = #tpu.dot_dimension_numbers<[1], [0], [0], [1], [0, 0, 1, 1], [], []>} : vector<2x32xf32>, vector<32x32xf32>, vector<2x32xf32> -> vector<2x32xf32>
    %1656 = vector.broadcast %1520 : vector<1x32xf32> to vector<2x32xf32>
    %1657 = arith.addf %1655, %1656 : vector<2x32xf32>
    %1658 = vector.extract_strided_slice %1494 {offsets = [6, 0], sizes = [2, 32], strides = [1, 1]} : vector<16x32xf32> to vector<2x32xf32>
    %1659 = arith.addf %1658, %1651 : vector<2x32xf32>
    %1660 = arith.negf %1659 : vector<2x32xf32>
    %1661 = math.exp %1660 : vector<2x32xf32>
    %cst_526 = arith.constant 1.000000e+00 : f32
    %1662 = vector.broadcast %cst_526 : f32 to vector<2x32xf32>
    %1663 = arith.addf %1662, %1661 : vector<2x32xf32>
    %1664 = arith.divf %1662, %1663 : vector<2x32xf32>
    %1665 = vector.extract_strided_slice %1501 {offsets = [6, 0], sizes = [2, 32], strides = [1, 1]} : vector<16x32xf32> to vector<2x32xf32>
    %1666 = arith.addf %1665, %1654 : vector<2x32xf32>
    %1667 = arith.negf %1666 : vector<2x32xf32>
    %1668 = math.exp %1667 : vector<2x32xf32>
    %cst_527 = arith.constant 1.000000e+00 : f32
    %1669 = vector.broadcast %cst_527 : f32 to vector<2x32xf32>
    %1670 = arith.addf %1669, %1668 : vector<2x32xf32>
    %1671 = arith.divf %1669, %1670 : vector<2x32xf32>
    %1672 = vector.extract_strided_slice %1508 {offsets = [6, 0], sizes = [2, 32], strides = [1, 1]} : vector<16x32xf32> to vector<2x32xf32>
    %1673 = arith.mulf %1664, %1657 : vector<2x32xf32>
    %1674 = arith.addf %1672, %1673 : vector<2x32xf32>
    %1675 = math.tanh %1674 : vector<2x32xf32>
    %cst_528 = arith.constant 1.000000e+00 : f32
    %1676 = vector.broadcast %cst_528 : f32 to vector<2x32xf32>
    %1677 = arith.subf %1676, %1671 : vector<2x32xf32>
    %1678 = arith.mulf %1677, %1675 : vector<2x32xf32>
    %1679 = arith.mulf %1671, %1648 : vector<2x32xf32>
    %1680 = arith.addf %1678, %1679 : vector<2x32xf32>
    %cst_529 = arith.constant dense<0.000000e+00> : vector<2x32xf32>
    %1681 = tpu.matmul %1680, %1510, %cst_529 {dimension_numbers = #tpu.dot_dimension_numbers<[1], [0], [0], [1], [0, 0, 1, 1], [], []>} : vector<2x32xf32>, vector<32x32xf32>, vector<2x32xf32> -> vector<2x32xf32>
    %1682 = vector.broadcast %1516 : vector<1x32xf32> to vector<2x32xf32>
    %1683 = arith.addf %1681, %1682 : vector<2x32xf32>
    %cst_530 = arith.constant dense<0.000000e+00> : vector<2x32xf32>
    %1684 = tpu.matmul %1680, %1512, %cst_530 {dimension_numbers = #tpu.dot_dimension_numbers<[1], [0], [0], [1], [0, 0, 1, 1], [], []>} : vector<2x32xf32>, vector<32x32xf32>, vector<2x32xf32> -> vector<2x32xf32>
    %1685 = vector.broadcast %1518 : vector<1x32xf32> to vector<2x32xf32>
    %1686 = arith.addf %1684, %1685 : vector<2x32xf32>
    %cst_531 = arith.constant dense<0.000000e+00> : vector<2x32xf32>
    %1687 = tpu.matmul %1680, %1514, %cst_531 {dimension_numbers = #tpu.dot_dimension_numbers<[1], [0], [0], [1], [0, 0, 1, 1], [], []>} : vector<2x32xf32>, vector<32x32xf32>, vector<2x32xf32> -> vector<2x32xf32>
    %1688 = vector.broadcast %1520 : vector<1x32xf32> to vector<2x32xf32>
    %1689 = arith.addf %1687, %1688 : vector<2x32xf32>
    %1690 = vector.extract_strided_slice %1494 {offsets = [4, 0], sizes = [2, 32], strides = [1, 1]} : vector<16x32xf32> to vector<2x32xf32>
    %1691 = arith.addf %1690, %1683 : vector<2x32xf32>
    %1692 = arith.negf %1691 : vector<2x32xf32>
    %1693 = math.exp %1692 : vector<2x32xf32>
    %cst_532 = arith.constant 1.000000e+00 : f32
    %1694 = vector.broadcast %cst_532 : f32 to vector<2x32xf32>
    %1695 = arith.addf %1694, %1693 : vector<2x32xf32>
    %1696 = arith.divf %1694, %1695 : vector<2x32xf32>
    %1697 = vector.extract_strided_slice %1501 {offsets = [4, 0], sizes = [2, 32], strides = [1, 1]} : vector<16x32xf32> to vector<2x32xf32>
    %1698 = arith.addf %1697, %1686 : vector<2x32xf32>
    %1699 = arith.negf %1698 : vector<2x32xf32>
    %1700 = math.exp %1699 : vector<2x32xf32>
    %cst_533 = arith.constant 1.000000e+00 : f32
    %1701 = vector.broadcast %cst_533 : f32 to vector<2x32xf32>
    %1702 = arith.addf %1701, %1700 : vector<2x32xf32>
    %1703 = arith.divf %1701, %1702 : vector<2x32xf32>
    %1704 = vector.extract_strided_slice %1508 {offsets = [4, 0], sizes = [2, 32], strides = [1, 1]} : vector<16x32xf32> to vector<2x32xf32>
    %1705 = arith.mulf %1696, %1689 : vector<2x32xf32>
    %1706 = arith.addf %1704, %1705 : vector<2x32xf32>
    %1707 = math.tanh %1706 : vector<2x32xf32>
    %cst_534 = arith.constant 1.000000e+00 : f32
    %1708 = vector.broadcast %cst_534 : f32 to vector<2x32xf32>
    %1709 = arith.subf %1708, %1703 : vector<2x32xf32>
    %1710 = arith.mulf %1709, %1707 : vector<2x32xf32>
    %1711 = arith.mulf %1703, %1680 : vector<2x32xf32>
    %1712 = arith.addf %1710, %1711 : vector<2x32xf32>
    %cst_535 = arith.constant dense<0.000000e+00> : vector<2x32xf32>
    %1713 = tpu.matmul %1712, %1510, %cst_535 {dimension_numbers = #tpu.dot_dimension_numbers<[1], [0], [0], [1], [0, 0, 1, 1], [], []>} : vector<2x32xf32>, vector<32x32xf32>, vector<2x32xf32> -> vector<2x32xf32>
    %1714 = vector.broadcast %1516 : vector<1x32xf32> to vector<2x32xf32>
    %1715 = arith.addf %1713, %1714 : vector<2x32xf32>
    %cst_536 = arith.constant dense<0.000000e+00> : vector<2x32xf32>
    %1716 = tpu.matmul %1712, %1512, %cst_536 {dimension_numbers = #tpu.dot_dimension_numbers<[1], [0], [0], [1], [0, 0, 1, 1], [], []>} : vector<2x32xf32>, vector<32x32xf32>, vector<2x32xf32> -> vector<2x32xf32>
    %1717 = vector.broadcast %1518 : vector<1x32xf32> to vector<2x32xf32>
    %1718 = arith.addf %1716, %1717 : vector<2x32xf32>
    %cst_537 = arith.constant dense<0.000000e+00> : vector<2x32xf32>
    %1719 = tpu.matmul %1712, %1514, %cst_537 {dimension_numbers = #tpu.dot_dimension_numbers<[1], [0], [0], [1], [0, 0, 1, 1], [], []>} : vector<2x32xf32>, vector<32x32xf32>, vector<2x32xf32> -> vector<2x32xf32>
    %1720 = vector.broadcast %1520 : vector<1x32xf32> to vector<2x32xf32>
    %1721 = arith.addf %1719, %1720 : vector<2x32xf32>
    %1722 = vector.extract_strided_slice %1494 {offsets = [2, 0], sizes = [2, 32], strides = [1, 1]} : vector<16x32xf32> to vector<2x32xf32>
    %1723 = arith.addf %1722, %1715 : vector<2x32xf32>
    %1724 = arith.negf %1723 : vector<2x32xf32>
    %1725 = math.exp %1724 : vector<2x32xf32>
    %cst_538 = arith.constant 1.000000e+00 : f32
    %1726 = vector.broadcast %cst_538 : f32 to vector<2x32xf32>
    %1727 = arith.addf %1726, %1725 : vector<2x32xf32>
    %1728 = arith.divf %1726, %1727 : vector<2x32xf32>
    %1729 = vector.extract_strided_slice %1501 {offsets = [2, 0], sizes = [2, 32], strides = [1, 1]} : vector<16x32xf32> to vector<2x32xf32>
    %1730 = arith.addf %1729, %1718 : vector<2x32xf32>
    %1731 = arith.negf %1730 : vector<2x32xf32>
    %1732 = math.exp %1731 : vector<2x32xf32>
    %cst_539 = arith.constant 1.000000e+00 : f32
    %1733 = vector.broadcast %cst_539 : f32 to vector<2x32xf32>
    %1734 = arith.addf %1733, %1732 : vector<2x32xf32>
    %1735 = arith.divf %1733, %1734 : vector<2x32xf32>
    %1736 = vector.extract_strided_slice %1508 {offsets = [2, 0], sizes = [2, 32], strides = [1, 1]} : vector<16x32xf32> to vector<2x32xf32>
    %1737 = arith.mulf %1728, %1721 : vector<2x32xf32>
    %1738 = arith.addf %1736, %1737 : vector<2x32xf32>
    %1739 = math.tanh %1738 : vector<2x32xf32>
    %cst_540 = arith.constant 1.000000e+00 : f32
    %1740 = vector.broadcast %cst_540 : f32 to vector<2x32xf32>
    %1741 = arith.subf %1740, %1735 : vector<2x32xf32>
    %1742 = arith.mulf %1741, %1739 : vector<2x32xf32>
    %1743 = arith.mulf %1735, %1712 : vector<2x32xf32>
    %1744 = arith.addf %1742, %1743 : vector<2x32xf32>
    %cst_541 = arith.constant dense<0.000000e+00> : vector<2x32xf32>
    %1745 = tpu.matmul %1744, %1510, %cst_541 {dimension_numbers = #tpu.dot_dimension_numbers<[1], [0], [0], [1], [0, 0, 1, 1], [], []>} : vector<2x32xf32>, vector<32x32xf32>, vector<2x32xf32> -> vector<2x32xf32>
    %1746 = vector.broadcast %1516 : vector<1x32xf32> to vector<2x32xf32>
    %1747 = arith.addf %1745, %1746 : vector<2x32xf32>
    %cst_542 = arith.constant dense<0.000000e+00> : vector<2x32xf32>
    %1748 = tpu.matmul %1744, %1512, %cst_542 {dimension_numbers = #tpu.dot_dimension_numbers<[1], [0], [0], [1], [0, 0, 1, 1], [], []>} : vector<2x32xf32>, vector<32x32xf32>, vector<2x32xf32> -> vector<2x32xf32>
    %1749 = vector.broadcast %1518 : vector<1x32xf32> to vector<2x32xf32>
    %1750 = arith.addf %1748, %1749 : vector<2x32xf32>
    %cst_543 = arith.constant dense<0.000000e+00> : vector<2x32xf32>
    %1751 = tpu.matmul %1744, %1514, %cst_543 {dimension_numbers = #tpu.dot_dimension_numbers<[1], [0], [0], [1], [0, 0, 1, 1], [], []>} : vector<2x32xf32>, vector<32x32xf32>, vector<2x32xf32> -> vector<2x32xf32>
    %1752 = vector.broadcast %1520 : vector<1x32xf32> to vector<2x32xf32>
    %1753 = arith.addf %1751, %1752 : vector<2x32xf32>
    %1754 = vector.extract_strided_slice %1494 {offsets = [0, 0], sizes = [2, 32], strides = [1, 1]} : vector<16x32xf32> to vector<2x32xf32>
    %1755 = arith.addf %1754, %1747 : vector<2x32xf32>
    %1756 = arith.negf %1755 : vector<2x32xf32>
    %1757 = math.exp %1756 : vector<2x32xf32>
    %cst_544 = arith.constant 1.000000e+00 : f32
    %1758 = vector.broadcast %cst_544 : f32 to vector<2x32xf32>
    %1759 = arith.addf %1758, %1757 : vector<2x32xf32>
    %1760 = arith.divf %1758, %1759 : vector<2x32xf32>
    %1761 = vector.extract_strided_slice %1501 {offsets = [0, 0], sizes = [2, 32], strides = [1, 1]} : vector<16x32xf32> to vector<2x32xf32>
    %1762 = arith.addf %1761, %1750 : vector<2x32xf32>
    %1763 = arith.negf %1762 : vector<2x32xf32>
    %1764 = math.exp %1763 : vector<2x32xf32>
    %cst_545 = arith.constant 1.000000e+00 : f32
    %1765 = vector.broadcast %cst_545 : f32 to vector<2x32xf32>
    %1766 = arith.addf %1765, %1764 : vector<2x32xf32>
    %1767 = arith.divf %1765, %1766 : vector<2x32xf32>
    %1768 = vector.extract_strided_slice %1508 {offsets = [0, 0], sizes = [2, 32], strides = [1, 1]} : vector<16x32xf32> to vector<2x32xf32>
    %1769 = arith.mulf %1760, %1753 : vector<2x32xf32>
    %1770 = arith.addf %1768, %1769 : vector<2x32xf32>
    %1771 = math.tanh %1770 : vector<2x32xf32>
    %cst_546 = arith.constant 1.000000e+00 : f32
    %1772 = vector.broadcast %cst_546 : f32 to vector<2x32xf32>
    %1773 = arith.subf %1772, %1767 : vector<2x32xf32>
    %1774 = arith.mulf %1773, %1771 : vector<2x32xf32>
    %1775 = arith.mulf %1767, %1744 : vector<2x32xf32>
    %1776 = arith.addf %1774, %1775 : vector<2x32xf32>
    %c4_547 = arith.constant 4 : index
    %c0_548 = arith.constant 0 : index
    %c0_549 = arith.constant 0 : index
    %1777 = vector.load %arg29[%c4_547, %c0_548, %c0_549] : memref<6x2x32xf32, #tpu.memory_space<vmem>>, vector<1x2x32xf32>
    %1778 = vector.shape_cast %1777 : vector<1x2x32xf32> to vector<2x32xf32>
    %1779 = vector.shape_cast %1485 : vector<2x32xf32> to vector<1x2x32xf32>
    tpu.vector_store %arg29[%c4_547, %c0_548, %c0_549], %1779 {strides = array<i32>} : memref<6x2x32xf32, #tpu.memory_space<vmem>>, vector<1x2x32xf32>,
    %c5_550 = arith.constant 5 : index
    %c0_551 = arith.constant 0 : index
    %c0_552 = arith.constant 0 : index
    %1780 = vector.load %arg29[%c5_550, %c0_551, %c0_552] : memref<6x2x32xf32, #tpu.memory_space<vmem>>, vector<1x2x32xf32>
    %1781 = vector.shape_cast %1780 : vector<1x2x32xf32> to vector<2x32xf32>
    %1782 = vector.shape_cast %1776 : vector<2x32xf32> to vector<1x2x32xf32>
    tpu.vector_store %arg29[%c5_550, %c0_551, %c0_552], %1782 {strides = array<i32>} : memref<6x2x32xf32, #tpu.memory_space<vmem>>, vector<1x2x32xf32>,
    %1783 = vector.extract_strided_slice %1261 {offsets = [1, 0], sizes = [1, 32], strides = [1, 1]} : vector<2x32xf32> to vector<1x32xf32>
    %1784 = vector.extract_strided_slice %1776 {offsets = [0, 0], sizes = [1, 32], strides = [1, 1]} : vector<2x32xf32> to vector<1x32xf32>
    %1785 = tpu.concatenate %1783, %1784 in 1 : vector<1x32xf32>, vector<1x32xf32> -> vector<1x64xf32>
    %1786 = vector.extract_strided_slice %1293 {offsets = [1, 0], sizes = [1, 32], strides = [1, 1]} : vector<2x32xf32> to vector<1x32xf32>
    %1787 = vector.extract_strided_slice %1744 {offsets = [0, 0], sizes = [1, 32], strides = [1, 1]} : vector<2x32xf32> to vector<1x32xf32>
    %1788 = tpu.concatenate %1786, %1787 in 1 : vector<1x32xf32>, vector<1x32xf32> -> vector<1x64xf32>
    %1789 = vector.extract_strided_slice %1325 {offsets = [1, 0], sizes = [1, 32], strides = [1, 1]} : vector<2x32xf32> to vector<1x32xf32>
    %1790 = vector.extract_strided_slice %1712 {offsets = [0, 0], sizes = [1, 32], strides = [1, 1]} : vector<2x32xf32> to vector<1x32xf32>
    %1791 = tpu.concatenate %1789, %1790 in 1 : vector<1x32xf32>, vector<1x32xf32> -> vector<1x64xf32>
    %1792 = vector.extract_strided_slice %1357 {offsets = [1, 0], sizes = [1, 32], strides = [1, 1]} : vector<2x32xf32> to vector<1x32xf32>
    %1793 = vector.extract_strided_slice %1680 {offsets = [0, 0], sizes = [1, 32], strides = [1, 1]} : vector<2x32xf32> to vector<1x32xf32>
    %1794 = tpu.concatenate %1792, %1793 in 1 : vector<1x32xf32>, vector<1x32xf32> -> vector<1x64xf32>
    %1795 = vector.extract_strided_slice %1389 {offsets = [1, 0], sizes = [1, 32], strides = [1, 1]} : vector<2x32xf32> to vector<1x32xf32>
    %1796 = vector.extract_strided_slice %1648 {offsets = [0, 0], sizes = [1, 32], strides = [1, 1]} : vector<2x32xf32> to vector<1x32xf32>
    %1797 = tpu.concatenate %1795, %1796 in 1 : vector<1x32xf32>, vector<1x32xf32> -> vector<1x64xf32>
    %1798 = vector.extract_strided_slice %1421 {offsets = [1, 0], sizes = [1, 32], strides = [1, 1]} : vector<2x32xf32> to vector<1x32xf32>
    %1799 = vector.extract_strided_slice %1616 {offsets = [0, 0], sizes = [1, 32], strides = [1, 1]} : vector<2x32xf32> to vector<1x32xf32>
    %1800 = tpu.concatenate %1798, %1799 in 1 : vector<1x32xf32>, vector<1x32xf32> -> vector<1x64xf32>
    %1801 = vector.extract_strided_slice %1453 {offsets = [1, 0], sizes = [1, 32], strides = [1, 1]} : vector<2x32xf32> to vector<1x32xf32>
    %1802 = vector.extract_strided_slice %1584 {offsets = [0, 0], sizes = [1, 32], strides = [1, 1]} : vector<2x32xf32> to vector<1x32xf32>
    %1803 = tpu.concatenate %1801, %1802 in 1 : vector<1x32xf32>, vector<1x32xf32> -> vector<1x64xf32>
    %1804 = vector.extract_strided_slice %1485 {offsets = [1, 0], sizes = [1, 32], strides = [1, 1]} : vector<2x32xf32> to vector<1x32xf32>
    %1805 = vector.extract_strided_slice %1552 {offsets = [0, 0], sizes = [1, 32], strides = [1, 1]} : vector<2x32xf32> to vector<1x32xf32>
    %1806 = tpu.concatenate %1804, %1805 in 1 : vector<1x32xf32>, vector<1x32xf32> -> vector<1x64xf32>
    %1807 = tpu.concatenate %1785, %1788, %1791, %1794, %1797, %1800, %1803, %1806 in 0 : vector<1x64xf32>, vector<1x64xf32>, vector<1x64xf32>, vector<1x64xf32>, vector<1x64xf32>, vector<1x64xf32>, vector<1x64xf32>, vector<1x64xf32> -> vector<8x64xf32>
    %cst_553 = arith.constant 0.000000e+00 : f32
    %1808 = vector.broadcast %cst_553 : f32 to vector<8x64xf32>
    %1809 = arith.maximumf %1807, %1808 : vector<8x64xf32>
    %c0_554 = arith.constant 0 : index
    %c0_555 = arith.constant 0 : index
    %1810 = vector.load %arg26[%c0_554, %c0_555] : memref<64x3xf32, #tpu.memory_space<vmem>>, vector<64x3xf32>
    %cst_556 = arith.constant dense<0.000000e+00> : vector<8x3xf32>
    %1811 = tpu.matmul %1809, %1810, %cst_556 {dimension_numbers = #tpu.dot_dimension_numbers<[1], [0], [0], [1], [0, 0, 1, 1], [], []>} : vector<8x64xf32>, vector<64x3xf32>, vector<8x3xf32> -> vector<8x3xf32>
    %c0_557 = arith.constant 0 : index
    %c0_558 = arith.constant 0 : index
    %1812 = vector.load %arg27[%c0_557, %c0_558] : memref<1x3xf32, #tpu.memory_space<vmem>>, vector<1x3xf32>
    %1813 = vector.broadcast %1812 : vector<1x3xf32> to vector<8x3xf32>
    %1814 = arith.addf %1811, %1813 : vector<8x3xf32>
    %cst_559 = arith.constant dense<0xFF800000> : vector<8xf32>
    %1815 = vector.multi_reduction <maximumf>, %1814, %cst_559 [1] : vector<8x3xf32> to vector<8xf32>
    %1816 = vector.shape_cast %1815 : vector<8xf32> to vector<8x1xf32>
    %1817 = vector.broadcast %1816 : vector<8x1xf32> to vector<8x3xf32>
    %1818 = arith.subf %1814, %1817 : vector<8x3xf32>
    %1819 = math.exp %1818 : vector<8x3xf32>
    %cst_560 = arith.constant dense<0.000000e+00> : vector<8xf32>
    %1820 = vector.multi_reduction <add>, %1819, %cst_560 [1] : vector<8x3xf32> to vector<8xf32>
    %1821 = vector.shape_cast %1820 : vector<8xf32> to vector<8x1xf32>
    %1822 = math.log %1821 : vector<8x1xf32>
    %1823 = arith.addf %1822, %1816 : vector<8x1xf32>
    %1824 = vector.broadcast %1823 : vector<8x1xf32> to vector<8x3xf32>
    %1825 = arith.subf %1814, %1824 : vector<8x3xf32>
    %c0_561 = arith.constant 0 : index
    %c0_562 = arith.constant 0 : index
    %1826 = vector.load %arg28[%c0_561, %c0_562] : memref<8x3xf32, #tpu.memory_space<vmem>>, vector<8x3xf32>
    tpu.vector_store %arg28[%c0_561, %c0_562], %1825 {strides = array<i32>} : memref<8x3xf32, #tpu.memory_space<vmem>>, vector<8x3xf32>,
    return
  }
}

</mosaic_0001>

<llo_original>
// kernel: tpu_custom_call.1
$region0: #{tpu_custom_call.1}
  #allocation0 [shape = 'u32[]', space=smem, size = 0x4, offset = 0x4, fixed_abs, tag = 'smem constant byte address 0x4 - core index']
  #allocation1 [shape = 'u32[72,128]{1,0:T(1,128)}', space=vmem, size = 0x9000, scoped, tag = 'internal scratch']
  %s0 = inlined_call_operand.smem [shape: u32[30], index: -1, kind: input, shape index: {}]
  %s1 = sld [smem:[%s0]]
  %s2 = scalar_lea.smem %s0, 1
  %s3 = sld [smem:[%s2]]
  %s4 = scalar_lea.smem %s0, 2
  %s5 = sld [smem:[%s4]]
  %s6 = scalar_lea.smem %s0, 3
  %s7 = sld [smem:[%s6]]
  %s8 = scalar_lea.smem %s0, 4
  %s9 = sld [smem:[%s8]]
  %s10 = scalar_lea.smem %s0, 5
  %s11 = sld [smem:[%s10]]
  %s12 = scalar_lea.smem %s0, 6
  %s13 = sld [smem:[%s12]]
  %s14 = scalar_lea.smem %s0, 7
  %s15 = sld [smem:[%s14]]
  %s16 = scalar_lea.smem %s0, 8
  %s17 = sld [smem:[%s16]]
  %s18 = scalar_lea.smem %s0, 9
  %s19 = sld [smem:[%s18]]
  %s20 = scalar_lea.smem %s0, 10
  %s21 = sld [smem:[%s20]]
  %s22 = scalar_lea.smem %s0, 11
  %s23 = sld [smem:[%s22]]
  %s24 = scalar_lea.smem %s0, 12
  %s25 = sld [smem:[%s24]]
  %s26 = scalar_lea.smem %s0, 13
  %s27 = sld [smem:[%s26]]
  %s28 = scalar_lea.smem %s0, 14
  %s29 = sld [smem:[%s28]]
  %s30 = scalar_lea.smem %s0, 15
  %s31 = sld [smem:[%s30]]
  %s32 = scalar_lea.smem %s0, 16
  %s33 = sld [smem:[%s32]]
  %s34 = scalar_lea.smem %s0, 17
  %s35 = sld [smem:[%s34]]
  %s36 = scalar_lea.smem %s0, 18
  %s37 = sld [smem:[%s36]]
  %s38 = scalar_lea.smem %s0, 19
  %s39 = sld [smem:[%s38]]
  %s40 = scalar_lea.smem %s0, 20
  %s41 = sld [smem:[%s40]]
  %s42 = scalar_lea.smem %s0, 21
  %s43 = sld [smem:[%s42]]
  %s44 = scalar_lea.smem %s0, 22
  %s45 = sld [smem:[%s44]]
  %s46 = scalar_lea.smem %s0, 23
  %s47 = sld [smem:[%s46]]
  %s48 = scalar_lea.smem %s0, 24
  %s49 = sld [smem:[%s48]]
  %s50 = scalar_lea.smem %s0, 25
  %s51 = sld [smem:[%s50]]
  %s52 = scalar_lea.smem %s0, 26
  %s53 = sld [smem:[%s52]]
  %s54 = scalar_lea.smem %s0, 27
  %s55 = sld [smem:[%s54]]
  %s56 = scalar_lea.smem %s0, 28
  %s57 = sld [smem:[%s56]]
  %s58 = scalar_lea.smem %s0, 29
  %s59 = sld [smem:[%s58]]
  %60 = xla_tuple %s57, %s59
  %s61 = sld [smem:[#allocation0]]
  $region130: #{tpu_custom_call.1} parent=0
    _
  %s63 = ssub.s32 1, %s61
  %s64 = scalar_select 0, %s63, %s61
  $region1: #{tpu_custom_call.1} parent=0
    #allocation2 [shape = 'u8[6144]{0}', space=vmem, size = 0x1800, scoped, tag = 'output window, operand 1, single buffered']
    #allocation3 [shape = 's32[1]{0}', space=sflag, size = 0x4, scoped, tag = 'scoped memory for tpu_custom_call.1']
    %65 = vsyncpa [#allocation3], 0
    // Predicated region
    $region2: #{tpu_custom_call.1} parent=1 // pred_check
      _
    $region3: #{tpu_custom_call.1} parent=1 // pred_check_branch
      %67 = sbr.rel (0) target = $region5
    $region4: #{tpu_custom_call.1} parent=1 // pred_region
      _
    $region5: #{tpu_custom_call.1} parent=1 // pred_fallthru
      _
    // Predicated region
    $region6: #{tpu_custom_call.1} parent=1 // pred_check
      _
    $region7: #{tpu_custom_call.1} parent=1 // pred_check_branch
      %69 = sbr.rel (0) target = $region9
    $region8: #{tpu_custom_call.1} parent=1 // pred_region
      _
    $region9: #{tpu_custom_call.1} parent=1 // pred_fallthru
      _
    // Predicated region
    $region10: #{tpu_custom_call.1} parent=1 // pred_check
      _
    $region11: #{tpu_custom_call.1} parent=1 // pred_check_branch
      %71 = sbr.rel (0) target = $region13
    $region12: #{tpu_custom_call.1} parent=1 // pred_region
      _
    $region13: #{tpu_custom_call.1} parent=1 // pred_fallthru
      _
    // Predicated region
    $region14: #{tpu_custom_call.1} parent=1 // pred_check
      _
    $region15: #{tpu_custom_call.1} parent=1 // pred_check_branch
      %73 = sbr.rel (0) target = $region17
    $region16: #{tpu_custom_call.1} parent=1 // pred_region
      _
    $region17: #{tpu_custom_call.1} parent=1 // pred_fallthru
      _
    // Predicated region
    $region18: #{tpu_custom_call.1} parent=1 // pred_check
      _
    $region19: #{tpu_custom_call.1} parent=1 // pred_check_branch
      %75 = sbr.rel (0) target = $region21
    $region20: #{tpu_custom_call.1} parent=1 // pred_region
      _
    $region21: #{tpu_custom_call.1} parent=1 // pred_fallthru
      _
    // Predicated region
    $region22: #{tpu_custom_call.1} parent=1 // pred_check
      _
    $region23: #{tpu_custom_call.1} parent=1 // pred_check_branch
      %77 = sbr.rel (0) target = $region25
    $region24: #{tpu_custom_call.1} parent=1 // pred_region
      _
    $region25: #{tpu_custom_call.1} parent=1 // pred_fallthru
      _
    // Predicated region
    $region26: #{tpu_custom_call.1} parent=1 // pred_check
      _
    $region27: #{tpu_custom_call.1} parent=1 // pred_check_branch
      %79 = sbr.rel (0) target = $region29
    $region28: #{tpu_custom_call.1} parent=1 // pred_region
      _
    $region29: #{tpu_custom_call.1} parent=1 // pred_fallthru
      _
    // Predicated region
    $region30: #{tpu_custom_call.1} parent=1 // pred_check
      _
    $region31: #{tpu_custom_call.1} parent=1 // pred_check_branch
      %81 = sbr.rel (0) target = $region33
    $region32: #{tpu_custom_call.1} parent=1 // pred_region
      _
    $region33: #{tpu_custom_call.1} parent=1 // pred_fallthru
      _
    // Predicated region
    $region34: #{tpu_custom_call.1} parent=1 // pred_check
      _
    $region35: #{tpu_custom_call.1} parent=1 // pred_check_branch
      %83 = sbr.rel (0) target = $region37
    $region36: #{tpu_custom_call.1} parent=1 // pred_region
      _
    $region37: #{tpu_custom_call.1} parent=1 // pred_fallthru
      _
    // Predicated region
    $region38: #{tpu_custom_call.1} parent=1 // pred_check
      _
    $region39: #{tpu_custom_call.1} parent=1 // pred_check_branch
      %85 = sbr.rel (0) target = $region41
    $region40: #{tpu_custom_call.1} parent=1 // pred_region
      _
    $region41: #{tpu_custom_call.1} parent=1 // pred_fallthru
      _
    // Predicated region
    $region42: #{tpu_custom_call.1} parent=1 // pred_check
      _
    $region43: #{tpu_custom_call.1} parent=1 // pred_check_branch
      %87 = sbr.rel (0) target = $region45
    $region44: #{tpu_custom_call.1} parent=1 // pred_region
      _
    $region45: #{tpu_custom_call.1} parent=1 // pred_fallthru
      _
    // Predicated region
    $region46: #{tpu_custom_call.1} parent=1 // pred_check
      _
    $region47: #{tpu_custom_call.1} parent=1 // pred_check_branch
      %89 = sbr.rel (0) target = $region49
    $region48: #{tpu_custom_call.1} parent=1 // pred_region
      _
    $region49: #{tpu_custom_call.1} parent=1 // pred_fallthru
      _
    // Predicated region
    $region50: #{tpu_custom_call.1} parent=1 // pred_check
      _
    $region51: #{tpu_custom_call.1} parent=1 // pred_check_branch
      %91 = sbr.rel (0) target = $region53
    $region52: #{tpu_custom_call.1} parent=1 // pred_region
      _
    $region53: #{tpu_custom_call.1} parent=1 // pred_fallthru
      _
    // Predicated region
    $region54: #{tpu_custom_call.1} parent=1 // pred_check
      _
    $region55: #{tpu_custom_call.1} parent=1 // pred_check_branch
      %93 = sbr.rel (0) target = $region57
    $region56: #{tpu_custom_call.1} parent=1 // pred_region
      _
    $region57: #{tpu_custom_call.1} parent=1 // pred_fallthru
      _
    // Predicated region
    $region58: #{tpu_custom_call.1} parent=1 // pred_check
      _
    $region59: #{tpu_custom_call.1} parent=1 // pred_check_branch
      %95 = sbr.rel (0) target = $region61
    $region60: #{tpu_custom_call.1} parent=1 // pred_region
      _
    $region61: #{tpu_custom_call.1} parent=1 // pred_fallthru
      _
    // Predicated region
    $region62: #{tpu_custom_call.1} parent=1 // pred_check
      _
    $region63: #{tpu_custom_call.1} parent=1 // pred_check_branch
      %97 = sbr.rel (0) target = $region65
    $region64: #{tpu_custom_call.1} parent=1 // pred_region
      _
    $region65: #{tpu_custom_call.1} parent=1 // pred_fallthru
      _
    // Predicated region
    $region66: #{tpu_custom_call.1} parent=1 // pred_check
      _
    $region67: #{tpu_custom_call.1} parent=1 // pred_check_branch
      %99 = sbr.rel (0) target = $region69
    $region68: #{tpu_custom_call.1} parent=1 // pred_region
      _
    $region69: #{tpu_custom_call.1} parent=1 // pred_fallthru
      _
    // Predicated region
    $region70: #{tpu_custom_call.1} parent=1 // pred_check
      _
    $region71: #{tpu_custom_call.1} parent=1 // pred_check_branch
      %101 = sbr.rel (0) target = $region73
    $region72: #{tpu_custom_call.1} parent=1 // pred_region
      _
    $region73: #{tpu_custom_call.1} parent=1 // pred_fallthru
      _
    // Predicated region
    $region74: #{tpu_custom_call.1} parent=1 // pred_check
      _
    $region75: #{tpu_custom_call.1} parent=1 // pred_check_branch
      %103 = sbr.rel (0) target = $region77
    $region76: #{tpu_custom_call.1} parent=1 // pred_region
      _
    $region77: #{tpu_custom_call.1} parent=1 // pred_fallthru
      _
    // Predicated region
    $region78: #{tpu_custom_call.1} parent=1 // pred_check
      _
    $region79: #{tpu_custom_call.1} parent=1 // pred_check_branch
      %105 = sbr.rel (0) target = $region81
    $region80: #{tpu_custom_call.1} parent=1 // pred_region
      _
    $region81: #{tpu_custom_call.1} parent=1 // pred_fallthru
      _
    // Predicated region
    $region82: #{tpu_custom_call.1} parent=1 // pred_check
      _
    $region83: #{tpu_custom_call.1} parent=1 // pred_check_branch
      %107 = sbr.rel (0) target = $region85
    $region84: #{tpu_custom_call.1} parent=1 // pred_region
      _
    $region85: #{tpu_custom_call.1} parent=1 // pred_fallthru
      _
    // Predicated region
    $region86: #{tpu_custom_call.1} parent=1 // pred_check
      _
    $region87: #{tpu_custom_call.1} parent=1 // pred_check_branch
      %109 = sbr.rel (0) target = $region89
    $region88: #{tpu_custom_call.1} parent=1 // pred_region
      _
    $region89: #{tpu_custom_call.1} parent=1 // pred_fallthru
      _
    // Predicated region
    $region90: #{tpu_custom_call.1} parent=1 // pred_check
      _
    $region91: #{tpu_custom_call.1} parent=1 // pred_check_branch
      %111 = sbr.rel (0) target = $region93
    $region92: #{tpu_custom_call.1} parent=1 // pred_region
      _
    $region93: #{tpu_custom_call.1} parent=1 // pred_fallthru
      _
    // Predicated region
    $region94: #{tpu_custom_call.1} parent=1 // pred_check
      _
    $region95: #{tpu_custom_call.1} parent=1 // pred_check_branch
      %113 = sbr.rel (0) target = $region97
    $region96: #{tpu_custom_call.1} parent=1 // pred_region
      _
    $region97: #{tpu_custom_call.1} parent=1 // pred_fallthru
      _
    // Predicated region
    $region98: #{tpu_custom_call.1} parent=1 // pred_check
      _
    $region99: #{tpu_custom_call.1} parent=1 // pred_check_branch
      %115 = sbr.rel (0) target = $region101
    $region100: #{tpu_custom_call.1} parent=1 // pred_region
      _
    $region101: #{tpu_custom_call.1} parent=1 // pred_fallthru
      _
    // Predicated region
    $region102: #{tpu_custom_call.1} parent=1 // pred_check
      _
    $region103: #{tpu_custom_call.1} parent=1 // pred_check_branch
      %117 = sbr.rel (0) target = $region105
    $region104: #{tpu_custom_call.1} parent=1 // pred_region
      _
    $region105: #{tpu_custom_call.1} parent=1 // pred_fallthru
      _
    // Predicated region
    $region106: #{tpu_custom_call.1} parent=1 // pred_check
      _
    $region107: #{tpu_custom_call.1} parent=1 // pred_check_branch
      %119 = sbr.rel (0) target = $region109
    $region108: #{tpu_custom_call.1} parent=1 // pred_region
      _
    $region109: #{tpu_custom_call.1} parent=1 // pred_fallthru
      _
    // Predicated region
    $region110: #{tpu_custom_call.1} parent=1 // pred_check
      _
    $region111: #{tpu_custom_call.1} parent=1 // pred_check_branch
      %121 = sbr.rel (0) target = $region113
    $region112: #{tpu_custom_call.1} parent=1 // pred_region
      _
    $region113: #{tpu_custom_call.1} parent=1 // pred_fallthru
      _
    %v122 = vld [vmem:[%s1] sm:$0xff]
    %v123 = vld [vmem:[%s1 + $0x8] sm:$0xff]
    %v124 = vld [vmem:[%s3] sm:$0x3]
    %v125 = vld [vmem:[%s5] sm:$0xff]
    %v126 = vld [vmem:[%s5 + $0x8] sm:$0xff]
    %v127 = vld [vmem:[%s5 + $0x10] sm:$0xff]
    %v128 = vld [vmem:[%s5 + $0x18] sm:$0xff]
    %v129 = vld [vmem:[%s9] sm:$0x1]
    %v131 = vperm.slane %v129, 0
    %vm133 = vcmask 261120
    %v135 = vsel %vm133, %v122, 0
    %v138 = vsel %vm133, %v123, 0
    %140 = vmatpush.msra.mxu0 0.0
    %141 = vmatpush.msra.mxu0 0.0
    %142 = vmatpush.msra.mxu0 0.0
    %143 = vmatpush.msra.mxu0 0.0
    %144 = vmatpush.msra.mxu0 0.0
    %145 = vmatpush.msra.mxu0 0.0
    %146 = vmatpush.msra.mxu0 0.0
    %147 = vmatpush.msra.mxu0 0.0
    %148 = vmatpush.msra.mxu0 0.0
    %149 = vmatpush.msra.mxu0 0.0
    %150 = vmatpush.msra.mxu0 0.0
    %151 = vmatpush.msra.mxu0 0.0
    %152 = vmatpush.msra.mxu0 %v128
    %153 = vmatpush.msra.mxu0 %v127
    %154 = vmatpush.msra.mxu0 %v126
    %155 = vmatpush.msra.mxu0 %v125
    %156 = vmatmul.f32.gmra.mxu0 %v135
    %v157 = vpop.f32.mrf.mxu0
    %v158 = vadd.f32 %v131, %v157
    %159 = vmatmul.f32.gmra.mxu0 %v138
    %v160 = vpop.f32.mrf.mxu0
    %v161 = vadd.f32 %v131, %v160
    %162 = vdwg.mxu0
    %s163 = scalar_lea.vmem %s5, 32
    %v164 = vld [vmem:[%s163] sm:$0xff]
    %v165 = vld [vmem:[%s163 + $0x8] sm:$0xff]
    %v166 = vld [vmem:[%s163 + $0x10] sm:$0xff]
    %v167 = vld [vmem:[%s163 + $0x18] sm:$0xff]
    %s168 = scalar_lea.vmem %s9, 1
    %v169 = vld [vmem:[%s168] sm:$0x1]
    %v171 = vperm.slane %v169, 0
    %173 = vmatpush.msra.mxu0 0.0
    %174 = vmatpush.msra.mxu0 0.0
    %175 = vmatpush.msra.mxu0 0.0
    %176 = vmatpush.msra.mxu0 0.0
    %177 = vmatpush.msra.mxu0 0.0
    %178 = vmatpush.msra.mxu0 0.0
    %179 = vmatpush.msra.mxu0 0.0
    %180 = vmatpush.msra.mxu0 0.0
    %181 = vmatpush.msra.mxu0 0.0
    %182 = vmatpush.msra.mxu0 0.0
    %183 = vmatpush.msra.mxu0 0.0
    %184 = vmatpush.msra.mxu0 0.0
    %185 = vmatpush.msra.mxu0 %v167
    %186 = vmatpush.msra.mxu0 %v166
    %187 = vmatpush.msra.mxu0 %v165
    %188 = vmatpush.msra.mxu0 %v164
    %189 = vmatmul.f32.gmra.mxu0 %v135
    %v190 = vpop.f32.mrf.mxu0
    %v191 = vadd.f32 %v171, %v190
    %192 = vmatmul.f32.gmra.mxu0 %v138
    %v193 = vpop.f32.mrf.mxu0
    %v194 = vadd.f32 %v171, %v193
    %195 = vdwg.mxu0
    %s196 = scalar_lea.vmem %s5, 64
    %v197 = vld [vmem:[%s196] sm:$0xff]
    %v198 = vld [vmem:[%s196 + $0x8] sm:$0xff]
    %v199 = vld [vmem:[%s196 + $0x10] sm:$0xff]
    %v200 = vld [vmem:[%s196 + $0x18] sm:$0xff]
    %s201 = scalar_lea.vmem %s9, 2
    %v202 = vld [vmem:[%s201] sm:$0x1]
    %v204 = vperm.slane %v202, 0
    %206 = vmatpush.msra.mxu0 0.0
    %207 = vmatpush.msra.mxu0 0.0
    %208 = vmatpush.msra.mxu0 0.0
    %209 = vmatpush.msra.mxu0 0.0
    %210 = vmatpush.msra.mxu0 0.0
    %211 = vmatpush.msra.mxu0 0.0
    %212 = vmatpush.msra.mxu0 0.0
    %213 = vmatpush.msra.mxu0 0.0
    %214 = vmatpush.msra.mxu0 0.0
    %215 = vmatpush.msra.mxu0 0.0
    %216 = vmatpush.msra.mxu0 0.0
    %217 = vmatpush.msra.mxu0 0.0
    %218 = vmatpush.msra.mxu0 %v200
    %219 = vmatpush.msra.mxu0 %v199
    %220 = vmatpush.msra.mxu0 %v198
    %221 = vmatpush.msra.mxu0 %v197
    %222 = vmatmul.f32.gmra.mxu0 %v135
    %v223 = vpop.f32.mrf.mxu0
    %v224 = vadd.f32 %v204, %v223
    %225 = vmatmul.f32.gmra.mxu0 %v138
    %v226 = vpop.f32.mrf.mxu0
    %v227 = vadd.f32 %v204, %v226
    %228 = vdwg.mxu0
    %v229 = vld [vmem:[%s7] sm:$0xff]
    %v230 = vld [vmem:[%s7 + $0x8] sm:$0xff]
    %v231 = vld [vmem:[%s7 + $0x10] sm:$0xff]
    %v232 = vld [vmem:[%s7 + $0x18] sm:$0xff]
    %s233 = scalar_lea.vmem %s7, 32
    %v234 = vld [vmem:[%s233] sm:$0xff]
    %v235 = vld [vmem:[%s233 + $0x8] sm:$0xff]
    %v236 = vld [vmem:[%s233 + $0x10] sm:$0xff]
    %v237 = vld [vmem:[%s233 + $0x18] sm:$0xff]
    %s238 = scalar_lea.vmem %s7, 64
    %v239 = vld [vmem:[%s238] sm:$0xff]
    %v240 = vld [vmem:[%s238 + $0x8] sm:$0xff]
    %v241 = vld [vmem:[%s238 + $0x10] sm:$0xff]
    %v242 = vld [vmem:[%s238 + $0x18] sm:$0xff]
    %v243 = vld [vmem:[%s11] sm:$0x1]
    %s244 = scalar_lea.vmem %s11, 1
    %v245 = vld [vmem:[%s244] sm:$0x1]
    %s246 = scalar_lea.vmem %s11, 2
    %v247 = vld [vmem:[%s246] sm:$0x1]
    %v249 = vperm.slane %v243, 0
    %v252 = vsel %vm133, %v124, 0
    %254 = vmatpush.msra.mxu0 0.0
    %255 = vmatpush.msra.mxu0 0.0
    %256 = vmatpush.msra.mxu0 0.0
    %257 = vmatpush.msra.mxu0 0.0
    %258 = vmatpush.msra.mxu0 0.0
    %259 = vmatpush.msra.mxu0 0.0
    %260 = vmatpush.msra.mxu0 0.0
    %261 = vmatpush.msra.mxu0 0.0
    %262 = vmatpush.msra.mxu0 0.0
    %263 = vmatpush.msra.mxu0 0.0
    %264 = vmatpush.msra.mxu0 0.0
    %265 = vmatpush.msra.mxu0 0.0
    %266 = vmatpush.msra.mxu0 %v232
    %267 = vmatpush.msra.mxu0 %v231
    %268 = vmatpush.msra.mxu0 %v230
    %269 = vmatpush.msra.mxu0 %v229
    %270 = vmatmul.f32.gmra.mxu0 %v252
    %v271 = vpop.f32.mrf.mxu0
    %v272 = vadd.f32 %v249, %v271
    %273 = vdwg.mxu0
    %v275 = vperm.slane %v245, 0
    %277 = vmatpush.msra.mxu0 0.0
    %278 = vmatpush.msra.mxu0 0.0
    %279 = vmatpush.msra.mxu0 0.0
    %280 = vmatpush.msra.mxu0 0.0
    %281 = vmatpush.msra.mxu0 0.0
    %282 = vmatpush.msra.mxu0 0.0
    %283 = vmatpush.msra.mxu0 0.0
    %284 = vmatpush.msra.mxu0 0.0
    %285 = vmatpush.msra.mxu0 0.0
    %286 = vmatpush.msra.mxu0 0.0
    %287 = vmatpush.msra.mxu0 0.0
    %288 = vmatpush.msra.mxu0 0.0
    %289 = vmatpush.msra.mxu0 %v237
    %290 = vmatpush.msra.mxu0 %v236
    %291 = vmatpush.msra.mxu0 %v235
    %292 = vmatpush.msra.mxu0 %v234
    %293 = vmatmul.f32.gmra.mxu0 %v252
    %v294 = vpop.f32.mrf.mxu0
    %v295 = vadd.f32 %v275, %v294
    %296 = vdwg.mxu0
    %v298 = vperm.slane %v247, 0
    %300 = vmatpush.msra.mxu0 0.0
    %301 = vmatpush.msra.mxu0 0.0
    %302 = vmatpush.msra.mxu0 0.0
    %303 = vmatpush.msra.mxu0 0.0
    %304 = vmatpush.msra.mxu0 0.0
    %305 = vmatpush.msra.mxu0 0.0
    %306 = vmatpush.msra.mxu0 0.0
    %307 = vmatpush.msra.mxu0 0.0
    %308 = vmatpush.msra.mxu0 0.0
    %309 = vmatpush.msra.mxu0 0.0
    %310 = vmatpush.msra.mxu0 0.0
    %311 = vmatpush.msra.mxu0 0.0
    %312 = vmatpush.msra.mxu0 %v242
    %313 = vmatpush.msra.mxu0 %v241
    %314 = vmatpush.msra.mxu0 %v240
    %315 = vmatpush.msra.mxu0 %v239
    %316 = vmatmul.f32.gmra.mxu0 %v252
    %v317 = vpop.f32.mrf.mxu0
    %v318 = vadd.f32 %v298, %v317
    %319 = vdwg.mxu0
    %v320 = vadd.f32 %v158, %v272
    %v321 = vxor.u32 %v320, 2147483648
    %v322 = vmul.f32 %v321, 1.442695
    %v323 = vpow.pop %v322
    %v324 = vadd.f32 %v323, 1.0
    %v325 = vrcp.pop %v324
    %v326 = vmul.f32 %v324, %v325
    %v327 = vsub.f32 1.0, %v326
    %v328 = vmul.f32 %v325, %v327
    %v329 = vadd.f32 %v325, %v328
    %vm330 = vweird.f32 %v324
    %vm331 = vweird.f32 %v325
    %vm332 = vmor %vm330, %vm331
    %v333 = vsel %vm332, %v325, %v329
    %v334 = vand.u32 2147483647, %v324
    %vm335 = vcmp.eq.f32.partialorder %v334, 8.507059e+37
    %v336 = vand.u32 %v324, 2147483648
    %v337 = vor.u32 1.1754944e-38, %v336
    %v338 = vsel %vm335, %v337, %v333
    %v339 = vmul.f32 1.0, %v338
    %v340 = vadd.f32 %v191, %v295
    %v341 = vxor.u32 %v340, 2147483648
    %v342 = vmul.f32 %v341, 1.442695
    %v343 = vpow.pop %v342
    %v344 = vadd.f32 %v343, 1.0
    %v345 = vrcp.pop %v344
    %v346 = vmul.f32 %v344, %v345
    %v347 = vsub.f32 1.0, %v346
    %v348 = vmul.f32 %v345, %v347
    %v349 = vadd.f32 %v345, %v348
    %vm350 = vweird.f32 %v344
    %vm351 = vweird.f32 %v345
    %vm352 = vmor %vm350, %vm351
    %v353 = vsel %vm352, %v345, %v349
    %v354 = vand.u32 2147483647, %v344
    %vm355 = vcmp.eq.f32.partialorder %v354, 8.507059e+37
    %v356 = vand.u32 %v344, 2147483648
    %v357 = vor.u32 1.1754944e-38, %v356
    %v358 = vsel %vm355, %v357, %v353
    %v359 = vmul.f32 1.0, %v358
    %v360 = vmul.f32 %v339, %v318
    %v361 = vadd.f32 %v224, %v360
    %v362 = vtanh.pop %v361
    %v363 = vsub.f32 1.0, %v359
    %v364 = vmul.f32 %v363, %v362
    %v365 = vmul.f32 %v359, %v124
    %v366 = vadd.f32 %v364, %v365
    %v368 = vsel %vm133, %v366, 0
    %370 = vmatpush.msra.mxu0 0.0
    %371 = vmatpush.msra.mxu0 0.0
    %372 = vmatpush.msra.mxu0 0.0
    %373 = vmatpush.msra.mxu0 0.0
    %374 = vmatpush.msra.mxu0 0.0
    %375 = vmatpush.msra.mxu0 0.0
    %376 = vmatpush.msra.mxu0 0.0
    %377 = vmatpush.msra.mxu0 0.0
    %378 = vmatpush.msra.mxu0 0.0
    %379 = vmatpush.msra.mxu0 0.0
    %380 = vmatpush.msra.mxu0 0.0
    %381 = vmatpush.msra.mxu0 0.0
    %382 = vmatpush.msra.mxu0 %v232
    %383 = vmatpush.msra.mxu0 %v231
    %384 = vmatpush.msra.mxu0 %v230
    %385 = vmatpush.msra.mxu0 %v229
    %386 = vmatmul.f32.gmra.mxu0 %v368
    %v387 = vpop.f32.mrf.mxu0
    %v388 = vadd.f32 %v249, %v387
    %389 = vdwg.mxu0
    %390 = vmatpush.msra.mxu0 0.0
    %391 = vmatpush.msra.mxu0 0.0
    %392 = vmatpush.msra.mxu0 0.0
    %393 = vmatpush.msra.mxu0 0.0
    %394 = vmatpush.msra.mxu0 0.0
    %395 = vmatpush.msra.mxu0 0.0
    %396 = vmatpush.msra.mxu0 0.0
    %397 = vmatpush.msra.mxu0 0.0
    %398 = vmatpush.msra.mxu0 0.0
    %399 = vmatpush.msra.mxu0 0.0
    %400 = vmatpush.msra.mxu0 0.0
    %401 = vmatpush.msra.mxu0 0.0
    %402 = vmatpush.msra.mxu0 %v237
    %403 = vmatpush.msra.mxu0 %v236
    %404 = vmatpush.msra.mxu0 %v235
    %405 = vmatpush.msra.mxu0 %v234
    %406 = vmatmul.f32.gmra.mxu0 %v368
    %v407 = vpop.f32.mrf.mxu0
    %v408 = vadd.f32 %v275, %v407
    %409 = vdwg.mxu0
    %410 = vmatpush.msra.mxu0 0.0
    %411 = vmatpush.msra.mxu0 0.0
    %412 = vmatpush.msra.mxu0 0.0
    %413 = vmatpush.msra.mxu0 0.0
    %414 = vmatpush.msra.mxu0 0.0
    %415 = vmatpush.msra.mxu0 0.0
    %416 = vmatpush.msra.mxu0 0.0
    %417 = vmatpush.msra.mxu0 0.0
    %418 = vmatpush.msra.mxu0 0.0
    %419 = vmatpush.msra.mxu0 0.0
    %420 = vmatpush.msra.mxu0 0.0
    %421 = vmatpush.msra.mxu0 0.0
    %422 = vmatpush.msra.mxu0 %v242
    %423 = vmatpush.msra.mxu0 %v241
    %424 = vmatpush.msra.mxu0 %v240
    %425 = vmatpush.msra.mxu0 %v239
    %426 = vmatmul.f32.gmra.mxu0 %v368
    %v427 = vpop.f32.mrf.mxu0
    %v428 = vadd.f32 %v298, %v427
    %429 = vdwg.mxu0
    %v431 = vrot.slane %v388, 6
    %v433 = vadd.f32 %v158, %v431
    %v434 = vxor.u32 %v433, 2147483648
    %v435 = vmul.f32 %v434, 1.442695
    %v436 = vpow.pop %v435
    %v437 = vadd.f32 %v436, 1.0
    %v438 = vrcp.pop %v437
    %v439 = vmul.f32 %v437, %v438
    %v440 = vsub.f32 1.0, %v439
    %v441 = vmul.f32 %v438, %v440
    %v442 = vadd.f32 %v438, %v441
    %vm443 = vweird.f32 %v437
    %vm444 = vweird.f32 %v438
    %vm445 = vmor %vm443, %vm444
    %v446 = vsel %vm445, %v438, %v442
    %v447 = vand.u32 2147483647, %v437
    %vm448 = vcmp.eq.f32.partialorder %v447, 8.507059e+37
    %v449 = vand.u32 %v437, 2147483648
    %v450 = vor.u32 1.1754944e-38, %v449
    %v451 = vsel %vm448, %v450, %v446
    %v452 = vmul.f32 1.0, %v451
    %v454 = vrot.slane %v408, 6
    %v456 = vadd.f32 %v191, %v454
    %v457 = vxor.u32 %v456, 2147483648
    %v458 = vmul.f32 %v457, 1.442695
    %v459 = vpow.pop %v458
    %v460 = vadd.f32 %v459, 1.0
    %v461 = vrcp.pop %v460
    %v462 = vmul.f32 %v460, %v461
    %v463 = vsub.f32 1.0, %v462
    %v464 = vmul.f32 %v461, %v463
    %v465 = vadd.f32 %v461, %v464
    %vm466 = vweird.f32 %v460
    %vm467 = vweird.f32 %v461
    %vm468 = vmor %vm466, %vm467
    %v469 = vsel %vm468, %v461, %v465
    %v470 = vand.u32 2147483647, %v460
    %vm471 = vcmp.eq.f32.partialorder %v470, 8.507059e+37
    %v472 = vand.u32 %v460, 2147483648
    %v473 = vor.u32 1.1754944e-38, %v472
    %v474 = vsel %vm471, %v473, %v469
    %v475 = vmul.f32 1.0, %v474
    %v477 = vrot.slane %v428, 6
    %v479 = vmul.f32 %v452, %v477
    %v480 = vadd.f32 %v224, %v479
    %v481 = vtanh.pop %v480
    %v482 = vsub.f32 1.0, %v475
    %v483 = vmul.f32 %v482, %v481
    %v484 = vrot.slane %v366, 6
    %v486 = vmul.f32 %v475, %v484
    %v487 = vadd.f32 %v483, %v486
    %v489 = vrot.slane %v487, 2
    %v490 = vsel %vm133, %v489, 0
    %492 = vmatpush.msra.mxu0 0.0
    %493 = vmatpush.msra.mxu0 0.0
    %494 = vmatpush.msra.mxu0 0.0
    %495 = vmatpush.msra.mxu0 0.0
    %496 = vmatpush.msra.mxu0 0.0
    %497 = vmatpush.msra.mxu0 0.0
    %498 = vmatpush.msra.mxu0 0.0
    %499 = vmatpush.msra.mxu0 0.0
    %500 = vmatpush.msra.mxu0 0.0
    %501 = vmatpush.msra.mxu0 0.0
    %502 = vmatpush.msra.mxu0 0.0
    %503 = vmatpush.msra.mxu0 0.0
    %504 = vmatpush.msra.mxu0 %v232
    %505 = vmatpush.msra.mxu0 %v231
    %506 = vmatpush.msra.mxu0 %v230
    %507 = vmatpush.msra.mxu0 %v229
    %508 = vmatmul.f32.gmra.mxu0 %v490
    %v509 = vpop.f32.mrf.mxu0
    %v510 = vadd.f32 %v249, %v509
    %511 = vdwg.mxu0
    %512 = vmatpush.msra.mxu0 0.0
    %513 = vmatpush.msra.mxu0 0.0
    %514 = vmatpush.msra.mxu0 0.0
    %515 = vmatpush.msra.mxu0 0.0
    %516 = vmatpush.msra.mxu0 0.0
    %517 = vmatpush.msra.mxu0 0.0
    %518 = vmatpush.msra.mxu0 0.0
    %519 = vmatpush.msra.mxu0 0.0
    %520 = vmatpush.msra.mxu0 0.0
    %521 = vmatpush.msra.mxu0 0.0
    %522 = vmatpush.msra.mxu0 0.0
    %523 = vmatpush.msra.mxu0 0.0
    %524 = vmatpush.msra.mxu0 %v237
    %525 = vmatpush.msra.mxu0 %v236
    %526 = vmatpush.msra.mxu0 %v235
    %527 = vmatpush.msra.mxu0 %v234
    %528 = vmatmul.f32.gmra.mxu0 %v490
    %v529 = vpop.f32.mrf.mxu0
    %v530 = vadd.f32 %v275, %v529
    %531 = vdwg.mxu0
    %532 = vmatpush.msra.mxu0 0.0
    %533 = vmatpush.msra.mxu0 0.0
    %534 = vmatpush.msra.mxu0 0.0
    %535 = vmatpush.msra.mxu0 0.0
    %536 = vmatpush.msra.mxu0 0.0
    %537 = vmatpush.msra.mxu0 0.0
    %538 = vmatpush.msra.mxu0 0.0
    %539 = vmatpush.msra.mxu0 0.0
    %540 = vmatpush.msra.mxu0 0.0
    %541 = vmatpush.msra.mxu0 0.0
    %542 = vmatpush.msra.mxu0 0.0
    %543 = vmatpush.msra.mxu0 0.0
    %544 = vmatpush.msra.mxu0 %v242
    %545 = vmatpush.msra.mxu0 %v241
    %546 = vmatpush.msra.mxu0 %v240
    %547 = vmatpush.msra.mxu0 %v239
    %548 = vmatmul.f32.gmra.mxu0 %v490
    %v549 = vpop.f32.mrf.mxu0
    %v550 = vadd.f32 %v298, %v549
    %551 = vdwg.mxu0
    %v553 = vrot.slane %v510, 4
    %v555 = vadd.f32 %v158, %v553
    %v556 = vxor.u32 %v555, 2147483648
    %v557 = vmul.f32 %v556, 1.442695
    %v558 = vpow.pop %v557
    %v559 = vadd.f32 %v558, 1.0
    %v560 = vrcp.pop %v559
    %v561 = vmul.f32 %v559, %v560
    %v562 = vsub.f32 1.0, %v561
    %v563 = vmul.f32 %v560, %v562
    %v564 = vadd.f32 %v560, %v563
    %vm565 = vweird.f32 %v559
    %vm566 = vweird.f32 %v560
    %vm567 = vmor %vm565, %vm566
    %v568 = vsel %vm567, %v560, %v564
    %v569 = vand.u32 2147483647, %v559
    %vm570 = vcmp.eq.f32.partialorder %v569, 8.507059e+37
    %v571 = vand.u32 %v559, 2147483648
    %v572 = vor.u32 1.1754944e-38, %v571
    %v573 = vsel %vm570, %v572, %v568
    %v574 = vmul.f32 1.0, %v573
    %v576 = vrot.slane %v530, 4
    %v578 = vadd.f32 %v191, %v576
    %v579 = vxor.u32 %v578, 2147483648
    %v580 = vmul.f32 %v579, 1.442695
    %v581 = vpow.pop %v580
    %v582 = vadd.f32 %v581, 1.0
    %v583 = vrcp.pop %v582
    %v584 = vmul.f32 %v582, %v583
    %v585 = vsub.f32 1.0, %v584
    %v586 = vmul.f32 %v583, %v585
    %v587 = vadd.f32 %v583, %v586
    %vm588 = vweird.f32 %v582
    %vm589 = vweird.f32 %v583
    %vm590 = vmor %vm588, %vm589
    %v591 = vsel %vm590, %v583, %v587
    %v592 = vand.u32 2147483647, %v582
    %vm593 = vcmp.eq.f32.partialorder %v592, 8.507059e+37
    %v594 = vand.u32 %v582, 2147483648
    %v595 = vor.u32 1.1754944e-38, %v594
    %v596 = vsel %vm593, %v595, %v591
    %v597 = vmul.f32 1.0, %v596
    %v599 = vrot.slane %v550, 4
    %v601 = vmul.f32 %v574, %v599
    %v602 = vadd.f32 %v224, %v601
    %v603 = vtanh.pop %v602
    %v604 = vsub.f32 1.0, %v597
    %v605 = vmul.f32 %v604, %v603
    %v606 = vrot.slane %v487, 6
    %v608 = vmul.f32 %v597, %v606
    %v609 = vadd.f32 %v605, %v608
    %v611 = vrot.slane %v609, 4
    %v612 = vsel %vm133, %v611, 0
    %614 = vmatpush.msra.mxu0 0.0
    %615 = vmatpush.msra.mxu0 0.0
    %616 = vmatpush.msra.mxu0 0.0
    %617 = vmatpush.msra.mxu0 0.0
    %618 = vmatpush.msra.mxu0 0.0
    %619 = vmatpush.msra.mxu0 0.0
    %620 = vmatpush.msra.mxu0 0.0
    %621 = vmatpush.msra.mxu0 0.0
    %622 = vmatpush.msra.mxu0 0.0
    %623 = vmatpush.msra.mxu0 0.0
    %624 = vmatpush.msra.mxu0 0.0
    %625 = vmatpush.msra.mxu0 0.0
    %626 = vmatpush.msra.mxu0 %v232
    %627 = vmatpush.msra.mxu0 %v231
    %628 = vmatpush.msra.mxu0 %v230
    %629 = vmatpush.msra.mxu0 %v229
    %630 = vmatmul.f32.gmra.mxu0 %v612
    %v631 = vpop.f32.mrf.mxu0
    %v632 = vadd.f32 %v249, %v631
    %633 = vdwg.mxu0
    %634 = vmatpush.msra.mxu0 0.0
    %635 = vmatpush.msra.mxu0 0.0
    %636 = vmatpush.msra.mxu0 0.0
    %637 = vmatpush.msra.mxu0 0.0
    %638 = vmatpush.msra.mxu0 0.0
    %639 = vmatpush.msra.mxu0 0.0
    %640 = vmatpush.msra.mxu0 0.0
    %641 = vmatpush.msra.mxu0 0.0
    %642 = vmatpush.msra.mxu0 0.0
    %643 = vmatpush.msra.mxu0 0.0
    %644 = vmatpush.msra.mxu0 0.0
    %645 = vmatpush.msra.mxu0 0.0
    %646 = vmatpush.msra.mxu0 %v237
    %647 = vmatpush.msra.mxu0 %v236
    %648 = vmatpush.msra.mxu0 %v235
    %649 = vmatpush.msra.mxu0 %v234
    %650 = vmatmul.f32.gmra.mxu0 %v612
    %v651 = vpop.f32.mrf.mxu0
    %v652 = vadd.f32 %v275, %v651
    %653 = vdwg.mxu0
    %654 = vmatpush.msra.mxu0 0.0
    %655 = vmatpush.msra.mxu0 0.0
    %656 = vmatpush.msra.mxu0 0.0
    %657 = vmatpush.msra.mxu0 0.0
    %658 = vmatpush.msra.mxu0 0.0
    %659 = vmatpush.msra.mxu0 0.0
    %660 = vmatpush.msra.mxu0 0.0
    %661 = vmatpush.msra.mxu0 0.0
    %662 = vmatpush.msra.mxu0 0.0
    %663 = vmatpush.msra.mxu0 0.0
    %664 = vmatpush.msra.mxu0 0.0
    %665 = vmatpush.msra.mxu0 0.0
    %666 = vmatpush.msra.mxu0 %v242
    %667 = vmatpush.msra.mxu0 %v241
    %668 = vmatpush.msra.mxu0 %v240
    %669 = vmatpush.msra.mxu0 %v239
    %670 = vmatmul.f32.gmra.mxu0 %v612
    %v671 = vpop.f32.mrf.mxu0
    %v672 = vadd.f32 %v298, %v671
    %673 = vdwg.mxu0
    %v675 = vrot.slane %v632, 2
    %v677 = vadd.f32 %v158, %v675
    %v678 = vxor.u32 %v677, 2147483648
    %v679 = vmul.f32 %v678, 1.442695
    %v680 = vpow.pop %v679
    %v681 = vadd.f32 %v680, 1.0
    %v682 = vrcp.pop %v681
    %v683 = vmul.f32 %v681, %v682
    %v684 = vsub.f32 1.0, %v683
    %v685 = vmul.f32 %v682, %v684
    %v686 = vadd.f32 %v682, %v685
    %vm687 = vweird.f32 %v681
    %vm688 = vweird.f32 %v682
    %vm689 = vmor %vm687, %vm688
    %v690 = vsel %vm689, %v682, %v686
    %v691 = vand.u32 2147483647, %v681
    %vm692 = vcmp.eq.f32.partialorder %v691, 8.507059e+37
    %v693 = vand.u32 %v681, 2147483648
    %v694 = vor.u32 1.1754944e-38, %v693
    %v695 = vsel %vm692, %v694, %v690
    %v696 = vmul.f32 1.0, %v695
    %v698 = vrot.slane %v652, 2
    %v700 = vadd.f32 %v191, %v698
    %v701 = vxor.u32 %v700, 2147483648
    %v702 = vmul.f32 %v701, 1.442695
    %v703 = vpow.pop %v702
    %v704 = vadd.f32 %v703, 1.0
    %v705 = vrcp.pop %v704
    %v706 = vmul.f32 %v704, %v705
    %v707 = vsub.f32 1.0, %v706
    %v708 = vmul.f32 %v705, %v707
    %v709 = vadd.f32 %v705, %v708
    %vm710 = vweird.f32 %v704
    %vm711 = vweird.f32 %v705
    %vm712 = vmor %vm710, %vm711
    %v713 = vsel %vm712, %v705, %v709
    %v714 = vand.u32 2147483647, %v704
    %vm715 = vcmp.eq.f32.partialorder %v714, 8.507059e+37
    %v716 = vand.u32 %v704, 2147483648
    %v717 = vor.u32 1.1754944e-38, %v716
    %v718 = vsel %vm715, %v717, %v713
    %v719 = vmul.f32 1.0, %v718
    %v721 = vrot.slane %v672, 2
    %v723 = vmul.f32 %v696, %v721
    %v724 = vadd.f32 %v224, %v723
    %v725 = vtanh.pop %v724
    %v726 = vsub.f32 1.0, %v719
    %v727 = vmul.f32 %v726, %v725
    %v728 = vrot.slane %v609, 6
    %v730 = vmul.f32 %v719, %v728
    %v731 = vadd.f32 %v727, %v730
    %v733 = vrot.slane %v731, 6
    %v734 = vsel %vm133, %v733, 0
    %736 = vmatpush.msra.mxu0 0.0
    %737 = vmatpush.msra.mxu0 0.0
    %738 = vmatpush.msra.mxu0 0.0
    %739 = vmatpush.msra.mxu0 0.0
    %740 = vmatpush.msra.mxu0 0.0
    %741 = vmatpush.msra.mxu0 0.0
    %742 = vmatpush.msra.mxu0 0.0
    %743 = vmatpush.msra.mxu0 0.0
    %744 = vmatpush.msra.mxu0 0.0
    %745 = vmatpush.msra.mxu0 0.0
    %746 = vmatpush.msra.mxu0 0.0
    %747 = vmatpush.msra.mxu0 0.0
    %748 = vmatpush.msra.mxu0 %v232
    %749 = vmatpush.msra.mxu0 %v231
    %750 = vmatpush.msra.mxu0 %v230
    %751 = vmatpush.msra.mxu0 %v229
    %752 = vmatmul.f32.gmra.mxu0 %v734
    %v753 = vpop.f32.mrf.mxu0
    %v754 = vadd.f32 %v249, %v753
    %755 = vdwg.mxu0
    %756 = vmatpush.msra.mxu0 0.0
    %757 = vmatpush.msra.mxu0 0.0
    %758 = vmatpush.msra.mxu0 0.0
    %759 = vmatpush.msra.mxu0 0.0
    %760 = vmatpush.msra.mxu0 0.0
    %761 = vmatpush.msra.mxu0 0.0
    %762 = vmatpush.msra.mxu0 0.0
    %763 = vmatpush.msra.mxu0 0.0
    %764 = vmatpush.msra.mxu0 0.0
    %765 = vmatpush.msra.mxu0 0.0
    %766 = vmatpush.msra.mxu0 0.0
    %767 = vmatpush.msra.mxu0 0.0
    %768 = vmatpush.msra.mxu0 %v237
    %769 = vmatpush.msra.mxu0 %v236
    %770 = vmatpush.msra.mxu0 %v235
    %771 = vmatpush.msra.mxu0 %v234
    %772 = vmatmul.f32.gmra.mxu0 %v734
    %v773 = vpop.f32.mrf.mxu0
    %v774 = vadd.f32 %v275, %v773
    %775 = vdwg.mxu0
    %776 = vmatpush.msra.mxu0 0.0
    %777 = vmatpush.msra.mxu0 0.0
    %778 = vmatpush.msra.mxu0 0.0
    %779 = vmatpush.msra.mxu0 0.0
    %780 = vmatpush.msra.mxu0 0.0
    %781 = vmatpush.msra.mxu0 0.0
    %782 = vmatpush.msra.mxu0 0.0
    %783 = vmatpush.msra.mxu0 0.0
    %784 = vmatpush.msra.mxu0 0.0
    %785 = vmatpush.msra.mxu0 0.0
    %786 = vmatpush.msra.mxu0 0.0
    %787 = vmatpush.msra.mxu0 0.0
    %788 = vmatpush.msra.mxu0 %v242
    %789 = vmatpush.msra.mxu0 %v241
    %790 = vmatpush.msra.mxu0 %v240
    %791 = vmatpush.msra.mxu0 %v239
    %792 = vmatmul.f32.gmra.mxu0 %v734
    %v793 = vpop.f32.mrf.mxu0
    %v794 = vadd.f32 %v298, %v793
    %795 = vdwg.mxu0
    %v796 = vadd.f32 %v161, %v754
    %v797 = vxor.u32 %v796, 2147483648
    %v798 = vmul.f32 %v797, 1.442695
    %v799 = vpow.pop %v798
    %v800 = vadd.f32 %v799, 1.0
    %v801 = vrcp.pop %v800
    %v802 = vmul.f32 %v800, %v801
    %v803 = vsub.f32 1.0, %v802
    %v804 = vmul.f32 %v801, %v803
    %v805 = vadd.f32 %v801, %v804
    %vm806 = vweird.f32 %v800
    %vm807 = vweird.f32 %v801
    %vm808 = vmor %vm806, %vm807
    %v809 = vsel %vm808, %v801, %v805
    %v810 = vand.u32 2147483647, %v800
    %vm811 = vcmp.eq.f32.partialorder %v810, 8.507059e+37
    %v812 = vand.u32 %v800, 2147483648
    %v813 = vor.u32 1.1754944e-38, %v812
    %v814 = vsel %vm811, %v813, %v809
    %v815 = vmul.f32 1.0, %v814
    %v816 = vadd.f32 %v194, %v774
    %v817 = vxor.u32 %v816, 2147483648
    %v818 = vmul.f32 %v817, 1.442695
    %v819 = vpow.pop %v818
    %v820 = vadd.f32 %v819, 1.0
    %v821 = vrcp.pop %v820
    %v822 = vmul.f32 %v820, %v821
    %v823 = vsub.f32 1.0, %v822
    %v824 = vmul.f32 %v821, %v823
    %v825 = vadd.f32 %v821, %v824
    %vm826 = vweird.f32 %v820
    %vm827 = vweird.f32 %v821
    %vm828 = vmor %vm826, %vm827
    %v829 = vsel %vm828, %v821, %v825
    %v830 = vand.u32 2147483647, %v820
    %vm831 = vcmp.eq.f32.partialorder %v830, 8.507059e+37
    %v832 = vand.u32 %v820, 2147483648
    %v833 = vor.u32 1.1754944e-38, %v832
    %v834 = vsel %vm831, %v833, %v829
    %v835 = vmul.f32 1.0, %v834
    %v836 = vmul.f32 %v815, %v794
    %v837 = vadd.f32 %v227, %v836
    %v838 = vtanh.pop %v837
    %v839 = vsub.f32 1.0, %v835
    %v840 = vmul.f32 %v839, %v838
    %v842 = vmul.f32 %v835, %v733
    %v843 = vadd.f32 %v840, %v842
    %v845 = vsel %vm133, %v843, 0
    %847 = vmatpush.msra.mxu0 0.0
    %848 = vmatpush.msra.mxu0 0.0
    %849 = vmatpush.msra.mxu0 0.0
    %850 = vmatpush.msra.mxu0 0.0
    %851 = vmatpush.msra.mxu0 0.0
    %852 = vmatpush.msra.mxu0 0.0
    %853 = vmatpush.msra.mxu0 0.0
    %854 = vmatpush.msra.mxu0 0.0
    %855 = vmatpush.msra.mxu0 0.0
    %856 = vmatpush.msra.mxu0 0.0
    %857 = vmatpush.msra.mxu0 0.0
    %858 = vmatpush.msra.mxu0 0.0
    %859 = vmatpush.msra.mxu0 %v232
    %860 = vmatpush.msra.mxu0 %v231
    %861 = vmatpush.msra.mxu0 %v230
    %862 = vmatpush.msra.mxu0 %v229
    %863 = vmatmul.f32.gmra.mxu0 %v845
    %v864 = vpop.f32.mrf.mxu0
    %v865 = vadd.f32 %v249, %v864
    %866 = vdwg.mxu0
    %867 = vmatpush.msra.mxu0 0.0
    %868 = vmatpush.msra.mxu0 0.0
    %869 = vmatpush.msra.mxu0 0.0
    %870 = vmatpush.msra.mxu0 0.0
    %871 = vmatpush.msra.mxu0 0.0
    %872 = vmatpush.msra.mxu0 0.0
    %873 = vmatpush.msra.mxu0 0.0
    %874 = vmatpush.msra.mxu0 0.0
    %875 = vmatpush.msra.mxu0 0.0
    %876 = vmatpush.msra.mxu0 0.0
    %877 = vmatpush.msra.mxu0 0.0
    %878 = vmatpush.msra.mxu0 0.0
    %879 = vmatpush.msra.mxu0 %v237
    %880 = vmatpush.msra.mxu0 %v236
    %881 = vmatpush.msra.mxu0 %v235
    %882 = vmatpush.msra.mxu0 %v234
    %883 = vmatmul.f32.gmra.mxu0 %v845
    %v884 = vpop.f32.mrf.mxu0
    %v885 = vadd.f32 %v275, %v884
    %886 = vdwg.mxu0
    %887 = vmatpush.msra.mxu0 0.0
    %888 = vmatpush.msra.mxu0 0.0
    %889 = vmatpush.msra.mxu0 0.0
    %890 = vmatpush.msra.mxu0 0.0
    %891 = vmatpush.msra.mxu0 0.0
    %892 = vmatpush.msra.mxu0 0.0
    %893 = vmatpush.msra.mxu0 0.0
    %894 = vmatpush.msra.mxu0 0.0
    %895 = vmatpush.msra.mxu0 0.0
    %896 = vmatpush.msra.mxu0 0.0
    %897 = vmatpush.msra.mxu0 0.0
    %898 = vmatpush.msra.mxu0 0.0
    %899 = vmatpush.msra.mxu0 %v242
    %900 = vmatpush.msra.mxu0 %v241
    %901 = vmatpush.msra.mxu0 %v240
    %902 = vmatpush.msra.mxu0 %v239
    %903 = vmatmul.f32.gmra.mxu0 %v845
    %v904 = vpop.f32.mrf.mxu0
    %v905 = vadd.f32 %v298, %v904
    %906 = vdwg.mxu0
    %v908 = vrot.slane %v865, 6
    %v910 = vadd.f32 %v161, %v908
    %v911 = vxor.u32 %v910, 2147483648
    %v912 = vmul.f32 %v911, 1.442695
    %v913 = vpow.pop %v912
    %v914 = vadd.f32 %v913, 1.0
    %v915 = vrcp.pop %v914
    %v916 = vmul.f32 %v914, %v915
    %v917 = vsub.f32 1.0, %v916
    %v918 = vmul.f32 %v915, %v917
    %v919 = vadd.f32 %v915, %v918
    %vm920 = vweird.f32 %v914
    %vm921 = vweird.f32 %v915
    %vm922 = vmor %vm920, %vm921
    %v923 = vsel %vm922, %v915, %v919
    %v924 = vand.u32 2147483647, %v914
    %vm925 = vcmp.eq.f32.partialorder %v924, 8.507059e+37
    %v926 = vand.u32 %v914, 2147483648
    %v927 = vor.u32 1.1754944e-38, %v926
    %v928 = vsel %vm925, %v927, %v923
    %v929 = vmul.f32 1.0, %v928
    %v931 = vrot.slane %v885, 6
    %v933 = vadd.f32 %v194, %v931
    %v934 = vxor.u32 %v933, 2147483648
    %v935 = vmul.f32 %v934, 1.442695
    %v936 = vpow.pop %v935
    %v937 = vadd.f32 %v936, 1.0
    %v938 = vrcp.pop %v937
    %v939 = vmul.f32 %v937, %v938
    %v940 = vsub.f32 1.0, %v939
    %v941 = vmul.f32 %v938, %v940
    %v942 = vadd.f32 %v938, %v941
    %vm943 = vweird.f32 %v937
    %vm944 = vweird.f32 %v938
    %vm945 = vmor %vm943, %vm944
    %v946 = vsel %vm945, %v938, %v942
    %v947 = vand.u32 2147483647, %v937
    %vm948 = vcmp.eq.f32.partialorder %v947, 8.507059e+37
    %v949 = vand.u32 %v937, 2147483648
    %v950 = vor.u32 1.1754944e-38, %v949
    %v951 = vsel %vm948, %v950, %v946
    %v952 = vmul.f32 1.0, %v951
    %v954 = vrot.slane %v905, 6
    %v956 = vmul.f32 %v929, %v954
    %v957 = vadd.f32 %v227, %v956
    %v958 = vtanh.pop %v957
    %v959 = vsub.f32 1.0, %v952
    %v960 = vmul.f32 %v959, %v958
    %v961 = vrot.slane %v843, 6
    %v963 = vmul.f32 %v952, %v961
    %v964 = vadd.f32 %v960, %v963
    %v966 = vrot.slane %v964, 2
    %v967 = vsel %vm133, %v966, 0
    %969 = vmatpush.msra.mxu0 0.0
    %970 = vmatpush.msra.mxu0 0.0
    %971 = vmatpush.msra.mxu0 0.0
    %972 = vmatpush.msra.mxu0 0.0
    %973 = vmatpush.msra.mxu0 0.0
    %974 = vmatpush.msra.mxu0 0.0
    %975 = vmatpush.msra.mxu0 0.0
    %976 = vmatpush.msra.mxu0 0.0
    %977 = vmatpush.msra.mxu0 0.0
    %978 = vmatpush.msra.mxu0 0.0
    %979 = vmatpush.msra.mxu0 0.0
    %980 = vmatpush.msra.mxu0 0.0
    %981 = vmatpush.msra.mxu0 %v232
    %982 = vmatpush.msra.mxu0 %v231
    %983 = vmatpush.msra.mxu0 %v230
    %984 = vmatpush.msra.mxu0 %v229
    %985 = vmatmul.f32.gmra.mxu0 %v967
    %v986 = vpop.f32.mrf.mxu0
    %v987 = vadd.f32 %v249, %v986
    %988 = vdwg.mxu0
    %989 = vmatpush.msra.mxu0 0.0
    %990 = vmatpush.msra.mxu0 0.0
    %991 = vmatpush.msra.mxu0 0.0
    %992 = vmatpush.msra.mxu0 0.0
    %993 = vmatpush.msra.mxu0 0.0
    %994 = vmatpush.msra.mxu0 0.0
    %995 = vmatpush.msra.mxu0 0.0
    %996 = vmatpush.msra.mxu0 0.0
    %997 = vmatpush.msra.mxu0 0.0
    %998 = vmatpush.msra.mxu0 0.0
    %999 = vmatpush.msra.mxu0 0.0
    %1000 = vmatpush.msra.mxu0 0.0
    %1001 = vmatpush.msra.mxu0 %v237
    %1002 = vmatpush.msra.mxu0 %v236
    %1003 = vmatpush.msra.mxu0 %v235
    %1004 = vmatpush.msra.mxu0 %v234
    %1005 = vmatmul.f32.gmra.mxu0 %v967
    %v1006 = vpop.f32.mrf.mxu0
    %v1007 = vadd.f32 %v275, %v1006
    %1008 = vdwg.mxu0
    %1009 = vmatpush.msra.mxu0 0.0
    %1010 = vmatpush.msra.mxu0 0.0
    %1011 = vmatpush.msra.mxu0 0.0
    %1012 = vmatpush.msra.mxu0 0.0
    %1013 = vmatpush.msra.mxu0 0.0
    %1014 = vmatpush.msra.mxu0 0.0
    %1015 = vmatpush.msra.mxu0 0.0
    %1016 = vmatpush.msra.mxu0 0.0
    %1017 = vmatpush.msra.mxu0 0.0
    %1018 = vmatpush.msra.mxu0 0.0
    %1019 = vmatpush.msra.mxu0 0.0
    %1020 = vmatpush.msra.mxu0 0.0
    %1021 = vmatpush.msra.mxu0 %v242
    %1022 = vmatpush.msra.mxu0 %v241
    %1023 = vmatpush.msra.mxu0 %v240
    %1024 = vmatpush.msra.mxu0 %v239
    %1025 = vmatmul.f32.gmra.mxu0 %v967
    %v1026 = vpop.f32.mrf.mxu0
    %v1027 = vadd.f32 %v298, %v1026
    %1028 = vdwg.mxu0
    %v1030 = vrot.slane %v987, 4
    %v1032 = vadd.f32 %v161, %v1030
    %v1033 = vxor.u32 %v1032, 2147483648
    %v1034 = vmul.f32 %v1033, 1.442695
    %v1035 = vpow.pop %v1034
    %v1036 = vadd.f32 %v1035, 1.0
    %v1037 = vrcp.pop %v1036
    %v1038 = vmul.f32 %v1036, %v1037
    %v1039 = vsub.f32 1.0, %v1038
    %v1040 = vmul.f32 %v1037, %v1039
    %v1041 = vadd.f32 %v1037, %v1040
    %vm1042 = vweird.f32 %v1036
    %vm1043 = vweird.f32 %v1037
    %vm1044 = vmor %vm1042, %vm1043
    %v1045 = vsel %vm1044, %v1037, %v1041
    %v1046 = vand.u32 2147483647, %v1036
    %vm1047 = vcmp.eq.f32.partialorder %v1046, 8.507059e+37
    %v1048 = vand.u32 %v1036, 2147483648
    %v1049 = vor.u32 1.1754944e-38, %v1048
    %v1050 = vsel %vm1047, %v1049, %v1045
    %v1051 = vmul.f32 1.0, %v1050
    %v1053 = vrot.slane %v1007, 4
    %v1055 = vadd.f32 %v194, %v1053
    %v1056 = vxor.u32 %v1055, 2147483648
    %v1057 = vmul.f32 %v1056, 1.442695
    %v1058 = vpow.pop %v1057
    %v1059 = vadd.f32 %v1058, 1.0
    %v1060 = vrcp.pop %v1059
    %v1061 = vmul.f32 %v1059, %v1060
    %v1062 = vsub.f32 1.0, %v1061
    %v1063 = vmul.f32 %v1060, %v1062
    %v1064 = vadd.f32 %v1060, %v1063
    %vm1065 = vweird.f32 %v1059
    %vm1066 = vweird.f32 %v1060
    %vm1067 = vmor %vm1065, %vm1066
    %v1068 = vsel %vm1067, %v1060, %v1064
    %v1069 = vand.u32 2147483647, %v1059
    %vm1070 = vcmp.eq.f32.partialorder %v1069, 8.507059e+37
    %v1071 = vand.u32 %v1059, 2147483648
    %v1072 = vor.u32 1.1754944e-38, %v1071
    %v1073 = vsel %vm1070, %v1072, %v1068
    %v1074 = vmul.f32 1.0, %v1073
    %v1076 = vrot.slane %v1027, 4
    %v1078 = vmul.f32 %v1051, %v1076
    %v1079 = vadd.f32 %v227, %v1078
    %v1080 = vtanh.pop %v1079
    %v1081 = vsub.f32 1.0, %v1074
    %v1082 = vmul.f32 %v1081, %v1080
    %v1083 = vrot.slane %v964, 6
    %v1085 = vmul.f32 %v1074, %v1083
    %v1086 = vadd.f32 %v1082, %v1085
    %v1088 = vrot.slane %v1086, 4
    %v1089 = vsel %vm133, %v1088, 0
    %1091 = vmatpush.msra.mxu0 0.0
    %1092 = vmatpush.msra.mxu0 0.0
    %1093 = vmatpush.msra.mxu0 0.0
    %1094 = vmatpush.msra.mxu0 0.0
    %1095 = vmatpush.msra.mxu0 0.0
    %1096 = vmatpush.msra.mxu0 0.0
    %1097 = vmatpush.msra.mxu0 0.0
    %1098 = vmatpush.msra.mxu0 0.0
    %1099 = vmatpush.msra.mxu0 0.0
    %1100 = vmatpush.msra.mxu0 0.0
    %1101 = vmatpush.msra.mxu0 0.0
    %1102 = vmatpush.msra.mxu0 0.0
    %1103 = vmatpush.msra.mxu0 %v232
    %1104 = vmatpush.msra.mxu0 %v231
    %1105 = vmatpush.msra.mxu0 %v230
    %1106 = vmatpush.msra.mxu0 %v229
    %1107 = vmatmul.f32.gmra.mxu0 %v1089
    %v1108 = vpop.f32.mrf.mxu0
    %v1109 = vadd.f32 %v249, %v1108
    %1110 = vdwg.mxu0
    %1111 = vmatpush.msra.mxu0 0.0
    %1112 = vmatpush.msra.mxu0 0.0
    %1113 = vmatpush.msra.mxu0 0.0
    %1114 = vmatpush.msra.mxu0 0.0
    %1115 = vmatpush.msra.mxu0 0.0
    %1116 = vmatpush.msra.mxu0 0.0
    %1117 = vmatpush.msra.mxu0 0.0
    %1118 = vmatpush.msra.mxu0 0.0
    %1119 = vmatpush.msra.mxu0 0.0
    %1120 = vmatpush.msra.mxu0 0.0
    %1121 = vmatpush.msra.mxu0 0.0
    %1122 = vmatpush.msra.mxu0 0.0
    %1123 = vmatpush.msra.mxu0 %v237
    %1124 = vmatpush.msra.mxu0 %v236
    %1125 = vmatpush.msra.mxu0 %v235
    %1126 = vmatpush.msra.mxu0 %v234
    %1127 = vmatmul.f32.gmra.mxu0 %v1089
    %v1128 = vpop.f32.mrf.mxu0
    %v1129 = vadd.f32 %v275, %v1128
    %1130 = vdwg.mxu0
    %1131 = vmatpush.msra.mxu0 0.0
    %1132 = vmatpush.msra.mxu0 0.0
    %1133 = vmatpush.msra.mxu0 0.0
    %1134 = vmatpush.msra.mxu0 0.0
    %1135 = vmatpush.msra.mxu0 0.0
    %1136 = vmatpush.msra.mxu0 0.0
    %1137 = vmatpush.msra.mxu0 0.0
    %1138 = vmatpush.msra.mxu0 0.0
    %1139 = vmatpush.msra.mxu0 0.0
    %1140 = vmatpush.msra.mxu0 0.0
    %1141 = vmatpush.msra.mxu0 0.0
    %1142 = vmatpush.msra.mxu0 0.0
    %1143 = vmatpush.msra.mxu0 %v242
    %1144 = vmatpush.msra.mxu0 %v241
    %1145 = vmatpush.msra.mxu0 %v240
    %1146 = vmatpush.msra.mxu0 %v239
    %1147 = vmatmul.f32.gmra.mxu0 %v1089
    %v1148 = vpop.f32.mrf.mxu0
    %v1149 = vadd.f32 %v298, %v1148
    %1150 = vdwg.mxu0
    %v1152 = vrot.slane %v1109, 2
    %v1154 = vadd.f32 %v161, %v1152
    %v1155 = vxor.u32 %v1154, 2147483648
    %v1156 = vmul.f32 %v1155, 1.442695
    %v1157 = vpow.pop %v1156
    %v1158 = vadd.f32 %v1157, 1.0
    %v1159 = vrcp.pop %v1158
    %v1160 = vmul.f32 %v1158, %v1159
    %v1161 = vsub.f32 1.0, %v1160
    %v1162 = vmul.f32 %v1159, %v1161
    %v1163 = vadd.f32 %v1159, %v1162
    %vm1164 = vweird.f32 %v1158
    %vm1165 = vweird.f32 %v1159
    %vm1166 = vmor %vm1164, %vm1165
    %v1167 = vsel %vm1166, %v1159, %v1163
    %v1168 = vand.u32 2147483647, %v1158
    %vm1169 = vcmp.eq.f32.partialorder %v1168, 8.507059e+37
    %v1170 = vand.u32 %v1158, 2147483648
    %v1171 = vor.u32 1.1754944e-38, %v1170
    %v1172 = vsel %vm1169, %v1171, %v1167
    %v1173 = vmul.f32 1.0, %v1172
    %v1175 = vrot.slane %v1129, 2
    %v1177 = vadd.f32 %v194, %v1175
    %v1178 = vxor.u32 %v1177, 2147483648
    %v1179 = vmul.f32 %v1178, 1.442695
    %v1180 = vpow.pop %v1179
    %v1181 = vadd.f32 %v1180, 1.0
    %v1182 = vrcp.pop %v1181
    %v1183 = vmul.f32 %v1181, %v1182
    %v1184 = vsub.f32 1.0, %v1183
    %v1185 = vmul.f32 %v1182, %v1184
    %v1186 = vadd.f32 %v1182, %v1185
    %vm1187 = vweird.f32 %v1181
    %vm1188 = vweird.f32 %v1182
    %vm1189 = vmor %vm1187, %vm1188
    %v1190 = vsel %vm1189, %v1182, %v1186
    %v1191 = vand.u32 2147483647, %v1181
    %vm1192 = vcmp.eq.f32.partialorder %v1191, 8.507059e+37
    %v1193 = vand.u32 %v1181, 2147483648
    %v1194 = vor.u32 1.1754944e-38, %v1193
    %v1195 = vsel %vm1192, %v1194, %v1190
    %v1196 = vmul.f32 1.0, %v1195
    %v1198 = vrot.slane %v1149, 2
    %v1200 = vmul.f32 %v1173, %v1198
    %v1201 = vadd.f32 %v227, %v1200
    %v1202 = vtanh.pop %v1201
    %v1203 = vsub.f32 1.0, %v1196
    %v1204 = vmul.f32 %v1203, %v1202
    %v1205 = vrot.slane %v1086, 6
    %v1207 = vmul.f32 %v1196, %v1205
    %v1208 = vadd.f32 %v1204, %v1207
    %s1209 = scalar_lea.vmem %s3, 2
    %v1210 = vld [vmem:[%s1209] sm:$0x3]
    %v1211 = vld [vmem:[%s13] sm:$0xff]
    %v1212 = vld [vmem:[%s13 + $0x8] sm:$0xff]
    %v1213 = vld [vmem:[%s13 + $0x10] sm:$0xff]
    %v1214 = vld [vmem:[%s13 + $0x18] sm:$0xff]
    %v1215 = vld [vmem:[%s17] sm:$0x1]
    %v1217 = vperm.slane %v1215, 0
    %1219 = vmatpush.msra.mxu0 0.0
    %1220 = vmatpush.msra.mxu0 0.0
    %1221 = vmatpush.msra.mxu0 0.0
    %1222 = vmatpush.msra.mxu0 0.0
    %1223 = vmatpush.msra.mxu0 0.0
    %1224 = vmatpush.msra.mxu0 0.0
    %1225 = vmatpush.msra.mxu0 0.0
    %1226 = vmatpush.msra.mxu0 0.0
    %1227 = vmatpush.msra.mxu0 0.0
    %1228 = vmatpush.msra.mxu0 0.0
    %1229 = vmatpush.msra.mxu0 0.0
    %1230 = vmatpush.msra.mxu0 0.0
    %1231 = vmatpush.msra.mxu0 %v1214
    %1232 = vmatpush.msra.mxu0 %v1213
    %1233 = vmatpush.msra.mxu0 %v1212
    %1234 = vmatpush.msra.mxu0 %v1211
    %1235 = vmatmul.f32.gmra.mxu0 %v135
    %v1236 = vpop.f32.mrf.mxu0
    %v1237 = vadd.f32 %v1217, %v1236
    %1238 = vmatmul.f32.gmra.mxu0 %v138
    %v1239 = vpop.f32.mrf.mxu0
    %v1240 = vadd.f32 %v1217, %v1239
    %1241 = vdwg.mxu0
    %s1242 = scalar_lea.vmem %s13, 32
    %v1243 = vld [vmem:[%s1242] sm:$0xff]
    %v1244 = vld [vmem:[%s1242 + $0x8] sm:$0xff]
    %v1245 = vld [vmem:[%s1242 + $0x10] sm:$0xff]
    %v1246 = vld [vmem:[%s1242 + $0x18] sm:$0xff]
    %s1247 = scalar_lea.vmem %s17, 1
    %v1248 = vld [vmem:[%s1247] sm:$0x1]
    %v1250 = vperm.slane %v1248, 0
    %1252 = vmatpush.msra.mxu0 0.0
    %1253 = vmatpush.msra.mxu0 0.0
    %1254 = vmatpush.msra.mxu0 0.0
    %1255 = vmatpush.msra.mxu0 0.0
    %1256 = vmatpush.msra.mxu0 0.0
    %1257 = vmatpush.msra.mxu0 0.0
    %1258 = vmatpush.msra.mxu0 0.0
    %1259 = vmatpush.msra.mxu0 0.0
    %1260 = vmatpush.msra.mxu0 0.0
    %1261 = vmatpush.msra.mxu0 0.0
    %1262 = vmatpush.msra.mxu0 0.0
    %1263 = vmatpush.msra.mxu0 0.0
    %1264 = vmatpush.msra.mxu0 %v1246
    %1265 = vmatpush.msra.mxu0 %v1245
    %1266 = vmatpush.msra.mxu0 %v1244
    %1267 = vmatpush.msra.mxu0 %v1243
    %1268 = vmatmul.f32.gmra.mxu0 %v135
    %v1269 = vpop.f32.mrf.mxu0
    %v1270 = vadd.f32 %v1250, %v1269
    %1271 = vmatmul.f32.gmra.mxu0 %v138
    %v1272 = vpop.f32.mrf.mxu0
    %v1273 = vadd.f32 %v1250, %v1272
    %1274 = vdwg.mxu0
    %s1275 = scalar_lea.vmem %s13, 64
    %v1276 = vld [vmem:[%s1275] sm:$0xff]
    %v1277 = vld [vmem:[%s1275 + $0x8] sm:$0xff]
    %v1278 = vld [vmem:[%s1275 + $0x10] sm:$0xff]
    %v1279 = vld [vmem:[%s1275 + $0x18] sm:$0xff]
    %s1280 = scalar_lea.vmem %s17, 2
    %v1281 = vld [vmem:[%s1280] sm:$0x1]
    %v1283 = vperm.slane %v1281, 0
    %1285 = vmatpush.msra.mxu0 0.0
    %1286 = vmatpush.msra.mxu0 0.0
    %1287 = vmatpush.msra.mxu0 0.0
    %1288 = vmatpush.msra.mxu0 0.0
    %1289 = vmatpush.msra.mxu0 0.0
    %1290 = vmatpush.msra.mxu0 0.0
    %1291 = vmatpush.msra.mxu0 0.0
    %1292 = vmatpush.msra.mxu0 0.0
    %1293 = vmatpush.msra.mxu0 0.0
    %1294 = vmatpush.msra.mxu0 0.0
    %1295 = vmatpush.msra.mxu0 0.0
    %1296 = vmatpush.msra.mxu0 0.0
    %1297 = vmatpush.msra.mxu0 %v1279
    %1298 = vmatpush.msra.mxu0 %v1278
    %1299 = vmatpush.msra.mxu0 %v1277
    %1300 = vmatpush.msra.mxu0 %v1276
    %1301 = vmatmul.f32.gmra.mxu0 %v135
    %v1302 = vpop.f32.mrf.mxu0
    %v1303 = vadd.f32 %v1283, %v1302
    %1304 = vmatmul.f32.gmra.mxu0 %v138
    %v1305 = vpop.f32.mrf.mxu0
    %v1306 = vadd.f32 %v1283, %v1305
    %1307 = vdwg.mxu0
    %v1308 = vld [vmem:[%s15] sm:$0xff]
    %v1309 = vld [vmem:[%s15 + $0x8] sm:$0xff]
    %v1310 = vld [vmem:[%s15 + $0x10] sm:$0xff]
    %v1311 = vld [vmem:[%s15 + $0x18] sm:$0xff]
    %s1312 = scalar_lea.vmem %s15, 32
    %v1313 = vld [vmem:[%s1312] sm:$0xff]
    %v1314 = vld [vmem:[%s1312 + $0x8] sm:$0xff]
    %v1315 = vld [vmem:[%s1312 + $0x10] sm:$0xff]
    %v1316 = vld [vmem:[%s1312 + $0x18] sm:$0xff]
    %s1317 = scalar_lea.vmem %s15, 64
    %v1318 = vld [vmem:[%s1317] sm:$0xff]
    %v1319 = vld [vmem:[%s1317 + $0x8] sm:$0xff]
    %v1320 = vld [vmem:[%s1317 + $0x10] sm:$0xff]
    %v1321 = vld [vmem:[%s1317 + $0x18] sm:$0xff]
    %v1322 = vld [vmem:[%s19] sm:$0x1]
    %s1323 = scalar_lea.vmem %s19, 1
    %v1324 = vld [vmem:[%s1323] sm:$0x1]
    %s1325 = scalar_lea.vmem %s19, 2
    %v1326 = vld [vmem:[%s1325] sm:$0x1]
    %v1328 = vperm.slane %v1322, 0
    %v1331 = vsel %vm133, %v1210, 0
    %1333 = vmatpush.msra.mxu0 0.0
    %1334 = vmatpush.msra.mxu0 0.0
    %1335 = vmatpush.msra.mxu0 0.0
    %1336 = vmatpush.msra.mxu0 0.0
    %1337 = vmatpush.msra.mxu0 0.0
    %1338 = vmatpush.msra.mxu0 0.0
    %1339 = vmatpush.msra.mxu0 0.0
    %1340 = vmatpush.msra.mxu0 0.0
    %1341 = vmatpush.msra.mxu0 0.0
    %1342 = vmatpush.msra.mxu0 0.0
    %1343 = vmatpush.msra.mxu0 0.0
    %1344 = vmatpush.msra.mxu0 0.0
    %1345 = vmatpush.msra.mxu0 %v1311
    %1346 = vmatpush.msra.mxu0 %v1310
    %1347 = vmatpush.msra.mxu0 %v1309
    %1348 = vmatpush.msra.mxu0 %v1308
    %1349 = vmatmul.f32.gmra.mxu0 %v1331
    %v1350 = vpop.f32.mrf.mxu0
    %v1351 = vadd.f32 %v1328, %v1350
    %1352 = vdwg.mxu0
    %v1354 = vperm.slane %v1324, 0
    %1356 = vmatpush.msra.mxu0 0.0
    %1357 = vmatpush.msra.mxu0 0.0
    %1358 = vmatpush.msra.mxu0 0.0
    %1359 = vmatpush.msra.mxu0 0.0
    %1360 = vmatpush.msra.mxu0 0.0
    %1361 = vmatpush.msra.mxu0 0.0
    %1362 = vmatpush.msra.mxu0 0.0
    %1363 = vmatpush.msra.mxu0 0.0
    %1364 = vmatpush.msra.mxu0 0.0
    %1365 = vmatpush.msra.mxu0 0.0
    %1366 = vmatpush.msra.mxu0 0.0
    %1367 = vmatpush.msra.mxu0 0.0
    %1368 = vmatpush.msra.mxu0 %v1316
    %1369 = vmatpush.msra.mxu0 %v1315
    %1370 = vmatpush.msra.mxu0 %v1314
    %1371 = vmatpush.msra.mxu0 %v1313
    %1372 = vmatmul.f32.gmra.mxu0 %v1331
    %v1373 = vpop.f32.mrf.mxu0
    %v1374 = vadd.f32 %v1354, %v1373
    %1375 = vdwg.mxu0
    %v1377 = vperm.slane %v1326, 0
    %1379 = vmatpush.msra.mxu0 0.0
    %1380 = vmatpush.msra.mxu0 0.0
    %1381 = vmatpush.msra.mxu0 0.0
    %1382 = vmatpush.msra.mxu0 0.0
    %1383 = vmatpush.msra.mxu0 0.0
    %1384 = vmatpush.msra.mxu0 0.0
    %1385 = vmatpush.msra.mxu0 0.0
    %1386 = vmatpush.msra.mxu0 0.0
    %1387 = vmatpush.msra.mxu0 0.0
    %1388 = vmatpush.msra.mxu0 0.0
    %1389 = vmatpush.msra.mxu0 0.0
    %1390 = vmatpush.msra.mxu0 0.0
    %1391 = vmatpush.msra.mxu0 %v1321
    %1392 = vmatpush.msra.mxu0 %v1320
    %1393 = vmatpush.msra.mxu0 %v1319
    %1394 = vmatpush.msra.mxu0 %v1318
    %1395 = vmatmul.f32.gmra.mxu0 %v1331
    %v1396 = vpop.f32.mrf.mxu0
    %v1397 = vadd.f32 %v1377, %v1396
    %1398 = vdwg.mxu0
    %v1400 = vrot.slane %v1351, 2
    %v1402 = vadd.f32 %v1240, %v1400
    %v1403 = vxor.u32 %v1402, 2147483648
    %v1404 = vmul.f32 %v1403, 1.442695
    %v1405 = vpow.pop %v1404
    %v1406 = vadd.f32 %v1405, 1.0
    %v1407 = vrcp.pop %v1406
    %v1408 = vmul.f32 %v1406, %v1407
    %v1409 = vsub.f32 1.0, %v1408
    %v1410 = vmul.f32 %v1407, %v1409
    %v1411 = vadd.f32 %v1407, %v1410
    %vm1412 = vweird.f32 %v1406
    %vm1413 = vweird.f32 %v1407
    %vm1414 = vmor %vm1412, %vm1413
    %v1415 = vsel %vm1414, %v1407, %v1411
    %v1416 = vand.u32 2147483647, %v1406
    %vm1417 = vcmp.eq.f32.partialorder %v1416, 8.507059e+37
    %v1418 = vand.u32 %v1406, 2147483648
    %v1419 = vor.u32 1.1754944e-38, %v1418
    %v1420 = vsel %vm1417, %v1419, %v1415
    %v1421 = vmul.f32 1.0, %v1420
    %v1423 = vrot.slane %v1374, 2
    %v1425 = vadd.f32 %v1273, %v1423
    %v1426 = vxor.u32 %v1425, 2147483648
    %v1427 = vmul.f32 %v1426, 1.442695
    %v1428 = vpow.pop %v1427
    %v1429 = vadd.f32 %v1428, 1.0
    %v1430 = vrcp.pop %v1429
    %v1431 = vmul.f32 %v1429, %v1430
    %v1432 = vsub.f32 1.0, %v1431
    %v1433 = vmul.f32 %v1430, %v1432
    %v1434 = vadd.f32 %v1430, %v1433
    %vm1435 = vweird.f32 %v1429
    %vm1436 = vweird.f32 %v1430
    %vm1437 = vmor %vm1435, %vm1436
    %v1438 = vsel %vm1437, %v1430, %v1434
    %v1439 = vand.u32 2147483647, %v1429
    %vm1440 = vcmp.eq.f32.partialorder %v1439, 8.507059e+37
    %v1441 = vand.u32 %v1429, 2147483648
    %v1442 = vor.u32 1.1754944e-38, %v1441
    %v1443 = vsel %vm1440, %v1442, %v1438
    %v1444 = vmul.f32 1.0, %v1443
    %v1446 = vrot.slane %v1397, 2
    %v1448 = vmul.f32 %v1421, %v1446
    %v1449 = vadd.f32 %v1306, %v1448
    %v1450 = vtanh.pop %v1449
    %v1451 = vsub.f32 1.0, %v1444
    %v1452 = vmul.f32 %v1451, %v1450
    %v1453 = vrot.slane %v1210, 2
    %v1455 = vmul.f32 %v1444, %v1453
    %v1456 = vadd.f32 %v1452, %v1455
    %v1458 = vrot.slane %v1456, 6
    %v1459 = vsel %vm133, %v1458, 0
    %1461 = vmatpush.msra.mxu0 0.0
    %1462 = vmatpush.msra.mxu0 0.0
    %1463 = vmatpush.msra.mxu0 0.0
    %1464 = vmatpush.msra.mxu0 0.0
    %1465 = vmatpush.msra.mxu0 0.0
    %1466 = vmatpush.msra.mxu0 0.0
    %1467 = vmatpush.msra.mxu0 0.0
    %1468 = vmatpush.msra.mxu0 0.0
    %1469 = vmatpush.msra.mxu0 0.0
    %1470 = vmatpush.msra.mxu0 0.0
    %1471 = vmatpush.msra.mxu0 0.0
    %1472 = vmatpush.msra.mxu0 0.0
    %1473 = vmatpush.msra.mxu0 %v1311
    %1474 = vmatpush.msra.mxu0 %v1310
    %1475 = vmatpush.msra.mxu0 %v1309
    %1476 = vmatpush.msra.mxu0 %v1308
    %1477 = vmatmul.f32.gmra.mxu0 %v1459
    %v1478 = vpop.f32.mrf.mxu0
    %v1479 = vadd.f32 %v1328, %v1478
    %1480 = vdwg.mxu0
    %1481 = vmatpush.msra.mxu0 0.0
    %1482 = vmatpush.msra.mxu0 0.0
    %1483 = vmatpush.msra.mxu0 0.0
    %1484 = vmatpush.msra.mxu0 0.0
    %1485 = vmatpush.msra.mxu0 0.0
    %1486 = vmatpush.msra.mxu0 0.0
    %1487 = vmatpush.msra.mxu0 0.0
    %1488 = vmatpush.msra.mxu0 0.0
    %1489 = vmatpush.msra.mxu0 0.0
    %1490 = vmatpush.msra.mxu0 0.0
    %1491 = vmatpush.msra.mxu0 0.0
    %1492 = vmatpush.msra.mxu0 0.0
    %1493 = vmatpush.msra.mxu0 %v1316
    %1494 = vmatpush.msra.mxu0 %v1315
    %1495 = vmatpush.msra.mxu0 %v1314
    %1496 = vmatpush.msra.mxu0 %v1313
    %1497 = vmatmul.f32.gmra.mxu0 %v1459
    %v1498 = vpop.f32.mrf.mxu0
    %v1499 = vadd.f32 %v1354, %v1498
    %1500 = vdwg.mxu0
    %1501 = vmatpush.msra.mxu0 0.0
    %1502 = vmatpush.msra.mxu0 0.0
    %1503 = vmatpush.msra.mxu0 0.0
    %1504 = vmatpush.msra.mxu0 0.0
    %1505 = vmatpush.msra.mxu0 0.0
    %1506 = vmatpush.msra.mxu0 0.0
    %1507 = vmatpush.msra.mxu0 0.0
    %1508 = vmatpush.msra.mxu0 0.0
    %1509 = vmatpush.msra.mxu0 0.0
    %1510 = vmatpush.msra.mxu0 0.0
    %1511 = vmatpush.msra.mxu0 0.0
    %1512 = vmatpush.msra.mxu0 0.0
    %1513 = vmatpush.msra.mxu0 %v1321
    %1514 = vmatpush.msra.mxu0 %v1320
    %1515 = vmatpush.msra.mxu0 %v1319
    %1516 = vmatpush.msra.mxu0 %v1318
    %1517 = vmatmul.f32.gmra.mxu0 %v1459
    %v1518 = vpop.f32.mrf.mxu0
    %v1519 = vadd.f32 %v1377, %v1518
    %1520 = vdwg.mxu0
    %v1522 = vrot.slane %v1479, 4
    %v1524 = vadd.f32 %v1240, %v1522
    %v1525 = vxor.u32 %v1524, 2147483648
    %v1526 = vmul.f32 %v1525, 1.442695
    %v1527 = vpow.pop %v1526
    %v1528 = vadd.f32 %v1527, 1.0
    %v1529 = vrcp.pop %v1528
    %v1530 = vmul.f32 %v1528, %v1529
    %v1531 = vsub.f32 1.0, %v1530
    %v1532 = vmul.f32 %v1529, %v1531
    %v1533 = vadd.f32 %v1529, %v1532
    %vm1534 = vweird.f32 %v1528
    %vm1535 = vweird.f32 %v1529
    %vm1536 = vmor %vm1534, %vm1535
    %v1537 = vsel %vm1536, %v1529, %v1533
    %v1538 = vand.u32 2147483647, %v1528
    %vm1539 = vcmp.eq.f32.partialorder %v1538, 8.507059e+37
    %v1540 = vand.u32 %v1528, 2147483648
    %v1541 = vor.u32 1.1754944e-38, %v1540
    %v1542 = vsel %vm1539, %v1541, %v1537
    %v1543 = vmul.f32 1.0, %v1542
    %v1545 = vrot.slane %v1499, 4
    %v1547 = vadd.f32 %v1273, %v1545
    %v1548 = vxor.u32 %v1547, 2147483648
    %v1549 = vmul.f32 %v1548, 1.442695
    %v1550 = vpow.pop %v1549
    %v1551 = vadd.f32 %v1550, 1.0
    %v1552 = vrcp.pop %v1551
    %v1553 = vmul.f32 %v1551, %v1552
    %v1554 = vsub.f32 1.0, %v1553
    %v1555 = vmul.f32 %v1552, %v1554
    %v1556 = vadd.f32 %v1552, %v1555
    %vm1557 = vweird.f32 %v1551
    %vm1558 = vweird.f32 %v1552
    %vm1559 = vmor %vm1557, %vm1558
    %v1560 = vsel %vm1559, %v1552, %v1556
    %v1561 = vand.u32 2147483647, %v1551
    %vm1562 = vcmp.eq.f32.partialorder %v1561, 8.507059e+37
    %v1563 = vand.u32 %v1551, 2147483648
    %v1564 = vor.u32 1.1754944e-38, %v1563
    %v1565 = vsel %vm1562, %v1564, %v1560
    %v1566 = vmul.f32 1.0, %v1565
    %v1568 = vrot.slane %v1519, 4
    %v1570 = vmul.f32 %v1543, %v1568
    %v1571 = vadd.f32 %v1306, %v1570
    %v1572 = vtanh.pop %v1571
    %v1573 = vsub.f32 1.0, %v1566
    %v1574 = vmul.f32 %v1573, %v1572
    %v1575 = vrot.slane %v1456, 2
    %v1577 = vmul.f32 %v1566, %v1575
    %v1578 = vadd.f32 %v1574, %v1577
    %v1580 = vrot.slane %v1578, 4
    %v1581 = vsel %vm133, %v1580, 0
    %1583 = vmatpush.msra.mxu0 0.0
    %1584 = vmatpush.msra.mxu0 0.0
    %1585 = vmatpush.msra.mxu0 0.0
    %1586 = vmatpush.msra.mxu0 0.0
    %1587 = vmatpush.msra.mxu0 0.0
    %1588 = vmatpush.msra.mxu0 0.0
    %1589 = vmatpush.msra.mxu0 0.0
    %1590 = vmatpush.msra.mxu0 0.0
    %1591 = vmatpush.msra.mxu0 0.0
    %1592 = vmatpush.msra.mxu0 0.0
    %1593 = vmatpush.msra.mxu0 0.0
    %1594 = vmatpush.msra.mxu0 0.0
    %1595 = vmatpush.msra.mxu0 %v1311
    %1596 = vmatpush.msra.mxu0 %v1310
    %1597 = vmatpush.msra.mxu0 %v1309
    %1598 = vmatpush.msra.mxu0 %v1308
    %1599 = vmatmul.f32.gmra.mxu0 %v1581
    %v1600 = vpop.f32.mrf.mxu0
    %v1601 = vadd.f32 %v1328, %v1600
    %1602 = vdwg.mxu0
    %1603 = vmatpush.msra.mxu0 0.0
    %1604 = vmatpush.msra.mxu0 0.0
    %1605 = vmatpush.msra.mxu0 0.0
    %1606 = vmatpush.msra.mxu0 0.0
    %1607 = vmatpush.msra.mxu0 0.0
    %1608 = vmatpush.msra.mxu0 0.0
    %1609 = vmatpush.msra.mxu0 0.0
    %1610 = vmatpush.msra.mxu0 0.0
    %1611 = vmatpush.msra.mxu0 0.0
    %1612 = vmatpush.msra.mxu0 0.0
    %1613 = vmatpush.msra.mxu0 0.0
    %1614 = vmatpush.msra.mxu0 0.0
    %1615 = vmatpush.msra.mxu0 %v1316
    %1616 = vmatpush.msra.mxu0 %v1315
    %1617 = vmatpush.msra.mxu0 %v1314
    %1618 = vmatpush.msra.mxu0 %v1313
    %1619 = vmatmul.f32.gmra.mxu0 %v1581
    %v1620 = vpop.f32.mrf.mxu0
    %v1621 = vadd.f32 %v1354, %v1620
    %1622 = vdwg.mxu0
    %1623 = vmatpush.msra.mxu0 0.0
    %1624 = vmatpush.msra.mxu0 0.0
    %1625 = vmatpush.msra.mxu0 0.0
    %1626 = vmatpush.msra.mxu0 0.0
    %1627 = vmatpush.msra.mxu0 0.0
    %1628 = vmatpush.msra.mxu0 0.0
    %1629 = vmatpush.msra.mxu0 0.0
    %1630 = vmatpush.msra.mxu0 0.0
    %1631 = vmatpush.msra.mxu0 0.0
    %1632 = vmatpush.msra.mxu0 0.0
    %1633 = vmatpush.msra.mxu0 0.0
    %1634 = vmatpush.msra.mxu0 0.0
    %1635 = vmatpush.msra.mxu0 %v1321
    %1636 = vmatpush.msra.mxu0 %v1320
    %1637 = vmatpush.msra.mxu0 %v1319
    %1638 = vmatpush.msra.mxu0 %v1318
    %1639 = vmatmul.f32.gmra.mxu0 %v1581
    %v1640 = vpop.f32.mrf.mxu0
    %v1641 = vadd.f32 %v1377, %v1640
    %1642 = vdwg.mxu0
    %v1644 = vrot.slane %v1601, 6
    %v1646 = vadd.f32 %v1240, %v1644
    %v1647 = vxor.u32 %v1646, 2147483648
    %v1648 = vmul.f32 %v1647, 1.442695
    %v1649 = vpow.pop %v1648
    %v1650 = vadd.f32 %v1649, 1.0
    %v1651 = vrcp.pop %v1650
    %v1652 = vmul.f32 %v1650, %v1651
    %v1653 = vsub.f32 1.0, %v1652
    %v1654 = vmul.f32 %v1651, %v1653
    %v1655 = vadd.f32 %v1651, %v1654
    %vm1656 = vweird.f32 %v1650
    %vm1657 = vweird.f32 %v1651
    %vm1658 = vmor %vm1656, %vm1657
    %v1659 = vsel %vm1658, %v1651, %v1655
    %v1660 = vand.u32 2147483647, %v1650
    %vm1661 = vcmp.eq.f32.partialorder %v1660, 8.507059e+37
    %v1662 = vand.u32 %v1650, 2147483648
    %v1663 = vor.u32 1.1754944e-38, %v1662
    %v1664 = vsel %vm1661, %v1663, %v1659
    %v1665 = vmul.f32 1.0, %v1664
    %v1667 = vrot.slane %v1621, 6
    %v1669 = vadd.f32 %v1273, %v1667
    %v1670 = vxor.u32 %v1669, 2147483648
    %v1671 = vmul.f32 %v1670, 1.442695
    %v1672 = vpow.pop %v1671
    %v1673 = vadd.f32 %v1672, 1.0
    %v1674 = vrcp.pop %v1673
    %v1675 = vmul.f32 %v1673, %v1674
    %v1676 = vsub.f32 1.0, %v1675
    %v1677 = vmul.f32 %v1674, %v1676
    %v1678 = vadd.f32 %v1674, %v1677
    %vm1679 = vweird.f32 %v1673
    %vm1680 = vweird.f32 %v1674
    %vm1681 = vmor %vm1679, %vm1680
    %v1682 = vsel %vm1681, %v1674, %v1678
    %v1683 = vand.u32 2147483647, %v1673
    %vm1684 = vcmp.eq.f32.partialorder %v1683, 8.507059e+37
    %v1685 = vand.u32 %v1673, 2147483648
    %v1686 = vor.u32 1.1754944e-38, %v1685
    %v1687 = vsel %vm1684, %v1686, %v1682
    %v1688 = vmul.f32 1.0, %v1687
    %v1690 = vrot.slane %v1641, 6
    %v1692 = vmul.f32 %v1665, %v1690
    %v1693 = vadd.f32 %v1306, %v1692
    %v1694 = vtanh.pop %v1693
    %v1695 = vsub.f32 1.0, %v1688
    %v1696 = vmul.f32 %v1695, %v1694
    %v1697 = vrot.slane %v1578, 2
    %v1699 = vmul.f32 %v1688, %v1697
    %v1700 = vadd.f32 %v1696, %v1699
    %v1702 = vrot.slane %v1700, 2
    %v1703 = vsel %vm133, %v1702, 0
    %1705 = vmatpush.msra.mxu0 0.0
    %1706 = vmatpush.msra.mxu0 0.0
    %1707 = vmatpush.msra.mxu0 0.0
    %1708 = vmatpush.msra.mxu0 0.0
    %1709 = vmatpush.msra.mxu0 0.0
    %1710 = vmatpush.msra.mxu0 0.0
    %1711 = vmatpush.msra.mxu0 0.0
    %1712 = vmatpush.msra.mxu0 0.0
    %1713 = vmatpush.msra.mxu0 0.0
    %1714 = vmatpush.msra.mxu0 0.0
    %1715 = vmatpush.msra.mxu0 0.0
    %1716 = vmatpush.msra.mxu0 0.0
    %1717 = vmatpush.msra.mxu0 %v1311
    %1718 = vmatpush.msra.mxu0 %v1310
    %1719 = vmatpush.msra.mxu0 %v1309
    %1720 = vmatpush.msra.mxu0 %v1308
    %1721 = vmatmul.f32.gmra.mxu0 %v1703
    %v1722 = vpop.f32.mrf.mxu0
    %v1723 = vadd.f32 %v1328, %v1722
    %1724 = vdwg.mxu0
    %1725 = vmatpush.msra.mxu0 0.0
    %1726 = vmatpush.msra.mxu0 0.0
    %1727 = vmatpush.msra.mxu0 0.0
    %1728 = vmatpush.msra.mxu0 0.0
    %1729 = vmatpush.msra.mxu0 0.0
    %1730 = vmatpush.msra.mxu0 0.0
    %1731 = vmatpush.msra.mxu0 0.0
    %1732 = vmatpush.msra.mxu0 0.0
    %1733 = vmatpush.msra.mxu0 0.0
    %1734 = vmatpush.msra.mxu0 0.0
    %1735 = vmatpush.msra.mxu0 0.0
    %1736 = vmatpush.msra.mxu0 0.0
    %1737 = vmatpush.msra.mxu0 %v1316
    %1738 = vmatpush.msra.mxu0 %v1315
    %1739 = vmatpush.msra.mxu0 %v1314
    %1740 = vmatpush.msra.mxu0 %v1313
    %1741 = vmatmul.f32.gmra.mxu0 %v1703
    %v1742 = vpop.f32.mrf.mxu0
    %v1743 = vadd.f32 %v1354, %v1742
    %1744 = vdwg.mxu0
    %1745 = vmatpush.msra.mxu0 0.0
    %1746 = vmatpush.msra.mxu0 0.0
    %1747 = vmatpush.msra.mxu0 0.0
    %1748 = vmatpush.msra.mxu0 0.0
    %1749 = vmatpush.msra.mxu0 0.0
    %1750 = vmatpush.msra.mxu0 0.0
    %1751 = vmatpush.msra.mxu0 0.0
    %1752 = vmatpush.msra.mxu0 0.0
    %1753 = vmatpush.msra.mxu0 0.0
    %1754 = vmatpush.msra.mxu0 0.0
    %1755 = vmatpush.msra.mxu0 0.0
    %1756 = vmatpush.msra.mxu0 0.0
    %1757 = vmatpush.msra.mxu0 %v1321
    %1758 = vmatpush.msra.mxu0 %v1320
    %1759 = vmatpush.msra.mxu0 %v1319
    %1760 = vmatpush.msra.mxu0 %v1318
    %1761 = vmatmul.f32.gmra.mxu0 %v1703
    %v1762 = vpop.f32.mrf.mxu0
    %v1763 = vadd.f32 %v1377, %v1762
    %1764 = vdwg.mxu0
    %v1765 = vadd.f32 %v1240, %v1723
    %v1766 = vxor.u32 %v1765, 2147483648
    %v1767 = vmul.f32 %v1766, 1.442695
    %v1768 = vpow.pop %v1767
    %v1769 = vadd.f32 %v1768, 1.0
    %v1770 = vrcp.pop %v1769
    %v1771 = vmul.f32 %v1769, %v1770
    %v1772 = vsub.f32 1.0, %v1771
    %v1773 = vmul.f32 %v1770, %v1772
    %v1774 = vadd.f32 %v1770, %v1773
    %vm1775 = vweird.f32 %v1769
    %vm1776 = vweird.f32 %v1770
    %vm1777 = vmor %vm1775, %vm1776
    %v1778 = vsel %vm1777, %v1770, %v1774
    %v1779 = vand.u32 2147483647, %v1769
    %vm1780 = vcmp.eq.f32.partialorder %v1779, 8.507059e+37
    %v1781 = vand.u32 %v1769, 2147483648
    %v1782 = vor.u32 1.1754944e-38, %v1781
    %v1783 = vsel %vm1780, %v1782, %v1778
    %v1784 = vmul.f32 1.0, %v1783
    %v1785 = vadd.f32 %v1273, %v1743
    %v1786 = vxor.u32 %v1785, 2147483648
    %v1787 = vmul.f32 %v1786, 1.442695
    %v1788 = vpow.pop %v1787
    %v1789 = vadd.f32 %v1788, 1.0
    %v1790 = vrcp.pop %v1789
    %v1791 = vmul.f32 %v1789, %v1790
    %v1792 = vsub.f32 1.0, %v1791
    %v1793 = vmul.f32 %v1790, %v1792
    %v1794 = vadd.f32 %v1790, %v1793
    %vm1795 = vweird.f32 %v1789
    %vm1796 = vweird.f32 %v1790
    %vm1797 = vmor %vm1795, %vm1796
    %v1798 = vsel %vm1797, %v1790, %v1794
    %v1799 = vand.u32 2147483647, %v1789
    %vm1800 = vcmp.eq.f32.partialorder %v1799, 8.507059e+37
    %v1801 = vand.u32 %v1789, 2147483648
    %v1802 = vor.u32 1.1754944e-38, %v1801
    %v1803 = vsel %vm1800, %v1802, %v1798
    %v1804 = vmul.f32 1.0, %v1803
    %v1805 = vmul.f32 %v1784, %v1763
    %v1806 = vadd.f32 %v1306, %v1805
    %v1807 = vtanh.pop %v1806
    %v1808 = vsub.f32 1.0, %v1804
    %v1809 = vmul.f32 %v1808, %v1807
    %v1811 = vmul.f32 %v1804, %v1702
    %v1812 = vadd.f32 %v1809, %v1811
    %v1814 = vsel %vm133, %v1812, 0
    %1816 = vmatpush.msra.mxu0 0.0
    %1817 = vmatpush.msra.mxu0 0.0
    %1818 = vmatpush.msra.mxu0 0.0
    %1819 = vmatpush.msra.mxu0 0.0
    %1820 = vmatpush.msra.mxu0 0.0
    %1821 = vmatpush.msra.mxu0 0.0
    %1822 = vmatpush.msra.mxu0 0.0
    %1823 = vmatpush.msra.mxu0 0.0
    %1824 = vmatpush.msra.mxu0 0.0
    %1825 = vmatpush.msra.mxu0 0.0
    %1826 = vmatpush.msra.mxu0 0.0
    %1827 = vmatpush.msra.mxu0 0.0
    %1828 = vmatpush.msra.mxu0 %v1311
    %1829 = vmatpush.msra.mxu0 %v1310
    %1830 = vmatpush.msra.mxu0 %v1309
    %1831 = vmatpush.msra.mxu0 %v1308
    %1832 = vmatmul.f32.gmra.mxu0 %v1814
    %v1833 = vpop.f32.mrf.mxu0
    %v1834 = vadd.f32 %v1328, %v1833
    %1835 = vdwg.mxu0
    %1836 = vmatpush.msra.mxu0 0.0
    %1837 = vmatpush.msra.mxu0 0.0
    %1838 = vmatpush.msra.mxu0 0.0
    %1839 = vmatpush.msra.mxu0 0.0
    %1840 = vmatpush.msra.mxu0 0.0
    %1841 = vmatpush.msra.mxu0 0.0
    %1842 = vmatpush.msra.mxu0 0.0
    %1843 = vmatpush.msra.mxu0 0.0
    %1844 = vmatpush.msra.mxu0 0.0
    %1845 = vmatpush.msra.mxu0 0.0
    %1846 = vmatpush.msra.mxu0 0.0
    %1847 = vmatpush.msra.mxu0 0.0
    %1848 = vmatpush.msra.mxu0 %v1316
    %1849 = vmatpush.msra.mxu0 %v1315
    %1850 = vmatpush.msra.mxu0 %v1314
    %1851 = vmatpush.msra.mxu0 %v1313
    %1852 = vmatmul.f32.gmra.mxu0 %v1814
    %v1853 = vpop.f32.mrf.mxu0
    %v1854 = vadd.f32 %v1354, %v1853
    %1855 = vdwg.mxu0
    %1856 = vmatpush.msra.mxu0 0.0
    %1857 = vmatpush.msra.mxu0 0.0
    %1858 = vmatpush.msra.mxu0 0.0
    %1859 = vmatpush.msra.mxu0 0.0
    %1860 = vmatpush.msra.mxu0 0.0
    %1861 = vmatpush.msra.mxu0 0.0
    %1862 = vmatpush.msra.mxu0 0.0
    %1863 = vmatpush.msra.mxu0 0.0
    %1864 = vmatpush.msra.mxu0 0.0
    %1865 = vmatpush.msra.mxu0 0.0
    %1866 = vmatpush.msra.mxu0 0.0
    %1867 = vmatpush.msra.mxu0 0.0
    %1868 = vmatpush.msra.mxu0 %v1321
    %1869 = vmatpush.msra.mxu0 %v1320
    %1870 = vmatpush.msra.mxu0 %v1319
    %1871 = vmatpush.msra.mxu0 %v1318
    %1872 = vmatmul.f32.gmra.mxu0 %v1814
    %v1873 = vpop.f32.mrf.mxu0
    %v1874 = vadd.f32 %v1377, %v1873
    %1875 = vdwg.mxu0
    %v1877 = vrot.slane %v1834, 2
    %v1879 = vadd.f32 %v1237, %v1877
    %v1880 = vxor.u32 %v1879, 2147483648
    %v1881 = vmul.f32 %v1880, 1.442695
    %v1882 = vpow.pop %v1881
    %v1883 = vadd.f32 %v1882, 1.0
    %v1884 = vrcp.pop %v1883
    %v1885 = vmul.f32 %v1883, %v1884
    %v1886 = vsub.f32 1.0, %v1885
    %v1887 = vmul.f32 %v1884, %v1886
    %v1888 = vadd.f32 %v1884, %v1887
    %vm1889 = vweird.f32 %v1883
    %vm1890 = vweird.f32 %v1884
    %vm1891 = vmor %vm1889, %vm1890
    %v1892 = vsel %vm1891, %v1884, %v1888
    %v1893 = vand.u32 2147483647, %v1883
    %vm1894 = vcmp.eq.f32.partialorder %v1893, 8.507059e+37
    %v1895 = vand.u32 %v1883, 2147483648
    %v1896 = vor.u32 1.1754944e-38, %v1895
    %v1897 = vsel %vm1894, %v1896, %v1892
    %v1898 = vmul.f32 1.0, %v1897
    %v1900 = vrot.slane %v1854, 2
    %v1902 = vadd.f32 %v1270, %v1900
    %v1903 = vxor.u32 %v1902, 2147483648
    %v1904 = vmul.f32 %v1903, 1.442695
    %v1905 = vpow.pop %v1904
    %v1906 = vadd.f32 %v1905, 1.0
    %v1907 = vrcp.pop %v1906
    %v1908 = vmul.f32 %v1906, %v1907
    %v1909 = vsub.f32 1.0, %v1908
    %v1910 = vmul.f32 %v1907, %v1909
    %v1911 = vadd.f32 %v1907, %v1910
    %vm1912 = vweird.f32 %v1906
    %vm1913 = vweird.f32 %v1907
    %vm1914 = vmor %vm1912, %vm1913
    %v1915 = vsel %vm1914, %v1907, %v1911
    %v1916 = vand.u32 2147483647, %v1906
    %vm1917 = vcmp.eq.f32.partialorder %v1916, 8.507059e+37
    %v1918 = vand.u32 %v1906, 2147483648
    %v1919 = vor.u32 1.1754944e-38, %v1918
    %v1920 = vsel %vm1917, %v1919, %v1915
    %v1921 = vmul.f32 1.0, %v1920
    %v1923 = vrot.slane %v1874, 2
    %v1925 = vmul.f32 %v1898, %v1923
    %v1926 = vadd.f32 %v1303, %v1925
    %v1927 = vtanh.pop %v1926
    %v1928 = vsub.f32 1.0, %v1921
    %v1929 = vmul.f32 %v1928, %v1927
    %v1930 = vrot.slane %v1812, 2
    %v1932 = vmul.f32 %v1921, %v1930
    %v1933 = vadd.f32 %v1929, %v1932
    %v1935 = vrot.slane %v1933, 6
    %v1936 = vsel %vm133, %v1935, 0
    %1938 = vmatpush.msra.mxu0 0.0
    %1939 = vmatpush.msra.mxu0 0.0
    %1940 = vmatpush.msra.mxu0 0.0
    %1941 = vmatpush.msra.mxu0 0.0
    %1942 = vmatpush.msra.mxu0 0.0
    %1943 = vmatpush.msra.mxu0 0.0
    %1944 = vmatpush.msra.mxu0 0.0
    %1945 = vmatpush.msra.mxu0 0.0
    %1946 = vmatpush.msra.mxu0 0.0
    %1947 = vmatpush.msra.mxu0 0.0
    %1948 = vmatpush.msra.mxu0 0.0
    %1949 = vmatpush.msra.mxu0 0.0
    %1950 = vmatpush.msra.mxu0 %v1311
    %1951 = vmatpush.msra.mxu0 %v1310
    %1952 = vmatpush.msra.mxu0 %v1309
    %1953 = vmatpush.msra.mxu0 %v1308
    %1954 = vmatmul.f32.gmra.mxu0 %v1936
    %v1955 = vpop.f32.mrf.mxu0
    %v1956 = vadd.f32 %v1328, %v1955
    %1957 = vdwg.mxu0
    %1958 = vmatpush.msra.mxu0 0.0
    %1959 = vmatpush.msra.mxu0 0.0
    %1960 = vmatpush.msra.mxu0 0.0
    %1961 = vmatpush.msra.mxu0 0.0
    %1962 = vmatpush.msra.mxu0 0.0
    %1963 = vmatpush.msra.mxu0 0.0
    %1964 = vmatpush.msra.mxu0 0.0
    %1965 = vmatpush.msra.mxu0 0.0
    %1966 = vmatpush.msra.mxu0 0.0
    %1967 = vmatpush.msra.mxu0 0.0
    %1968 = vmatpush.msra.mxu0 0.0
    %1969 = vmatpush.msra.mxu0 0.0
    %1970 = vmatpush.msra.mxu0 %v1316
    %1971 = vmatpush.msra.mxu0 %v1315
    %1972 = vmatpush.msra.mxu0 %v1314
    %1973 = vmatpush.msra.mxu0 %v1313
    %1974 = vmatmul.f32.gmra.mxu0 %v1936
    %v1975 = vpop.f32.mrf.mxu0
    %v1976 = vadd.f32 %v1354, %v1975
    %1977 = vdwg.mxu0
    %1978 = vmatpush.msra.mxu0 0.0
    %1979 = vmatpush.msra.mxu0 0.0
    %1980 = vmatpush.msra.mxu0 0.0
    %1981 = vmatpush.msra.mxu0 0.0
    %1982 = vmatpush.msra.mxu0 0.0
    %1983 = vmatpush.msra.mxu0 0.0
    %1984 = vmatpush.msra.mxu0 0.0
    %1985 = vmatpush.msra.mxu0 0.0
    %1986 = vmatpush.msra.mxu0 0.0
    %1987 = vmatpush.msra.mxu0 0.0
    %1988 = vmatpush.msra.mxu0 0.0
    %1989 = vmatpush.msra.mxu0 0.0
    %1990 = vmatpush.msra.mxu0 %v1321
    %1991 = vmatpush.msra.mxu0 %v1320
    %1992 = vmatpush.msra.mxu0 %v1319
    %1993 = vmatpush.msra.mxu0 %v1318
    %1994 = vmatmul.f32.gmra.mxu0 %v1936
    %v1995 = vpop.f32.mrf.mxu0
    %v1996 = vadd.f32 %v1377, %v1995
    %1997 = vdwg.mxu0
    %v1999 = vrot.slane %v1956, 4
    %v2001 = vadd.f32 %v1237, %v1999
    %v2002 = vxor.u32 %v2001, 2147483648
    %v2003 = vmul.f32 %v2002, 1.442695
    %v2004 = vpow.pop %v2003
    %v2005 = vadd.f32 %v2004, 1.0
    %v2006 = vrcp.pop %v2005
    %v2007 = vmul.f32 %v2005, %v2006
    %v2008 = vsub.f32 1.0, %v2007
    %v2009 = vmul.f32 %v2006, %v2008
    %v2010 = vadd.f32 %v2006, %v2009
    %vm2011 = vweird.f32 %v2005
    %vm2012 = vweird.f32 %v2006
    %vm2013 = vmor %vm2011, %vm2012
    %v2014 = vsel %vm2013, %v2006, %v2010
    %v2015 = vand.u32 2147483647, %v2005
    %vm2016 = vcmp.eq.f32.partialorder %v2015, 8.507059e+37
    %v2017 = vand.u32 %v2005, 2147483648
    %v2018 = vor.u32 1.1754944e-38, %v2017
    %v2019 = vsel %vm2016, %v2018, %v2014
    %v2020 = vmul.f32 1.0, %v2019
    %v2022 = vrot.slane %v1976, 4
    %v2024 = vadd.f32 %v1270, %v2022
    %v2025 = vxor.u32 %v2024, 2147483648
    %v2026 = vmul.f32 %v2025, 1.442695
    %v2027 = vpow.pop %v2026
    %v2028 = vadd.f32 %v2027, 1.0
    %v2029 = vrcp.pop %v2028
    %v2030 = vmul.f32 %v2028, %v2029
    %v2031 = vsub.f32 1.0, %v2030
    %v2032 = vmul.f32 %v2029, %v2031
    %v2033 = vadd.f32 %v2029, %v2032
    %vm2034 = vweird.f32 %v2028
    %vm2035 = vweird.f32 %v2029
    %vm2036 = vmor %vm2034, %vm2035
    %v2037 = vsel %vm2036, %v2029, %v2033
    %v2038 = vand.u32 2147483647, %v2028
    %vm2039 = vcmp.eq.f32.partialorder %v2038, 8.507059e+37
    %v2040 = vand.u32 %v2028, 2147483648
    %v2041 = vor.u32 1.1754944e-38, %v2040
    %v2042 = vsel %vm2039, %v2041, %v2037
    %v2043 = vmul.f32 1.0, %v2042
    %v2045 = vrot.slane %v1996, 4
    %v2047 = vmul.f32 %v2020, %v2045
    %v2048 = vadd.f32 %v1303, %v2047
    %v2049 = vtanh.pop %v2048
    %v2050 = vsub.f32 1.0, %v2043
    %v2051 = vmul.f32 %v2050, %v2049
    %v2052 = vrot.slane %v1933, 2
    %v2054 = vmul.f32 %v2043, %v2052
    %v2055 = vadd.f32 %v2051, %v2054
    %v2057 = vrot.slane %v2055, 4
    %v2058 = vsel %vm133, %v2057, 0
    %2060 = vmatpush.msra.mxu0 0.0
    %2061 = vmatpush.msra.mxu0 0.0
    %2062 = vmatpush.msra.mxu0 0.0
    %2063 = vmatpush.msra.mxu0 0.0
    %2064 = vmatpush.msra.mxu0 0.0
    %2065 = vmatpush.msra.mxu0 0.0
    %2066 = vmatpush.msra.mxu0 0.0
    %2067 = vmatpush.msra.mxu0 0.0
    %2068 = vmatpush.msra.mxu0 0.0
    %2069 = vmatpush.msra.mxu0 0.0
    %2070 = vmatpush.msra.mxu0 0.0
    %2071 = vmatpush.msra.mxu0 0.0
    %2072 = vmatpush.msra.mxu0 %v1311
    %2073 = vmatpush.msra.mxu0 %v1310
    %2074 = vmatpush.msra.mxu0 %v1309
    %2075 = vmatpush.msra.mxu0 %v1308
    %2076 = vmatmul.f32.gmra.mxu0 %v2058
    %v2077 = vpop.f32.mrf.mxu0
    %v2078 = vadd.f32 %v1328, %v2077
    %2079 = vdwg.mxu0
    %2080 = vmatpush.msra.mxu0 0.0
    %2081 = vmatpush.msra.mxu0 0.0
    %2082 = vmatpush.msra.mxu0 0.0
    %2083 = vmatpush.msra.mxu0 0.0
    %2084 = vmatpush.msra.mxu0 0.0
    %2085 = vmatpush.msra.mxu0 0.0
    %2086 = vmatpush.msra.mxu0 0.0
    %2087 = vmatpush.msra.mxu0 0.0
    %2088 = vmatpush.msra.mxu0 0.0
    %2089 = vmatpush.msra.mxu0 0.0
    %2090 = vmatpush.msra.mxu0 0.0
    %2091 = vmatpush.msra.mxu0 0.0
    %2092 = vmatpush.msra.mxu0 %v1316
    %2093 = vmatpush.msra.mxu0 %v1315
    %2094 = vmatpush.msra.mxu0 %v1314
    %2095 = vmatpush.msra.mxu0 %v1313
    %2096 = vmatmul.f32.gmra.mxu0 %v2058
    %v2097 = vpop.f32.mrf.mxu0
    %v2098 = vadd.f32 %v1354, %v2097
    %2099 = vdwg.mxu0
    %2100 = vmatpush.msra.mxu0 0.0
    %2101 = vmatpush.msra.mxu0 0.0
    %2102 = vmatpush.msra.mxu0 0.0
    %2103 = vmatpush.msra.mxu0 0.0
    %2104 = vmatpush.msra.mxu0 0.0
    %2105 = vmatpush.msra.mxu0 0.0
    %2106 = vmatpush.msra.mxu0 0.0
    %2107 = vmatpush.msra.mxu0 0.0
    %2108 = vmatpush.msra.mxu0 0.0
    %2109 = vmatpush.msra.mxu0 0.0
    %2110 = vmatpush.msra.mxu0 0.0
    %2111 = vmatpush.msra.mxu0 0.0
    %2112 = vmatpush.msra.mxu0 %v1321
    %2113 = vmatpush.msra.mxu0 %v1320
    %2114 = vmatpush.msra.mxu0 %v1319
    %2115 = vmatpush.msra.mxu0 %v1318
    %2116 = vmatmul.f32.gmra.mxu0 %v2058
    %v2117 = vpop.f32.mrf.mxu0
    %v2118 = vadd.f32 %v1377, %v2117
    %2119 = vdwg.mxu0
    %v2121 = vrot.slane %v2078, 6
    %v2123 = vadd.f32 %v1237, %v2121
    %v2124 = vxor.u32 %v2123, 2147483648
    %v2125 = vmul.f32 %v2124, 1.442695
    %v2126 = vpow.pop %v2125
    %v2127 = vadd.f32 %v2126, 1.0
    %v2128 = vrcp.pop %v2127
    %v2129 = vmul.f32 %v2127, %v2128
    %v2130 = vsub.f32 1.0, %v2129
    %v2131 = vmul.f32 %v2128, %v2130
    %v2132 = vadd.f32 %v2128, %v2131
    %vm2133 = vweird.f32 %v2127
    %vm2134 = vweird.f32 %v2128
    %vm2135 = vmor %vm2133, %vm2134
    %v2136 = vsel %vm2135, %v2128, %v2132
    %v2137 = vand.u32 2147483647, %v2127
    %vm2138 = vcmp.eq.f32.partialorder %v2137, 8.507059e+37
    %v2139 = vand.u32 %v2127, 2147483648
    %v2140 = vor.u32 1.1754944e-38, %v2139
    %v2141 = vsel %vm2138, %v2140, %v2136
    %v2142 = vmul.f32 1.0, %v2141
    %v2144 = vrot.slane %v2098, 6
    %v2146 = vadd.f32 %v1270, %v2144
    %v2147 = vxor.u32 %v2146, 2147483648
    %v2148 = vmul.f32 %v2147, 1.442695
    %v2149 = vpow.pop %v2148
    %v2150 = vadd.f32 %v2149, 1.0
    %v2151 = vrcp.pop %v2150
    %v2152 = vmul.f32 %v2150, %v2151
    %v2153 = vsub.f32 1.0, %v2152
    %v2154 = vmul.f32 %v2151, %v2153
    %v2155 = vadd.f32 %v2151, %v2154
    %vm2156 = vweird.f32 %v2150
    %vm2157 = vweird.f32 %v2151
    %vm2158 = vmor %vm2156, %vm2157
    %v2159 = vsel %vm2158, %v2151, %v2155
    %v2160 = vand.u32 2147483647, %v2150
    %vm2161 = vcmp.eq.f32.partialorder %v2160, 8.507059e+37
    %v2162 = vand.u32 %v2150, 2147483648
    %v2163 = vor.u32 1.1754944e-38, %v2162
    %v2164 = vsel %vm2161, %v2163, %v2159
    %v2165 = vmul.f32 1.0, %v2164
    %v2167 = vrot.slane %v2118, 6
    %v2169 = vmul.f32 %v2142, %v2167
    %v2170 = vadd.f32 %v1303, %v2169
    %v2171 = vtanh.pop %v2170
    %v2172 = vsub.f32 1.0, %v2165
    %v2173 = vmul.f32 %v2172, %v2171
    %v2174 = vrot.slane %v2055, 2
    %v2176 = vmul.f32 %v2165, %v2174
    %v2177 = vadd.f32 %v2173, %v2176
    %v2179 = vrot.slane %v2177, 2
    %v2180 = vsel %vm133, %v2179, 0
    %2182 = vmatpush.msra.mxu0 0.0
    %2183 = vmatpush.msra.mxu0 0.0
    %2184 = vmatpush.msra.mxu0 0.0
    %2185 = vmatpush.msra.mxu0 0.0
    %2186 = vmatpush.msra.mxu0 0.0
    %2187 = vmatpush.msra.mxu0 0.0
    %2188 = vmatpush.msra.mxu0 0.0
    %2189 = vmatpush.msra.mxu0 0.0
    %2190 = vmatpush.msra.mxu0 0.0
    %2191 = vmatpush.msra.mxu0 0.0
    %2192 = vmatpush.msra.mxu0 0.0
    %2193 = vmatpush.msra.mxu0 0.0
    %2194 = vmatpush.msra.mxu0 %v1311
    %2195 = vmatpush.msra.mxu0 %v1310
    %2196 = vmatpush.msra.mxu0 %v1309
    %2197 = vmatpush.msra.mxu0 %v1308
    %2198 = vmatmul.f32.gmra.mxu0 %v2180
    %v2199 = vpop.f32.mrf.mxu0
    %v2200 = vadd.f32 %v1328, %v2199
    %2201 = vdwg.mxu0
    %2202 = vmatpush.msra.mxu0 0.0
    %2203 = vmatpush.msra.mxu0 0.0
    %2204 = vmatpush.msra.mxu0 0.0
    %2205 = vmatpush.msra.mxu0 0.0
    %2206 = vmatpush.msra.mxu0 0.0
    %2207 = vmatpush.msra.mxu0 0.0
    %2208 = vmatpush.msra.mxu0 0.0
    %2209 = vmatpush.msra.mxu0 0.0
    %2210 = vmatpush.msra.mxu0 0.0
    %2211 = vmatpush.msra.mxu0 0.0
    %2212 = vmatpush.msra.mxu0 0.0
    %2213 = vmatpush.msra.mxu0 0.0
    %2214 = vmatpush.msra.mxu0 %v1316
    %2215 = vmatpush.msra.mxu0 %v1315
    %2216 = vmatpush.msra.mxu0 %v1314
    %2217 = vmatpush.msra.mxu0 %v1313
    %2218 = vmatmul.f32.gmra.mxu0 %v2180
    %v2219 = vpop.f32.mrf.mxu0
    %v2220 = vadd.f32 %v1354, %v2219
    %2221 = vdwg.mxu0
    %2222 = vmatpush.msra.mxu0 0.0
    %2223 = vmatpush.msra.mxu0 0.0
    %2224 = vmatpush.msra.mxu0 0.0
    %2225 = vmatpush.msra.mxu0 0.0
    %2226 = vmatpush.msra.mxu0 0.0
    %2227 = vmatpush.msra.mxu0 0.0
    %2228 = vmatpush.msra.mxu0 0.0
    %2229 = vmatpush.msra.mxu0 0.0
    %2230 = vmatpush.msra.mxu0 0.0
    %2231 = vmatpush.msra.mxu0 0.0
    %2232 = vmatpush.msra.mxu0 0.0
    %2233 = vmatpush.msra.mxu0 0.0
    %2234 = vmatpush.msra.mxu0 %v1321
    %2235 = vmatpush.msra.mxu0 %v1320
    %2236 = vmatpush.msra.mxu0 %v1319
    %2237 = vmatpush.msra.mxu0 %v1318
    %2238 = vmatmul.f32.gmra.mxu0 %v2180
    %v2239 = vpop.f32.mrf.mxu0
    %v2240 = vadd.f32 %v1377, %v2239
    %2241 = vdwg.mxu0
    %v2242 = vadd.f32 %v1237, %v2200
    %v2243 = vxor.u32 %v2242, 2147483648
    %v2244 = vmul.f32 %v2243, 1.442695
    %v2245 = vpow.pop %v2244
    %v2246 = vadd.f32 %v2245, 1.0
    %v2247 = vrcp.pop %v2246
    %v2248 = vmul.f32 %v2246, %v2247
    %v2249 = vsub.f32 1.0, %v2248
    %v2250 = vmul.f32 %v2247, %v2249
    %v2251 = vadd.f32 %v2247, %v2250
    %vm2252 = vweird.f32 %v2246
    %vm2253 = vweird.f32 %v2247
    %vm2254 = vmor %vm2252, %vm2253
    %v2255 = vsel %vm2254, %v2247, %v2251
    %v2256 = vand.u32 2147483647, %v2246
    %vm2257 = vcmp.eq.f32.partialorder %v2256, 8.507059e+37
    %v2258 = vand.u32 %v2246, 2147483648
    %v2259 = vor.u32 1.1754944e-38, %v2258
    %v2260 = vsel %vm2257, %v2259, %v2255
    %v2261 = vmul.f32 1.0, %v2260
    %v2262 = vadd.f32 %v1270, %v2220
    %v2263 = vxor.u32 %v2262, 2147483648
    %v2264 = vmul.f32 %v2263, 1.442695
    %v2265 = vpow.pop %v2264
    %v2266 = vadd.f32 %v2265, 1.0
    %v2267 = vrcp.pop %v2266
    %v2268 = vmul.f32 %v2266, %v2267
    %v2269 = vsub.f32 1.0, %v2268
    %v2270 = vmul.f32 %v2267, %v2269
    %v2271 = vadd.f32 %v2267, %v2270
    %vm2272 = vweird.f32 %v2266
    %vm2273 = vweird.f32 %v2267
    %vm2274 = vmor %vm2272, %vm2273
    %v2275 = vsel %vm2274, %v2267, %v2271
    %v2276 = vand.u32 2147483647, %v2266
    %vm2277 = vcmp.eq.f32.partialorder %v2276, 8.507059e+37
    %v2278 = vand.u32 %v2266, 2147483648
    %v2279 = vor.u32 1.1754944e-38, %v2278
    %v2280 = vsel %vm2277, %v2279, %v2275
    %v2281 = vmul.f32 1.0, %v2280
    %v2282 = vmul.f32 %v2261, %v2240
    %v2283 = vadd.f32 %v1303, %v2282
    %v2284 = vtanh.pop %v2283
    %v2285 = vsub.f32 1.0, %v2281
    %v2286 = vmul.f32 %v2285, %v2284
    %v2288 = vmul.f32 %v2281, %v2179
    %v2289 = vadd.f32 %v2286, %v2288
    %vm2290 = vcmask 261126
    %2291 = vst.msk [vmem:[#allocation2 - $0x6] sm:$0xc0] %vm2290, %v1208
    %s2292 = scalar_lea.vmem [#allocation2], 2
    %vm2293 = vcmask 254976
    %2294 = vst.msk [vmem:[%s2292] sm:$0x3] %vm2293, %v2289
    %2296 = vrot.lane.b32.xlu0 %v2289, 32
    %v2297 = vpop.permute.xlu0 %2296
    %v2299 = vsel %vm133, %v366, %v2297
    %2300 = vrot.lane.b32.xlu0 %v2177, 32
    %v2301 = vpop.permute.xlu0 %2300
    %v2303 = vsel %vm133, %v487, %v2301
    %2304 = vrot.lane.b32.xlu0 %v2055, 32
    %v2305 = vpop.permute.xlu0 %2304
    %v2307 = vsel %vm133, %v609, %v2305
    %2308 = vrot.lane.b32.xlu0 %v1933, 32
    %v2309 = vpop.permute.xlu0 %2308
    %v2311 = vsel %vm133, %v731, %v2309
    %2312 = vrot.lane.b32.xlu0 %v1812, 32
    %v2313 = vpop.permute.xlu0 %2312
    %v2315 = vsel %vm133, %v843, %v2313
    %2316 = vrot.lane.b32.xlu0 %v1700, 32
    %v2317 = vpop.permute.xlu0 %2316
    %v2319 = vsel %vm133, %v964, %v2317
    %2320 = vrot.lane.b32.xlu0 %v1578, 32
    %v2321 = vpop.permute.xlu0 %2320
    %v2323 = vsel %vm133, %v1086, %v2321
    %2324 = vrot.lane.b32.xlu0 %v1456, 32
    %v2325 = vpop.permute.xlu0 %2324
    %v2327 = vsel %vm133, %v1208, %v2325
    %vm2328 = vcmask 1041408
    %v2329 = vsel %vm2328, %v2299, %v2303
    %vm2330 = vcmask 1043456
    %v2331 = vsel %vm2330, %v2329, %v2307
    %vm2332 = vcmask 1045504
    %v2333 = vsel %vm2332, %v2331, %v2311
    %v2334 = vsel %vm2328, %v2315, %v2319
    %v2335 = vsel %vm2330, %v2334, %v2323
    %v2336 = vsel %vm2332, %v2335, %v2327
    %s2337 = scalar_lea.vmem %s3, 4
    %v2338 = vld [vmem:[%s2337] sm:$0x3]
    %v2339 = vld [vmem:[%s21] sm:$0xff]
    %v2340 = vld [vmem:[%s21 + $0x8] sm:$0xff]
    %v2341 = vld [vmem:[%s21 + $0x10] sm:$0xff]
    %v2342 = vld [vmem:[%s21 + $0x18] sm:$0xff]
    %v2343 = vld [vmem:[%s21 + $0x20] sm:$0xff]
    %v2344 = vld [vmem:[%s21 + $0x28] sm:$0xff]
    %v2345 = vld [vmem:[%s21 + $0x30] sm:$0xff]
    %v2346 = vld [vmem:[%s21 + $0x38] sm:$0xff]
    %v2347 = vld [vmem:[%s25] sm:$0x1]
    %v2349 = vperm.slane %v2347, 0
    %vm2351 = vcmask 523264
    %v2353 = vsel %vm2351, %v2333, 0
    %v2356 = vsel %vm2351, %v2336, 0
    %2358 = vmatpush.msra.mxu0 0.0
    %2359 = vmatpush.msra.mxu0 0.0
    %2360 = vmatpush.msra.mxu0 0.0
    %2361 = vmatpush.msra.mxu0 0.0
    %2362 = vmatpush.msra.mxu0 0.0
    %2363 = vmatpush.msra.mxu0 0.0
    %2364 = vmatpush.msra.mxu0 0.0
    %2365 = vmatpush.msra.mxu0 0.0
    %2366 = vmatpush.msra.mxu0 %v2346
    %2367 = vmatpush.msra.mxu0 %v2345
    %2368 = vmatpush.msra.mxu0 %v2344
    %2369 = vmatpush.msra.mxu0 %v2343
    %2370 = vmatpush.msra.mxu0 %v2342
    %2371 = vmatpush.msra.mxu0 %v2341
    %2372 = vmatpush.msra.mxu0 %v2340
    %2373 = vmatpush.msra.mxu0 %v2339
    %2374 = vmatmul.f32.gmra.mxu0 %v2353
    %v2375 = vpop.f32.mrf.mxu0
    %v2376 = vadd.f32 %v2349, %v2375
    %2377 = vmatmul.f32.gmra.mxu0 %v2356
    %v2378 = vpop.f32.mrf.mxu0
    %v2379 = vadd.f32 %v2349, %v2378
    %2380 = vdwg.mxu0
    %s2381 = scalar_lea.vmem %s21, 64
    %v2382 = vld [vmem:[%s2381] sm:$0xff]
    %v2383 = vld [vmem:[%s2381 + $0x8] sm:$0xff]
    %v2384 = vld [vmem:[%s2381 + $0x10] sm:$0xff]
    %v2385 = vld [vmem:[%s2381 + $0x18] sm:$0xff]
    %v2386 = vld [vmem:[%s2381 + $0x20] sm:$0xff]
    %v2387 = vld [vmem:[%s2381 + $0x28] sm:$0xff]
    %v2388 = vld [vmem:[%s2381 + $0x30] sm:$0xff]
    %v2389 = vld [vmem:[%s2381 + $0x38] sm:$0xff]
    %s2390 = scalar_lea.vmem %s25, 1
    %v2391 = vld [vmem:[%s2390] sm:$0x1]
    %v2393 = vperm.slane %v2391, 0
    %2395 = vmatpush.msra.mxu0 0.0
    %2396 = vmatpush.msra.mxu0 0.0
    %2397 = vmatpush.msra.mxu0 0.0
    %2398 = vmatpush.msra.mxu0 0.0
    %2399 = vmatpush.msra.mxu0 0.0
    %2400 = vmatpush.msra.mxu0 0.0
    %2401 = vmatpush.msra.mxu0 0.0
    %2402 = vmatpush.msra.mxu0 0.0
    %2403 = vmatpush.msra.mxu0 %v2389
    %2404 = vmatpush.msra.mxu0 %v2388
    %2405 = vmatpush.msra.mxu0 %v2387
    %2406 = vmatpush.msra.mxu0 %v2386
    %2407 = vmatpush.msra.mxu0 %v2385
    %2408 = vmatpush.msra.mxu0 %v2384
    %2409 = vmatpush.msra.mxu0 %v2383
    %2410 = vmatpush.msra.mxu0 %v2382
    %2411 = vmatmul.f32.gmra.mxu0 %v2353
    %v2412 = vpop.f32.mrf.mxu0
    %v2413 = vadd.f32 %v2393, %v2412
    %2414 = vmatmul.f32.gmra.mxu0 %v2356
    %v2415 = vpop.f32.mrf.mxu0
    %v2416 = vadd.f32 %v2393, %v2415
    %2417 = vdwg.mxu0
    %s2418 = scalar_lea.vmem %s21, 128
    %v2419 = vld [vmem:[%s2418] sm:$0xff]
    %v2420 = vld [vmem:[%s2418 + $0x8] sm:$0xff]
    %v2421 = vld [vmem:[%s2418 + $0x10] sm:$0xff]
    %v2422 = vld [vmem:[%s2418 + $0x18] sm:$0xff]
    %v2423 = vld [vmem:[%s2418 + $0x20] sm:$0xff]
    %v2424 = vld [vmem:[%s2418 + $0x28] sm:$0xff]
    %v2425 = vld [vmem:[%s2418 + $0x30] sm:$0xff]
    %v2426 = vld [vmem:[%s2418 + $0x38] sm:$0xff]
    %s2427 = scalar_lea.vmem %s25, 2
    %v2428 = vld [vmem:[%s2427] sm:$0x1]
    %v2430 = vperm.slane %v2428, 0
    %2432 = vmatpush.msra.mxu0 0.0
    %2433 = vmatpush.msra.mxu0 0.0
    %2434 = vmatpush.msra.mxu0 0.0
    %2435 = vmatpush.msra.mxu0 0.0
    %2436 = vmatpush.msra.mxu0 0.0
    %2437 = vmatpush.msra.mxu0 0.0
    %2438 = vmatpush.msra.mxu0 0.0
    %2439 = vmatpush.msra.mxu0 0.0
    %2440 = vmatpush.msra.mxu0 %v2426
    %2441 = vmatpush.msra.mxu0 %v2425
    %2442 = vmatpush.msra.mxu0 %v2424
    %2443 = vmatpush.msra.mxu0 %v2423
    %2444 = vmatpush.msra.mxu0 %v2422
    %2445 = vmatpush.msra.mxu0 %v2421
    %2446 = vmatpush.msra.mxu0 %v2420
    %2447 = vmatpush.msra.mxu0 %v2419
    %2448 = vmatmul.f32.gmra.mxu0 %v2353
    %v2449 = vpop.f32.mrf.mxu0
    %v2450 = vadd.f32 %v2430, %v2449
    %2451 = vmatmul.f32.gmra.mxu0 %v2356
    %v2452 = vpop.f32.mrf.mxu0
    %v2453 = vadd.f32 %v2430, %v2452
    %2454 = vdwg.mxu0
    %v2455 = vld [vmem:[%s23] sm:$0xff]
    %v2456 = vld [vmem:[%s23 + $0x8] sm:$0xff]
    %v2457 = vld [vmem:[%s23 + $0x10] sm:$0xff]
    %v2458 = vld [vmem:[%s23 + $0x18] sm:$0xff]
    %s2459 = scalar_lea.vmem %s23, 32
    %v2460 = vld [vmem:[%s2459] sm:$0xff]
    %v2461 = vld [vmem:[%s2459 + $0x8] sm:$0xff]
    %v2462 = vld [vmem:[%s2459 + $0x10] sm:$0xff]
    %v2463 = vld [vmem:[%s2459 + $0x18] sm:$0xff]
    %s2464 = scalar_lea.vmem %s23, 64
    %v2465 = vld [vmem:[%s2464] sm:$0xff]
    %v2466 = vld [vmem:[%s2464 + $0x8] sm:$0xff]
    %v2467 = vld [vmem:[%s2464 + $0x10] sm:$0xff]
    %v2468 = vld [vmem:[%s2464 + $0x18] sm:$0xff]
    %v2469 = vld [vmem:[%s27] sm:$0x1]
    %s2470 = scalar_lea.vmem %s27, 1
    %v2471 = vld [vmem:[%s2470] sm:$0x1]
    %s2472 = scalar_lea.vmem %s27, 2
    %v2473 = vld [vmem:[%s2472] sm:$0x1]
    %v2475 = vperm.slane %v2469, 0
    %v2478 = vsel %vm133, %v2338, 0
    %2480 = vmatpush.msra.mxu0 0.0
    %2481 = vmatpush.msra.mxu0 0.0
    %2482 = vmatpush.msra.mxu0 0.0
    %2483 = vmatpush.msra.mxu0 0.0
    %2484 = vmatpush.msra.mxu0 0.0
    %2485 = vmatpush.msra.mxu0 0.0
    %2486 = vmatpush.msra.mxu0 0.0
    %2487 = vmatpush.msra.mxu0 0.0
    %2488 = vmatpush.msra.mxu0 0.0
    %2489 = vmatpush.msra.mxu0 0.0
    %2490 = vmatpush.msra.mxu0 0.0
    %2491 = vmatpush.msra.mxu0 0.0
    %2492 = vmatpush.msra.mxu0 %v2458
    %2493 = vmatpush.msra.mxu0 %v2457
    %2494 = vmatpush.msra.mxu0 %v2456
    %2495 = vmatpush.msra.mxu0 %v2455
    %2496 = vmatmul.f32.gmra.mxu0 %v2478
    %v2497 = vpop.f32.mrf.mxu0
    %v2498 = vadd.f32 %v2475, %v2497
    %2499 = vdwg.mxu0
    %v2501 = vperm.slane %v2471, 0
    %2503 = vmatpush.msra.mxu0 0.0
    %2504 = vmatpush.msra.mxu0 0.0
    %2505 = vmatpush.msra.mxu0 0.0
    %2506 = vmatpush.msra.mxu0 0.0
    %2507 = vmatpush.msra.mxu0 0.0
    %2508 = vmatpush.msra.mxu0 0.0
    %2509 = vmatpush.msra.mxu0 0.0
    %2510 = vmatpush.msra.mxu0 0.0
    %2511 = vmatpush.msra.mxu0 0.0
    %2512 = vmatpush.msra.mxu0 0.0
    %2513 = vmatpush.msra.mxu0 0.0
    %2514 = vmatpush.msra.mxu0 0.0
    %2515 = vmatpush.msra.mxu0 %v2463
    %2516 = vmatpush.msra.mxu0 %v2462
    %2517 = vmatpush.msra.mxu0 %v2461
    %2518 = vmatpush.msra.mxu0 %v2460
    %2519 = vmatmul.f32.gmra.mxu0 %v2478
    %v2520 = vpop.f32.mrf.mxu0
    %v2521 = vadd.f32 %v2501, %v2520
    %2522 = vdwg.mxu0
    %v2524 = vperm.slane %v2473, 0
    %2526 = vmatpush.msra.mxu0 0.0
    %2527 = vmatpush.msra.mxu0 0.0
    %2528 = vmatpush.msra.mxu0 0.0
    %2529 = vmatpush.msra.mxu0 0.0
    %2530 = vmatpush.msra.mxu0 0.0
    %2531 = vmatpush.msra.mxu0 0.0
    %2532 = vmatpush.msra.mxu0 0.0
    %2533 = vmatpush.msra.mxu0 0.0
    %2534 = vmatpush.msra.mxu0 0.0
    %2535 = vmatpush.msra.mxu0 0.0
    %2536 = vmatpush.msra.mxu0 0.0
    %2537 = vmatpush.msra.mxu0 0.0
    %2538 = vmatpush.msra.mxu0 %v2468
    %2539 = vmatpush.msra.mxu0 %v2467
    %2540 = vmatpush.msra.mxu0 %v2466
    %2541 = vmatpush.msra.mxu0 %v2465
    %2542 = vmatmul.f32.gmra.mxu0 %v2478
    %v2543 = vpop.f32.mrf.mxu0
    %v2544 = vadd.f32 %v2524, %v2543
    %2545 = vdwg.mxu0
    %v2546 = vadd.f32 %v2376, %v2498
    %v2547 = vxor.u32 %v2546, 2147483648
    %v2548 = vmul.f32 %v2547, 1.442695
    %v2549 = vpow.pop %v2548
    %v2550 = vadd.f32 %v2549, 1.0
    %v2551 = vrcp.pop %v2550
    %v2552 = vmul.f32 %v2550, %v2551
    %v2553 = vsub.f32 1.0, %v2552
    %v2554 = vmul.f32 %v2551, %v2553
    %v2555 = vadd.f32 %v2551, %v2554
    %vm2556 = vweird.f32 %v2550
    %vm2557 = vweird.f32 %v2551
    %vm2558 = vmor %vm2556, %vm2557
    %v2559 = vsel %vm2558, %v2551, %v2555
    %v2560 = vand.u32 2147483647, %v2550
    %vm2561 = vcmp.eq.f32.partialorder %v2560, 8.507059e+37
    %v2562 = vand.u32 %v2550, 2147483648
    %v2563 = vor.u32 1.1754944e-38, %v2562
    %v2564 = vsel %vm2561, %v2563, %v2559
    %v2565 = vmul.f32 1.0, %v2564
    %v2566 = vadd.f32 %v2413, %v2521
    %v2567 = vxor.u32 %v2566, 2147483648
    %v2568 = vmul.f32 %v2567, 1.442695
    %v2569 = vpow.pop %v2568
    %v2570 = vadd.f32 %v2569, 1.0
    %v2571 = vrcp.pop %v2570
    %v2572 = vmul.f32 %v2570, %v2571
    %v2573 = vsub.f32 1.0, %v2572
    %v2574 = vmul.f32 %v2571, %v2573
    %v2575 = vadd.f32 %v2571, %v2574
    %vm2576 = vweird.f32 %v2570
    %vm2577 = vweird.f32 %v2571
    %vm2578 = vmor %vm2576, %vm2577
    %v2579 = vsel %vm2578, %v2571, %v2575
    %v2580 = vand.u32 2147483647, %v2570
    %vm2581 = vcmp.eq.f32.partialorder %v2580, 8.507059e+37
    %v2582 = vand.u32 %v2570, 2147483648
    %v2583 = vor.u32 1.1754944e-38, %v2582
    %v2584 = vsel %vm2581, %v2583, %v2579
    %v2585 = vmul.f32 1.0, %v2584
    %v2586 = vmul.f32 %v2565, %v2544
    %v2587 = vadd.f32 %v2450, %v2586
    %v2588 = vtanh.pop %v2587
    %v2589 = vsub.f32 1.0, %v2585
    %v2590 = vmul.f32 %v2589, %v2588
    %v2591 = vmul.f32 %v2585, %v2338
    %v2592 = vadd.f32 %v2590, %v2591
    %v2594 = vsel %vm133, %v2592, 0
    %2596 = vmatpush.msra.mxu0 0.0
    %2597 = vmatpush.msra.mxu0 0.0
    %2598 = vmatpush.msra.mxu0 0.0
    %2599 = vmatpush.msra.mxu0 0.0
    %2600 = vmatpush.msra.mxu0 0.0
    %2601 = vmatpush.msra.mxu0 0.0
    %2602 = vmatpush.msra.mxu0 0.0
    %2603 = vmatpush.msra.mxu0 0.0
    %2604 = vmatpush.msra.mxu0 0.0
    %2605 = vmatpush.msra.mxu0 0.0
    %2606 = vmatpush.msra.mxu0 0.0
    %2607 = vmatpush.msra.mxu0 0.0
    %2608 = vmatpush.msra.mxu0 %v2458
    %2609 = vmatpush.msra.mxu0 %v2457
    %2610 = vmatpush.msra.mxu0 %v2456
    %2611 = vmatpush.msra.mxu0 %v2455
    %2612 = vmatmul.f32.gmra.mxu0 %v2594
    %v2613 = vpop.f32.mrf.mxu0
    %v2614 = vadd.f32 %v2475, %v2613
    %2615 = vdwg.mxu0
    %2616 = vmatpush.msra.mxu0 0.0
    %2617 = vmatpush.msra.mxu0 0.0
    %2618 = vmatpush.msra.mxu0 0.0
    %2619 = vmatpush.msra.mxu0 0.0
    %2620 = vmatpush.msra.mxu0 0.0
    %2621 = vmatpush.msra.mxu0 0.0
    %2622 = vmatpush.msra.mxu0 0.0
    %2623 = vmatpush.msra.mxu0 0.0
    %2624 = vmatpush.msra.mxu0 0.0
    %2625 = vmatpush.msra.mxu0 0.0
    %2626 = vmatpush.msra.mxu0 0.0
    %2627 = vmatpush.msra.mxu0 0.0
    %2628 = vmatpush.msra.mxu0 %v2463
    %2629 = vmatpush.msra.mxu0 %v2462
    %2630 = vmatpush.msra.mxu0 %v2461
    %2631 = vmatpush.msra.mxu0 %v2460
    %2632 = vmatmul.f32.gmra.mxu0 %v2594
    %v2633 = vpop.f32.mrf.mxu0
    %v2634 = vadd.f32 %v2501, %v2633
    %2635 = vdwg.mxu0
    %2636 = vmatpush.msra.mxu0 0.0
    %2637 = vmatpush.msra.mxu0 0.0
    %2638 = vmatpush.msra.mxu0 0.0
    %2639 = vmatpush.msra.mxu0 0.0
    %2640 = vmatpush.msra.mxu0 0.0
    %2641 = vmatpush.msra.mxu0 0.0
    %2642 = vmatpush.msra.mxu0 0.0
    %2643 = vmatpush.msra.mxu0 0.0
    %2644 = vmatpush.msra.mxu0 0.0
    %2645 = vmatpush.msra.mxu0 0.0
    %2646 = vmatpush.msra.mxu0 0.0
    %2647 = vmatpush.msra.mxu0 0.0
    %2648 = vmatpush.msra.mxu0 %v2468
    %2649 = vmatpush.msra.mxu0 %v2467
    %2650 = vmatpush.msra.mxu0 %v2466
    %2651 = vmatpush.msra.mxu0 %v2465
    %2652 = vmatmul.f32.gmra.mxu0 %v2594
    %v2653 = vpop.f32.mrf.mxu0
    %v2654 = vadd.f32 %v2524, %v2653
    %2655 = vdwg.mxu0
    %v2657 = vrot.slane %v2614, 6
    %v2659 = vadd.f32 %v2376, %v2657
    %v2660 = vxor.u32 %v2659, 2147483648
    %v2661 = vmul.f32 %v2660, 1.442695
    %v2662 = vpow.pop %v2661
    %v2663 = vadd.f32 %v2662, 1.0
    %v2664 = vrcp.pop %v2663
    %v2665 = vmul.f32 %v2663, %v2664
    %v2666 = vsub.f32 1.0, %v2665
    %v2667 = vmul.f32 %v2664, %v2666
    %v2668 = vadd.f32 %v2664, %v2667
    %vm2669 = vweird.f32 %v2663
    %vm2670 = vweird.f32 %v2664
    %vm2671 = vmor %vm2669, %vm2670
    %v2672 = vsel %vm2671, %v2664, %v2668
    %v2673 = vand.u32 2147483647, %v2663
    %vm2674 = vcmp.eq.f32.partialorder %v2673, 8.507059e+37
    %v2675 = vand.u32 %v2663, 2147483648
    %v2676 = vor.u32 1.1754944e-38, %v2675
    %v2677 = vsel %vm2674, %v2676, %v2672
    %v2678 = vmul.f32 1.0, %v2677
    %v2680 = vrot.slane %v2634, 6
    %v2682 = vadd.f32 %v2413, %v2680
    %v2683 = vxor.u32 %v2682, 2147483648
    %v2684 = vmul.f32 %v2683, 1.442695
    %v2685 = vpow.pop %v2684
    %v2686 = vadd.f32 %v2685, 1.0
    %v2687 = vrcp.pop %v2686
    %v2688 = vmul.f32 %v2686, %v2687
    %v2689 = vsub.f32 1.0, %v2688
    %v2690 = vmul.f32 %v2687, %v2689
    %v2691 = vadd.f32 %v2687, %v2690
    %vm2692 = vweird.f32 %v2686
    %vm2693 = vweird.f32 %v2687
    %vm2694 = vmor %vm2692, %vm2693
    %v2695 = vsel %vm2694, %v2687, %v2691
    %v2696 = vand.u32 2147483647, %v2686
    %vm2697 = vcmp.eq.f32.partialorder %v2696, 8.507059e+37
    %v2698 = vand.u32 %v2686, 2147483648
    %v2699 = vor.u32 1.1754944e-38, %v2698
    %v2700 = vsel %vm2697, %v2699, %v2695
    %v2701 = vmul.f32 1.0, %v2700
    %v2703 = vrot.slane %v2654, 6
    %v2705 = vmul.f32 %v2678, %v2703
    %v2706 = vadd.f32 %v2450, %v2705
    %v2707 = vtanh.pop %v2706
    %v2708 = vsub.f32 1.0, %v2701
    %v2709 = vmul.f32 %v2708, %v2707
    %v2710 = vrot.slane %v2592, 6
    %v2712 = vmul.f32 %v2701, %v2710
    %v2713 = vadd.f32 %v2709, %v2712
    %v2715 = vrot.slane %v2713, 2
    %v2716 = vsel %vm133, %v2715, 0
    %2718 = vmatpush.msra.mxu0 0.0
    %2719 = vmatpush.msra.mxu0 0.0
    %2720 = vmatpush.msra.mxu0 0.0
    %2721 = vmatpush.msra.mxu0 0.0
    %2722 = vmatpush.msra.mxu0 0.0
    %2723 = vmatpush.msra.mxu0 0.0
    %2724 = vmatpush.msra.mxu0 0.0
    %2725 = vmatpush.msra.mxu0 0.0
    %2726 = vmatpush.msra.mxu0 0.0
    %2727 = vmatpush.msra.mxu0 0.0
    %2728 = vmatpush.msra.mxu0 0.0
    %2729 = vmatpush.msra.mxu0 0.0
    %2730 = vmatpush.msra.mxu0 %v2458
    %2731 = vmatpush.msra.mxu0 %v2457
    %2732 = vmatpush.msra.mxu0 %v2456
    %2733 = vmatpush.msra.mxu0 %v2455
    %2734 = vmatmul.f32.gmra.mxu0 %v2716
    %v2735 = vpop.f32.mrf.mxu0
    %v2736 = vadd.f32 %v2475, %v2735
    %2737 = vdwg.mxu0
    %2738 = vmatpush.msra.mxu0 0.0
    %2739 = vmatpush.msra.mxu0 0.0
    %2740 = vmatpush.msra.mxu0 0.0
    %2741 = vmatpush.msra.mxu0 0.0
    %2742 = vmatpush.msra.mxu0 0.0
    %2743 = vmatpush.msra.mxu0 0.0
    %2744 = vmatpush.msra.mxu0 0.0
    %2745 = vmatpush.msra.mxu0 0.0
    %2746 = vmatpush.msra.mxu0 0.0
    %2747 = vmatpush.msra.mxu0 0.0
    %2748 = vmatpush.msra.mxu0 0.0
    %2749 = vmatpush.msra.mxu0 0.0
    %2750 = vmatpush.msra.mxu0 %v2463
    %2751 = vmatpush.msra.mxu0 %v2462
    %2752 = vmatpush.msra.mxu0 %v2461
    %2753 = vmatpush.msra.mxu0 %v2460
    %2754 = vmatmul.f32.gmra.mxu0 %v2716
    %v2755 = vpop.f32.mrf.mxu0
    %v2756 = vadd.f32 %v2501, %v2755
    %2757 = vdwg.mxu0
    %2758 = vmatpush.msra.mxu0 0.0
    %2759 = vmatpush.msra.mxu0 0.0
    %2760 = vmatpush.msra.mxu0 0.0
    %2761 = vmatpush.msra.mxu0 0.0
    %2762 = vmatpush.msra.mxu0 0.0
    %2763 = vmatpush.msra.mxu0 0.0
    %2764 = vmatpush.msra.mxu0 0.0
    %2765 = vmatpush.msra.mxu0 0.0
    %2766 = vmatpush.msra.mxu0 0.0
    %2767 = vmatpush.msra.mxu0 0.0
    %2768 = vmatpush.msra.mxu0 0.0
    %2769 = vmatpush.msra.mxu0 0.0
    %2770 = vmatpush.msra.mxu0 %v2468
    %2771 = vmatpush.msra.mxu0 %v2467
    %2772 = vmatpush.msra.mxu0 %v2466
    %2773 = vmatpush.msra.mxu0 %v2465
    %2774 = vmatmul.f32.gmra.mxu0 %v2716
    %v2775 = vpop.f32.mrf.mxu0
    %v2776 = vadd.f32 %v2524, %v2775
    %2777 = vdwg.mxu0
    %v2779 = vrot.slane %v2736, 4
    %v2781 = vadd.f32 %v2376, %v2779
    %v2782 = vxor.u32 %v2781, 2147483648
    %v2783 = vmul.f32 %v2782, 1.442695
    %v2784 = vpow.pop %v2783
    %v2785 = vadd.f32 %v2784, 1.0
    %v2786 = vrcp.pop %v2785
    %v2787 = vmul.f32 %v2785, %v2786
    %v2788 = vsub.f32 1.0, %v2787
    %v2789 = vmul.f32 %v2786, %v2788
    %v2790 = vadd.f32 %v2786, %v2789
    %vm2791 = vweird.f32 %v2785
    %vm2792 = vweird.f32 %v2786
    %vm2793 = vmor %vm2791, %vm2792
    %v2794 = vsel %vm2793, %v2786, %v2790
    %v2795 = vand.u32 2147483647, %v2785
    %vm2796 = vcmp.eq.f32.partialorder %v2795, 8.507059e+37
    %v2797 = vand.u32 %v2785, 2147483648
    %v2798 = vor.u32 1.1754944e-38, %v2797
    %v2799 = vsel %vm2796, %v2798, %v2794
    %v2800 = vmul.f32 1.0, %v2799
    %v2802 = vrot.slane %v2756, 4
    %v2804 = vadd.f32 %v2413, %v2802
    %v2805 = vxor.u32 %v2804, 2147483648
    %v2806 = vmul.f32 %v2805, 1.442695
    %v2807 = vpow.pop %v2806
    %v2808 = vadd.f32 %v2807, 1.0
    %v2809 = vrcp.pop %v2808
    %v2810 = vmul.f32 %v2808, %v2809
    %v2811 = vsub.f32 1.0, %v2810
    %v2812 = vmul.f32 %v2809, %v2811
    %v2813 = vadd.f32 %v2809, %v2812
    %vm2814 = vweird.f32 %v2808
    %vm2815 = vweird.f32 %v2809
    %vm2816 = vmor %vm2814, %vm2815
    %v2817 = vsel %vm2816, %v2809, %v2813
    %v2818 = vand.u32 2147483647, %v2808
    %vm2819 = vcmp.eq.f32.partialorder %v2818, 8.507059e+37
    %v2820 = vand.u32 %v2808, 2147483648
    %v2821 = vor.u32 1.1754944e-38, %v2820
    %v2822 = vsel %vm2819, %v2821, %v2817
    %v2823 = vmul.f32 1.0, %v2822
    %v2825 = vrot.slane %v2776, 4
    %v2827 = vmul.f32 %v2800, %v2825
    %v2828 = vadd.f32 %v2450, %v2827
    %v2829 = vtanh.pop %v2828
    %v2830 = vsub.f32 1.0, %v2823
    %v2831 = vmul.f32 %v2830, %v2829
    %v2832 = vrot.slane %v2713, 6
    %v2834 = vmul.f32 %v2823, %v2832
    %v2835 = vadd.f32 %v2831, %v2834
    %v2837 = vrot.slane %v2835, 4
    %v2838 = vsel %vm133, %v2837, 0
    %2840 = vmatpush.msra.mxu0 0.0
    %2841 = vmatpush.msra.mxu0 0.0
    %2842 = vmatpush.msra.mxu0 0.0
    %2843 = vmatpush.msra.mxu0 0.0
    %2844 = vmatpush.msra.mxu0 0.0
    %2845 = vmatpush.msra.mxu0 0.0
    %2846 = vmatpush.msra.mxu0 0.0
    %2847 = vmatpush.msra.mxu0 0.0
    %2848 = vmatpush.msra.mxu0 0.0
    %2849 = vmatpush.msra.mxu0 0.0
    %2850 = vmatpush.msra.mxu0 0.0
    %2851 = vmatpush.msra.mxu0 0.0
    %2852 = vmatpush.msra.mxu0 %v2458
    %2853 = vmatpush.msra.mxu0 %v2457
    %2854 = vmatpush.msra.mxu0 %v2456
    %2855 = vmatpush.msra.mxu0 %v2455
    %2856 = vmatmul.f32.gmra.mxu0 %v2838
    %v2857 = vpop.f32.mrf.mxu0
    %v2858 = vadd.f32 %v2475, %v2857
    %2859 = vdwg.mxu0
    %2860 = vmatpush.msra.mxu0 0.0
    %2861 = vmatpush.msra.mxu0 0.0
    %2862 = vmatpush.msra.mxu0 0.0
    %2863 = vmatpush.msra.mxu0 0.0
    %2864 = vmatpush.msra.mxu0 0.0
    %2865 = vmatpush.msra.mxu0 0.0
    %2866 = vmatpush.msra.mxu0 0.0
    %2867 = vmatpush.msra.mxu0 0.0
    %2868 = vmatpush.msra.mxu0 0.0
    %2869 = vmatpush.msra.mxu0 0.0
    %2870 = vmatpush.msra.mxu0 0.0
    %2871 = vmatpush.msra.mxu0 0.0
    %2872 = vmatpush.msra.mxu0 %v2463
    %2873 = vmatpush.msra.mxu0 %v2462
    %2874 = vmatpush.msra.mxu0 %v2461
    %2875 = vmatpush.msra.mxu0 %v2460
    %2876 = vmatmul.f32.gmra.mxu0 %v2838
    %v2877 = vpop.f32.mrf.mxu0
    %v2878 = vadd.f32 %v2501, %v2877
    %2879 = vdwg.mxu0
    %2880 = vmatpush.msra.mxu0 0.0
    %2881 = vmatpush.msra.mxu0 0.0
    %2882 = vmatpush.msra.mxu0 0.0
    %2883 = vmatpush.msra.mxu0 0.0
    %2884 = vmatpush.msra.mxu0 0.0
    %2885 = vmatpush.msra.mxu0 0.0
    %2886 = vmatpush.msra.mxu0 0.0
    %2887 = vmatpush.msra.mxu0 0.0
    %2888 = vmatpush.msra.mxu0 0.0
    %2889 = vmatpush.msra.mxu0 0.0
    %2890 = vmatpush.msra.mxu0 0.0
    %2891 = vmatpush.msra.mxu0 0.0
    %2892 = vmatpush.msra.mxu0 %v2468
    %2893 = vmatpush.msra.mxu0 %v2467
    %2894 = vmatpush.msra.mxu0 %v2466
    %2895 = vmatpush.msra.mxu0 %v2465
    %2896 = vmatmul.f32.gmra.mxu0 %v2838
    %v2897 = vpop.f32.mrf.mxu0
    %v2898 = vadd.f32 %v2524, %v2897
    %2899 = vdwg.mxu0
    %v2901 = vrot.slane %v2858, 2
    %v2903 = vadd.f32 %v2376, %v2901
    %v2904 = vxor.u32 %v2903, 2147483648
    %v2905 = vmul.f32 %v2904, 1.442695
    %v2906 = vpow.pop %v2905
    %v2907 = vadd.f32 %v2906, 1.0
    %v2908 = vrcp.pop %v2907
    %v2909 = vmul.f32 %v2907, %v2908
    %v2910 = vsub.f32 1.0, %v2909
    %v2911 = vmul.f32 %v2908, %v2910
    %v2912 = vadd.f32 %v2908, %v2911
    %vm2913 = vweird.f32 %v2907
    %vm2914 = vweird.f32 %v2908
    %vm2915 = vmor %vm2913, %vm2914
    %v2916 = vsel %vm2915, %v2908, %v2912
    %v2917 = vand.u32 2147483647, %v2907
    %vm2918 = vcmp.eq.f32.partialorder %v2917, 8.507059e+37
    %v2919 = vand.u32 %v2907, 2147483648
    %v2920 = vor.u32 1.1754944e-38, %v2919
    %v2921 = vsel %vm2918, %v2920, %v2916
    %v2922 = vmul.f32 1.0, %v2921
    %v2924 = vrot.slane %v2878, 2
    %v2926 = vadd.f32 %v2413, %v2924
    %v2927 = vxor.u32 %v2926, 2147483648
    %v2928 = vmul.f32 %v2927, 1.442695
    %v2929 = vpow.pop %v2928
    %v2930 = vadd.f32 %v2929, 1.0
    %v2931 = vrcp.pop %v2930
    %v2932 = vmul.f32 %v2930, %v2931
    %v2933 = vsub.f32 1.0, %v2932
    %v2934 = vmul.f32 %v2931, %v2933
    %v2935 = vadd.f32 %v2931, %v2934
    %vm2936 = vweird.f32 %v2930
    %vm2937 = vweird.f32 %v2931
    %vm2938 = vmor %vm2936, %vm2937
    %v2939 = vsel %vm2938, %v2931, %v2935
    %v2940 = vand.u32 2147483647, %v2930
    %vm2941 = vcmp.eq.f32.partialorder %v2940, 8.507059e+37
    %v2942 = vand.u32 %v2930, 2147483648
    %v2943 = vor.u32 1.1754944e-38, %v2942
    %v2944 = vsel %vm2941, %v2943, %v2939
    %v2945 = vmul.f32 1.0, %v2944
    %v2947 = vrot.slane %v2898, 2
    %v2949 = vmul.f32 %v2922, %v2947
    %v2950 = vadd.f32 %v2450, %v2949
    %v2951 = vtanh.pop %v2950
    %v2952 = vsub.f32 1.0, %v2945
    %v2953 = vmul.f32 %v2952, %v2951
    %v2954 = vrot.slane %v2835, 6
    %v2956 = vmul.f32 %v2945, %v2954
    %v2957 = vadd.f32 %v2953, %v2956
    %v2959 = vrot.slane %v2957, 6
    %v2960 = vsel %vm133, %v2959, 0
    %2962 = vmatpush.msra.mxu0 0.0
    %2963 = vmatpush.msra.mxu0 0.0
    %2964 = vmatpush.msra.mxu0 0.0
    %2965 = vmatpush.msra.mxu0 0.0
    %2966 = vmatpush.msra.mxu0 0.0
    %2967 = vmatpush.msra.mxu0 0.0
    %2968 = vmatpush.msra.mxu0 0.0
    %2969 = vmatpush.msra.mxu0 0.0
    %2970 = vmatpush.msra.mxu0 0.0
    %2971 = vmatpush.msra.mxu0 0.0
    %2972 = vmatpush.msra.mxu0 0.0
    %2973 = vmatpush.msra.mxu0 0.0
    %2974 = vmatpush.msra.mxu0 %v2458
    %2975 = vmatpush.msra.mxu0 %v2457
    %2976 = vmatpush.msra.mxu0 %v2456
    %2977 = vmatpush.msra.mxu0 %v2455
    %2978 = vmatmul.f32.gmra.mxu0 %v2960
    %v2979 = vpop.f32.mrf.mxu0
    %v2980 = vadd.f32 %v2475, %v2979
    %2981 = vdwg.mxu0
    %2982 = vmatpush.msra.mxu0 0.0
    %2983 = vmatpush.msra.mxu0 0.0
    %2984 = vmatpush.msra.mxu0 0.0
    %2985 = vmatpush.msra.mxu0 0.0
    %2986 = vmatpush.msra.mxu0 0.0
    %2987 = vmatpush.msra.mxu0 0.0
    %2988 = vmatpush.msra.mxu0 0.0
    %2989 = vmatpush.msra.mxu0 0.0
    %2990 = vmatpush.msra.mxu0 0.0
    %2991 = vmatpush.msra.mxu0 0.0
    %2992 = vmatpush.msra.mxu0 0.0
    %2993 = vmatpush.msra.mxu0 0.0
    %2994 = vmatpush.msra.mxu0 %v2463
    %2995 = vmatpush.msra.mxu0 %v2462
    %2996 = vmatpush.msra.mxu0 %v2461
    %2997 = vmatpush.msra.mxu0 %v2460
    %2998 = vmatmul.f32.gmra.mxu0 %v2960
    %v2999 = vpop.f32.mrf.mxu0
    %v3000 = vadd.f32 %v2501, %v2999
    %3001 = vdwg.mxu0
    %3002 = vmatpush.msra.mxu0 0.0
    %3003 = vmatpush.msra.mxu0 0.0
    %3004 = vmatpush.msra.mxu0 0.0
    %3005 = vmatpush.msra.mxu0 0.0
    %3006 = vmatpush.msra.mxu0 0.0
    %3007 = vmatpush.msra.mxu0 0.0
    %3008 = vmatpush.msra.mxu0 0.0
    %3009 = vmatpush.msra.mxu0 0.0
    %3010 = vmatpush.msra.mxu0 0.0
    %3011 = vmatpush.msra.mxu0 0.0
    %3012 = vmatpush.msra.mxu0 0.0
    %3013 = vmatpush.msra.mxu0 0.0
    %3014 = vmatpush.msra.mxu0 %v2468
    %3015 = vmatpush.msra.mxu0 %v2467
    %3016 = vmatpush.msra.mxu0 %v2466
    %3017 = vmatpush.msra.mxu0 %v2465
    %3018 = vmatmul.f32.gmra.mxu0 %v2960
    %v3019 = vpop.f32.mrf.mxu0
    %v3020 = vadd.f32 %v2524, %v3019
    %3021 = vdwg.mxu0
    %v3022 = vadd.f32 %v2379, %v2980
    %v3023 = vxor.u32 %v3022, 2147483648
    %v3024 = vmul.f32 %v3023, 1.442695
    %v3025 = vpow.pop %v3024
    %v3026 = vadd.f32 %v3025, 1.0
    %v3027 = vrcp.pop %v3026
    %v3028 = vmul.f32 %v3026, %v3027
    %v3029 = vsub.f32 1.0, %v3028
    %v3030 = vmul.f32 %v3027, %v3029
    %v3031 = vadd.f32 %v3027, %v3030
    %vm3032 = vweird.f32 %v3026
    %vm3033 = vweird.f32 %v3027
    %vm3034 = vmor %vm3032, %vm3033
    %v3035 = vsel %vm3034, %v3027, %v3031
    %v3036 = vand.u32 2147483647, %v3026
    %vm3037 = vcmp.eq.f32.partialorder %v3036, 8.507059e+37
    %v3038 = vand.u32 %v3026, 2147483648
    %v3039 = vor.u32 1.1754944e-38, %v3038
    %v3040 = vsel %vm3037, %v3039, %v3035
    %v3041 = vmul.f32 1.0, %v3040
    %v3042 = vadd.f32 %v2416, %v3000
    %v3043 = vxor.u32 %v3042, 2147483648
    %v3044 = vmul.f32 %v3043, 1.442695
    %v3045 = vpow.pop %v3044
    %v3046 = vadd.f32 %v3045, 1.0
    %v3047 = vrcp.pop %v3046
    %v3048 = vmul.f32 %v3046, %v3047
    %v3049 = vsub.f32 1.0, %v3048
    %v3050 = vmul.f32 %v3047, %v3049
    %v3051 = vadd.f32 %v3047, %v3050
    %vm3052 = vweird.f32 %v3046
    %vm3053 = vweird.f32 %v3047
    %vm3054 = vmor %vm3052, %vm3053
    %v3055 = vsel %vm3054, %v3047, %v3051
    %v3056 = vand.u32 2147483647, %v3046
    %vm3057 = vcmp.eq.f32.partialorder %v3056, 8.507059e+37
    %v3058 = vand.u32 %v3046, 2147483648
    %v3059 = vor.u32 1.1754944e-38, %v3058
    %v3060 = vsel %vm3057, %v3059, %v3055
    %v3061 = vmul.f32 1.0, %v3060
    %v3062 = vmul.f32 %v3041, %v3020
    %v3063 = vadd.f32 %v2453, %v3062
    %v3064 = vtanh.pop %v3063
    %v3065 = vsub.f32 1.0, %v3061
    %v3066 = vmul.f32 %v3065, %v3064
    %v3068 = vmul.f32 %v3061, %v2959
    %v3069 = vadd.f32 %v3066, %v3068
    %v3071 = vsel %vm133, %v3069, 0
    %3073 = vmatpush.msra.mxu0 0.0
    %3074 = vmatpush.msra.mxu0 0.0
    %3075 = vmatpush.msra.mxu0 0.0
    %3076 = vmatpush.msra.mxu0 0.0
    %3077 = vmatpush.msra.mxu0 0.0
    %3078 = vmatpush.msra.mxu0 0.0
    %3079 = vmatpush.msra.mxu0 0.0
    %3080 = vmatpush.msra.mxu0 0.0
    %3081 = vmatpush.msra.mxu0 0.0
    %3082 = vmatpush.msra.mxu0 0.0
    %3083 = vmatpush.msra.mxu0 0.0
    %3084 = vmatpush.msra.mxu0 0.0
    %3085 = vmatpush.msra.mxu0 %v2458
    %3086 = vmatpush.msra.mxu0 %v2457
    %3087 = vmatpush.msra.mxu0 %v2456
    %3088 = vmatpush.msra.mxu0 %v2455
    %3089 = vmatmul.f32.gmra.mxu0 %v3071
    %v3090 = vpop.f32.mrf.mxu0
    %v3091 = vadd.f32 %v2475, %v3090
    %3092 = vdwg.mxu0
    %3093 = vmatpush.msra.mxu0 0.0
    %3094 = vmatpush.msra.mxu0 0.0
    %3095 = vmatpush.msra.mxu0 0.0
    %3096 = vmatpush.msra.mxu0 0.0
    %3097 = vmatpush.msra.mxu0 0.0
    %3098 = vmatpush.msra.mxu0 0.0
    %3099 = vmatpush.msra.mxu0 0.0
    %3100 = vmatpush.msra.mxu0 0.0
    %3101 = vmatpush.msra.mxu0 0.0
    %3102 = vmatpush.msra.mxu0 0.0
    %3103 = vmatpush.msra.mxu0 0.0
    %3104 = vmatpush.msra.mxu0 0.0
    %3105 = vmatpush.msra.mxu0 %v2463
    %3106 = vmatpush.msra.mxu0 %v2462
    %3107 = vmatpush.msra.mxu0 %v2461
    %3108 = vmatpush.msra.mxu0 %v2460
    %3109 = vmatmul.f32.gmra.mxu0 %v3071
    %v3110 = vpop.f32.mrf.mxu0
    %v3111 = vadd.f32 %v2501, %v3110
    %3112 = vdwg.mxu0
    %3113 = vmatpush.msra.mxu0 0.0
    %3114 = vmatpush.msra.mxu0 0.0
    %3115 = vmatpush.msra.mxu0 0.0
    %3116 = vmatpush.msra.mxu0 0.0
    %3117 = vmatpush.msra.mxu0 0.0
    %3118 = vmatpush.msra.mxu0 0.0
    %3119 = vmatpush.msra.mxu0 0.0
    %3120 = vmatpush.msra.mxu0 0.0
    %3121 = vmatpush.msra.mxu0 0.0
    %3122 = vmatpush.msra.mxu0 0.0
    %3123 = vmatpush.msra.mxu0 0.0
    %3124 = vmatpush.msra.mxu0 0.0
    %3125 = vmatpush.msra.mxu0 %v2468
    %3126 = vmatpush.msra.mxu0 %v2467
    %3127 = vmatpush.msra.mxu0 %v2466
    %3128 = vmatpush.msra.mxu0 %v2465
    %3129 = vmatmul.f32.gmra.mxu0 %v3071
    %v3130 = vpop.f32.mrf.mxu0
    %v3131 = vadd.f32 %v2524, %v3130
    %3132 = vdwg.mxu0
    %v3134 = vrot.slane %v3091, 6
    %v3136 = vadd.f32 %v2379, %v3134
    %v3137 = vxor.u32 %v3136, 2147483648
    %v3138 = vmul.f32 %v3137, 1.442695
    %v3139 = vpow.pop %v3138
    %v3140 = vadd.f32 %v3139, 1.0
    %v3141 = vrcp.pop %v3140
    %v3142 = vmul.f32 %v3140, %v3141
    %v3143 = vsub.f32 1.0, %v3142
    %v3144 = vmul.f32 %v3141, %v3143
    %v3145 = vadd.f32 %v3141, %v3144
    %vm3146 = vweird.f32 %v3140
    %vm3147 = vweird.f32 %v3141
    %vm3148 = vmor %vm3146, %vm3147
    %v3149 = vsel %vm3148, %v3141, %v3145
    %v3150 = vand.u32 2147483647, %v3140
    %vm3151 = vcmp.eq.f32.partialorder %v3150, 8.507059e+37
    %v3152 = vand.u32 %v3140, 2147483648
    %v3153 = vor.u32 1.1754944e-38, %v3152
    %v3154 = vsel %vm3151, %v3153, %v3149
    %v3155 = vmul.f32 1.0, %v3154
    %v3157 = vrot.slane %v3111, 6
    %v3159 = vadd.f32 %v2416, %v3157
    %v3160 = vxor.u32 %v3159, 2147483648
    %v3161 = vmul.f32 %v3160, 1.442695
    %v3162 = vpow.pop %v3161
    %v3163 = vadd.f32 %v3162, 1.0
    %v3164 = vrcp.pop %v3163
    %v3165 = vmul.f32 %v3163, %v3164
    %v3166 = vsub.f32 1.0, %v3165
    %v3167 = vmul.f32 %v3164, %v3166
    %v3168 = vadd.f32 %v3164, %v3167
    %vm3169 = vweird.f32 %v3163
    %vm3170 = vweird.f32 %v3164
    %vm3171 = vmor %vm3169, %vm3170
    %v3172 = vsel %vm3171, %v3164, %v3168
    %v3173 = vand.u32 2147483647, %v3163
    %vm3174 = vcmp.eq.f32.partialorder %v3173, 8.507059e+37
    %v3175 = vand.u32 %v3163, 2147483648
    %v3176 = vor.u32 1.1754944e-38, %v3175
    %v3177 = vsel %vm3174, %v3176, %v3172
    %v3178 = vmul.f32 1.0, %v3177
    %v3180 = vrot.slane %v3131, 6
    %v3182 = vmul.f32 %v3155, %v3180
    %v3183 = vadd.f32 %v2453, %v3182
    %v3184 = vtanh.pop %v3183
    %v3185 = vsub.f32 1.0, %v3178
    %v3186 = vmul.f32 %v3185, %v3184
    %v3187 = vrot.slane %v3069, 6
    %v3189 = vmul.f32 %v3178, %v3187
    %v3190 = vadd.f32 %v3186, %v3189
    %v3192 = vrot.slane %v3190, 2
    %v3193 = vsel %vm133, %v3192, 0
    %3195 = vmatpush.msra.mxu0 0.0
    %3196 = vmatpush.msra.mxu0 0.0
    %3197 = vmatpush.msra.mxu0 0.0
    %3198 = vmatpush.msra.mxu0 0.0
    %3199 = vmatpush.msra.mxu0 0.0
    %3200 = vmatpush.msra.mxu0 0.0
    %3201 = vmatpush.msra.mxu0 0.0
    %3202 = vmatpush.msra.mxu0 0.0
    %3203 = vmatpush.msra.mxu0 0.0
    %3204 = vmatpush.msra.mxu0 0.0
    %3205 = vmatpush.msra.mxu0 0.0
    %3206 = vmatpush.msra.mxu0 0.0
    %3207 = vmatpush.msra.mxu0 %v2458
    %3208 = vmatpush.msra.mxu0 %v2457
    %3209 = vmatpush.msra.mxu0 %v2456
    %3210 = vmatpush.msra.mxu0 %v2455
    %3211 = vmatmul.f32.gmra.mxu0 %v3193
    %v3212 = vpop.f32.mrf.mxu0
    %v3213 = vadd.f32 %v2475, %v3212
    %3214 = vdwg.mxu0
    %3215 = vmatpush.msra.mxu0 0.0
    %3216 = vmatpush.msra.mxu0 0.0
    %3217 = vmatpush.msra.mxu0 0.0
    %3218 = vmatpush.msra.mxu0 0.0
    %3219 = vmatpush.msra.mxu0 0.0
    %3220 = vmatpush.msra.mxu0 0.0
    %3221 = vmatpush.msra.mxu0 0.0
    %3222 = vmatpush.msra.mxu0 0.0
    %3223 = vmatpush.msra.mxu0 0.0
    %3224 = vmatpush.msra.mxu0 0.0
    %3225 = vmatpush.msra.mxu0 0.0
    %3226 = vmatpush.msra.mxu0 0.0
    %3227 = vmatpush.msra.mxu0 %v2463
    %3228 = vmatpush.msra.mxu0 %v2462
    %3229 = vmatpush.msra.mxu0 %v2461
    %3230 = vmatpush.msra.mxu0 %v2460
    %3231 = vmatmul.f32.gmra.mxu0 %v3193
    %v3232 = vpop.f32.mrf.mxu0
    %v3233 = vadd.f32 %v2501, %v3232
    %3234 = vdwg.mxu0
    %3235 = vmatpush.msra.mxu0 0.0
    %3236 = vmatpush.msra.mxu0 0.0
    %3237 = vmatpush.msra.mxu0 0.0
    %3238 = vmatpush.msra.mxu0 0.0
    %3239 = vmatpush.msra.mxu0 0.0
    %3240 = vmatpush.msra.mxu0 0.0
    %3241 = vmatpush.msra.mxu0 0.0
    %3242 = vmatpush.msra.mxu0 0.0
    %3243 = vmatpush.msra.mxu0 0.0
    %3244 = vmatpush.msra.mxu0 0.0
    %3245 = vmatpush.msra.mxu0 0.0
    %3246 = vmatpush.msra.mxu0 0.0
    %3247 = vmatpush.msra.mxu0 %v2468
    %3248 = vmatpush.msra.mxu0 %v2467
    %3249 = vmatpush.msra.mxu0 %v2466
    %3250 = vmatpush.msra.mxu0 %v2465
    %3251 = vmatmul.f32.gmra.mxu0 %v3193
    %v3252 = vpop.f32.mrf.mxu0
    %v3253 = vadd.f32 %v2524, %v3252
    %3254 = vdwg.mxu0
    %v3256 = vrot.slane %v3213, 4
    %v3258 = vadd.f32 %v2379, %v3256
    %v3259 = vxor.u32 %v3258, 2147483648
    %v3260 = vmul.f32 %v3259, 1.442695
    %v3261 = vpow.pop %v3260
    %v3262 = vadd.f32 %v3261, 1.0
    %v3263 = vrcp.pop %v3262
    %v3264 = vmul.f32 %v3262, %v3263
    %v3265 = vsub.f32 1.0, %v3264
    %v3266 = vmul.f32 %v3263, %v3265
    %v3267 = vadd.f32 %v3263, %v3266
    %vm3268 = vweird.f32 %v3262
    %vm3269 = vweird.f32 %v3263
    %vm3270 = vmor %vm3268, %vm3269
    %v3271 = vsel %vm3270, %v3263, %v3267
    %v3272 = vand.u32 2147483647, %v3262
    %vm3273 = vcmp.eq.f32.partialorder %v3272, 8.507059e+37
    %v3274 = vand.u32 %v3262, 2147483648
    %v3275 = vor.u32 1.1754944e-38, %v3274
    %v3276 = vsel %vm3273, %v3275, %v3271
    %v3277 = vmul.f32 1.0, %v3276
    %v3279 = vrot.slane %v3233, 4
    %v3281 = vadd.f32 %v2416, %v3279
    %v3282 = vxor.u32 %v3281, 2147483648
    %v3283 = vmul.f32 %v3282, 1.442695
    %v3284 = vpow.pop %v3283
    %v3285 = vadd.f32 %v3284, 1.0
    %v3286 = vrcp.pop %v3285
    %v3287 = vmul.f32 %v3285, %v3286
    %v3288 = vsub.f32 1.0, %v3287
    %v3289 = vmul.f32 %v3286, %v3288
    %v3290 = vadd.f32 %v3286, %v3289
    %vm3291 = vweird.f32 %v3285
    %vm3292 = vweird.f32 %v3286
    %vm3293 = vmor %vm3291, %vm3292
    %v3294 = vsel %vm3293, %v3286, %v3290
    %v3295 = vand.u32 2147483647, %v3285
    %vm3296 = vcmp.eq.f32.partialorder %v3295, 8.507059e+37
    %v3297 = vand.u32 %v3285, 2147483648
    %v3298 = vor.u32 1.1754944e-38, %v3297
    %v3299 = vsel %vm3296, %v3298, %v3294
    %v3300 = vmul.f32 1.0, %v3299
    %v3302 = vrot.slane %v3253, 4
    %v3304 = vmul.f32 %v3277, %v3302
    %v3305 = vadd.f32 %v2453, %v3304
    %v3306 = vtanh.pop %v3305
    %v3307 = vsub.f32 1.0, %v3300
    %v3308 = vmul.f32 %v3307, %v3306
    %v3309 = vrot.slane %v3190, 6
    %v3311 = vmul.f32 %v3300, %v3309
    %v3312 = vadd.f32 %v3308, %v3311
    %v3314 = vrot.slane %v3312, 4
    %v3315 = vsel %vm133, %v3314, 0
    %3317 = vmatpush.msra.mxu0 0.0
    %3318 = vmatpush.msra.mxu0 0.0
    %3319 = vmatpush.msra.mxu0 0.0
    %3320 = vmatpush.msra.mxu0 0.0
    %3321 = vmatpush.msra.mxu0 0.0
    %3322 = vmatpush.msra.mxu0 0.0
    %3323 = vmatpush.msra.mxu0 0.0
    %3324 = vmatpush.msra.mxu0 0.0
    %3325 = vmatpush.msra.mxu0 0.0
    %3326 = vmatpush.msra.mxu0 0.0
    %3327 = vmatpush.msra.mxu0 0.0
    %3328 = vmatpush.msra.mxu0 0.0
    %3329 = vmatpush.msra.mxu0 %v2458
    %3330 = vmatpush.msra.mxu0 %v2457
    %3331 = vmatpush.msra.mxu0 %v2456
    %3332 = vmatpush.msra.mxu0 %v2455
    %3333 = vmatmul.f32.gmra.mxu0 %v3315
    %v3334 = vpop.f32.mrf.mxu0
    %v3335 = vadd.f32 %v2475, %v3334
    %3336 = vdwg.mxu0
    %3337 = vmatpush.msra.mxu0 0.0
    %3338 = vmatpush.msra.mxu0 0.0
    %3339 = vmatpush.msra.mxu0 0.0
    %3340 = vmatpush.msra.mxu0 0.0
    %3341 = vmatpush.msra.mxu0 0.0
    %3342 = vmatpush.msra.mxu0 0.0
    %3343 = vmatpush.msra.mxu0 0.0
    %3344 = vmatpush.msra.mxu0 0.0
    %3345 = vmatpush.msra.mxu0 0.0
    %3346 = vmatpush.msra.mxu0 0.0
    %3347 = vmatpush.msra.mxu0 0.0
    %3348 = vmatpush.msra.mxu0 0.0
    %3349 = vmatpush.msra.mxu0 %v2463
    %3350 = vmatpush.msra.mxu0 %v2462
    %3351 = vmatpush.msra.mxu0 %v2461
    %3352 = vmatpush.msra.mxu0 %v2460
    %3353 = vmatmul.f32.gmra.mxu0 %v3315
    %v3354 = vpop.f32.mrf.mxu0
    %v3355 = vadd.f32 %v2501, %v3354
    %3356 = vdwg.mxu0
    %3357 = vmatpush.msra.mxu0 0.0
    %3358 = vmatpush.msra.mxu0 0.0
    %3359 = vmatpush.msra.mxu0 0.0
    %3360 = vmatpush.msra.mxu0 0.0
    %3361 = vmatpush.msra.mxu0 0.0
    %3362 = vmatpush.msra.mxu0 0.0
    %3363 = vmatpush.msra.mxu0 0.0
    %3364 = vmatpush.msra.mxu0 0.0
    %3365 = vmatpush.msra.mxu0 0.0
    %3366 = vmatpush.msra.mxu0 0.0
    %3367 = vmatpush.msra.mxu0 0.0
    %3368 = vmatpush.msra.mxu0 0.0
    %3369 = vmatpush.msra.mxu0 %v2468
    %3370 = vmatpush.msra.mxu0 %v2467
    %3371 = vmatpush.msra.mxu0 %v2466
    %3372 = vmatpush.msra.mxu0 %v2465
    %3373 = vmatmul.f32.gmra.mxu0 %v3315
    %v3374 = vpop.f32.mrf.mxu0
    %v3375 = vadd.f32 %v2524, %v3374
    %3376 = vdwg.mxu0
    %v3378 = vrot.slane %v3335, 2
    %v3380 = vadd.f32 %v2379, %v3378
    %v3381 = vxor.u32 %v3380, 2147483648
    %v3382 = vmul.f32 %v3381, 1.442695
    %v3383 = vpow.pop %v3382
    %v3384 = vadd.f32 %v3383, 1.0
    %v3385 = vrcp.pop %v3384
    %v3386 = vmul.f32 %v3384, %v3385
    %v3387 = vsub.f32 1.0, %v3386
    %v3388 = vmul.f32 %v3385, %v3387
    %v3389 = vadd.f32 %v3385, %v3388
    %vm3390 = vweird.f32 %v3384
    %vm3391 = vweird.f32 %v3385
    %vm3392 = vmor %vm3390, %vm3391
    %v3393 = vsel %vm3392, %v3385, %v3389
    %v3394 = vand.u32 2147483647, %v3384
    %vm3395 = vcmp.eq.f32.partialorder %v3394, 8.507059e+37
    %v3396 = vand.u32 %v3384, 2147483648
    %v3397 = vor.u32 1.1754944e-38, %v3396
    %v3398 = vsel %vm3395, %v3397, %v3393
    %v3399 = vmul.f32 1.0, %v3398
    %v3401 = vrot.slane %v3355, 2
    %v3403 = vadd.f32 %v2416, %v3401
    %v3404 = vxor.u32 %v3403, 2147483648
    %v3405 = vmul.f32 %v3404, 1.442695
    %v3406 = vpow.pop %v3405
    %v3407 = vadd.f32 %v3406, 1.0
    %v3408 = vrcp.pop %v3407
    %v3409 = vmul.f32 %v3407, %v3408
    %v3410 = vsub.f32 1.0, %v3409
    %v3411 = vmul.f32 %v3408, %v3410
    %v3412 = vadd.f32 %v3408, %v3411
    %vm3413 = vweird.f32 %v3407
    %vm3414 = vweird.f32 %v3408
    %vm3415 = vmor %vm3413, %vm3414
    %v3416 = vsel %vm3415, %v3408, %v3412
    %v3417 = vand.u32 2147483647, %v3407
    %vm3418 = vcmp.eq.f32.partialorder %v3417, 8.507059e+37
    %v3419 = vand.u32 %v3407, 2147483648
    %v3420 = vor.u32 1.1754944e-38, %v3419
    %v3421 = vsel %vm3418, %v3420, %v3416
    %v3422 = vmul.f32 1.0, %v3421
    %v3424 = vrot.slane %v3375, 2
    %v3426 = vmul.f32 %v3399, %v3424
    %v3427 = vadd.f32 %v2453, %v3426
    %v3428 = vtanh.pop %v3427
    %v3429 = vsub.f32 1.0, %v3422
    %v3430 = vmul.f32 %v3429, %v3428
    %v3431 = vrot.slane %v3312, 6
    %v3433 = vmul.f32 %v3422, %v3431
    %v3434 = vadd.f32 %v3430, %v3433
    %s3435 = scalar_lea.vmem %s3, 6
    %v3436 = vld [vmem:[%s3435] sm:$0x3]
    %v3437 = vld [vmem:[%s29] sm:$0xff]
    %v3438 = vld [vmem:[%s29 + $0x8] sm:$0xff]
    %v3439 = vld [vmem:[%s29 + $0x10] sm:$0xff]
    %v3440 = vld [vmem:[%s29 + $0x18] sm:$0xff]
    %v3441 = vld [vmem:[%s29 + $0x20] sm:$0xff]
    %v3442 = vld [vmem:[%s29 + $0x28] sm:$0xff]
    %v3443 = vld [vmem:[%s29 + $0x30] sm:$0xff]
    %v3444 = vld [vmem:[%s29 + $0x38] sm:$0xff]
    %v3445 = vld [vmem:[%s33] sm:$0x1]
    %v3447 = vperm.slane %v3445, 0
    %3449 = vmatpush.msra.mxu0 0.0
    %3450 = vmatpush.msra.mxu0 0.0
    %3451 = vmatpush.msra.mxu0 0.0
    %3452 = vmatpush.msra.mxu0 0.0
    %3453 = vmatpush.msra.mxu0 0.0
    %3454 = vmatpush.msra.mxu0 0.0
    %3455 = vmatpush.msra.mxu0 0.0
    %3456 = vmatpush.msra.mxu0 0.0
    %3457 = vmatpush.msra.mxu0 %v3444
    %3458 = vmatpush.msra.mxu0 %v3443
    %3459 = vmatpush.msra.mxu0 %v3442
    %3460 = vmatpush.msra.mxu0 %v3441
    %3461 = vmatpush.msra.mxu0 %v3440
    %3462 = vmatpush.msra.mxu0 %v3439
    %3463 = vmatpush.msra.mxu0 %v3438
    %3464 = vmatpush.msra.mxu0 %v3437
    %3465 = vmatmul.f32.gmra.mxu0 %v2353
    %v3466 = vpop.f32.mrf.mxu0
    %v3467 = vadd.f32 %v3447, %v3466
    %3468 = vmatmul.f32.gmra.mxu0 %v2356
    %v3469 = vpop.f32.mrf.mxu0
    %v3470 = vadd.f32 %v3447, %v3469
    %3471 = vdwg.mxu0
    %s3472 = scalar_lea.vmem %s29, 64
    %v3473 = vld [vmem:[%s3472] sm:$0xff]
    %v3474 = vld [vmem:[%s3472 + $0x8] sm:$0xff]
    %v3475 = vld [vmem:[%s3472 + $0x10] sm:$0xff]
    %v3476 = vld [vmem:[%s3472 + $0x18] sm:$0xff]
    %v3477 = vld [vmem:[%s3472 + $0x20] sm:$0xff]
    %v3478 = vld [vmem:[%s3472 + $0x28] sm:$0xff]
    %v3479 = vld [vmem:[%s3472 + $0x30] sm:$0xff]
    %v3480 = vld [vmem:[%s3472 + $0x38] sm:$0xff]
    %s3481 = scalar_lea.vmem %s33, 1
    %v3482 = vld [vmem:[%s3481] sm:$0x1]
    %v3484 = vperm.slane %v3482, 0
    %3486 = vmatpush.msra.mxu0 0.0
    %3487 = vmatpush.msra.mxu0 0.0
    %3488 = vmatpush.msra.mxu0 0.0
    %3489 = vmatpush.msra.mxu0 0.0
    %3490 = vmatpush.msra.mxu0 0.0
    %3491 = vmatpush.msra.mxu0 0.0
    %3492 = vmatpush.msra.mxu0 0.0
    %3493 = vmatpush.msra.mxu0 0.0
    %3494 = vmatpush.msra.mxu0 %v3480
    %3495 = vmatpush.msra.mxu0 %v3479
    %3496 = vmatpush.msra.mxu0 %v3478
    %3497 = vmatpush.msra.mxu0 %v3477
    %3498 = vmatpush.msra.mxu0 %v3476
    %3499 = vmatpush.msra.mxu0 %v3475
    %3500 = vmatpush.msra.mxu0 %v3474
    %3501 = vmatpush.msra.mxu0 %v3473
    %3502 = vmatmul.f32.gmra.mxu0 %v2353
    %v3503 = vpop.f32.mrf.mxu0
    %v3504 = vadd.f32 %v3484, %v3503
    %3505 = vmatmul.f32.gmra.mxu0 %v2356
    %v3506 = vpop.f32.mrf.mxu0
    %v3507 = vadd.f32 %v3484, %v3506
    %3508 = vdwg.mxu0
    %s3509 = scalar_lea.vmem %s29, 128
    %v3510 = vld [vmem:[%s3509] sm:$0xff]
    %v3511 = vld [vmem:[%s3509 + $0x8] sm:$0xff]
    %v3512 = vld [vmem:[%s3509 + $0x10] sm:$0xff]
    %v3513 = vld [vmem:[%s3509 + $0x18] sm:$0xff]
    %v3514 = vld [vmem:[%s3509 + $0x20] sm:$0xff]
    %v3515 = vld [vmem:[%s3509 + $0x28] sm:$0xff]
    %v3516 = vld [vmem:[%s3509 + $0x30] sm:$0xff]
    %v3517 = vld [vmem:[%s3509 + $0x38] sm:$0xff]
    %s3518 = scalar_lea.vmem %s33, 2
    %v3519 = vld [vmem:[%s3518] sm:$0x1]
    %v3521 = vperm.slane %v3519, 0
    %3523 = vmatpush.msra.mxu0 0.0
    %3524 = vmatpush.msra.mxu0 0.0
    %3525 = vmatpush.msra.mxu0 0.0
    %3526 = vmatpush.msra.mxu0 0.0
    %3527 = vmatpush.msra.mxu0 0.0
    %3528 = vmatpush.msra.mxu0 0.0
    %3529 = vmatpush.msra.mxu0 0.0
    %3530 = vmatpush.msra.mxu0 0.0
    %3531 = vmatpush.msra.mxu0 %v3517
    %3532 = vmatpush.msra.mxu0 %v3516
    %3533 = vmatpush.msra.mxu0 %v3515
    %3534 = vmatpush.msra.mxu0 %v3514
    %3535 = vmatpush.msra.mxu0 %v3513
    %3536 = vmatpush.msra.mxu0 %v3512
    %3537 = vmatpush.msra.mxu0 %v3511
    %3538 = vmatpush.msra.mxu0 %v3510
    %3539 = vmatmul.f32.gmra.mxu0 %v2353
    %v3540 = vpop.f32.mrf.mxu0
    %v3541 = vadd.f32 %v3521, %v3540
    %3542 = vmatmul.f32.gmra.mxu0 %v2356
    %v3543 = vpop.f32.mrf.mxu0
    %v3544 = vadd.f32 %v3521, %v3543
    %3545 = vdwg.mxu0
    %v3546 = vld [vmem:[%s31] sm:$0xff]
    %v3547 = vld [vmem:[%s31 + $0x8] sm:$0xff]
    %v3548 = vld [vmem:[%s31 + $0x10] sm:$0xff]
    %v3549 = vld [vmem:[%s31 + $0x18] sm:$0xff]
    %s3550 = scalar_lea.vmem %s31, 32
    %v3551 = vld [vmem:[%s3550] sm:$0xff]
    %v3552 = vld [vmem:[%s3550 + $0x8] sm:$0xff]
    %v3553 = vld [vmem:[%s3550 + $0x10] sm:$0xff]
    %v3554 = vld [vmem:[%s3550 + $0x18] sm:$0xff]
    %s3555 = scalar_lea.vmem %s31, 64
    %v3556 = vld [vmem:[%s3555] sm:$0xff]
    %v3557 = vld [vmem:[%s3555 + $0x8] sm:$0xff]
    %v3558 = vld [vmem:[%s3555 + $0x10] sm:$0xff]
    %v3559 = vld [vmem:[%s3555 + $0x18] sm:$0xff]
    %v3560 = vld [vmem:[%s35] sm:$0x1]
    %s3561 = scalar_lea.vmem %s35, 1
    %v3562 = vld [vmem:[%s3561] sm:$0x1]
    %s3563 = scalar_lea.vmem %s35, 2
    %v3564 = vld [vmem:[%s3563] sm:$0x1]
    %v3566 = vperm.slane %v3560, 0
    %v3569 = vsel %vm133, %v3436, 0
    %3571 = vmatpush.msra.mxu0 0.0
    %3572 = vmatpush.msra.mxu0 0.0
    %3573 = vmatpush.msra.mxu0 0.0
    %3574 = vmatpush.msra.mxu0 0.0
    %3575 = vmatpush.msra.mxu0 0.0
    %3576 = vmatpush.msra.mxu0 0.0
    %3577 = vmatpush.msra.mxu0 0.0
    %3578 = vmatpush.msra.mxu0 0.0
    %3579 = vmatpush.msra.mxu0 0.0
    %3580 = vmatpush.msra.mxu0 0.0
    %3581 = vmatpush.msra.mxu0 0.0
    %3582 = vmatpush.msra.mxu0 0.0
    %3583 = vmatpush.msra.mxu0 %v3549
    %3584 = vmatpush.msra.mxu0 %v3548
    %3585 = vmatpush.msra.mxu0 %v3547
    %3586 = vmatpush.msra.mxu0 %v3546
    %3587 = vmatmul.f32.gmra.mxu0 %v3569
    %v3588 = vpop.f32.mrf.mxu0
    %v3589 = vadd.f32 %v3566, %v3588
    %3590 = vdwg.mxu0
    %v3592 = vperm.slane %v3562, 0
    %3594 = vmatpush.msra.mxu0 0.0
    %3595 = vmatpush.msra.mxu0 0.0
    %3596 = vmatpush.msra.mxu0 0.0
    %3597 = vmatpush.msra.mxu0 0.0
    %3598 = vmatpush.msra.mxu0 0.0
    %3599 = vmatpush.msra.mxu0 0.0
    %3600 = vmatpush.msra.mxu0 0.0
    %3601 = vmatpush.msra.mxu0 0.0
    %3602 = vmatpush.msra.mxu0 0.0
    %3603 = vmatpush.msra.mxu0 0.0
    %3604 = vmatpush.msra.mxu0 0.0
    %3605 = vmatpush.msra.mxu0 0.0
    %3606 = vmatpush.msra.mxu0 %v3554
    %3607 = vmatpush.msra.mxu0 %v3553
    %3608 = vmatpush.msra.mxu0 %v3552
    %3609 = vmatpush.msra.mxu0 %v3551
    %3610 = vmatmul.f32.gmra.mxu0 %v3569
    %v3611 = vpop.f32.mrf.mxu0
    %v3612 = vadd.f32 %v3592, %v3611
    %3613 = vdwg.mxu0
    %v3615 = vperm.slane %v3564, 0
    %3617 = vmatpush.msra.mxu0 0.0
    %3618 = vmatpush.msra.mxu0 0.0
    %3619 = vmatpush.msra.mxu0 0.0
    %3620 = vmatpush.msra.mxu0 0.0
    %3621 = vmatpush.msra.mxu0 0.0
    %3622 = vmatpush.msra.mxu0 0.0
    %3623 = vmatpush.msra.mxu0 0.0
    %3624 = vmatpush.msra.mxu0 0.0
    %3625 = vmatpush.msra.mxu0 0.0
    %3626 = vmatpush.msra.mxu0 0.0
    %3627 = vmatpush.msra.mxu0 0.0
    %3628 = vmatpush.msra.mxu0 0.0
    %3629 = vmatpush.msra.mxu0 %v3559
    %3630 = vmatpush.msra.mxu0 %v3558
    %3631 = vmatpush.msra.mxu0 %v3557
    %3632 = vmatpush.msra.mxu0 %v3556
    %3633 = vmatmul.f32.gmra.mxu0 %v3569
    %v3634 = vpop.f32.mrf.mxu0
    %v3635 = vadd.f32 %v3615, %v3634
    %3636 = vdwg.mxu0
    %v3638 = vrot.slane %v3589, 2
    %v3640 = vadd.f32 %v3470, %v3638
    %v3641 = vxor.u32 %v3640, 2147483648
    %v3642 = vmul.f32 %v3641, 1.442695
    %v3643 = vpow.pop %v3642
    %v3644 = vadd.f32 %v3643, 1.0
    %v3645 = vrcp.pop %v3644
    %v3646 = vmul.f32 %v3644, %v3645
    %v3647 = vsub.f32 1.0, %v3646
    %v3648 = vmul.f32 %v3645, %v3647
    %v3649 = vadd.f32 %v3645, %v3648
    %vm3650 = vweird.f32 %v3644
    %vm3651 = vweird.f32 %v3645
    %vm3652 = vmor %vm3650, %vm3651
    %v3653 = vsel %vm3652, %v3645, %v3649
    %v3654 = vand.u32 2147483647, %v3644
    %vm3655 = vcmp.eq.f32.partialorder %v3654, 8.507059e+37
    %v3656 = vand.u32 %v3644, 2147483648
    %v3657 = vor.u32 1.1754944e-38, %v3656
    %v3658 = vsel %vm3655, %v3657, %v3653
    %v3659 = vmul.f32 1.0, %v3658
    %v3661 = vrot.slane %v3612, 2
    %v3663 = vadd.f32 %v3507, %v3661
    %v3664 = vxor.u32 %v3663, 2147483648
    %v3665 = vmul.f32 %v3664, 1.442695
    %v3666 = vpow.pop %v3665
    %v3667 = vadd.f32 %v3666, 1.0
    %v3668 = vrcp.pop %v3667
    %v3669 = vmul.f32 %v3667, %v3668
    %v3670 = vsub.f32 1.0, %v3669
    %v3671 = vmul.f32 %v3668, %v3670
    %v3672 = vadd.f32 %v3668, %v3671
    %vm3673 = vweird.f32 %v3667
    %vm3674 = vweird.f32 %v3668
    %vm3675 = vmor %vm3673, %vm3674
    %v3676 = vsel %vm3675, %v3668, %v3672
    %v3677 = vand.u32 2147483647, %v3667
    %vm3678 = vcmp.eq.f32.partialorder %v3677, 8.507059e+37
    %v3679 = vand.u32 %v3667, 2147483648
    %v3680 = vor.u32 1.1754944e-38, %v3679
    %v3681 = vsel %vm3678, %v3680, %v3676
    %v3682 = vmul.f32 1.0, %v3681
    %v3684 = vrot.slane %v3635, 2
    %v3686 = vmul.f32 %v3659, %v3684
    %v3687 = vadd.f32 %v3544, %v3686
    %v3688 = vtanh.pop %v3687
    %v3689 = vsub.f32 1.0, %v3682
    %v3690 = vmul.f32 %v3689, %v3688
    %v3691 = vrot.slane %v3436, 2
    %v3693 = vmul.f32 %v3682, %v3691
    %v3694 = vadd.f32 %v3690, %v3693
    %v3696 = vrot.slane %v3694, 6
    %v3697 = vsel %vm133, %v3696, 0
    %3699 = vmatpush.msra.mxu0 0.0
    %3700 = vmatpush.msra.mxu0 0.0
    %3701 = vmatpush.msra.mxu0 0.0
    %3702 = vmatpush.msra.mxu0 0.0
    %3703 = vmatpush.msra.mxu0 0.0
    %3704 = vmatpush.msra.mxu0 0.0
    %3705 = vmatpush.msra.mxu0 0.0
    %3706 = vmatpush.msra.mxu0 0.0
    %3707 = vmatpush.msra.mxu0 0.0
    %3708 = vmatpush.msra.mxu0 0.0
    %3709 = vmatpush.msra.mxu0 0.0
    %3710 = vmatpush.msra.mxu0 0.0
    %3711 = vmatpush.msra.mxu0 %v3549
    %3712 = vmatpush.msra.mxu0 %v3548
    %3713 = vmatpush.msra.mxu0 %v3547
    %3714 = vmatpush.msra.mxu0 %v3546
    %3715 = vmatmul.f32.gmra.mxu0 %v3697
    %v3716 = vpop.f32.mrf.mxu0
    %v3717 = vadd.f32 %v3566, %v3716
    %3718 = vdwg.mxu0
    %3719 = vmatpush.msra.mxu0 0.0
    %3720 = vmatpush.msra.mxu0 0.0
    %3721 = vmatpush.msra.mxu0 0.0
    %3722 = vmatpush.msra.mxu0 0.0
    %3723 = vmatpush.msra.mxu0 0.0
    %3724 = vmatpush.msra.mxu0 0.0
    %3725 = vmatpush.msra.mxu0 0.0
    %3726 = vmatpush.msra.mxu0 0.0
    %3727 = vmatpush.msra.mxu0 0.0
    %3728 = vmatpush.msra.mxu0 0.0
    %3729 = vmatpush.msra.mxu0 0.0
    %3730 = vmatpush.msra.mxu0 0.0
    %3731 = vmatpush.msra.mxu0 %v3554
    %3732 = vmatpush.msra.mxu0 %v3553
    %3733 = vmatpush.msra.mxu0 %v3552
    %3734 = vmatpush.msra.mxu0 %v3551
    %3735 = vmatmul.f32.gmra.mxu0 %v3697
    %v3736 = vpop.f32.mrf.mxu0
    %v3737 = vadd.f32 %v3592, %v3736
    %3738 = vdwg.mxu0
    %3739 = vmatpush.msra.mxu0 0.0
    %3740 = vmatpush.msra.mxu0 0.0
    %3741 = vmatpush.msra.mxu0 0.0
    %3742 = vmatpush.msra.mxu0 0.0
    %3743 = vmatpush.msra.mxu0 0.0
    %3744 = vmatpush.msra.mxu0 0.0
    %3745 = vmatpush.msra.mxu0 0.0
    %3746 = vmatpush.msra.mxu0 0.0
    %3747 = vmatpush.msra.mxu0 0.0
    %3748 = vmatpush.msra.mxu0 0.0
    %3749 = vmatpush.msra.mxu0 0.0
    %3750 = vmatpush.msra.mxu0 0.0
    %3751 = vmatpush.msra.mxu0 %v3559
    %3752 = vmatpush.msra.mxu0 %v3558
    %3753 = vmatpush.msra.mxu0 %v3557
    %3754 = vmatpush.msra.mxu0 %v3556
    %3755 = vmatmul.f32.gmra.mxu0 %v3697
    %v3756 = vpop.f32.mrf.mxu0
    %v3757 = vadd.f32 %v3615, %v3756
    %3758 = vdwg.mxu0
    %v3760 = vrot.slane %v3717, 4
    %v3762 = vadd.f32 %v3470, %v3760
    %v3763 = vxor.u32 %v3762, 2147483648
    %v3764 = vmul.f32 %v3763, 1.442695
    %v3765 = vpow.pop %v3764
    %v3766 = vadd.f32 %v3765, 1.0
    %v3767 = vrcp.pop %v3766
    %v3768 = vmul.f32 %v3766, %v3767
    %v3769 = vsub.f32 1.0, %v3768
    %v3770 = vmul.f32 %v3767, %v3769
    %v3771 = vadd.f32 %v3767, %v3770
    %vm3772 = vweird.f32 %v3766
    %vm3773 = vweird.f32 %v3767
    %vm3774 = vmor %vm3772, %vm3773
    %v3775 = vsel %vm3774, %v3767, %v3771
    %v3776 = vand.u32 2147483647, %v3766
    %vm3777 = vcmp.eq.f32.partialorder %v3776, 8.507059e+37
    %v3778 = vand.u32 %v3766, 2147483648
    %v3779 = vor.u32 1.1754944e-38, %v3778
    %v3780 = vsel %vm3777, %v3779, %v3775
    %v3781 = vmul.f32 1.0, %v3780
    %v3783 = vrot.slane %v3737, 4
    %v3785 = vadd.f32 %v3507, %v3783
    %v3786 = vxor.u32 %v3785, 2147483648
    %v3787 = vmul.f32 %v3786, 1.442695
    %v3788 = vpow.pop %v3787
    %v3789 = vadd.f32 %v3788, 1.0
    %v3790 = vrcp.pop %v3789
    %v3791 = vmul.f32 %v3789, %v3790
    %v3792 = vsub.f32 1.0, %v3791
    %v3793 = vmul.f32 %v3790, %v3792
    %v3794 = vadd.f32 %v3790, %v3793
    %vm3795 = vweird.f32 %v3789
    %vm3796 = vweird.f32 %v3790
    %vm3797 = vmor %vm3795, %vm3796
    %v3798 = vsel %vm3797, %v3790, %v3794
    %v3799 = vand.u32 2147483647, %v3789
    %vm3800 = vcmp.eq.f32.partialorder %v3799, 8.507059e+37
    %v3801 = vand.u32 %v3789, 2147483648
    %v3802 = vor.u32 1.1754944e-38, %v3801
    %v3803 = vsel %vm3800, %v3802, %v3798
    %v3804 = vmul.f32 1.0, %v3803
    %v3806 = vrot.slane %v3757, 4
    %v3808 = vmul.f32 %v3781, %v3806
    %v3809 = vadd.f32 %v3544, %v3808
    %v3810 = vtanh.pop %v3809
    %v3811 = vsub.f32 1.0, %v3804
    %v3812 = vmul.f32 %v3811, %v3810
    %v3813 = vrot.slane %v3694, 2
    %v3815 = vmul.f32 %v3804, %v3813
    %v3816 = vadd.f32 %v3812, %v3815
    %v3818 = vrot.slane %v3816, 4
    %v3819 = vsel %vm133, %v3818, 0
    %3821 = vmatpush.msra.mxu0 0.0
    %3822 = vmatpush.msra.mxu0 0.0
    %3823 = vmatpush.msra.mxu0 0.0
    %3824 = vmatpush.msra.mxu0 0.0
    %3825 = vmatpush.msra.mxu0 0.0
    %3826 = vmatpush.msra.mxu0 0.0
    %3827 = vmatpush.msra.mxu0 0.0
    %3828 = vmatpush.msra.mxu0 0.0
    %3829 = vmatpush.msra.mxu0 0.0
    %3830 = vmatpush.msra.mxu0 0.0
    %3831 = vmatpush.msra.mxu0 0.0
    %3832 = vmatpush.msra.mxu0 0.0
    %3833 = vmatpush.msra.mxu0 %v3549
    %3834 = vmatpush.msra.mxu0 %v3548
    %3835 = vmatpush.msra.mxu0 %v3547
    %3836 = vmatpush.msra.mxu0 %v3546
    %3837 = vmatmul.f32.gmra.mxu0 %v3819
    %v3838 = vpop.f32.mrf.mxu0
    %v3839 = vadd.f32 %v3566, %v3838
    %3840 = vdwg.mxu0
    %3841 = vmatpush.msra.mxu0 0.0
    %3842 = vmatpush.msra.mxu0 0.0
    %3843 = vmatpush.msra.mxu0 0.0
    %3844 = vmatpush.msra.mxu0 0.0
    %3845 = vmatpush.msra.mxu0 0.0
    %3846 = vmatpush.msra.mxu0 0.0
    %3847 = vmatpush.msra.mxu0 0.0
    %3848 = vmatpush.msra.mxu0 0.0
    %3849 = vmatpush.msra.mxu0 0.0
    %3850 = vmatpush.msra.mxu0 0.0
    %3851 = vmatpush.msra.mxu0 0.0
    %3852 = vmatpush.msra.mxu0 0.0
    %3853 = vmatpush.msra.mxu0 %v3554
    %3854 = vmatpush.msra.mxu0 %v3553
    %3855 = vmatpush.msra.mxu0 %v3552
    %3856 = vmatpush.msra.mxu0 %v3551
    %3857 = vmatmul.f32.gmra.mxu0 %v3819
    %v3858 = vpop.f32.mrf.mxu0
    %v3859 = vadd.f32 %v3592, %v3858
    %3860 = vdwg.mxu0
    %3861 = vmatpush.msra.mxu0 0.0
    %3862 = vmatpush.msra.mxu0 0.0
    %3863 = vmatpush.msra.mxu0 0.0
    %3864 = vmatpush.msra.mxu0 0.0
    %3865 = vmatpush.msra.mxu0 0.0
    %3866 = vmatpush.msra.mxu0 0.0
    %3867 = vmatpush.msra.mxu0 0.0
    %3868 = vmatpush.msra.mxu0 0.0
    %3869 = vmatpush.msra.mxu0 0.0
    %3870 = vmatpush.msra.mxu0 0.0
    %3871 = vmatpush.msra.mxu0 0.0
    %3872 = vmatpush.msra.mxu0 0.0
    %3873 = vmatpush.msra.mxu0 %v3559
    %3874 = vmatpush.msra.mxu0 %v3558
    %3875 = vmatpush.msra.mxu0 %v3557
    %3876 = vmatpush.msra.mxu0 %v3556
    %3877 = vmatmul.f32.gmra.mxu0 %v3819
    %v3878 = vpop.f32.mrf.mxu0
    %v3879 = vadd.f32 %v3615, %v3878
    %3880 = vdwg.mxu0
    %v3882 = vrot.slane %v3839, 6
    %v3884 = vadd.f32 %v3470, %v3882
    %v3885 = vxor.u32 %v3884, 2147483648
    %v3886 = vmul.f32 %v3885, 1.442695
    %v3887 = vpow.pop %v3886
    %v3888 = vadd.f32 %v3887, 1.0
    %v3889 = vrcp.pop %v3888
    %v3890 = vmul.f32 %v3888, %v3889
    %v3891 = vsub.f32 1.0, %v3890
    %v3892 = vmul.f32 %v3889, %v3891
    %v3893 = vadd.f32 %v3889, %v3892
    %vm3894 = vweird.f32 %v3888
    %vm3895 = vweird.f32 %v3889
    %vm3896 = vmor %vm3894, %vm3895
    %v3897 = vsel %vm3896, %v3889, %v3893
    %v3898 = vand.u32 2147483647, %v3888
    %vm3899 = vcmp.eq.f32.partialorder %v3898, 8.507059e+37
    %v3900 = vand.u32 %v3888, 2147483648
    %v3901 = vor.u32 1.1754944e-38, %v3900
    %v3902 = vsel %vm3899, %v3901, %v3897
    %v3903 = vmul.f32 1.0, %v3902
    %v3905 = vrot.slane %v3859, 6
    %v3907 = vadd.f32 %v3507, %v3905
    %v3908 = vxor.u32 %v3907, 2147483648
    %v3909 = vmul.f32 %v3908, 1.442695
    %v3910 = vpow.pop %v3909
    %v3911 = vadd.f32 %v3910, 1.0
    %v3912 = vrcp.pop %v3911
    %v3913 = vmul.f32 %v3911, %v3912
    %v3914 = vsub.f32 1.0, %v3913
    %v3915 = vmul.f32 %v3912, %v3914
    %v3916 = vadd.f32 %v3912, %v3915
    %vm3917 = vweird.f32 %v3911
    %vm3918 = vweird.f32 %v3912
    %vm3919 = vmor %vm3917, %vm3918
    %v3920 = vsel %vm3919, %v3912, %v3916
    %v3921 = vand.u32 2147483647, %v3911
    %vm3922 = vcmp.eq.f32.partialorder %v3921, 8.507059e+37
    %v3923 = vand.u32 %v3911, 2147483648
    %v3924 = vor.u32 1.1754944e-38, %v3923
    %v3925 = vsel %vm3922, %v3924, %v3920
    %v3926 = vmul.f32 1.0, %v3925
    %v3928 = vrot.slane %v3879, 6
    %v3930 = vmul.f32 %v3903, %v3928
    %v3931 = vadd.f32 %v3544, %v3930
    %v3932 = vtanh.pop %v3931
    %v3933 = vsub.f32 1.0, %v3926
    %v3934 = vmul.f32 %v3933, %v3932
    %v3935 = vrot.slane %v3816, 2
    %v3937 = vmul.f32 %v3926, %v3935
    %v3938 = vadd.f32 %v3934, %v3937
    %v3940 = vrot.slane %v3938, 2
    %v3941 = vsel %vm133, %v3940, 0
    %3943 = vmatpush.msra.mxu0 0.0
    %3944 = vmatpush.msra.mxu0 0.0
    %3945 = vmatpush.msra.mxu0 0.0
    %3946 = vmatpush.msra.mxu0 0.0
    %3947 = vmatpush.msra.mxu0 0.0
    %3948 = vmatpush.msra.mxu0 0.0
    %3949 = vmatpush.msra.mxu0 0.0
    %3950 = vmatpush.msra.mxu0 0.0
    %3951 = vmatpush.msra.mxu0 0.0
    %3952 = vmatpush.msra.mxu0 0.0
    %3953 = vmatpush.msra.mxu0 0.0
    %3954 = vmatpush.msra.mxu0 0.0
    %3955 = vmatpush.msra.mxu0 %v3549
    %3956 = vmatpush.msra.mxu0 %v3548
    %3957 = vmatpush.msra.mxu0 %v3547
    %3958 = vmatpush.msra.mxu0 %v3546
    %3959 = vmatmul.f32.gmra.mxu0 %v3941
    %v3960 = vpop.f32.mrf.mxu0
    %v3961 = vadd.f32 %v3566, %v3960
    %3962 = vdwg.mxu0
    %3963 = vmatpush.msra.mxu0 0.0
    %3964 = vmatpush.msra.mxu0 0.0
    %3965 = vmatpush.msra.mxu0 0.0
    %3966 = vmatpush.msra.mxu0 0.0
    %3967 = vmatpush.msra.mxu0 0.0
    %3968 = vmatpush.msra.mxu0 0.0
    %3969 = vmatpush.msra.mxu0 0.0
    %3970 = vmatpush.msra.mxu0 0.0
    %3971 = vmatpush.msra.mxu0 0.0
    %3972 = vmatpush.msra.mxu0 0.0
    %3973 = vmatpush.msra.mxu0 0.0
    %3974 = vmatpush.msra.mxu0 0.0
    %3975 = vmatpush.msra.mxu0 %v3554
    %3976 = vmatpush.msra.mxu0 %v3553
    %3977 = vmatpush.msra.mxu0 %v3552
    %3978 = vmatpush.msra.mxu0 %v3551
    %3979 = vmatmul.f32.gmra.mxu0 %v3941
    %v3980 = vpop.f32.mrf.mxu0
    %v3981 = vadd.f32 %v3592, %v3980
    %3982 = vdwg.mxu0
    %3983 = vmatpush.msra.mxu0 0.0
    %3984 = vmatpush.msra.mxu0 0.0
    %3985 = vmatpush.msra.mxu0 0.0
    %3986 = vmatpush.msra.mxu0 0.0
    %3987 = vmatpush.msra.mxu0 0.0
    %3988 = vmatpush.msra.mxu0 0.0
    %3989 = vmatpush.msra.mxu0 0.0
    %3990 = vmatpush.msra.mxu0 0.0
    %3991 = vmatpush.msra.mxu0 0.0
    %3992 = vmatpush.msra.mxu0 0.0
    %3993 = vmatpush.msra.mxu0 0.0
    %3994 = vmatpush.msra.mxu0 0.0
    %3995 = vmatpush.msra.mxu0 %v3559
    %3996 = vmatpush.msra.mxu0 %v3558
    %3997 = vmatpush.msra.mxu0 %v3557
    %3998 = vmatpush.msra.mxu0 %v3556
    %3999 = vmatmul.f32.gmra.mxu0 %v3941
    %v4000 = vpop.f32.mrf.mxu0
    %v4001 = vadd.f32 %v3615, %v4000
    %4002 = vdwg.mxu0
    %v4003 = vadd.f32 %v3470, %v3961
    %v4004 = vxor.u32 %v4003, 2147483648
    %v4005 = vmul.f32 %v4004, 1.442695
    %v4006 = vpow.pop %v4005
    %v4007 = vadd.f32 %v4006, 1.0
    %v4008 = vrcp.pop %v4007
    %v4009 = vmul.f32 %v4007, %v4008
    %v4010 = vsub.f32 1.0, %v4009
    %v4011 = vmul.f32 %v4008, %v4010
    %v4012 = vadd.f32 %v4008, %v4011
    %vm4013 = vweird.f32 %v4007
    %vm4014 = vweird.f32 %v4008
    %vm4015 = vmor %vm4013, %vm4014
    %v4016 = vsel %vm4015, %v4008, %v4012
    %v4017 = vand.u32 2147483647, %v4007
    %vm4018 = vcmp.eq.f32.partialorder %v4017, 8.507059e+37
    %v4019 = vand.u32 %v4007, 2147483648
    %v4020 = vor.u32 1.1754944e-38, %v4019
    %v4021 = vsel %vm4018, %v4020, %v4016
    %v4022 = vmul.f32 1.0, %v4021
    %v4023 = vadd.f32 %v3507, %v3981
    %v4024 = vxor.u32 %v4023, 2147483648
    %v4025 = vmul.f32 %v4024, 1.442695
    %v4026 = vpow.pop %v4025
    %v4027 = vadd.f32 %v4026, 1.0
    %v4028 = vrcp.pop %v4027
    %v4029 = vmul.f32 %v4027, %v4028
    %v4030 = vsub.f32 1.0, %v4029
    %v4031 = vmul.f32 %v4028, %v4030
    %v4032 = vadd.f32 %v4028, %v4031
    %vm4033 = vweird.f32 %v4027
    %vm4034 = vweird.f32 %v4028
    %vm4035 = vmor %vm4033, %vm4034
    %v4036 = vsel %vm4035, %v4028, %v4032
    %v4037 = vand.u32 2147483647, %v4027
    %vm4038 = vcmp.eq.f32.partialorder %v4037, 8.507059e+37
    %v4039 = vand.u32 %v4027, 2147483648
    %v4040 = vor.u32 1.1754944e-38, %v4039
    %v4041 = vsel %vm4038, %v4040, %v4036
    %v4042 = vmul.f32 1.0, %v4041
    %v4043 = vmul.f32 %v4022, %v4001
    %v4044 = vadd.f32 %v3544, %v4043
    %v4045 = vtanh.pop %v4044
    %v4046 = vsub.f32 1.0, %v4042
    %v4047 = vmul.f32 %v4046, %v4045
    %v4049 = vmul.f32 %v4042, %v3940
    %v4050 = vadd.f32 %v4047, %v4049
    %v4052 = vsel %vm133, %v4050, 0
    %4054 = vmatpush.msra.mxu0 0.0
    %4055 = vmatpush.msra.mxu0 0.0
    %4056 = vmatpush.msra.mxu0 0.0
    %4057 = vmatpush.msra.mxu0 0.0
    %4058 = vmatpush.msra.mxu0 0.0
    %4059 = vmatpush.msra.mxu0 0.0
    %4060 = vmatpush.msra.mxu0 0.0
    %4061 = vmatpush.msra.mxu0 0.0
    %4062 = vmatpush.msra.mxu0 0.0
    %4063 = vmatpush.msra.mxu0 0.0
    %4064 = vmatpush.msra.mxu0 0.0
    %4065 = vmatpush.msra.mxu0 0.0
    %4066 = vmatpush.msra.mxu0 %v3549
    %4067 = vmatpush.msra.mxu0 %v3548
    %4068 = vmatpush.msra.mxu0 %v3547
    %4069 = vmatpush.msra.mxu0 %v3546
    %4070 = vmatmul.f32.gmra.mxu0 %v4052
    %v4071 = vpop.f32.mrf.mxu0
    %v4072 = vadd.f32 %v3566, %v4071
    %4073 = vdwg.mxu0
    %4074 = vmatpush.msra.mxu0 0.0
    %4075 = vmatpush.msra.mxu0 0.0
    %4076 = vmatpush.msra.mxu0 0.0
    %4077 = vmatpush.msra.mxu0 0.0
    %4078 = vmatpush.msra.mxu0 0.0
    %4079 = vmatpush.msra.mxu0 0.0
    %4080 = vmatpush.msra.mxu0 0.0
    %4081 = vmatpush.msra.mxu0 0.0
    %4082 = vmatpush.msra.mxu0 0.0
    %4083 = vmatpush.msra.mxu0 0.0
    %4084 = vmatpush.msra.mxu0 0.0
    %4085 = vmatpush.msra.mxu0 0.0
    %4086 = vmatpush.msra.mxu0 %v3554
    %4087 = vmatpush.msra.mxu0 %v3553
    %4088 = vmatpush.msra.mxu0 %v3552
    %4089 = vmatpush.msra.mxu0 %v3551
    %4090 = vmatmul.f32.gmra.mxu0 %v4052
    %v4091 = vpop.f32.mrf.mxu0
    %v4092 = vadd.f32 %v3592, %v4091
    %4093 = vdwg.mxu0
    %4094 = vmatpush.msra.mxu0 0.0
    %4095 = vmatpush.msra.mxu0 0.0
    %4096 = vmatpush.msra.mxu0 0.0
    %4097 = vmatpush.msra.mxu0 0.0
    %4098 = vmatpush.msra.mxu0 0.0
    %4099 = vmatpush.msra.mxu0 0.0
    %4100 = vmatpush.msra.mxu0 0.0
    %4101 = vmatpush.msra.mxu0 0.0
    %4102 = vmatpush.msra.mxu0 0.0
    %4103 = vmatpush.msra.mxu0 0.0
    %4104 = vmatpush.msra.mxu0 0.0
    %4105 = vmatpush.msra.mxu0 0.0
    %4106 = vmatpush.msra.mxu0 %v3559
    %4107 = vmatpush.msra.mxu0 %v3558
    %4108 = vmatpush.msra.mxu0 %v3557
    %4109 = vmatpush.msra.mxu0 %v3556
    %4110 = vmatmul.f32.gmra.mxu0 %v4052
    %v4111 = vpop.f32.mrf.mxu0
    %v4112 = vadd.f32 %v3615, %v4111
    %4113 = vdwg.mxu0
    %v4115 = vrot.slane %v4072, 2
    %v4117 = vadd.f32 %v3467, %v4115
    %v4118 = vxor.u32 %v4117, 2147483648
    %v4119 = vmul.f32 %v4118, 1.442695
    %v4120 = vpow.pop %v4119
    %v4121 = vadd.f32 %v4120, 1.0
    %v4122 = vrcp.pop %v4121
    %v4123 = vmul.f32 %v4121, %v4122
    %v4124 = vsub.f32 1.0, %v4123
    %v4125 = vmul.f32 %v4122, %v4124
    %v4126 = vadd.f32 %v4122, %v4125
    %vm4127 = vweird.f32 %v4121
    %vm4128 = vweird.f32 %v4122
    %vm4129 = vmor %vm4127, %vm4128
    %v4130 = vsel %vm4129, %v4122, %v4126
    %v4131 = vand.u32 2147483647, %v4121
    %vm4132 = vcmp.eq.f32.partialorder %v4131, 8.507059e+37
    %v4133 = vand.u32 %v4121, 2147483648
    %v4134 = vor.u32 1.1754944e-38, %v4133
    %v4135 = vsel %vm4132, %v4134, %v4130
    %v4136 = vmul.f32 1.0, %v4135
    %v4138 = vrot.slane %v4092, 2
    %v4140 = vadd.f32 %v3504, %v4138
    %v4141 = vxor.u32 %v4140, 2147483648
    %v4142 = vmul.f32 %v4141, 1.442695
    %v4143 = vpow.pop %v4142
    %v4144 = vadd.f32 %v4143, 1.0
    %v4145 = vrcp.pop %v4144
    %v4146 = vmul.f32 %v4144, %v4145
    %v4147 = vsub.f32 1.0, %v4146
    %v4148 = vmul.f32 %v4145, %v4147
    %v4149 = vadd.f32 %v4145, %v4148
    %vm4150 = vweird.f32 %v4144
    %vm4151 = vweird.f32 %v4145
    %vm4152 = vmor %vm4150, %vm4151
    %v4153 = vsel %vm4152, %v4145, %v4149
    %v4154 = vand.u32 2147483647, %v4144
    %vm4155 = vcmp.eq.f32.partialorder %v4154, 8.507059e+37
    %v4156 = vand.u32 %v4144, 2147483648
    %v4157 = vor.u32 1.1754944e-38, %v4156
    %v4158 = vsel %vm4155, %v4157, %v4153
    %v4159 = vmul.f32 1.0, %v4158
    %v4161 = vrot.slane %v4112, 2
    %v4163 = vmul.f32 %v4136, %v4161
    %v4164 = vadd.f32 %v3541, %v4163
    %v4165 = vtanh.pop %v4164
    %v4166 = vsub.f32 1.0, %v4159
    %v4167 = vmul.f32 %v4166, %v4165
    %v4168 = vrot.slane %v4050, 2
    %v4170 = vmul.f32 %v4159, %v4168
    %v4171 = vadd.f32 %v4167, %v4170
    %v4173 = vrot.slane %v4171, 6
    %v4174 = vsel %vm133, %v4173, 0
    %4176 = vmatpush.msra.mxu0 0.0
    %4177 = vmatpush.msra.mxu0 0.0
    %4178 = vmatpush.msra.mxu0 0.0
    %4179 = vmatpush.msra.mxu0 0.0
    %4180 = vmatpush.msra.mxu0 0.0
    %4181 = vmatpush.msra.mxu0 0.0
    %4182 = vmatpush.msra.mxu0 0.0
    %4183 = vmatpush.msra.mxu0 0.0
    %4184 = vmatpush.msra.mxu0 0.0
    %4185 = vmatpush.msra.mxu0 0.0
    %4186 = vmatpush.msra.mxu0 0.0
    %4187 = vmatpush.msra.mxu0 0.0
    %4188 = vmatpush.msra.mxu0 %v3549
    %4189 = vmatpush.msra.mxu0 %v3548
    %4190 = vmatpush.msra.mxu0 %v3547
    %4191 = vmatpush.msra.mxu0 %v3546
    %4192 = vmatmul.f32.gmra.mxu0 %v4174
    %v4193 = vpop.f32.mrf.mxu0
    %v4194 = vadd.f32 %v3566, %v4193
    %4195 = vdwg.mxu0
    %4196 = vmatpush.msra.mxu0 0.0
    %4197 = vmatpush.msra.mxu0 0.0
    %4198 = vmatpush.msra.mxu0 0.0
    %4199 = vmatpush.msra.mxu0 0.0
    %4200 = vmatpush.msra.mxu0 0.0
    %4201 = vmatpush.msra.mxu0 0.0
    %4202 = vmatpush.msra.mxu0 0.0
    %4203 = vmatpush.msra.mxu0 0.0
    %4204 = vmatpush.msra.mxu0 0.0
    %4205 = vmatpush.msra.mxu0 0.0
    %4206 = vmatpush.msra.mxu0 0.0
    %4207 = vmatpush.msra.mxu0 0.0
    %4208 = vmatpush.msra.mxu0 %v3554
    %4209 = vmatpush.msra.mxu0 %v3553
    %4210 = vmatpush.msra.mxu0 %v3552
    %4211 = vmatpush.msra.mxu0 %v3551
    %4212 = vmatmul.f32.gmra.mxu0 %v4174
    %v4213 = vpop.f32.mrf.mxu0
    %v4214 = vadd.f32 %v3592, %v4213
    %4215 = vdwg.mxu0
    %4216 = vmatpush.msra.mxu0 0.0
    %4217 = vmatpush.msra.mxu0 0.0
    %4218 = vmatpush.msra.mxu0 0.0
    %4219 = vmatpush.msra.mxu0 0.0
    %4220 = vmatpush.msra.mxu0 0.0
    %4221 = vmatpush.msra.mxu0 0.0
    %4222 = vmatpush.msra.mxu0 0.0
    %4223 = vmatpush.msra.mxu0 0.0
    %4224 = vmatpush.msra.mxu0 0.0
    %4225 = vmatpush.msra.mxu0 0.0
    %4226 = vmatpush.msra.mxu0 0.0
    %4227 = vmatpush.msra.mxu0 0.0
    %4228 = vmatpush.msra.mxu0 %v3559
    %4229 = vmatpush.msra.mxu0 %v3558
    %4230 = vmatpush.msra.mxu0 %v3557
    %4231 = vmatpush.msra.mxu0 %v3556
    %4232 = vmatmul.f32.gmra.mxu0 %v4174
    %v4233 = vpop.f32.mrf.mxu0
    %v4234 = vadd.f32 %v3615, %v4233
    %4235 = vdwg.mxu0
    %v4237 = vrot.slane %v4194, 4
    %v4239 = vadd.f32 %v3467, %v4237
    %v4240 = vxor.u32 %v4239, 2147483648
    %v4241 = vmul.f32 %v4240, 1.442695
    %v4242 = vpow.pop %v4241
    %v4243 = vadd.f32 %v4242, 1.0
    %v4244 = vrcp.pop %v4243
    %v4245 = vmul.f32 %v4243, %v4244
    %v4246 = vsub.f32 1.0, %v4245
    %v4247 = vmul.f32 %v4244, %v4246
    %v4248 = vadd.f32 %v4244, %v4247
    %vm4249 = vweird.f32 %v4243
    %vm4250 = vweird.f32 %v4244
    %vm4251 = vmor %vm4249, %vm4250
    %v4252 = vsel %vm4251, %v4244, %v4248
    %v4253 = vand.u32 2147483647, %v4243
    %vm4254 = vcmp.eq.f32.partialorder %v4253, 8.507059e+37
    %v4255 = vand.u32 %v4243, 2147483648
    %v4256 = vor.u32 1.1754944e-38, %v4255
    %v4257 = vsel %vm4254, %v4256, %v4252
    %v4258 = vmul.f32 1.0, %v4257
    %v4260 = vrot.slane %v4214, 4
    %v4262 = vadd.f32 %v3504, %v4260
    %v4263 = vxor.u32 %v4262, 2147483648
    %v4264 = vmul.f32 %v4263, 1.442695
    %v4265 = vpow.pop %v4264
    %v4266 = vadd.f32 %v4265, 1.0
    %v4267 = vrcp.pop %v4266
    %v4268 = vmul.f32 %v4266, %v4267
    %v4269 = vsub.f32 1.0, %v4268
    %v4270 = vmul.f32 %v4267, %v4269
    %v4271 = vadd.f32 %v4267, %v4270
    %vm4272 = vweird.f32 %v4266
    %vm4273 = vweird.f32 %v4267
    %vm4274 = vmor %vm4272, %vm4273
    %v4275 = vsel %vm4274, %v4267, %v4271
    %v4276 = vand.u32 2147483647, %v4266
    %vm4277 = vcmp.eq.f32.partialorder %v4276, 8.507059e+37
    %v4278 = vand.u32 %v4266, 2147483648
    %v4279 = vor.u32 1.1754944e-38, %v4278
    %v4280 = vsel %vm4277, %v4279, %v4275
    %v4281 = vmul.f32 1.0, %v4280
    %v4283 = vrot.slane %v4234, 4
    %v4285 = vmul.f32 %v4258, %v4283
    %v4286 = vadd.f32 %v3541, %v4285
    %v4287 = vtanh.pop %v4286
    %v4288 = vsub.f32 1.0, %v4281
    %v4289 = vmul.f32 %v4288, %v4287
    %v4290 = vrot.slane %v4171, 2
    %v4292 = vmul.f32 %v4281, %v4290
    %v4293 = vadd.f32 %v4289, %v4292
    %v4295 = vrot.slane %v4293, 4
    %v4296 = vsel %vm133, %v4295, 0
    %4298 = vmatpush.msra.mxu0 0.0
    %4299 = vmatpush.msra.mxu0 0.0
    %4300 = vmatpush.msra.mxu0 0.0
    %4301 = vmatpush.msra.mxu0 0.0
    %4302 = vmatpush.msra.mxu0 0.0
    %4303 = vmatpush.msra.mxu0 0.0
    %4304 = vmatpush.msra.mxu0 0.0
    %4305 = vmatpush.msra.mxu0 0.0
    %4306 = vmatpush.msra.mxu0 0.0
    %4307 = vmatpush.msra.mxu0 0.0
    %4308 = vmatpush.msra.mxu0 0.0
    %4309 = vmatpush.msra.mxu0 0.0
    %4310 = vmatpush.msra.mxu0 %v3549
    %4311 = vmatpush.msra.mxu0 %v3548
    %4312 = vmatpush.msra.mxu0 %v3547
    %4313 = vmatpush.msra.mxu0 %v3546
    %4314 = vmatmul.f32.gmra.mxu0 %v4296
    %v4315 = vpop.f32.mrf.mxu0
    %v4316 = vadd.f32 %v3566, %v4315
    %4317 = vdwg.mxu0
    %4318 = vmatpush.msra.mxu0 0.0
    %4319 = vmatpush.msra.mxu0 0.0
    %4320 = vmatpush.msra.mxu0 0.0
    %4321 = vmatpush.msra.mxu0 0.0
    %4322 = vmatpush.msra.mxu0 0.0
    %4323 = vmatpush.msra.mxu0 0.0
    %4324 = vmatpush.msra.mxu0 0.0
    %4325 = vmatpush.msra.mxu0 0.0
    %4326 = vmatpush.msra.mxu0 0.0
    %4327 = vmatpush.msra.mxu0 0.0
    %4328 = vmatpush.msra.mxu0 0.0
    %4329 = vmatpush.msra.mxu0 0.0
    %4330 = vmatpush.msra.mxu0 %v3554
    %4331 = vmatpush.msra.mxu0 %v3553
    %4332 = vmatpush.msra.mxu0 %v3552
    %4333 = vmatpush.msra.mxu0 %v3551
    %4334 = vmatmul.f32.gmra.mxu0 %v4296
    %v4335 = vpop.f32.mrf.mxu0
    %v4336 = vadd.f32 %v3592, %v4335
    %4337 = vdwg.mxu0
    %4338 = vmatpush.msra.mxu0 0.0
    %4339 = vmatpush.msra.mxu0 0.0
    %4340 = vmatpush.msra.mxu0 0.0
    %4341 = vmatpush.msra.mxu0 0.0
    %4342 = vmatpush.msra.mxu0 0.0
    %4343 = vmatpush.msra.mxu0 0.0
    %4344 = vmatpush.msra.mxu0 0.0
    %4345 = vmatpush.msra.mxu0 0.0
    %4346 = vmatpush.msra.mxu0 0.0
    %4347 = vmatpush.msra.mxu0 0.0
    %4348 = vmatpush.msra.mxu0 0.0
    %4349 = vmatpush.msra.mxu0 0.0
    %4350 = vmatpush.msra.mxu0 %v3559
    %4351 = vmatpush.msra.mxu0 %v3558
    %4352 = vmatpush.msra.mxu0 %v3557
    %4353 = vmatpush.msra.mxu0 %v3556
    %4354 = vmatmul.f32.gmra.mxu0 %v4296
    %v4355 = vpop.f32.mrf.mxu0
    %v4356 = vadd.f32 %v3615, %v4355
    %4357 = vdwg.mxu0
    %v4359 = vrot.slane %v4316, 6
    %v4361 = vadd.f32 %v3467, %v4359
    %v4362 = vxor.u32 %v4361, 2147483648
    %v4363 = vmul.f32 %v4362, 1.442695
    %v4364 = vpow.pop %v4363
    %v4365 = vadd.f32 %v4364, 1.0
    %v4366 = vrcp.pop %v4365
    %v4367 = vmul.f32 %v4365, %v4366
    %v4368 = vsub.f32 1.0, %v4367
    %v4369 = vmul.f32 %v4366, %v4368
    %v4370 = vadd.f32 %v4366, %v4369
    %vm4371 = vweird.f32 %v4365
    %vm4372 = vweird.f32 %v4366
    %vm4373 = vmor %vm4371, %vm4372
    %v4374 = vsel %vm4373, %v4366, %v4370
    %v4375 = vand.u32 2147483647, %v4365
    %vm4376 = vcmp.eq.f32.partialorder %v4375, 8.507059e+37
    %v4377 = vand.u32 %v4365, 2147483648
    %v4378 = vor.u32 1.1754944e-38, %v4377
    %v4379 = vsel %vm4376, %v4378, %v4374
    %v4380 = vmul.f32 1.0, %v4379
    %v4382 = vrot.slane %v4336, 6
    %v4384 = vadd.f32 %v3504, %v4382
    %v4385 = vxor.u32 %v4384, 2147483648
    %v4386 = vmul.f32 %v4385, 1.442695
    %v4387 = vpow.pop %v4386
    %v4388 = vadd.f32 %v4387, 1.0
    %v4389 = vrcp.pop %v4388
    %v4390 = vmul.f32 %v4388, %v4389
    %v4391 = vsub.f32 1.0, %v4390
    %v4392 = vmul.f32 %v4389, %v4391
    %v4393 = vadd.f32 %v4389, %v4392
    %vm4394 = vweird.f32 %v4388
    %vm4395 = vweird.f32 %v4389
    %vm4396 = vmor %vm4394, %vm4395
    %v4397 = vsel %vm4396, %v4389, %v4393
    %v4398 = vand.u32 2147483647, %v4388
    %vm4399 = vcmp.eq.f32.partialorder %v4398, 8.507059e+37
    %v4400 = vand.u32 %v4388, 2147483648
    %v4401 = vor.u32 1.1754944e-38, %v4400
    %v4402 = vsel %vm4399, %v4401, %v4397
    %v4403 = vmul.f32 1.0, %v4402
    %v4405 = vrot.slane %v4356, 6
    %v4407 = vmul.f32 %v4380, %v4405
    %v4408 = vadd.f32 %v3541, %v4407
    %v4409 = vtanh.pop %v4408
    %v4410 = vsub.f32 1.0, %v4403
    %v4411 = vmul.f32 %v4410, %v4409
    %v4412 = vrot.slane %v4293, 2
    %v4414 = vmul.f32 %v4403, %v4412
    %v4415 = vadd.f32 %v4411, %v4414
    %v4417 = vrot.slane %v4415, 2
    %v4418 = vsel %vm133, %v4417, 0
    %4420 = vmatpush.msra.mxu0 0.0
    %4421 = vmatpush.msra.mxu0 0.0
    %4422 = vmatpush.msra.mxu0 0.0
    %4423 = vmatpush.msra.mxu0 0.0
    %4424 = vmatpush.msra.mxu0 0.0
    %4425 = vmatpush.msra.mxu0 0.0
    %4426 = vmatpush.msra.mxu0 0.0
    %4427 = vmatpush.msra.mxu0 0.0
    %4428 = vmatpush.msra.mxu0 0.0
    %4429 = vmatpush.msra.mxu0 0.0
    %4430 = vmatpush.msra.mxu0 0.0
    %4431 = vmatpush.msra.mxu0 0.0
    %4432 = vmatpush.msra.mxu0 %v3549
    %4433 = vmatpush.msra.mxu0 %v3548
    %4434 = vmatpush.msra.mxu0 %v3547
    %4435 = vmatpush.msra.mxu0 %v3546
    %4436 = vmatmul.f32.gmra.mxu0 %v4418
    %v4437 = vpop.f32.mrf.mxu0
    %v4438 = vadd.f32 %v3566, %v4437
    %4439 = vdwg.mxu0
    %4440 = vmatpush.msra.mxu0 0.0
    %4441 = vmatpush.msra.mxu0 0.0
    %4442 = vmatpush.msra.mxu0 0.0
    %4443 = vmatpush.msra.mxu0 0.0
    %4444 = vmatpush.msra.mxu0 0.0
    %4445 = vmatpush.msra.mxu0 0.0
    %4446 = vmatpush.msra.mxu0 0.0
    %4447 = vmatpush.msra.mxu0 0.0
    %4448 = vmatpush.msra.mxu0 0.0
    %4449 = vmatpush.msra.mxu0 0.0
    %4450 = vmatpush.msra.mxu0 0.0
    %4451 = vmatpush.msra.mxu0 0.0
    %4452 = vmatpush.msra.mxu0 %v3554
    %4453 = vmatpush.msra.mxu0 %v3553
    %4454 = vmatpush.msra.mxu0 %v3552
    %4455 = vmatpush.msra.mxu0 %v3551
    %4456 = vmatmul.f32.gmra.mxu0 %v4418
    %v4457 = vpop.f32.mrf.mxu0
    %v4458 = vadd.f32 %v3592, %v4457
    %4459 = vdwg.mxu0
    %4460 = vmatpush.msra.mxu0 0.0
    %4461 = vmatpush.msra.mxu0 0.0
    %4462 = vmatpush.msra.mxu0 0.0
    %4463 = vmatpush.msra.mxu0 0.0
    %4464 = vmatpush.msra.mxu0 0.0
    %4465 = vmatpush.msra.mxu0 0.0
    %4466 = vmatpush.msra.mxu0 0.0
    %4467 = vmatpush.msra.mxu0 0.0
    %4468 = vmatpush.msra.mxu0 0.0
    %4469 = vmatpush.msra.mxu0 0.0
    %4470 = vmatpush.msra.mxu0 0.0
    %4471 = vmatpush.msra.mxu0 0.0
    %4472 = vmatpush.msra.mxu0 %v3559
    %4473 = vmatpush.msra.mxu0 %v3558
    %4474 = vmatpush.msra.mxu0 %v3557
    %4475 = vmatpush.msra.mxu0 %v3556
    %4476 = vmatmul.f32.gmra.mxu0 %v4418
    %v4477 = vpop.f32.mrf.mxu0
    %v4478 = vadd.f32 %v3615, %v4477
    %4479 = vdwg.mxu0
    %v4480 = vadd.f32 %v3467, %v4438
    %v4481 = vxor.u32 %v4480, 2147483648
    %v4482 = vmul.f32 %v4481, 1.442695
    %v4483 = vpow.pop %v4482
    %v4484 = vadd.f32 %v4483, 1.0
    %v4485 = vrcp.pop %v4484
    %v4486 = vmul.f32 %v4484, %v4485
    %v4487 = vsub.f32 1.0, %v4486
    %v4488 = vmul.f32 %v4485, %v4487
    %v4489 = vadd.f32 %v4485, %v4488
    %vm4490 = vweird.f32 %v4484
    %vm4491 = vweird.f32 %v4485
    %vm4492 = vmor %vm4490, %vm4491
    %v4493 = vsel %vm4492, %v4485, %v4489
    %v4494 = vand.u32 2147483647, %v4484
    %vm4495 = vcmp.eq.f32.partialorder %v4494, 8.507059e+37
    %v4496 = vand.u32 %v4484, 2147483648
    %v4497 = vor.u32 1.1754944e-38, %v4496
    %v4498 = vsel %vm4495, %v4497, %v4493
    %v4499 = vmul.f32 1.0, %v4498
    %v4500 = vadd.f32 %v3504, %v4458
    %v4501 = vxor.u32 %v4500, 2147483648
    %v4502 = vmul.f32 %v4501, 1.442695
    %v4503 = vpow.pop %v4502
    %v4504 = vadd.f32 %v4503, 1.0
    %v4505 = vrcp.pop %v4504
    %v4506 = vmul.f32 %v4504, %v4505
    %v4507 = vsub.f32 1.0, %v4506
    %v4508 = vmul.f32 %v4505, %v4507
    %v4509 = vadd.f32 %v4505, %v4508
    %vm4510 = vweird.f32 %v4504
    %vm4511 = vweird.f32 %v4505
    %vm4512 = vmor %vm4510, %vm4511
    %v4513 = vsel %vm4512, %v4505, %v4509
    %v4514 = vand.u32 2147483647, %v4504
    %vm4515 = vcmp.eq.f32.partialorder %v4514, 8.507059e+37
    %v4516 = vand.u32 %v4504, 2147483648
    %v4517 = vor.u32 1.1754944e-38, %v4516
    %v4518 = vsel %vm4515, %v4517, %v4513
    %v4519 = vmul.f32 1.0, %v4518
    %v4520 = vmul.f32 %v4499, %v4478
    %v4521 = vadd.f32 %v3541, %v4520
    %v4522 = vtanh.pop %v4521
    %v4523 = vsub.f32 1.0, %v4519
    %v4524 = vmul.f32 %v4523, %v4522
    %v4526 = vmul.f32 %v4519, %v4417
    %v4527 = vadd.f32 %v4524, %v4526
    %s4528 = scalar_lea.vmem [#allocation2], 4
    %4529 = vst.msk [vmem:[%s4528 - $0x6] sm:$0xc0] %vm2290, %v3434
    %s4530 = scalar_lea.vmem [#allocation2], 6
    %4531 = vst.msk [vmem:[%s4530] sm:$0x3] %vm2293, %v4527
    %4533 = vrot.lane.b32.xlu0 %v4527, 32
    %v4534 = vpop.permute.xlu0 %4533
    %v4536 = vsel %vm133, %v2592, %v4534
    %4537 = vrot.lane.b32.xlu0 %v4415, 32
    %v4538 = vpop.permute.xlu0 %4537
    %v4540 = vsel %vm133, %v2713, %v4538
    %4541 = vrot.lane.b32.xlu0 %v4293, 32
    %v4542 = vpop.permute.xlu0 %4541
    %v4544 = vsel %vm133, %v2835, %v4542
    %4545 = vrot.lane.b32.xlu0 %v4171, 32
    %v4546 = vpop.permute.xlu0 %4545
    %v4548 = vsel %vm133, %v2957, %v4546
    %4549 = vrot.lane.b32.xlu0 %v4050, 32
    %v4550 = vpop.permute.xlu0 %4549
    %v4552 = vsel %vm133, %v3069, %v4550
    %4553 = vrot.lane.b32.xlu0 %v3938, 32
    %v4554 = vpop.permute.xlu0 %4553
    %v4556 = vsel %vm133, %v3190, %v4554
    %4557 = vrot.lane.b32.xlu0 %v3816, 32
    %v4558 = vpop.permute.xlu0 %4557
    %v4560 = vsel %vm133, %v3312, %v4558
    %4561 = vrot.lane.b32.xlu0 %v3694, 32
    %v4562 = vpop.permute.xlu0 %4561
    %v4564 = vsel %vm133, %v3434, %v4562
    %v4565 = vsel %vm2328, %v4536, %v4540
    %v4566 = vsel %vm2330, %v4565, %v4544
    %v4567 = vsel %vm2332, %v4566, %v4548
    %v4568 = vsel %vm2328, %v4552, %v4556
    %v4569 = vsel %vm2330, %v4568, %v4560
    %v4570 = vsel %vm2332, %v4569, %v4564
    %s4571 = scalar_lea.vmem %s3, 8
    %v4572 = vld [vmem:[%s4571] sm:$0x3]
    %v4573 = vld [vmem:[%s37] sm:$0xff]
    %v4574 = vld [vmem:[%s37 + $0x8] sm:$0xff]
    %v4575 = vld [vmem:[%s37 + $0x10] sm:$0xff]
    %v4576 = vld [vmem:[%s37 + $0x18] sm:$0xff]
    %v4577 = vld [vmem:[%s37 + $0x20] sm:$0xff]
    %v4578 = vld [vmem:[%s37 + $0x28] sm:$0xff]
    %v4579 = vld [vmem:[%s37 + $0x30] sm:$0xff]
    %v4580 = vld [vmem:[%s37 + $0x38] sm:$0xff]
    %v4581 = vld [vmem:[%s41] sm:$0x1]
    %v4583 = vperm.slane %v4581, 0
    %v4586 = vsel %vm2351, %v4567, 0
    %v4589 = vsel %vm2351, %v4570, 0
    %4591 = vmatpush.msra.mxu0 0.0
    %4592 = vmatpush.msra.mxu0 0.0
    %4593 = vmatpush.msra.mxu0 0.0
    %4594 = vmatpush.msra.mxu0 0.0
    %4595 = vmatpush.msra.mxu0 0.0
    %4596 = vmatpush.msra.mxu0 0.0
    %4597 = vmatpush.msra.mxu0 0.0
    %4598 = vmatpush.msra.mxu0 0.0
    %4599 = vmatpush.msra.mxu0 %v4580
    %4600 = vmatpush.msra.mxu0 %v4579
    %4601 = vmatpush.msra.mxu0 %v4578
    %4602 = vmatpush.msra.mxu0 %v4577
    %4603 = vmatpush.msra.mxu0 %v4576
    %4604 = vmatpush.msra.mxu0 %v4575
    %4605 = vmatpush.msra.mxu0 %v4574
    %4606 = vmatpush.msra.mxu0 %v4573
    %4607 = vmatmul.f32.gmra.mxu0 %v4586
    %v4608 = vpop.f32.mrf.mxu0
    %v4609 = vadd.f32 %v4583, %v4608
    %4610 = vmatmul.f32.gmra.mxu0 %v4589
    %v4611 = vpop.f32.mrf.mxu0
    %v4612 = vadd.f32 %v4583, %v4611
    %4613 = vdwg.mxu0
    %s4614 = scalar_lea.vmem %s37, 64
    %v4615 = vld [vmem:[%s4614] sm:$0xff]
    %v4616 = vld [vmem:[%s4614 + $0x8] sm:$0xff]
    %v4617 = vld [vmem:[%s4614 + $0x10] sm:$0xff]
    %v4618 = vld [vmem:[%s4614 + $0x18] sm:$0xff]
    %v4619 = vld [vmem:[%s4614 + $0x20] sm:$0xff]
    %v4620 = vld [vmem:[%s4614 + $0x28] sm:$0xff]
    %v4621 = vld [vmem:[%s4614 + $0x30] sm:$0xff]
    %v4622 = vld [vmem:[%s4614 + $0x38] sm:$0xff]
    %s4623 = scalar_lea.vmem %s41, 1
    %v4624 = vld [vmem:[%s4623] sm:$0x1]
    %v4626 = vperm.slane %v4624, 0
    %4628 = vmatpush.msra.mxu0 0.0
    %4629 = vmatpush.msra.mxu0 0.0
    %4630 = vmatpush.msra.mxu0 0.0
    %4631 = vmatpush.msra.mxu0 0.0
    %4632 = vmatpush.msra.mxu0 0.0
    %4633 = vmatpush.msra.mxu0 0.0
    %4634 = vmatpush.msra.mxu0 0.0
    %4635 = vmatpush.msra.mxu0 0.0
    %4636 = vmatpush.msra.mxu0 %v4622
    %4637 = vmatpush.msra.mxu0 %v4621
    %4638 = vmatpush.msra.mxu0 %v4620
    %4639 = vmatpush.msra.mxu0 %v4619
    %4640 = vmatpush.msra.mxu0 %v4618
    %4641 = vmatpush.msra.mxu0 %v4617
    %4642 = vmatpush.msra.mxu0 %v4616
    %4643 = vmatpush.msra.mxu0 %v4615
    %4644 = vmatmul.f32.gmra.mxu0 %v4586
    %v4645 = vpop.f32.mrf.mxu0
    %v4646 = vadd.f32 %v4626, %v4645
    %4647 = vmatmul.f32.gmra.mxu0 %v4589
    %v4648 = vpop.f32.mrf.mxu0
    %v4649 = vadd.f32 %v4626, %v4648
    %4650 = vdwg.mxu0
    %s4651 = scalar_lea.vmem %s37, 128
    %v4652 = vld [vmem:[%s4651] sm:$0xff]
    %v4653 = vld [vmem:[%s4651 + $0x8] sm:$0xff]
    %v4654 = vld [vmem:[%s4651 + $0x10] sm:$0xff]
    %v4655 = vld [vmem:[%s4651 + $0x18] sm:$0xff]
    %v4656 = vld [vmem:[%s4651 + $0x20] sm:$0xff]
    %v4657 = vld [vmem:[%s4651 + $0x28] sm:$0xff]
    %v4658 = vld [vmem:[%s4651 + $0x30] sm:$0xff]
    %v4659 = vld [vmem:[%s4651 + $0x38] sm:$0xff]
    %s4660 = scalar_lea.vmem %s41, 2
    %v4661 = vld [vmem:[%s4660] sm:$0x1]
    %v4663 = vperm.slane %v4661, 0
    %4665 = vmatpush.msra.mxu0 0.0
    %4666 = vmatpush.msra.mxu0 0.0
    %4667 = vmatpush.msra.mxu0 0.0
    %4668 = vmatpush.msra.mxu0 0.0
    %4669 = vmatpush.msra.mxu0 0.0
    %4670 = vmatpush.msra.mxu0 0.0
    %4671 = vmatpush.msra.mxu0 0.0
    %4672 = vmatpush.msra.mxu0 0.0
    %4673 = vmatpush.msra.mxu0 %v4659
    %4674 = vmatpush.msra.mxu0 %v4658
    %4675 = vmatpush.msra.mxu0 %v4657
    %4676 = vmatpush.msra.mxu0 %v4656
    %4677 = vmatpush.msra.mxu0 %v4655
    %4678 = vmatpush.msra.mxu0 %v4654
    %4679 = vmatpush.msra.mxu0 %v4653
    %4680 = vmatpush.msra.mxu0 %v4652
    %4681 = vmatmul.f32.gmra.mxu0 %v4586
    %v4682 = vpop.f32.mrf.mxu0
    %v4683 = vadd.f32 %v4663, %v4682
    %4684 = vmatmul.f32.gmra.mxu0 %v4589
    %v4685 = vpop.f32.mrf.mxu0
    %v4686 = vadd.f32 %v4663, %v4685
    %4687 = vdwg.mxu0
    %v4688 = vld [vmem:[%s39] sm:$0xff]
    %v4689 = vld [vmem:[%s39 + $0x8] sm:$0xff]
    %v4690 = vld [vmem:[%s39 + $0x10] sm:$0xff]
    %v4691 = vld [vmem:[%s39 + $0x18] sm:$0xff]
    %s4692 = scalar_lea.vmem %s39, 32
    %v4693 = vld [vmem:[%s4692] sm:$0xff]
    %v4694 = vld [vmem:[%s4692 + $0x8] sm:$0xff]
    %v4695 = vld [vmem:[%s4692 + $0x10] sm:$0xff]
    %v4696 = vld [vmem:[%s4692 + $0x18] sm:$0xff]
    %s4697 = scalar_lea.vmem %s39, 64
    %v4698 = vld [vmem:[%s4697] sm:$0xff]
    %v4699 = vld [vmem:[%s4697 + $0x8] sm:$0xff]
    %v4700 = vld [vmem:[%s4697 + $0x10] sm:$0xff]
    %v4701 = vld [vmem:[%s4697 + $0x18] sm:$0xff]
    %v4702 = vld [vmem:[%s43] sm:$0x1]
    %s4703 = scalar_lea.vmem %s43, 1
    %v4704 = vld [vmem:[%s4703] sm:$0x1]
    %s4705 = scalar_lea.vmem %s43, 2
    %v4706 = vld [vmem:[%s4705] sm:$0x1]
    %v4708 = vperm.slane %v4702, 0
    %v4711 = vsel %vm133, %v4572, 0
    %4713 = vmatpush.msra.mxu0 0.0
    %4714 = vmatpush.msra.mxu0 0.0
    %4715 = vmatpush.msra.mxu0 0.0
    %4716 = vmatpush.msra.mxu0 0.0
    %4717 = vmatpush.msra.mxu0 0.0
    %4718 = vmatpush.msra.mxu0 0.0
    %4719 = vmatpush.msra.mxu0 0.0
    %4720 = vmatpush.msra.mxu0 0.0
    %4721 = vmatpush.msra.mxu0 0.0
    %4722 = vmatpush.msra.mxu0 0.0
    %4723 = vmatpush.msra.mxu0 0.0
    %4724 = vmatpush.msra.mxu0 0.0
    %4725 = vmatpush.msra.mxu0 %v4691
    %4726 = vmatpush.msra.mxu0 %v4690
    %4727 = vmatpush.msra.mxu0 %v4689
    %4728 = vmatpush.msra.mxu0 %v4688
    %4729 = vmatmul.f32.gmra.mxu0 %v4711
    %v4730 = vpop.f32.mrf.mxu0
    %v4731 = vadd.f32 %v4708, %v4730
    %4732 = vdwg.mxu0
    %v4734 = vperm.slane %v4704, 0
    %4736 = vmatpush.msra.mxu0 0.0
    %4737 = vmatpush.msra.mxu0 0.0
    %4738 = vmatpush.msra.mxu0 0.0
    %4739 = vmatpush.msra.mxu0 0.0
    %4740 = vmatpush.msra.mxu0 0.0
    %4741 = vmatpush.msra.mxu0 0.0
    %4742 = vmatpush.msra.mxu0 0.0
    %4743 = vmatpush.msra.mxu0 0.0
    %4744 = vmatpush.msra.mxu0 0.0
    %4745 = vmatpush.msra.mxu0 0.0
    %4746 = vmatpush.msra.mxu0 0.0
    %4747 = vmatpush.msra.mxu0 0.0
    %4748 = vmatpush.msra.mxu0 %v4696
    %4749 = vmatpush.msra.mxu0 %v4695
    %4750 = vmatpush.msra.mxu0 %v4694
    %4751 = vmatpush.msra.mxu0 %v4693
    %4752 = vmatmul.f32.gmra.mxu0 %v4711
    %v4753 = vpop.f32.mrf.mxu0
    %v4754 = vadd.f32 %v4734, %v4753
    %4755 = vdwg.mxu0
    %v4757 = vperm.slane %v4706, 0
    %4759 = vmatpush.msra.mxu0 0.0
    %4760 = vmatpush.msra.mxu0 0.0
    %4761 = vmatpush.msra.mxu0 0.0
    %4762 = vmatpush.msra.mxu0 0.0
    %4763 = vmatpush.msra.mxu0 0.0
    %4764 = vmatpush.msra.mxu0 0.0
    %4765 = vmatpush.msra.mxu0 0.0
    %4766 = vmatpush.msra.mxu0 0.0
    %4767 = vmatpush.msra.mxu0 0.0
    %4768 = vmatpush.msra.mxu0 0.0
    %4769 = vmatpush.msra.mxu0 0.0
    %4770 = vmatpush.msra.mxu0 0.0
    %4771 = vmatpush.msra.mxu0 %v4701
    %4772 = vmatpush.msra.mxu0 %v4700
    %4773 = vmatpush.msra.mxu0 %v4699
    %4774 = vmatpush.msra.mxu0 %v4698
    %4775 = vmatmul.f32.gmra.mxu0 %v4711
    %v4776 = vpop.f32.mrf.mxu0
    %v4777 = vadd.f32 %v4757, %v4776
    %4778 = vdwg.mxu0
    %v4779 = vadd.f32 %v4609, %v4731
    %v4780 = vxor.u32 %v4779, 2147483648
    %v4781 = vmul.f32 %v4780, 1.442695
    %v4782 = vpow.pop %v4781
    %v4783 = vadd.f32 %v4782, 1.0
    %v4784 = vrcp.pop %v4783
    %v4785 = vmul.f32 %v4783, %v4784
    %v4786 = vsub.f32 1.0, %v4785
    %v4787 = vmul.f32 %v4784, %v4786
    %v4788 = vadd.f32 %v4784, %v4787
    %vm4789 = vweird.f32 %v4783
    %vm4790 = vweird.f32 %v4784
    %vm4791 = vmor %vm4789, %vm4790
    %v4792 = vsel %vm4791, %v4784, %v4788
    %v4793 = vand.u32 2147483647, %v4783
    %vm4794 = vcmp.eq.f32.partialorder %v4793, 8.507059e+37
    %v4795 = vand.u32 %v4783, 2147483648
    %v4796 = vor.u32 1.1754944e-38, %v4795
    %v4797 = vsel %vm4794, %v4796, %v4792
    %v4798 = vmul.f32 1.0, %v4797
    %v4799 = vadd.f32 %v4646, %v4754
    %v4800 = vxor.u32 %v4799, 2147483648
    %v4801 = vmul.f32 %v4800, 1.442695
    %v4802 = vpow.pop %v4801
    %v4803 = vadd.f32 %v4802, 1.0
    %v4804 = vrcp.pop %v4803
    %v4805 = vmul.f32 %v4803, %v4804
    %v4806 = vsub.f32 1.0, %v4805
    %v4807 = vmul.f32 %v4804, %v4806
    %v4808 = vadd.f32 %v4804, %v4807
    %vm4809 = vweird.f32 %v4803
    %vm4810 = vweird.f32 %v4804
    %vm4811 = vmor %vm4809, %vm4810
    %v4812 = vsel %vm4811, %v4804, %v4808
    %v4813 = vand.u32 2147483647, %v4803
    %vm4814 = vcmp.eq.f32.partialorder %v4813, 8.507059e+37
    %v4815 = vand.u32 %v4803, 2147483648
    %v4816 = vor.u32 1.1754944e-38, %v4815
    %v4817 = vsel %vm4814, %v4816, %v4812
    %v4818 = vmul.f32 1.0, %v4817
    %v4819 = vmul.f32 %v4798, %v4777
    %v4820 = vadd.f32 %v4683, %v4819
    %v4821 = vtanh.pop %v4820
    %v4822 = vsub.f32 1.0, %v4818
    %v4823 = vmul.f32 %v4822, %v4821
    %v4824 = vmul.f32 %v4818, %v4572
    %v4825 = vadd.f32 %v4823, %v4824
    %v4827 = vsel %vm133, %v4825, 0
    %4829 = vmatpush.msra.mxu0 0.0
    %4830 = vmatpush.msra.mxu0 0.0
    %4831 = vmatpush.msra.mxu0 0.0
    %4832 = vmatpush.msra.mxu0 0.0
    %4833 = vmatpush.msra.mxu0 0.0
    %4834 = vmatpush.msra.mxu0 0.0
    %4835 = vmatpush.msra.mxu0 0.0
    %4836 = vmatpush.msra.mxu0 0.0
    %4837 = vmatpush.msra.mxu0 0.0
    %4838 = vmatpush.msra.mxu0 0.0
    %4839 = vmatpush.msra.mxu0 0.0
    %4840 = vmatpush.msra.mxu0 0.0
    %4841 = vmatpush.msra.mxu0 %v4691
    %4842 = vmatpush.msra.mxu0 %v4690
    %4843 = vmatpush.msra.mxu0 %v4689
    %4844 = vmatpush.msra.mxu0 %v4688
    %4845 = vmatmul.f32.gmra.mxu0 %v4827
    %v4846 = vpop.f32.mrf.mxu0
    %v4847 = vadd.f32 %v4708, %v4846
    %4848 = vdwg.mxu0
    %4849 = vmatpush.msra.mxu0 0.0
    %4850 = vmatpush.msra.mxu0 0.0
    %4851 = vmatpush.msra.mxu0 0.0
    %4852 = vmatpush.msra.mxu0 0.0
    %4853 = vmatpush.msra.mxu0 0.0
    %4854 = vmatpush.msra.mxu0 0.0
    %4855 = vmatpush.msra.mxu0 0.0
    %4856 = vmatpush.msra.mxu0 0.0
    %4857 = vmatpush.msra.mxu0 0.0
    %4858 = vmatpush.msra.mxu0 0.0
    %4859 = vmatpush.msra.mxu0 0.0
    %4860 = vmatpush.msra.mxu0 0.0
    %4861 = vmatpush.msra.mxu0 %v4696
    %4862 = vmatpush.msra.mxu0 %v4695
    %4863 = vmatpush.msra.mxu0 %v4694
    %4864 = vmatpush.msra.mxu0 %v4693
    %4865 = vmatmul.f32.gmra.mxu0 %v4827
    %v4866 = vpop.f32.mrf.mxu0
    %v4867 = vadd.f32 %v4734, %v4866
    %4868 = vdwg.mxu0
    %4869 = vmatpush.msra.mxu0 0.0
    %4870 = vmatpush.msra.mxu0 0.0
    %4871 = vmatpush.msra.mxu0 0.0
    %4872 = vmatpush.msra.mxu0 0.0
    %4873 = vmatpush.msra.mxu0 0.0
    %4874 = vmatpush.msra.mxu0 0.0
    %4875 = vmatpush.msra.mxu0 0.0
    %4876 = vmatpush.msra.mxu0 0.0
    %4877 = vmatpush.msra.mxu0 0.0
    %4878 = vmatpush.msra.mxu0 0.0
    %4879 = vmatpush.msra.mxu0 0.0
    %4880 = vmatpush.msra.mxu0 0.0
    %4881 = vmatpush.msra.mxu0 %v4701
    %4882 = vmatpush.msra.mxu0 %v4700
    %4883 = vmatpush.msra.mxu0 %v4699
    %4884 = vmatpush.msra.mxu0 %v4698
    %4885 = vmatmul.f32.gmra.mxu0 %v4827
    %v4886 = vpop.f32.mrf.mxu0
    %v4887 = vadd.f32 %v4757, %v4886
    %4888 = vdwg.mxu0
    %v4890 = vrot.slane %v4847, 6
    %v4892 = vadd.f32 %v4609, %v4890
    %v4893 = vxor.u32 %v4892, 2147483648
    %v4894 = vmul.f32 %v4893, 1.442695
    %v4895 = vpow.pop %v4894
    %v4896 = vadd.f32 %v4895, 1.0
    %v4897 = vrcp.pop %v4896
    %v4898 = vmul.f32 %v4896, %v4897
    %v4899 = vsub.f32 1.0, %v4898
    %v4900 = vmul.f32 %v4897, %v4899
    %v4901 = vadd.f32 %v4897, %v4900
    %vm4902 = vweird.f32 %v4896
    %vm4903 = vweird.f32 %v4897
    %vm4904 = vmor %vm4902, %vm4903
    %v4905 = vsel %vm4904, %v4897, %v4901
    %v4906 = vand.u32 2147483647, %v4896
    %vm4907 = vcmp.eq.f32.partialorder %v4906, 8.507059e+37
    %v4908 = vand.u32 %v4896, 2147483648
    %v4909 = vor.u32 1.1754944e-38, %v4908
    %v4910 = vsel %vm4907, %v4909, %v4905
    %v4911 = vmul.f32 1.0, %v4910
    %v4913 = vrot.slane %v4867, 6
    %v4915 = vadd.f32 %v4646, %v4913
    %v4916 = vxor.u32 %v4915, 2147483648
    %v4917 = vmul.f32 %v4916, 1.442695
    %v4918 = vpow.pop %v4917
    %v4919 = vadd.f32 %v4918, 1.0
    %v4920 = vrcp.pop %v4919
    %v4921 = vmul.f32 %v4919, %v4920
    %v4922 = vsub.f32 1.0, %v4921
    %v4923 = vmul.f32 %v4920, %v4922
    %v4924 = vadd.f32 %v4920, %v4923
    %vm4925 = vweird.f32 %v4919
    %vm4926 = vweird.f32 %v4920
    %vm4927 = vmor %vm4925, %vm4926
    %v4928 = vsel %vm4927, %v4920, %v4924
    %v4929 = vand.u32 2147483647, %v4919
    %vm4930 = vcmp.eq.f32.partialorder %v4929, 8.507059e+37
    %v4931 = vand.u32 %v4919, 2147483648
    %v4932 = vor.u32 1.1754944e-38, %v4931
    %v4933 = vsel %vm4930, %v4932, %v4928
    %v4934 = vmul.f32 1.0, %v4933
    %v4936 = vrot.slane %v4887, 6
    %v4938 = vmul.f32 %v4911, %v4936
    %v4939 = vadd.f32 %v4683, %v4938
    %v4940 = vtanh.pop %v4939
    %v4941 = vsub.f32 1.0, %v4934
    %v4942 = vmul.f32 %v4941, %v4940
    %v4943 = vrot.slane %v4825, 6
    %v4945 = vmul.f32 %v4934, %v4943
    %v4946 = vadd.f32 %v4942, %v4945
    %v4948 = vrot.slane %v4946, 2
    %v4949 = vsel %vm133, %v4948, 0
    %4951 = vmatpush.msra.mxu0 0.0
    %4952 = vmatpush.msra.mxu0 0.0
    %4953 = vmatpush.msra.mxu0 0.0
    %4954 = vmatpush.msra.mxu0 0.0
    %4955 = vmatpush.msra.mxu0 0.0
    %4956 = vmatpush.msra.mxu0 0.0
    %4957 = vmatpush.msra.mxu0 0.0
    %4958 = vmatpush.msra.mxu0 0.0
    %4959 = vmatpush.msra.mxu0 0.0
    %4960 = vmatpush.msra.mxu0 0.0
    %4961 = vmatpush.msra.mxu0 0.0
    %4962 = vmatpush.msra.mxu0 0.0
    %4963 = vmatpush.msra.mxu0 %v4691
    %4964 = vmatpush.msra.mxu0 %v4690
    %4965 = vmatpush.msra.mxu0 %v4689
    %4966 = vmatpush.msra.mxu0 %v4688
    %4967 = vmatmul.f32.gmra.mxu0 %v4949
    %v4968 = vpop.f32.mrf.mxu0
    %v4969 = vadd.f32 %v4708, %v4968
    %4970 = vdwg.mxu0
    %4971 = vmatpush.msra.mxu0 0.0
    %4972 = vmatpush.msra.mxu0 0.0
    %4973 = vmatpush.msra.mxu0 0.0
    %4974 = vmatpush.msra.mxu0 0.0
    %4975 = vmatpush.msra.mxu0 0.0
    %4976 = vmatpush.msra.mxu0 0.0
    %4977 = vmatpush.msra.mxu0 0.0
    %4978 = vmatpush.msra.mxu0 0.0
    %4979 = vmatpush.msra.mxu0 0.0
    %4980 = vmatpush.msra.mxu0 0.0
    %4981 = vmatpush.msra.mxu0 0.0
    %4982 = vmatpush.msra.mxu0 0.0
    %4983 = vmatpush.msra.mxu0 %v4696
    %4984 = vmatpush.msra.mxu0 %v4695
    %4985 = vmatpush.msra.mxu0 %v4694
    %4986 = vmatpush.msra.mxu0 %v4693
    %4987 = vmatmul.f32.gmra.mxu0 %v4949
    %v4988 = vpop.f32.mrf.mxu0
    %v4989 = vadd.f32 %v4734, %v4988
    %4990 = vdwg.mxu0
    %4991 = vmatpush.msra.mxu0 0.0
    %4992 = vmatpush.msra.mxu0 0.0
    %4993 = vmatpush.msra.mxu0 0.0
    %4994 = vmatpush.msra.mxu0 0.0
    %4995 = vmatpush.msra.mxu0 0.0
    %4996 = vmatpush.msra.mxu0 0.0
    %4997 = vmatpush.msra.mxu0 0.0
    %4998 = vmatpush.msra.mxu0 0.0
    %4999 = vmatpush.msra.mxu0 0.0
    %5000 = vmatpush.msra.mxu0 0.0
    %5001 = vmatpush.msra.mxu0 0.0
    %5002 = vmatpush.msra.mxu0 0.0
    %5003 = vmatpush.msra.mxu0 %v4701
    %5004 = vmatpush.msra.mxu0 %v4700
    %5005 = vmatpush.msra.mxu0 %v4699
    %5006 = vmatpush.msra.mxu0 %v4698
    %5007 = vmatmul.f32.gmra.mxu0 %v4949
    %v5008 = vpop.f32.mrf.mxu0
    %v5009 = vadd.f32 %v4757, %v5008
    %5010 = vdwg.mxu0
    %v5012 = vrot.slane %v4969, 4
    %v5014 = vadd.f32 %v4609, %v5012
    %v5015 = vxor.u32 %v5014, 2147483648
    %v5016 = vmul.f32 %v5015, 1.442695
    %v5017 = vpow.pop %v5016
    %v5018 = vadd.f32 %v5017, 1.0
    %v5019 = vrcp.pop %v5018
    %v5020 = vmul.f32 %v5018, %v5019
    %v5021 = vsub.f32 1.0, %v5020
    %v5022 = vmul.f32 %v5019, %v5021
    %v5023 = vadd.f32 %v5019, %v5022
    %vm5024 = vweird.f32 %v5018
    %vm5025 = vweird.f32 %v5019
    %vm5026 = vmor %vm5024, %vm5025
    %v5027 = vsel %vm5026, %v5019, %v5023
    %v5028 = vand.u32 2147483647, %v5018
    %vm5029 = vcmp.eq.f32.partialorder %v5028, 8.507059e+37
    %v5030 = vand.u32 %v5018, 2147483648
    %v5031 = vor.u32 1.1754944e-38, %v5030
    %v5032 = vsel %vm5029, %v5031, %v5027
    %v5033 = vmul.f32 1.0, %v5032
    %v5035 = vrot.slane %v4989, 4
    %v5037 = vadd.f32 %v4646, %v5035
    %v5038 = vxor.u32 %v5037, 2147483648
    %v5039 = vmul.f32 %v5038, 1.442695
    %v5040 = vpow.pop %v5039
    %v5041 = vadd.f32 %v5040, 1.0
    %v5042 = vrcp.pop %v5041
    %v5043 = vmul.f32 %v5041, %v5042
    %v5044 = vsub.f32 1.0, %v5043
    %v5045 = vmul.f32 %v5042, %v5044
    %v5046 = vadd.f32 %v5042, %v5045
    %vm5047 = vweird.f32 %v5041
    %vm5048 = vweird.f32 %v5042
    %vm5049 = vmor %vm5047, %vm5048
    %v5050 = vsel %vm5049, %v5042, %v5046
    %v5051 = vand.u32 2147483647, %v5041
    %vm5052 = vcmp.eq.f32.partialorder %v5051, 8.507059e+37
    %v5053 = vand.u32 %v5041, 2147483648
    %v5054 = vor.u32 1.1754944e-38, %v5053
    %v5055 = vsel %vm5052, %v5054, %v5050
    %v5056 = vmul.f32 1.0, %v5055
    %v5058 = vrot.slane %v5009, 4
    %v5060 = vmul.f32 %v5033, %v5058
    %v5061 = vadd.f32 %v4683, %v5060
    %v5062 = vtanh.pop %v5061
    %v5063 = vsub.f32 1.0, %v5056
    %v5064 = vmul.f32 %v5063, %v5062
    %v5065 = vrot.slane %v4946, 6
    %v5067 = vmul.f32 %v5056, %v5065
    %v5068 = vadd.f32 %v5064, %v5067
    %v5070 = vrot.slane %v5068, 4
    %v5071 = vsel %vm133, %v5070, 0
    %5073 = vmatpush.msra.mxu0 0.0
    %5074 = vmatpush.msra.mxu0 0.0
    %5075 = vmatpush.msra.mxu0 0.0
    %5076 = vmatpush.msra.mxu0 0.0
    %5077 = vmatpush.msra.mxu0 0.0
    %5078 = vmatpush.msra.mxu0 0.0
    %5079 = vmatpush.msra.mxu0 0.0
    %5080 = vmatpush.msra.mxu0 0.0
    %5081 = vmatpush.msra.mxu0 0.0
    %5082 = vmatpush.msra.mxu0 0.0
    %5083 = vmatpush.msra.mxu0 0.0
    %5084 = vmatpush.msra.mxu0 0.0
    %5085 = vmatpush.msra.mxu0 %v4691
    %5086 = vmatpush.msra.mxu0 %v4690
    %5087 = vmatpush.msra.mxu0 %v4689
    %5088 = vmatpush.msra.mxu0 %v4688
    %5089 = vmatmul.f32.gmra.mxu0 %v5071
    %v5090 = vpop.f32.mrf.mxu0
    %v5091 = vadd.f32 %v4708, %v5090
    %5092 = vdwg.mxu0
    %5093 = vmatpush.msra.mxu0 0.0
    %5094 = vmatpush.msra.mxu0 0.0
    %5095 = vmatpush.msra.mxu0 0.0
    %5096 = vmatpush.msra.mxu0 0.0
    %5097 = vmatpush.msra.mxu0 0.0
    %5098 = vmatpush.msra.mxu0 0.0
    %5099 = vmatpush.msra.mxu0 0.0
    %5100 = vmatpush.msra.mxu0 0.0
    %5101 = vmatpush.msra.mxu0 0.0
    %5102 = vmatpush.msra.mxu0 0.0
    %5103 = vmatpush.msra.mxu0 0.0
    %5104 = vmatpush.msra.mxu0 0.0
    %5105 = vmatpush.msra.mxu0 %v4696
    %5106 = vmatpush.msra.mxu0 %v4695
    %5107 = vmatpush.msra.mxu0 %v4694
    %5108 = vmatpush.msra.mxu0 %v4693
    %5109 = vmatmul.f32.gmra.mxu0 %v5071
    %v5110 = vpop.f32.mrf.mxu0
    %v5111 = vadd.f32 %v4734, %v5110
    %5112 = vdwg.mxu0
    %5113 = vmatpush.msra.mxu0 0.0
    %5114 = vmatpush.msra.mxu0 0.0
    %5115 = vmatpush.msra.mxu0 0.0
    %5116 = vmatpush.msra.mxu0 0.0
    %5117 = vmatpush.msra.mxu0 0.0
    %5118 = vmatpush.msra.mxu0 0.0
    %5119 = vmatpush.msra.mxu0 0.0
    %5120 = vmatpush.msra.mxu0 0.0
    %5121 = vmatpush.msra.mxu0 0.0
    %5122 = vmatpush.msra.mxu0 0.0
    %5123 = vmatpush.msra.mxu0 0.0
    %5124 = vmatpush.msra.mxu0 0.0
    %5125 = vmatpush.msra.mxu0 %v4701
    %5126 = vmatpush.msra.mxu0 %v4700
    %5127 = vmatpush.msra.mxu0 %v4699
    %5128 = vmatpush.msra.mxu0 %v4698
    %5129 = vmatmul.f32.gmra.mxu0 %v5071
    %v5130 = vpop.f32.mrf.mxu0
    %v5131 = vadd.f32 %v4757, %v5130
    %5132 = vdwg.mxu0
    %v5134 = vrot.slane %v5091, 2
    %v5136 = vadd.f32 %v4609, %v5134
    %v5137 = vxor.u32 %v5136, 2147483648
    %v5138 = vmul.f32 %v5137, 1.442695
    %v5139 = vpow.pop %v5138
    %v5140 = vadd.f32 %v5139, 1.0
    %v5141 = vrcp.pop %v5140
    %v5142 = vmul.f32 %v5140, %v5141
    %v5143 = vsub.f32 1.0, %v5142
    %v5144 = vmul.f32 %v5141, %v5143
    %v5145 = vadd.f32 %v5141, %v5144
    %vm5146 = vweird.f32 %v5140
    %vm5147 = vweird.f32 %v5141
    %vm5148 = vmor %vm5146, %vm5147
    %v5149 = vsel %vm5148, %v5141, %v5145
    %v5150 = vand.u32 2147483647, %v5140
    %vm5151 = vcmp.eq.f32.partialorder %v5150, 8.507059e+37
    %v5152 = vand.u32 %v5140, 2147483648
    %v5153 = vor.u32 1.1754944e-38, %v5152
    %v5154 = vsel %vm5151, %v5153, %v5149
    %v5155 = vmul.f32 1.0, %v5154
    %v5157 = vrot.slane %v5111, 2
    %v5159 = vadd.f32 %v4646, %v5157
    %v5160 = vxor.u32 %v5159, 2147483648
    %v5161 = vmul.f32 %v5160, 1.442695
    %v5162 = vpow.pop %v5161
    %v5163 = vadd.f32 %v5162, 1.0
    %v5164 = vrcp.pop %v5163
    %v5165 = vmul.f32 %v5163, %v5164
    %v5166 = vsub.f32 1.0, %v5165
    %v5167 = vmul.f32 %v5164, %v5166
    %v5168 = vadd.f32 %v5164, %v5167
    %vm5169 = vweird.f32 %v5163
    %vm5170 = vweird.f32 %v5164
    %vm5171 = vmor %vm5169, %vm5170
    %v5172 = vsel %vm5171, %v5164, %v5168
    %v5173 = vand.u32 2147483647, %v5163
    %vm5174 = vcmp.eq.f32.partialorder %v5173, 8.507059e+37
    %v5175 = vand.u32 %v5163, 2147483648
    %v5176 = vor.u32 1.1754944e-38, %v5175
    %v5177 = vsel %vm5174, %v5176, %v5172
    %v5178 = vmul.f32 1.0, %v5177
    %v5180 = vrot.slane %v5131, 2
    %v5182 = vmul.f32 %v5155, %v5180
    %v5183 = vadd.f32 %v4683, %v5182
    %v5184 = vtanh.pop %v5183
    %v5185 = vsub.f32 1.0, %v5178
    %v5186 = vmul.f32 %v5185, %v5184
    %v5187 = vrot.slane %v5068, 6
    %v5189 = vmul.f32 %v5178, %v5187
    %v5190 = vadd.f32 %v5186, %v5189
    %v5192 = vrot.slane %v5190, 6
    %v5193 = vsel %vm133, %v5192, 0
    %5195 = vmatpush.msra.mxu0 0.0
    %5196 = vmatpush.msra.mxu0 0.0
    %5197 = vmatpush.msra.mxu0 0.0
    %5198 = vmatpush.msra.mxu0 0.0
    %5199 = vmatpush.msra.mxu0 0.0
    %5200 = vmatpush.msra.mxu0 0.0
    %5201 = vmatpush.msra.mxu0 0.0
    %5202 = vmatpush.msra.mxu0 0.0
    %5203 = vmatpush.msra.mxu0 0.0
    %5204 = vmatpush.msra.mxu0 0.0
    %5205 = vmatpush.msra.mxu0 0.0
    %5206 = vmatpush.msra.mxu0 0.0
    %5207 = vmatpush.msra.mxu0 %v4691
    %5208 = vmatpush.msra.mxu0 %v4690
    %5209 = vmatpush.msra.mxu0 %v4689
    %5210 = vmatpush.msra.mxu0 %v4688
    %5211 = vmatmul.f32.gmra.mxu0 %v5193
    %v5212 = vpop.f32.mrf.mxu0
    %v5213 = vadd.f32 %v4708, %v5212
    %5214 = vdwg.mxu0
    %5215 = vmatpush.msra.mxu0 0.0
    %5216 = vmatpush.msra.mxu0 0.0
    %5217 = vmatpush.msra.mxu0 0.0
    %5218 = vmatpush.msra.mxu0 0.0
    %5219 = vmatpush.msra.mxu0 0.0
    %5220 = vmatpush.msra.mxu0 0.0
    %5221 = vmatpush.msra.mxu0 0.0
    %5222 = vmatpush.msra.mxu0 0.0
    %5223 = vmatpush.msra.mxu0 0.0
    %5224 = vmatpush.msra.mxu0 0.0
    %5225 = vmatpush.msra.mxu0 0.0
    %5226 = vmatpush.msra.mxu0 0.0
    %5227 = vmatpush.msra.mxu0 %v4696
    %5228 = vmatpush.msra.mxu0 %v4695
    %5229 = vmatpush.msra.mxu0 %v4694
    %5230 = vmatpush.msra.mxu0 %v4693
    %5231 = vmatmul.f32.gmra.mxu0 %v5193
    %v5232 = vpop.f32.mrf.mxu0
    %v5233 = vadd.f32 %v4734, %v5232
    %5234 = vdwg.mxu0
    %5235 = vmatpush.msra.mxu0 0.0
    %5236 = vmatpush.msra.mxu0 0.0
    %5237 = vmatpush.msra.mxu0 0.0
    %5238 = vmatpush.msra.mxu0 0.0
    %5239 = vmatpush.msra.mxu0 0.0
    %5240 = vmatpush.msra.mxu0 0.0
    %5241 = vmatpush.msra.mxu0 0.0
    %5242 = vmatpush.msra.mxu0 0.0
    %5243 = vmatpush.msra.mxu0 0.0
    %5244 = vmatpush.msra.mxu0 0.0
    %5245 = vmatpush.msra.mxu0 0.0
    %5246 = vmatpush.msra.mxu0 0.0
    %5247 = vmatpush.msra.mxu0 %v4701
    %5248 = vmatpush.msra.mxu0 %v4700
    %5249 = vmatpush.msra.mxu0 %v4699
    %5250 = vmatpush.msra.mxu0 %v4698
    %5251 = vmatmul.f32.gmra.mxu0 %v5193
    %v5252 = vpop.f32.mrf.mxu0
    %v5253 = vadd.f32 %v4757, %v5252
    %5254 = vdwg.mxu0
    %v5255 = vadd.f32 %v4612, %v5213
    %v5256 = vxor.u32 %v5255, 2147483648
    %v5257 = vmul.f32 %v5256, 1.442695
    %v5258 = vpow.pop %v5257
    %v5259 = vadd.f32 %v5258, 1.0
    %v5260 = vrcp.pop %v5259
    %v5261 = vmul.f32 %v5259, %v5260
    %v5262 = vsub.f32 1.0, %v5261
    %v5263 = vmul.f32 %v5260, %v5262
    %v5264 = vadd.f32 %v5260, %v5263
    %vm5265 = vweird.f32 %v5259
    %vm5266 = vweird.f32 %v5260
    %vm5267 = vmor %vm5265, %vm5266
    %v5268 = vsel %vm5267, %v5260, %v5264
    %v5269 = vand.u32 2147483647, %v5259
    %vm5270 = vcmp.eq.f32.partialorder %v5269, 8.507059e+37
    %v5271 = vand.u32 %v5259, 2147483648
    %v5272 = vor.u32 1.1754944e-38, %v5271
    %v5273 = vsel %vm5270, %v5272, %v5268
    %v5274 = vmul.f32 1.0, %v5273
    %v5275 = vadd.f32 %v4649, %v5233
    %v5276 = vxor.u32 %v5275, 2147483648
    %v5277 = vmul.f32 %v5276, 1.442695
    %v5278 = vpow.pop %v5277
    %v5279 = vadd.f32 %v5278, 1.0
    %v5280 = vrcp.pop %v5279
    %v5281 = vmul.f32 %v5279, %v5280
    %v5282 = vsub.f32 1.0, %v5281
    %v5283 = vmul.f32 %v5280, %v5282
    %v5284 = vadd.f32 %v5280, %v5283
    %vm5285 = vweird.f32 %v5279
    %vm5286 = vweird.f32 %v5280
    %vm5287 = vmor %vm5285, %vm5286
    %v5288 = vsel %vm5287, %v5280, %v5284
    %v5289 = vand.u32 2147483647, %v5279
    %vm5290 = vcmp.eq.f32.partialorder %v5289, 8.507059e+37
    %v5291 = vand.u32 %v5279, 2147483648
    %v5292 = vor.u32 1.1754944e-38, %v5291
    %v5293 = vsel %vm5290, %v5292, %v5288
    %v5294 = vmul.f32 1.0, %v5293
    %v5295 = vmul.f32 %v5274, %v5253
    %v5296 = vadd.f32 %v4686, %v5295
    %v5297 = vtanh.pop %v5296
    %v5298 = vsub.f32 1.0, %v5294
    %v5299 = vmul.f32 %v5298, %v5297
    %v5301 = vmul.f32 %v5294, %v5192
    %v5302 = vadd.f32 %v5299, %v5301
    %v5304 = vsel %vm133, %v5302, 0
    %5306 = vmatpush.msra.mxu0 0.0
    %5307 = vmatpush.msra.mxu0 0.0
    %5308 = vmatpush.msra.mxu0 0.0
    %5309 = vmatpush.msra.mxu0 0.0
    %5310 = vmatpush.msra.mxu0 0.0
    %5311 = vmatpush.msra.mxu0 0.0
    %5312 = vmatpush.msra.mxu0 0.0
    %5313 = vmatpush.msra.mxu0 0.0
    %5314 = vmatpush.msra.mxu0 0.0
    %5315 = vmatpush.msra.mxu0 0.0
    %5316 = vmatpush.msra.mxu0 0.0
    %5317 = vmatpush.msra.mxu0 0.0
    %5318 = vmatpush.msra.mxu0 %v4691
    %5319 = vmatpush.msra.mxu0 %v4690
    %5320 = vmatpush.msra.mxu0 %v4689
    %5321 = vmatpush.msra.mxu0 %v4688
    %5322 = vmatmul.f32.gmra.mxu0 %v5304
    %v5323 = vpop.f32.mrf.mxu0
    %v5324 = vadd.f32 %v4708, %v5323
    %5325 = vdwg.mxu0
    %5326 = vmatpush.msra.mxu0 0.0
    %5327 = vmatpush.msra.mxu0 0.0
    %5328 = vmatpush.msra.mxu0 0.0
    %5329 = vmatpush.msra.mxu0 0.0
    %5330 = vmatpush.msra.mxu0 0.0
    %5331 = vmatpush.msra.mxu0 0.0
    %5332 = vmatpush.msra.mxu0 0.0
    %5333 = vmatpush.msra.mxu0 0.0
    %5334 = vmatpush.msra.mxu0 0.0
    %5335 = vmatpush.msra.mxu0 0.0
    %5336 = vmatpush.msra.mxu0 0.0
    %5337 = vmatpush.msra.mxu0 0.0
    %5338 = vmatpush.msra.mxu0 %v4696
    %5339 = vmatpush.msra.mxu0 %v4695
    %5340 = vmatpush.msra.mxu0 %v4694
    %5341 = vmatpush.msra.mxu0 %v4693
    %5342 = vmatmul.f32.gmra.mxu0 %v5304
    %v5343 = vpop.f32.mrf.mxu0
    %v5344 = vadd.f32 %v4734, %v5343
    %5345 = vdwg.mxu0
    %5346 = vmatpush.msra.mxu0 0.0
    %5347 = vmatpush.msra.mxu0 0.0
    %5348 = vmatpush.msra.mxu0 0.0
    %5349 = vmatpush.msra.mxu0 0.0
    %5350 = vmatpush.msra.mxu0 0.0
    %5351 = vmatpush.msra.mxu0 0.0
    %5352 = vmatpush.msra.mxu0 0.0
    %5353 = vmatpush.msra.mxu0 0.0
    %5354 = vmatpush.msra.mxu0 0.0
    %5355 = vmatpush.msra.mxu0 0.0
    %5356 = vmatpush.msra.mxu0 0.0
    %5357 = vmatpush.msra.mxu0 0.0
    %5358 = vmatpush.msra.mxu0 %v4701
    %5359 = vmatpush.msra.mxu0 %v4700
    %5360 = vmatpush.msra.mxu0 %v4699
    %5361 = vmatpush.msra.mxu0 %v4698
    %5362 = vmatmul.f32.gmra.mxu0 %v5304
    %v5363 = vpop.f32.mrf.mxu0
    %v5364 = vadd.f32 %v4757, %v5363
    %5365 = vdwg.mxu0
    %v5367 = vrot.slane %v5324, 6
    %v5369 = vadd.f32 %v4612, %v5367
    %v5370 = vxor.u32 %v5369, 2147483648
    %v5371 = vmul.f32 %v5370, 1.442695
    %v5372 = vpow.pop %v5371
    %v5373 = vadd.f32 %v5372, 1.0
    %v5374 = vrcp.pop %v5373
    %v5375 = vmul.f32 %v5373, %v5374
    %v5376 = vsub.f32 1.0, %v5375
    %v5377 = vmul.f32 %v5374, %v5376
    %v5378 = vadd.f32 %v5374, %v5377
    %vm5379 = vweird.f32 %v5373
    %vm5380 = vweird.f32 %v5374
    %vm5381 = vmor %vm5379, %vm5380
    %v5382 = vsel %vm5381, %v5374, %v5378
    %v5383 = vand.u32 2147483647, %v5373
    %vm5384 = vcmp.eq.f32.partialorder %v5383, 8.507059e+37
    %v5385 = vand.u32 %v5373, 2147483648
    %v5386 = vor.u32 1.1754944e-38, %v5385
    %v5387 = vsel %vm5384, %v5386, %v5382
    %v5388 = vmul.f32 1.0, %v5387
    %v5390 = vrot.slane %v5344, 6
    %v5392 = vadd.f32 %v4649, %v5390
    %v5393 = vxor.u32 %v5392, 2147483648
    %v5394 = vmul.f32 %v5393, 1.442695
    %v5395 = vpow.pop %v5394
    %v5396 = vadd.f32 %v5395, 1.0
    %v5397 = vrcp.pop %v5396
    %v5398 = vmul.f32 %v5396, %v5397
    %v5399 = vsub.f32 1.0, %v5398
    %v5400 = vmul.f32 %v5397, %v5399
    %v5401 = vadd.f32 %v5397, %v5400
    %vm5402 = vweird.f32 %v5396
    %vm5403 = vweird.f32 %v5397
    %vm5404 = vmor %vm5402, %vm5403
    %v5405 = vsel %vm5404, %v5397, %v5401
    %v5406 = vand.u32 2147483647, %v5396
    %vm5407 = vcmp.eq.f32.partialorder %v5406, 8.507059e+37
    %v5408 = vand.u32 %v5396, 2147483648
    %v5409 = vor.u32 1.1754944e-38, %v5408
    %v5410 = vsel %vm5407, %v5409, %v5405
    %v5411 = vmul.f32 1.0, %v5410
    %v5413 = vrot.slane %v5364, 6
    %v5415 = vmul.f32 %v5388, %v5413
    %v5416 = vadd.f32 %v4686, %v5415
    %v5417 = vtanh.pop %v5416
    %v5418 = vsub.f32 1.0, %v5411
    %v5419 = vmul.f32 %v5418, %v5417
    %v5420 = vrot.slane %v5302, 6
    %v5422 = vmul.f32 %v5411, %v5420
    %v5423 = vadd.f32 %v5419, %v5422
    %v5425 = vrot.slane %v5423, 2
    %v5426 = vsel %vm133, %v5425, 0
    %5428 = vmatpush.msra.mxu0 0.0
    %5429 = vmatpush.msra.mxu0 0.0
    %5430 = vmatpush.msra.mxu0 0.0
    %5431 = vmatpush.msra.mxu0 0.0
    %5432 = vmatpush.msra.mxu0 0.0
    %5433 = vmatpush.msra.mxu0 0.0
    %5434 = vmatpush.msra.mxu0 0.0
    %5435 = vmatpush.msra.mxu0 0.0
    %5436 = vmatpush.msra.mxu0 0.0
    %5437 = vmatpush.msra.mxu0 0.0
    %5438 = vmatpush.msra.mxu0 0.0
    %5439 = vmatpush.msra.mxu0 0.0
    %5440 = vmatpush.msra.mxu0 %v4691
    %5441 = vmatpush.msra.mxu0 %v4690
    %5442 = vmatpush.msra.mxu0 %v4689
    %5443 = vmatpush.msra.mxu0 %v4688
    %5444 = vmatmul.f32.gmra.mxu0 %v5426
    %v5445 = vpop.f32.mrf.mxu0
    %v5446 = vadd.f32 %v4708, %v5445
    %5447 = vdwg.mxu0
    %5448 = vmatpush.msra.mxu0 0.0
    %5449 = vmatpush.msra.mxu0 0.0
    %5450 = vmatpush.msra.mxu0 0.0
    %5451 = vmatpush.msra.mxu0 0.0
    %5452 = vmatpush.msra.mxu0 0.0
    %5453 = vmatpush.msra.mxu0 0.0
    %5454 = vmatpush.msra.mxu0 0.0
    %5455 = vmatpush.msra.mxu0 0.0
    %5456 = vmatpush.msra.mxu0 0.0
    %5457 = vmatpush.msra.mxu0 0.0
    %5458 = vmatpush.msra.mxu0 0.0
    %5459 = vmatpush.msra.mxu0 0.0
    %5460 = vmatpush.msra.mxu0 %v4696
    %5461 = vmatpush.msra.mxu0 %v4695
    %5462 = vmatpush.msra.mxu0 %v4694
    %5463 = vmatpush.msra.mxu0 %v4693
    %5464 = vmatmul.f32.gmra.mxu0 %v5426
    %v5465 = vpop.f32.mrf.mxu0
    %v5466 = vadd.f32 %v4734, %v5465
    %5467 = vdwg.mxu0
    %5468 = vmatpush.msra.mxu0 0.0
    %5469 = vmatpush.msra.mxu0 0.0
    %5470 = vmatpush.msra.mxu0 0.0
    %5471 = vmatpush.msra.mxu0 0.0
    %5472 = vmatpush.msra.mxu0 0.0
    %5473 = vmatpush.msra.mxu0 0.0
    %5474 = vmatpush.msra.mxu0 0.0
    %5475 = vmatpush.msra.mxu0 0.0
    %5476 = vmatpush.msra.mxu0 0.0
    %5477 = vmatpush.msra.mxu0 0.0
    %5478 = vmatpush.msra.mxu0 0.0
    %5479 = vmatpush.msra.mxu0 0.0
    %5480 = vmatpush.msra.mxu0 %v4701
    %5481 = vmatpush.msra.mxu0 %v4700
    %5482 = vmatpush.msra.mxu0 %v4699
    %5483 = vmatpush.msra.mxu0 %v4698
    %5484 = vmatmul.f32.gmra.mxu0 %v5426
    %v5485 = vpop.f32.mrf.mxu0
    %v5486 = vadd.f32 %v4757, %v5485
    %5487 = vdwg.mxu0
    %v5489 = vrot.slane %v5446, 4
    %v5491 = vadd.f32 %v4612, %v5489
    %v5492 = vxor.u32 %v5491, 2147483648
    %v5493 = vmul.f32 %v5492, 1.442695
    %v5494 = vpow.pop %v5493
    %v5495 = vadd.f32 %v5494, 1.0
    %v5496 = vrcp.pop %v5495
    %v5497 = vmul.f32 %v5495, %v5496
    %v5498 = vsub.f32 1.0, %v5497
    %v5499 = vmul.f32 %v5496, %v5498
    %v5500 = vadd.f32 %v5496, %v5499
    %vm5501 = vweird.f32 %v5495
    %vm5502 = vweird.f32 %v5496
    %vm5503 = vmor %vm5501, %vm5502
    %v5504 = vsel %vm5503, %v5496, %v5500
    %v5505 = vand.u32 2147483647, %v5495
    %vm5506 = vcmp.eq.f32.partialorder %v5505, 8.507059e+37
    %v5507 = vand.u32 %v5495, 2147483648
    %v5508 = vor.u32 1.1754944e-38, %v5507
    %v5509 = vsel %vm5506, %v5508, %v5504
    %v5510 = vmul.f32 1.0, %v5509
    %v5512 = vrot.slane %v5466, 4
    %v5514 = vadd.f32 %v4649, %v5512
    %v5515 = vxor.u32 %v5514, 2147483648
    %v5516 = vmul.f32 %v5515, 1.442695
    %v5517 = vpow.pop %v5516
    %v5518 = vadd.f32 %v5517, 1.0
    %v5519 = vrcp.pop %v5518
    %v5520 = vmul.f32 %v5518, %v5519
    %v5521 = vsub.f32 1.0, %v5520
    %v5522 = vmul.f32 %v5519, %v5521
    %v5523 = vadd.f32 %v5519, %v5522
    %vm5524 = vweird.f32 %v5518
    %vm5525 = vweird.f32 %v5519
    %vm5526 = vmor %vm5524, %vm5525
    %v5527 = vsel %vm5526, %v5519, %v5523
    %v5528 = vand.u32 2147483647, %v5518
    %vm5529 = vcmp.eq.f32.partialorder %v5528, 8.507059e+37
    %v5530 = vand.u32 %v5518, 2147483648
    %v5531 = vor.u32 1.1754944e-38, %v5530
    %v5532 = vsel %vm5529, %v5531, %v5527
    %v5533 = vmul.f32 1.0, %v5532
    %v5535 = vrot.slane %v5486, 4
    %v5537 = vmul.f32 %v5510, %v5535
    %v5538 = vadd.f32 %v4686, %v5537
    %v5539 = vtanh.pop %v5538
    %v5540 = vsub.f32 1.0, %v5533
    %v5541 = vmul.f32 %v5540, %v5539
    %v5542 = vrot.slane %v5423, 6
    %v5544 = vmul.f32 %v5533, %v5542
    %v5545 = vadd.f32 %v5541, %v5544
    %v5547 = vrot.slane %v5545, 4
    %v5548 = vsel %vm133, %v5547, 0
    %5550 = vmatpush.msra.mxu0 0.0
    %5551 = vmatpush.msra.mxu0 0.0
    %5552 = vmatpush.msra.mxu0 0.0
    %5553 = vmatpush.msra.mxu0 0.0
    %5554 = vmatpush.msra.mxu0 0.0
    %5555 = vmatpush.msra.mxu0 0.0
    %5556 = vmatpush.msra.mxu0 0.0
    %5557 = vmatpush.msra.mxu0 0.0
    %5558 = vmatpush.msra.mxu0 0.0
    %5559 = vmatpush.msra.mxu0 0.0
    %5560 = vmatpush.msra.mxu0 0.0
    %5561 = vmatpush.msra.mxu0 0.0
    %5562 = vmatpush.msra.mxu0 %v4691
    %5563 = vmatpush.msra.mxu0 %v4690
    %5564 = vmatpush.msra.mxu0 %v4689
    %5565 = vmatpush.msra.mxu0 %v4688
    %5566 = vmatmul.f32.gmra.mxu0 %v5548
    %v5567 = vpop.f32.mrf.mxu0
    %v5568 = vadd.f32 %v4708, %v5567
    %5569 = vdwg.mxu0
    %5570 = vmatpush.msra.mxu0 0.0
    %5571 = vmatpush.msra.mxu0 0.0
    %5572 = vmatpush.msra.mxu0 0.0
    %5573 = vmatpush.msra.mxu0 0.0
    %5574 = vmatpush.msra.mxu0 0.0
    %5575 = vmatpush.msra.mxu0 0.0
    %5576 = vmatpush.msra.mxu0 0.0
    %5577 = vmatpush.msra.mxu0 0.0
    %5578 = vmatpush.msra.mxu0 0.0
    %5579 = vmatpush.msra.mxu0 0.0
    %5580 = vmatpush.msra.mxu0 0.0
    %5581 = vmatpush.msra.mxu0 0.0
    %5582 = vmatpush.msra.mxu0 %v4696
    %5583 = vmatpush.msra.mxu0 %v4695
    %5584 = vmatpush.msra.mxu0 %v4694
    %5585 = vmatpush.msra.mxu0 %v4693
    %5586 = vmatmul.f32.gmra.mxu0 %v5548
    %v5587 = vpop.f32.mrf.mxu0
    %v5588 = vadd.f32 %v4734, %v5587
    %5589 = vdwg.mxu0
    %5590 = vmatpush.msra.mxu0 0.0
    %5591 = vmatpush.msra.mxu0 0.0
    %5592 = vmatpush.msra.mxu0 0.0
    %5593 = vmatpush.msra.mxu0 0.0
    %5594 = vmatpush.msra.mxu0 0.0
    %5595 = vmatpush.msra.mxu0 0.0
    %5596 = vmatpush.msra.mxu0 0.0
    %5597 = vmatpush.msra.mxu0 0.0
    %5598 = vmatpush.msra.mxu0 0.0
    %5599 = vmatpush.msra.mxu0 0.0
    %5600 = vmatpush.msra.mxu0 0.0
    %5601 = vmatpush.msra.mxu0 0.0
    %5602 = vmatpush.msra.mxu0 %v4701
    %5603 = vmatpush.msra.mxu0 %v4700
    %5604 = vmatpush.msra.mxu0 %v4699
    %5605 = vmatpush.msra.mxu0 %v4698
    %5606 = vmatmul.f32.gmra.mxu0 %v5548
    %v5607 = vpop.f32.mrf.mxu0
    %v5608 = vadd.f32 %v4757, %v5607
    %5609 = vdwg.mxu0
    %v5611 = vrot.slane %v5568, 2
    %v5613 = vadd.f32 %v4612, %v5611
    %v5614 = vxor.u32 %v5613, 2147483648
    %v5615 = vmul.f32 %v5614, 1.442695
    %v5616 = vpow.pop %v5615
    %v5617 = vadd.f32 %v5616, 1.0
    %v5618 = vrcp.pop %v5617
    %v5619 = vmul.f32 %v5617, %v5618
    %v5620 = vsub.f32 1.0, %v5619
    %v5621 = vmul.f32 %v5618, %v5620
    %v5622 = vadd.f32 %v5618, %v5621
    %vm5623 = vweird.f32 %v5617
    %vm5624 = vweird.f32 %v5618
    %vm5625 = vmor %vm5623, %vm5624
    %v5626 = vsel %vm5625, %v5618, %v5622
    %v5627 = vand.u32 2147483647, %v5617
    %vm5628 = vcmp.eq.f32.partialorder %v5627, 8.507059e+37
    %v5629 = vand.u32 %v5617, 2147483648
    %v5630 = vor.u32 1.1754944e-38, %v5629
    %v5631 = vsel %vm5628, %v5630, %v5626
    %v5632 = vmul.f32 1.0, %v5631
    %v5634 = vrot.slane %v5588, 2
    %v5636 = vadd.f32 %v4649, %v5634
    %v5637 = vxor.u32 %v5636, 2147483648
    %v5638 = vmul.f32 %v5637, 1.442695
    %v5639 = vpow.pop %v5638
    %v5640 = vadd.f32 %v5639, 1.0
    %v5641 = vrcp.pop %v5640
    %v5642 = vmul.f32 %v5640, %v5641
    %v5643 = vsub.f32 1.0, %v5642
    %v5644 = vmul.f32 %v5641, %v5643
    %v5645 = vadd.f32 %v5641, %v5644
    %vm5646 = vweird.f32 %v5640
    %vm5647 = vweird.f32 %v5641
    %vm5648 = vmor %vm5646, %vm5647
    %v5649 = vsel %vm5648, %v5641, %v5645
    %v5650 = vand.u32 2147483647, %v5640
    %vm5651 = vcmp.eq.f32.partialorder %v5650, 8.507059e+37
    %v5652 = vand.u32 %v5640, 2147483648
    %v5653 = vor.u32 1.1754944e-38, %v5652
    %v5654 = vsel %vm5651, %v5653, %v5649
    %v5655 = vmul.f32 1.0, %v5654
    %v5657 = vrot.slane %v5608, 2
    %v5659 = vmul.f32 %v5632, %v5657
    %v5660 = vadd.f32 %v4686, %v5659
    %v5661 = vtanh.pop %v5660
    %v5662 = vsub.f32 1.0, %v5655
    %v5663 = vmul.f32 %v5662, %v5661
    %v5664 = vrot.slane %v5545, 6
    %v5666 = vmul.f32 %v5655, %v5664
    %v5667 = vadd.f32 %v5663, %v5666
    %s5668 = scalar_lea.vmem %s3, 10
    %v5669 = vld [vmem:[%s5668] sm:$0x3]
    %v5670 = vld [vmem:[%s45] sm:$0xff]
    %v5671 = vld [vmem:[%s45 + $0x8] sm:$0xff]
    %v5672 = vld [vmem:[%s45 + $0x10] sm:$0xff]
    %v5673 = vld [vmem:[%s45 + $0x18] sm:$0xff]
    %v5674 = vld [vmem:[%s45 + $0x20] sm:$0xff]
    %v5675 = vld [vmem:[%s45 + $0x28] sm:$0xff]
    %v5676 = vld [vmem:[%s45 + $0x30] sm:$0xff]
    %v5677 = vld [vmem:[%s45 + $0x38] sm:$0xff]
    %v5678 = vld [vmem:[%s49] sm:$0x1]
    %v5680 = vperm.slane %v5678, 0
    %5682 = vmatpush.msra.mxu0 0.0
    %5683 = vmatpush.msra.mxu0 0.0
    %5684 = vmatpush.msra.mxu0 0.0
    %5685 = vmatpush.msra.mxu0 0.0
    %5686 = vmatpush.msra.mxu0 0.0
    %5687 = vmatpush.msra.mxu0 0.0
    %5688 = vmatpush.msra.mxu0 0.0
    %5689 = vmatpush.msra.mxu0 0.0
    %5690 = vmatpush.msra.mxu0 %v5677
    %5691 = vmatpush.msra.mxu0 %v5676
    %5692 = vmatpush.msra.mxu0 %v5675
    %5693 = vmatpush.msra.mxu0 %v5674
    %5694 = vmatpush.msra.mxu0 %v5673
    %5695 = vmatpush.msra.mxu0 %v5672
    %5696 = vmatpush.msra.mxu0 %v5671
    %5697 = vmatpush.msra.mxu0 %v5670
    %5698 = vmatmul.f32.gmra.mxu0 %v4586
    %v5699 = vpop.f32.mrf.mxu0
    %v5700 = vadd.f32 %v5680, %v5699
    %5701 = vmatmul.f32.gmra.mxu0 %v4589
    %v5702 = vpop.f32.mrf.mxu0
    %v5703 = vadd.f32 %v5680, %v5702
    %5704 = vdwg.mxu0
    %s5705 = scalar_lea.vmem %s45, 64
    %v5706 = vld [vmem:[%s5705] sm:$0xff]
    %v5707 = vld [vmem:[%s5705 + $0x8] sm:$0xff]
    %v5708 = vld [vmem:[%s5705 + $0x10] sm:$0xff]
    %v5709 = vld [vmem:[%s5705 + $0x18] sm:$0xff]
    %v5710 = vld [vmem:[%s5705 + $0x20] sm:$0xff]
    %v5711 = vld [vmem:[%s5705 + $0x28] sm:$0xff]
    %v5712 = vld [vmem:[%s5705 + $0x30] sm:$0xff]
    %v5713 = vld [vmem:[%s5705 + $0x38] sm:$0xff]
    %s5714 = scalar_lea.vmem %s49, 1
    %v5715 = vld [vmem:[%s5714] sm:$0x1]
    %v5717 = vperm.slane %v5715, 0
    %5719 = vmatpush.msra.mxu0 0.0
    %5720 = vmatpush.msra.mxu0 0.0
    %5721 = vmatpush.msra.mxu0 0.0
    %5722 = vmatpush.msra.mxu0 0.0
    %5723 = vmatpush.msra.mxu0 0.0
    %5724 = vmatpush.msra.mxu0 0.0
    %5725 = vmatpush.msra.mxu0 0.0
    %5726 = vmatpush.msra.mxu0 0.0
    %5727 = vmatpush.msra.mxu0 %v5713
    %5728 = vmatpush.msra.mxu0 %v5712
    %5729 = vmatpush.msra.mxu0 %v5711
    %5730 = vmatpush.msra.mxu0 %v5710
    %5731 = vmatpush.msra.mxu0 %v5709
    %5732 = vmatpush.msra.mxu0 %v5708
    %5733 = vmatpush.msra.mxu0 %v5707
    %5734 = vmatpush.msra.mxu0 %v5706
    %5735 = vmatmul.f32.gmra.mxu0 %v4586
    %v5736 = vpop.f32.mrf.mxu0
    %v5737 = vadd.f32 %v5717, %v5736
    %5738 = vmatmul.f32.gmra.mxu0 %v4589
    %v5739 = vpop.f32.mrf.mxu0
    %v5740 = vadd.f32 %v5717, %v5739
    %5741 = vdwg.mxu0
    %s5742 = scalar_lea.vmem %s45, 128
    %v5743 = vld [vmem:[%s5742] sm:$0xff]
    %v5744 = vld [vmem:[%s5742 + $0x8] sm:$0xff]
    %v5745 = vld [vmem:[%s5742 + $0x10] sm:$0xff]
    %v5746 = vld [vmem:[%s5742 + $0x18] sm:$0xff]
    %v5747 = vld [vmem:[%s5742 + $0x20] sm:$0xff]
    %v5748 = vld [vmem:[%s5742 + $0x28] sm:$0xff]
    %v5749 = vld [vmem:[%s5742 + $0x30] sm:$0xff]
    %v5750 = vld [vmem:[%s5742 + $0x38] sm:$0xff]
    %s5751 = scalar_lea.vmem %s49, 2
    %v5752 = vld [vmem:[%s5751] sm:$0x1]
    %v5754 = vperm.slane %v5752, 0
    %5756 = vmatpush.msra.mxu0 0.0
    %5757 = vmatpush.msra.mxu0 0.0
    %5758 = vmatpush.msra.mxu0 0.0
    %5759 = vmatpush.msra.mxu0 0.0
    %5760 = vmatpush.msra.mxu0 0.0
    %5761 = vmatpush.msra.mxu0 0.0
    %5762 = vmatpush.msra.mxu0 0.0
    %5763 = vmatpush.msra.mxu0 0.0
    %5764 = vmatpush.msra.mxu0 %v5750
    %5765 = vmatpush.msra.mxu0 %v5749
    %5766 = vmatpush.msra.mxu0 %v5748
    %5767 = vmatpush.msra.mxu0 %v5747
    %5768 = vmatpush.msra.mxu0 %v5746
    %5769 = vmatpush.msra.mxu0 %v5745
    %5770 = vmatpush.msra.mxu0 %v5744
    %5771 = vmatpush.msra.mxu0 %v5743
    %5772 = vmatmul.f32.gmra.mxu0 %v4586
    %v5773 = vpop.f32.mrf.mxu0
    %v5774 = vadd.f32 %v5754, %v5773
    %5775 = vmatmul.f32.gmra.mxu0 %v4589
    %v5776 = vpop.f32.mrf.mxu0
    %v5777 = vadd.f32 %v5754, %v5776
    %5778 = vdwg.mxu0
    %v5779 = vld [vmem:[%s47] sm:$0xff]
    %v5780 = vld [vmem:[%s47 + $0x8] sm:$0xff]
    %v5781 = vld [vmem:[%s47 + $0x10] sm:$0xff]
    %v5782 = vld [vmem:[%s47 + $0x18] sm:$0xff]
    %s5783 = scalar_lea.vmem %s47, 32
    %v5784 = vld [vmem:[%s5783] sm:$0xff]
    %v5785 = vld [vmem:[%s5783 + $0x8] sm:$0xff]
    %v5786 = vld [vmem:[%s5783 + $0x10] sm:$0xff]
    %v5787 = vld [vmem:[%s5783 + $0x18] sm:$0xff]
    %s5788 = scalar_lea.vmem %s47, 64
    %v5789 = vld [vmem:[%s5788] sm:$0xff]
    %v5790 = vld [vmem:[%s5788 + $0x8] sm:$0xff]
    %v5791 = vld [vmem:[%s5788 + $0x10] sm:$0xff]
    %v5792 = vld [vmem:[%s5788 + $0x18] sm:$0xff]
    %v5793 = vld [vmem:[%s51] sm:$0x1]
    %s5794 = scalar_lea.vmem %s51, 1
    %v5795 = vld [vmem:[%s5794] sm:$0x1]
    %s5796 = scalar_lea.vmem %s51, 2
    %v5797 = vld [vmem:[%s5796] sm:$0x1]
    %v5799 = vperm.slane %v5793, 0
    %v5802 = vsel %vm133, %v5669, 0
    %5804 = vmatpush.msra.mxu0 0.0
    %5805 = vmatpush.msra.mxu0 0.0
    %5806 = vmatpush.msra.mxu0 0.0
    %5807 = vmatpush.msra.mxu0 0.0
    %5808 = vmatpush.msra.mxu0 0.0
    %5809 = vmatpush.msra.mxu0 0.0
    %5810 = vmatpush.msra.mxu0 0.0
    %5811 = vmatpush.msra.mxu0 0.0
    %5812 = vmatpush.msra.mxu0 0.0
    %5813 = vmatpush.msra.mxu0 0.0
    %5814 = vmatpush.msra.mxu0 0.0
    %5815 = vmatpush.msra.mxu0 0.0
    %5816 = vmatpush.msra.mxu0 %v5782
    %5817 = vmatpush.msra.mxu0 %v5781
    %5818 = vmatpush.msra.mxu0 %v5780
    %5819 = vmatpush.msra.mxu0 %v5779
    %5820 = vmatmul.f32.gmra.mxu0 %v5802
    %v5821 = vpop.f32.mrf.mxu0
    %v5822 = vadd.f32 %v5799, %v5821
    %5823 = vdwg.mxu0
    %v5825 = vperm.slane %v5795, 0
    %5827 = vmatpush.msra.mxu0 0.0
    %5828 = vmatpush.msra.mxu0 0.0
    %5829 = vmatpush.msra.mxu0 0.0
    %5830 = vmatpush.msra.mxu0 0.0
    %5831 = vmatpush.msra.mxu0 0.0
    %5832 = vmatpush.msra.mxu0 0.0
    %5833 = vmatpush.msra.mxu0 0.0
    %5834 = vmatpush.msra.mxu0 0.0
    %5835 = vmatpush.msra.mxu0 0.0
    %5836 = vmatpush.msra.mxu0 0.0
    %5837 = vmatpush.msra.mxu0 0.0
    %5838 = vmatpush.msra.mxu0 0.0
    %5839 = vmatpush.msra.mxu0 %v5787
    %5840 = vmatpush.msra.mxu0 %v5786
    %5841 = vmatpush.msra.mxu0 %v5785
    %5842 = vmatpush.msra.mxu0 %v5784
    %5843 = vmatmul.f32.gmra.mxu0 %v5802
    %v5844 = vpop.f32.mrf.mxu0
    %v5845 = vadd.f32 %v5825, %v5844
    %5846 = vdwg.mxu0
    %v5848 = vperm.slane %v5797, 0
    %5850 = vmatpush.msra.mxu0 0.0
    %5851 = vmatpush.msra.mxu0 0.0
    %5852 = vmatpush.msra.mxu0 0.0
    %5853 = vmatpush.msra.mxu0 0.0
    %5854 = vmatpush.msra.mxu0 0.0
    %5855 = vmatpush.msra.mxu0 0.0
    %5856 = vmatpush.msra.mxu0 0.0
    %5857 = vmatpush.msra.mxu0 0.0
    %5858 = vmatpush.msra.mxu0 0.0
    %5859 = vmatpush.msra.mxu0 0.0
    %5860 = vmatpush.msra.mxu0 0.0
    %5861 = vmatpush.msra.mxu0 0.0
    %5862 = vmatpush.msra.mxu0 %v5792
    %5863 = vmatpush.msra.mxu0 %v5791
    %5864 = vmatpush.msra.mxu0 %v5790
    %5865 = vmatpush.msra.mxu0 %v5789
    %5866 = vmatmul.f32.gmra.mxu0 %v5802
    %v5867 = vpop.f32.mrf.mxu0
    %v5868 = vadd.f32 %v5848, %v5867
    %5869 = vdwg.mxu0
    %v5871 = vrot.slane %v5822, 2
    %v5873 = vadd.f32 %v5703, %v5871
    %v5874 = vxor.u32 %v5873, 2147483648
    %v5875 = vmul.f32 %v5874, 1.442695
    %v5876 = vpow.pop %v5875
    %v5877 = vadd.f32 %v5876, 1.0
    %v5878 = vrcp.pop %v5877
    %v5879 = vmul.f32 %v5877, %v5878
    %v5880 = vsub.f32 1.0, %v5879
    %v5881 = vmul.f32 %v5878, %v5880
    %v5882 = vadd.f32 %v5878, %v5881
    %vm5883 = vweird.f32 %v5877
    %vm5884 = vweird.f32 %v5878
    %vm5885 = vmor %vm5883, %vm5884
    %v5886 = vsel %vm5885, %v5878, %v5882
    %v5887 = vand.u32 2147483647, %v5877
    %vm5888 = vcmp.eq.f32.partialorder %v5887, 8.507059e+37
    %v5889 = vand.u32 %v5877, 2147483648
    %v5890 = vor.u32 1.1754944e-38, %v5889
    %v5891 = vsel %vm5888, %v5890, %v5886
    %v5892 = vmul.f32 1.0, %v5891
    %v5894 = vrot.slane %v5845, 2
    %v5896 = vadd.f32 %v5740, %v5894
    %v5897 = vxor.u32 %v5896, 2147483648
    %v5898 = vmul.f32 %v5897, 1.442695
    %v5899 = vpow.pop %v5898
    %v5900 = vadd.f32 %v5899, 1.0
    %v5901 = vrcp.pop %v5900
    %v5902 = vmul.f32 %v5900, %v5901
    %v5903 = vsub.f32 1.0, %v5902
    %v5904 = vmul.f32 %v5901, %v5903
    %v5905 = vadd.f32 %v5901, %v5904
    %vm5906 = vweird.f32 %v5900
    %vm5907 = vweird.f32 %v5901
    %vm5908 = vmor %vm5906, %vm5907
    %v5909 = vsel %vm5908, %v5901, %v5905
    %v5910 = vand.u32 2147483647, %v5900
    %vm5911 = vcmp.eq.f32.partialorder %v5910, 8.507059e+37
    %v5912 = vand.u32 %v5900, 2147483648
    %v5913 = vor.u32 1.1754944e-38, %v5912
    %v5914 = vsel %vm5911, %v5913, %v5909
    %v5915 = vmul.f32 1.0, %v5914
    %v5917 = vrot.slane %v5868, 2
    %v5919 = vmul.f32 %v5892, %v5917
    %v5920 = vadd.f32 %v5777, %v5919
    %v5921 = vtanh.pop %v5920
    %v5922 = vsub.f32 1.0, %v5915
    %v5923 = vmul.f32 %v5922, %v5921
    %v5924 = vrot.slane %v5669, 2
    %v5926 = vmul.f32 %v5915, %v5924
    %v5927 = vadd.f32 %v5923, %v5926
    %v5929 = vrot.slane %v5927, 6
    %v5930 = vsel %vm133, %v5929, 0
    %5932 = vmatpush.msra.mxu0 0.0
    %5933 = vmatpush.msra.mxu0 0.0
    %5934 = vmatpush.msra.mxu0 0.0
    %5935 = vmatpush.msra.mxu0 0.0
    %5936 = vmatpush.msra.mxu0 0.0
    %5937 = vmatpush.msra.mxu0 0.0
    %5938 = vmatpush.msra.mxu0 0.0
    %5939 = vmatpush.msra.mxu0 0.0
    %5940 = vmatpush.msra.mxu0 0.0
    %5941 = vmatpush.msra.mxu0 0.0
    %5942 = vmatpush.msra.mxu0 0.0
    %5943 = vmatpush.msra.mxu0 0.0
    %5944 = vmatpush.msra.mxu0 %v5782
    %5945 = vmatpush.msra.mxu0 %v5781
    %5946 = vmatpush.msra.mxu0 %v5780
    %5947 = vmatpush.msra.mxu0 %v5779
    %5948 = vmatmul.f32.gmra.mxu0 %v5930
    %v5949 = vpop.f32.mrf.mxu0
    %v5950 = vadd.f32 %v5799, %v5949
    %5951 = vdwg.mxu0
    %5952 = vmatpush.msra.mxu0 0.0
    %5953 = vmatpush.msra.mxu0 0.0
    %5954 = vmatpush.msra.mxu0 0.0
    %5955 = vmatpush.msra.mxu0 0.0
    %5956 = vmatpush.msra.mxu0 0.0
    %5957 = vmatpush.msra.mxu0 0.0
    %5958 = vmatpush.msra.mxu0 0.0
    %5959 = vmatpush.msra.mxu0 0.0
    %5960 = vmatpush.msra.mxu0 0.0
    %5961 = vmatpush.msra.mxu0 0.0
    %5962 = vmatpush.msra.mxu0 0.0
    %5963 = vmatpush.msra.mxu0 0.0
    %5964 = vmatpush.msra.mxu0 %v5787
    %5965 = vmatpush.msra.mxu0 %v5786
    %5966 = vmatpush.msra.mxu0 %v5785
    %5967 = vmatpush.msra.mxu0 %v5784
    %5968 = vmatmul.f32.gmra.mxu0 %v5930
    %v5969 = vpop.f32.mrf.mxu0
    %v5970 = vadd.f32 %v5825, %v5969
    %5971 = vdwg.mxu0
    %5972 = vmatpush.msra.mxu0 0.0
    %5973 = vmatpush.msra.mxu0 0.0
    %5974 = vmatpush.msra.mxu0 0.0
    %5975 = vmatpush.msra.mxu0 0.0
    %5976 = vmatpush.msra.mxu0 0.0
    %5977 = vmatpush.msra.mxu0 0.0
    %5978 = vmatpush.msra.mxu0 0.0
    %5979 = vmatpush.msra.mxu0 0.0
    %5980 = vmatpush.msra.mxu0 0.0
    %5981 = vmatpush.msra.mxu0 0.0
    %5982 = vmatpush.msra.mxu0 0.0
    %5983 = vmatpush.msra.mxu0 0.0
    %5984 = vmatpush.msra.mxu0 %v5792
    %5985 = vmatpush.msra.mxu0 %v5791
    %5986 = vmatpush.msra.mxu0 %v5790
    %5987 = vmatpush.msra.mxu0 %v5789
    %5988 = vmatmul.f32.gmra.mxu0 %v5930
    %v5989 = vpop.f32.mrf.mxu0
    %v5990 = vadd.f32 %v5848, %v5989
    %5991 = vdwg.mxu0
    %v5993 = vrot.slane %v5950, 4
    %v5995 = vadd.f32 %v5703, %v5993
    %v5996 = vxor.u32 %v5995, 2147483648
    %v5997 = vmul.f32 %v5996, 1.442695
    %v5998 = vpow.pop %v5997
    %v5999 = vadd.f32 %v5998, 1.0
    %v6000 = vrcp.pop %v5999
    %v6001 = vmul.f32 %v5999, %v6000
    %v6002 = vsub.f32 1.0, %v6001
    %v6003 = vmul.f32 %v6000, %v6002
    %v6004 = vadd.f32 %v6000, %v6003
    %vm6005 = vweird.f32 %v5999
    %vm6006 = vweird.f32 %v6000
    %vm6007 = vmor %vm6005, %vm6006
    %v6008 = vsel %vm6007, %v6000, %v6004
    %v6009 = vand.u32 2147483647, %v5999
    %vm6010 = vcmp.eq.f32.partialorder %v6009, 8.507059e+37
    %v6011 = vand.u32 %v5999, 2147483648
    %v6012 = vor.u32 1.1754944e-38, %v6011
    %v6013 = vsel %vm6010, %v6012, %v6008
    %v6014 = vmul.f32 1.0, %v6013
    %v6016 = vrot.slane %v5970, 4
    %v6018 = vadd.f32 %v5740, %v6016
    %v6019 = vxor.u32 %v6018, 2147483648
    %v6020 = vmul.f32 %v6019, 1.442695
    %v6021 = vpow.pop %v6020
    %v6022 = vadd.f32 %v6021, 1.0
    %v6023 = vrcp.pop %v6022
    %v6024 = vmul.f32 %v6022, %v6023
    %v6025 = vsub.f32 1.0, %v6024
    %v6026 = vmul.f32 %v6023, %v6025
    %v6027 = vadd.f32 %v6023, %v6026
    %vm6028 = vweird.f32 %v6022
    %vm6029 = vweird.f32 %v6023
    %vm6030 = vmor %vm6028, %vm6029
    %v6031 = vsel %vm6030, %v6023, %v6027
    %v6032 = vand.u32 2147483647, %v6022
    %vm6033 = vcmp.eq.f32.partialorder %v6032, 8.507059e+37
    %v6034 = vand.u32 %v6022, 2147483648
    %v6035 = vor.u32 1.1754944e-38, %v6034
    %v6036 = vsel %vm6033, %v6035, %v6031
    %v6037 = vmul.f32 1.0, %v6036
    %v6039 = vrot.slane %v5990, 4
    %v6041 = vmul.f32 %v6014, %v6039
    %v6042 = vadd.f32 %v5777, %v6041
    %v6043 = vtanh.pop %v6042
    %v6044 = vsub.f32 1.0, %v6037
    %v6045 = vmul.f32 %v6044, %v6043
    %v6046 = vrot.slane %v5927, 2
    %v6048 = vmul.f32 %v6037, %v6046
    %v6049 = vadd.f32 %v6045, %v6048
    %v6051 = vrot.slane %v6049, 4
    %v6052 = vsel %vm133, %v6051, 0
    %6054 = vmatpush.msra.mxu0 0.0
    %6055 = vmatpush.msra.mxu0 0.0
    %6056 = vmatpush.msra.mxu0 0.0
    %6057 = vmatpush.msra.mxu0 0.0
    %6058 = vmatpush.msra.mxu0 0.0
    %6059 = vmatpush.msra.mxu0 0.0
    %6060 = vmatpush.msra.mxu0 0.0
    %6061 = vmatpush.msra.mxu0 0.0
    %6062 = vmatpush.msra.mxu0 0.0
    %6063 = vmatpush.msra.mxu0 0.0
    %6064 = vmatpush.msra.mxu0 0.0
    %6065 = vmatpush.msra.mxu0 0.0
    %6066 = vmatpush.msra.mxu0 %v5782
    %6067 = vmatpush.msra.mxu0 %v5781
    %6068 = vmatpush.msra.mxu0 %v5780
    %6069 = vmatpush.msra.mxu0 %v5779
    %6070 = vmatmul.f32.gmra.mxu0 %v6052
    %v6071 = vpop.f32.mrf.mxu0
    %v6072 = vadd.f32 %v5799, %v6071
    %6073 = vdwg.mxu0
    %6074 = vmatpush.msra.mxu0 0.0
    %6075 = vmatpush.msra.mxu0 0.0
    %6076 = vmatpush.msra.mxu0 0.0
    %6077 = vmatpush.msra.mxu0 0.0
    %6078 = vmatpush.msra.mxu0 0.0
    %6079 = vmatpush.msra.mxu0 0.0
    %6080 = vmatpush.msra.mxu0 0.0
    %6081 = vmatpush.msra.mxu0 0.0
    %6082 = vmatpush.msra.mxu0 0.0
    %6083 = vmatpush.msra.mxu0 0.0
    %6084 = vmatpush.msra.mxu0 0.0
    %6085 = vmatpush.msra.mxu0 0.0
    %6086 = vmatpush.msra.mxu0 %v5787
    %6087 = vmatpush.msra.mxu0 %v5786
    %6088 = vmatpush.msra.mxu0 %v5785
    %6089 = vmatpush.msra.mxu0 %v5784
    %6090 = vmatmul.f32.gmra.mxu0 %v6052
    %v6091 = vpop.f32.mrf.mxu0
    %v6092 = vadd.f32 %v5825, %v6091
    %6093 = vdwg.mxu0
    %6094 = vmatpush.msra.mxu0 0.0
    %6095 = vmatpush.msra.mxu0 0.0
    %6096 = vmatpush.msra.mxu0 0.0
    %6097 = vmatpush.msra.mxu0 0.0
    %6098 = vmatpush.msra.mxu0 0.0
    %6099 = vmatpush.msra.mxu0 0.0
    %6100 = vmatpush.msra.mxu0 0.0
    %6101 = vmatpush.msra.mxu0 0.0
    %6102 = vmatpush.msra.mxu0 0.0
    %6103 = vmatpush.msra.mxu0 0.0
    %6104 = vmatpush.msra.mxu0 0.0
    %6105 = vmatpush.msra.mxu0 0.0
    %6106 = vmatpush.msra.mxu0 %v5792
    %6107 = vmatpush.msra.mxu0 %v5791
    %6108 = vmatpush.msra.mxu0 %v5790
    %6109 = vmatpush.msra.mxu0 %v5789
    %6110 = vmatmul.f32.gmra.mxu0 %v6052
    %v6111 = vpop.f32.mrf.mxu0
    %v6112 = vadd.f32 %v5848, %v6111
    %6113 = vdwg.mxu0
    %v6115 = vrot.slane %v6072, 6
    %v6117 = vadd.f32 %v5703, %v6115
    %v6118 = vxor.u32 %v6117, 2147483648
    %v6119 = vmul.f32 %v6118, 1.442695
    %v6120 = vpow.pop %v6119
    %v6121 = vadd.f32 %v6120, 1.0
    %v6122 = vrcp.pop %v6121
    %v6123 = vmul.f32 %v6121, %v6122
    %v6124 = vsub.f32 1.0, %v6123
    %v6125 = vmul.f32 %v6122, %v6124
    %v6126 = vadd.f32 %v6122, %v6125
    %vm6127 = vweird.f32 %v6121
    %vm6128 = vweird.f32 %v6122
    %vm6129 = vmor %vm6127, %vm6128
    %v6130 = vsel %vm6129, %v6122, %v6126
    %v6131 = vand.u32 2147483647, %v6121
    %vm6132 = vcmp.eq.f32.partialorder %v6131, 8.507059e+37
    %v6133 = vand.u32 %v6121, 2147483648
    %v6134 = vor.u32 1.1754944e-38, %v6133
    %v6135 = vsel %vm6132, %v6134, %v6130
    %v6136 = vmul.f32 1.0, %v6135
    %v6138 = vrot.slane %v6092, 6
    %v6140 = vadd.f32 %v5740, %v6138
    %v6141 = vxor.u32 %v6140, 2147483648
    %v6142 = vmul.f32 %v6141, 1.442695
    %v6143 = vpow.pop %v6142
    %v6144 = vadd.f32 %v6143, 1.0
    %v6145 = vrcp.pop %v6144
    %v6146 = vmul.f32 %v6144, %v6145
    %v6147 = vsub.f32 1.0, %v6146
    %v6148 = vmul.f32 %v6145, %v6147
    %v6149 = vadd.f32 %v6145, %v6148
    %vm6150 = vweird.f32 %v6144
    %vm6151 = vweird.f32 %v6145
    %vm6152 = vmor %vm6150, %vm6151
    %v6153 = vsel %vm6152, %v6145, %v6149
    %v6154 = vand.u32 2147483647, %v6144
    %vm6155 = vcmp.eq.f32.partialorder %v6154, 8.507059e+37
    %v6156 = vand.u32 %v6144, 2147483648
    %v6157 = vor.u32 1.1754944e-38, %v6156
    %v6158 = vsel %vm6155, %v6157, %v6153
    %v6159 = vmul.f32 1.0, %v6158
    %v6161 = vrot.slane %v6112, 6
    %v6163 = vmul.f32 %v6136, %v6161
    %v6164 = vadd.f32 %v5777, %v6163
    %v6165 = vtanh.pop %v6164
    %v6166 = vsub.f32 1.0, %v6159
    %v6167 = vmul.f32 %v6166, %v6165
    %v6168 = vrot.slane %v6049, 2
    %v6170 = vmul.f32 %v6159, %v6168
    %v6171 = vadd.f32 %v6167, %v6170
    %v6173 = vrot.slane %v6171, 2
    %v6174 = vsel %vm133, %v6173, 0
    %6176 = vmatpush.msra.mxu0 0.0
    %6177 = vmatpush.msra.mxu0 0.0
    %6178 = vmatpush.msra.mxu0 0.0
    %6179 = vmatpush.msra.mxu0 0.0
    %6180 = vmatpush.msra.mxu0 0.0
    %6181 = vmatpush.msra.mxu0 0.0
    %6182 = vmatpush.msra.mxu0 0.0
    %6183 = vmatpush.msra.mxu0 0.0
    %6184 = vmatpush.msra.mxu0 0.0
    %6185 = vmatpush.msra.mxu0 0.0
    %6186 = vmatpush.msra.mxu0 0.0
    %6187 = vmatpush.msra.mxu0 0.0
    %6188 = vmatpush.msra.mxu0 %v5782
    %6189 = vmatpush.msra.mxu0 %v5781
    %6190 = vmatpush.msra.mxu0 %v5780
    %6191 = vmatpush.msra.mxu0 %v5779
    %6192 = vmatmul.f32.gmra.mxu0 %v6174
    %v6193 = vpop.f32.mrf.mxu0
    %v6194 = vadd.f32 %v5799, %v6193
    %6195 = vdwg.mxu0
    %6196 = vmatpush.msra.mxu0 0.0
    %6197 = vmatpush.msra.mxu0 0.0
    %6198 = vmatpush.msra.mxu0 0.0
    %6199 = vmatpush.msra.mxu0 0.0
    %6200 = vmatpush.msra.mxu0 0.0
    %6201 = vmatpush.msra.mxu0 0.0
    %6202 = vmatpush.msra.mxu0 0.0
    %6203 = vmatpush.msra.mxu0 0.0
    %6204 = vmatpush.msra.mxu0 0.0
    %6205 = vmatpush.msra.mxu0 0.0
    %6206 = vmatpush.msra.mxu0 0.0
    %6207 = vmatpush.msra.mxu0 0.0
    %6208 = vmatpush.msra.mxu0 %v5787
    %6209 = vmatpush.msra.mxu0 %v5786
    %6210 = vmatpush.msra.mxu0 %v5785
    %6211 = vmatpush.msra.mxu0 %v5784
    %6212 = vmatmul.f32.gmra.mxu0 %v6174
    %v6213 = vpop.f32.mrf.mxu0
    %v6214 = vadd.f32 %v5825, %v6213
    %6215 = vdwg.mxu0
    %6216 = vmatpush.msra.mxu0 0.0
    %6217 = vmatpush.msra.mxu0 0.0
    %6218 = vmatpush.msra.mxu0 0.0
    %6219 = vmatpush.msra.mxu0 0.0
    %6220 = vmatpush.msra.mxu0 0.0
    %6221 = vmatpush.msra.mxu0 0.0
    %6222 = vmatpush.msra.mxu0 0.0
    %6223 = vmatpush.msra.mxu0 0.0
    %6224 = vmatpush.msra.mxu0 0.0
    %6225 = vmatpush.msra.mxu0 0.0
    %6226 = vmatpush.msra.mxu0 0.0
    %6227 = vmatpush.msra.mxu0 0.0
    %6228 = vmatpush.msra.mxu0 %v5792
    %6229 = vmatpush.msra.mxu0 %v5791
    %6230 = vmatpush.msra.mxu0 %v5790
    %6231 = vmatpush.msra.mxu0 %v5789
    %6232 = vmatmul.f32.gmra.mxu0 %v6174
    %v6233 = vpop.f32.mrf.mxu0
    %v6234 = vadd.f32 %v5848, %v6233
    %6235 = vdwg.mxu0
    %v6236 = vadd.f32 %v5703, %v6194
    %v6237 = vxor.u32 %v6236, 2147483648
    %v6238 = vmul.f32 %v6237, 1.442695
    %v6239 = vpow.pop %v6238
    %v6240 = vadd.f32 %v6239, 1.0
    %v6241 = vrcp.pop %v6240
    %v6242 = vmul.f32 %v6240, %v6241
    %v6243 = vsub.f32 1.0, %v6242
    %v6244 = vmul.f32 %v6241, %v6243
    %v6245 = vadd.f32 %v6241, %v6244
    %vm6246 = vweird.f32 %v6240
    %vm6247 = vweird.f32 %v6241
    %vm6248 = vmor %vm6246, %vm6247
    %v6249 = vsel %vm6248, %v6241, %v6245
    %v6250 = vand.u32 2147483647, %v6240
    %vm6251 = vcmp.eq.f32.partialorder %v6250, 8.507059e+37
    %v6252 = vand.u32 %v6240, 2147483648
    %v6253 = vor.u32 1.1754944e-38, %v6252
    %v6254 = vsel %vm6251, %v6253, %v6249
    %v6255 = vmul.f32 1.0, %v6254
    %v6256 = vadd.f32 %v5740, %v6214
    %v6257 = vxor.u32 %v6256, 2147483648
    %v6258 = vmul.f32 %v6257, 1.442695
    %v6259 = vpow.pop %v6258
    %v6260 = vadd.f32 %v6259, 1.0
    %v6261 = vrcp.pop %v6260
    %v6262 = vmul.f32 %v6260, %v6261
    %v6263 = vsub.f32 1.0, %v6262
    %v6264 = vmul.f32 %v6261, %v6263
    %v6265 = vadd.f32 %v6261, %v6264
    %vm6266 = vweird.f32 %v6260
    %vm6267 = vweird.f32 %v6261
    %vm6268 = vmor %vm6266, %vm6267
    %v6269 = vsel %vm6268, %v6261, %v6265
    %v6270 = vand.u32 2147483647, %v6260
    %vm6271 = vcmp.eq.f32.partialorder %v6270, 8.507059e+37
    %v6272 = vand.u32 %v6260, 2147483648
    %v6273 = vor.u32 1.1754944e-38, %v6272
    %v6274 = vsel %vm6271, %v6273, %v6269
    %v6275 = vmul.f32 1.0, %v6274
    %v6276 = vmul.f32 %v6255, %v6234
    %v6277 = vadd.f32 %v5777, %v6276
    %v6278 = vtanh.pop %v6277
    %v6279 = vsub.f32 1.0, %v6275
    %v6280 = vmul.f32 %v6279, %v6278
    %v6282 = vmul.f32 %v6275, %v6173
    %v6283 = vadd.f32 %v6280, %v6282
    %v6285 = vsel %vm133, %v6283, 0
    %6287 = vmatpush.msra.mxu0 0.0
    %6288 = vmatpush.msra.mxu0 0.0
    %6289 = vmatpush.msra.mxu0 0.0
    %6290 = vmatpush.msra.mxu0 0.0
    %6291 = vmatpush.msra.mxu0 0.0
    %6292 = vmatpush.msra.mxu0 0.0
    %6293 = vmatpush.msra.mxu0 0.0
    %6294 = vmatpush.msra.mxu0 0.0
    %6295 = vmatpush.msra.mxu0 0.0
    %6296 = vmatpush.msra.mxu0 0.0
    %6297 = vmatpush.msra.mxu0 0.0
    %6298 = vmatpush.msra.mxu0 0.0
    %6299 = vmatpush.msra.mxu0 %v5782
    %6300 = vmatpush.msra.mxu0 %v5781
    %6301 = vmatpush.msra.mxu0 %v5780
    %6302 = vmatpush.msra.mxu0 %v5779
    %6303 = vmatmul.f32.gmra.mxu0 %v6285
    %v6304 = vpop.f32.mrf.mxu0
    %v6305 = vadd.f32 %v5799, %v6304
    %6306 = vdwg.mxu0
    %6307 = vmatpush.msra.mxu0 0.0
    %6308 = vmatpush.msra.mxu0 0.0
    %6309 = vmatpush.msra.mxu0 0.0
    %6310 = vmatpush.msra.mxu0 0.0
    %6311 = vmatpush.msra.mxu0 0.0
    %6312 = vmatpush.msra.mxu0 0.0
    %6313 = vmatpush.msra.mxu0 0.0
    %6314 = vmatpush.msra.mxu0 0.0
    %6315 = vmatpush.msra.mxu0 0.0
    %6316 = vmatpush.msra.mxu0 0.0
    %6317 = vmatpush.msra.mxu0 0.0
    %6318 = vmatpush.msra.mxu0 0.0
    %6319 = vmatpush.msra.mxu0 %v5787
    %6320 = vmatpush.msra.mxu0 %v5786
    %6321 = vmatpush.msra.mxu0 %v5785
    %6322 = vmatpush.msra.mxu0 %v5784
    %6323 = vmatmul.f32.gmra.mxu0 %v6285
    %v6324 = vpop.f32.mrf.mxu0
    %v6325 = vadd.f32 %v5825, %v6324
    %6326 = vdwg.mxu0
    %6327 = vmatpush.msra.mxu0 0.0
    %6328 = vmatpush.msra.mxu0 0.0
    %6329 = vmatpush.msra.mxu0 0.0
    %6330 = vmatpush.msra.mxu0 0.0
    %6331 = vmatpush.msra.mxu0 0.0
    %6332 = vmatpush.msra.mxu0 0.0
    %6333 = vmatpush.msra.mxu0 0.0
    %6334 = vmatpush.msra.mxu0 0.0
    %6335 = vmatpush.msra.mxu0 0.0
    %6336 = vmatpush.msra.mxu0 0.0
    %6337 = vmatpush.msra.mxu0 0.0
    %6338 = vmatpush.msra.mxu0 0.0
    %6339 = vmatpush.msra.mxu0 %v5792
    %6340 = vmatpush.msra.mxu0 %v5791
    %6341 = vmatpush.msra.mxu0 %v5790
    %6342 = vmatpush.msra.mxu0 %v5789
    %6343 = vmatmul.f32.gmra.mxu0 %v6285
    %v6344 = vpop.f32.mrf.mxu0
    %v6345 = vadd.f32 %v5848, %v6344
    %6346 = vdwg.mxu0
    %v6348 = vrot.slane %v6305, 2
    %v6350 = vadd.f32 %v5700, %v6348
    %v6351 = vxor.u32 %v6350, 2147483648
    %v6352 = vmul.f32 %v6351, 1.442695
    %v6353 = vpow.pop %v6352
    %v6354 = vadd.f32 %v6353, 1.0
    %v6355 = vrcp.pop %v6354
    %v6356 = vmul.f32 %v6354, %v6355
    %v6357 = vsub.f32 1.0, %v6356
    %v6358 = vmul.f32 %v6355, %v6357
    %v6359 = vadd.f32 %v6355, %v6358
    %vm6360 = vweird.f32 %v6354
    %vm6361 = vweird.f32 %v6355
    %vm6362 = vmor %vm6360, %vm6361
    %v6363 = vsel %vm6362, %v6355, %v6359
    %v6364 = vand.u32 2147483647, %v6354
    %vm6365 = vcmp.eq.f32.partialorder %v6364, 8.507059e+37
    %v6366 = vand.u32 %v6354, 2147483648
    %v6367 = vor.u32 1.1754944e-38, %v6366
    %v6368 = vsel %vm6365, %v6367, %v6363
    %v6369 = vmul.f32 1.0, %v6368
    %v6371 = vrot.slane %v6325, 2
    %v6373 = vadd.f32 %v5737, %v6371
    %v6374 = vxor.u32 %v6373, 2147483648
    %v6375 = vmul.f32 %v6374, 1.442695
    %v6376 = vpow.pop %v6375
    %v6377 = vadd.f32 %v6376, 1.0
    %v6378 = vrcp.pop %v6377
    %v6379 = vmul.f32 %v6377, %v6378
    %v6380 = vsub.f32 1.0, %v6379
    %v6381 = vmul.f32 %v6378, %v6380
    %v6382 = vadd.f32 %v6378, %v6381
    %vm6383 = vweird.f32 %v6377
    %vm6384 = vweird.f32 %v6378
    %vm6385 = vmor %vm6383, %vm6384
    %v6386 = vsel %vm6385, %v6378, %v6382
    %v6387 = vand.u32 2147483647, %v6377
    %vm6388 = vcmp.eq.f32.partialorder %v6387, 8.507059e+37
    %v6389 = vand.u32 %v6377, 2147483648
    %v6390 = vor.u32 1.1754944e-38, %v6389
    %v6391 = vsel %vm6388, %v6390, %v6386
    %v6392 = vmul.f32 1.0, %v6391
    %v6394 = vrot.slane %v6345, 2
    %v6396 = vmul.f32 %v6369, %v6394
    %v6397 = vadd.f32 %v5774, %v6396
    %v6398 = vtanh.pop %v6397
    %v6399 = vsub.f32 1.0, %v6392
    %v6400 = vmul.f32 %v6399, %v6398
    %v6401 = vrot.slane %v6283, 2
    %v6403 = vmul.f32 %v6392, %v6401
    %v6404 = vadd.f32 %v6400, %v6403
    %v6406 = vrot.slane %v6404, 6
    %v6407 = vsel %vm133, %v6406, 0
    %6409 = vmatpush.msra.mxu0 0.0
    %6410 = vmatpush.msra.mxu0 0.0
    %6411 = vmatpush.msra.mxu0 0.0
    %6412 = vmatpush.msra.mxu0 0.0
    %6413 = vmatpush.msra.mxu0 0.0
    %6414 = vmatpush.msra.mxu0 0.0
    %6415 = vmatpush.msra.mxu0 0.0
    %6416 = vmatpush.msra.mxu0 0.0
    %6417 = vmatpush.msra.mxu0 0.0
    %6418 = vmatpush.msra.mxu0 0.0
    %6419 = vmatpush.msra.mxu0 0.0
    %6420 = vmatpush.msra.mxu0 0.0
    %6421 = vmatpush.msra.mxu0 %v5782
    %6422 = vmatpush.msra.mxu0 %v5781
    %6423 = vmatpush.msra.mxu0 %v5780
    %6424 = vmatpush.msra.mxu0 %v5779
    %6425 = vmatmul.f32.gmra.mxu0 %v6407
    %v6426 = vpop.f32.mrf.mxu0
    %v6427 = vadd.f32 %v5799, %v6426
    %6428 = vdwg.mxu0
    %6429 = vmatpush.msra.mxu0 0.0
    %6430 = vmatpush.msra.mxu0 0.0
    %6431 = vmatpush.msra.mxu0 0.0
    %6432 = vmatpush.msra.mxu0 0.0
    %6433 = vmatpush.msra.mxu0 0.0
    %6434 = vmatpush.msra.mxu0 0.0
    %6435 = vmatpush.msra.mxu0 0.0
    %6436 = vmatpush.msra.mxu0 0.0
    %6437 = vmatpush.msra.mxu0 0.0
    %6438 = vmatpush.msra.mxu0 0.0
    %6439 = vmatpush.msra.mxu0 0.0
    %6440 = vmatpush.msra.mxu0 0.0
    %6441 = vmatpush.msra.mxu0 %v5787
    %6442 = vmatpush.msra.mxu0 %v5786
    %6443 = vmatpush.msra.mxu0 %v5785
    %6444 = vmatpush.msra.mxu0 %v5784
    %6445 = vmatmul.f32.gmra.mxu0 %v6407
    %v6446 = vpop.f32.mrf.mxu0
    %v6447 = vadd.f32 %v5825, %v6446
    %6448 = vdwg.mxu0
    %6449 = vmatpush.msra.mxu0 0.0
    %6450 = vmatpush.msra.mxu0 0.0
    %6451 = vmatpush.msra.mxu0 0.0
    %6452 = vmatpush.msra.mxu0 0.0
    %6453 = vmatpush.msra.mxu0 0.0
    %6454 = vmatpush.msra.mxu0 0.0
    %6455 = vmatpush.msra.mxu0 0.0
    %6456 = vmatpush.msra.mxu0 0.0
    %6457 = vmatpush.msra.mxu0 0.0
    %6458 = vmatpush.msra.mxu0 0.0
    %6459 = vmatpush.msra.mxu0 0.0
    %6460 = vmatpush.msra.mxu0 0.0
    %6461 = vmatpush.msra.mxu0 %v5792
    %6462 = vmatpush.msra.mxu0 %v5791
    %6463 = vmatpush.msra.mxu0 %v5790
    %6464 = vmatpush.msra.mxu0 %v5789
    %6465 = vmatmul.f32.gmra.mxu0 %v6407
    %v6466 = vpop.f32.mrf.mxu0
    %v6467 = vadd.f32 %v5848, %v6466
    %6468 = vdwg.mxu0
    %v6470 = vrot.slane %v6427, 4
    %v6472 = vadd.f32 %v5700, %v6470
    %v6473 = vxor.u32 %v6472, 2147483648
    %v6474 = vmul.f32 %v6473, 1.442695
    %v6475 = vpow.pop %v6474
    %v6476 = vadd.f32 %v6475, 1.0
    %v6477 = vrcp.pop %v6476
    %v6478 = vmul.f32 %v6476, %v6477
    %v6479 = vsub.f32 1.0, %v6478
    %v6480 = vmul.f32 %v6477, %v6479
    %v6481 = vadd.f32 %v6477, %v6480
    %vm6482 = vweird.f32 %v6476
    %vm6483 = vweird.f32 %v6477
    %vm6484 = vmor %vm6482, %vm6483
    %v6485 = vsel %vm6484, %v6477, %v6481
    %v6486 = vand.u32 2147483647, %v6476
    %vm6487 = vcmp.eq.f32.partialorder %v6486, 8.507059e+37
    %v6488 = vand.u32 %v6476, 2147483648
    %v6489 = vor.u32 1.1754944e-38, %v6488
    %v6490 = vsel %vm6487, %v6489, %v6485
    %v6491 = vmul.f32 1.0, %v6490
    %v6493 = vrot.slane %v6447, 4
    %v6495 = vadd.f32 %v5737, %v6493
    %v6496 = vxor.u32 %v6495, 2147483648
    %v6497 = vmul.f32 %v6496, 1.442695
    %v6498 = vpow.pop %v6497
    %v6499 = vadd.f32 %v6498, 1.0
    %v6500 = vrcp.pop %v6499
    %v6501 = vmul.f32 %v6499, %v6500
    %v6502 = vsub.f32 1.0, %v6501
    %v6503 = vmul.f32 %v6500, %v6502
    %v6504 = vadd.f32 %v6500, %v6503
    %vm6505 = vweird.f32 %v6499
    %vm6506 = vweird.f32 %v6500
    %vm6507 = vmor %vm6505, %vm6506
    %v6508 = vsel %vm6507, %v6500, %v6504
    %v6509 = vand.u32 2147483647, %v6499
    %vm6510 = vcmp.eq.f32.partialorder %v6509, 8.507059e+37
    %v6511 = vand.u32 %v6499, 2147483648
    %v6512 = vor.u32 1.1754944e-38, %v6511
    %v6513 = vsel %vm6510, %v6512, %v6508
    %v6514 = vmul.f32 1.0, %v6513
    %v6516 = vrot.slane %v6467, 4
    %v6518 = vmul.f32 %v6491, %v6516
    %v6519 = vadd.f32 %v5774, %v6518
    %v6520 = vtanh.pop %v6519
    %v6521 = vsub.f32 1.0, %v6514
    %v6522 = vmul.f32 %v6521, %v6520
    %v6523 = vrot.slane %v6404, 2
    %v6525 = vmul.f32 %v6514, %v6523
    %v6526 = vadd.f32 %v6522, %v6525
    %v6528 = vrot.slane %v6526, 4
    %v6529 = vsel %vm133, %v6528, 0
    %6531 = vmatpush.msra.mxu0 0.0
    %6532 = vmatpush.msra.mxu0 0.0
    %6533 = vmatpush.msra.mxu0 0.0
    %6534 = vmatpush.msra.mxu0 0.0
    %6535 = vmatpush.msra.mxu0 0.0
    %6536 = vmatpush.msra.mxu0 0.0
    %6537 = vmatpush.msra.mxu0 0.0
    %6538 = vmatpush.msra.mxu0 0.0
    %6539 = vmatpush.msra.mxu0 0.0
    %6540 = vmatpush.msra.mxu0 0.0
    %6541 = vmatpush.msra.mxu0 0.0
    %6542 = vmatpush.msra.mxu0 0.0
    %6543 = vmatpush.msra.mxu0 %v5782
    %6544 = vmatpush.msra.mxu0 %v5781
    %6545 = vmatpush.msra.mxu0 %v5780
    %6546 = vmatpush.msra.mxu0 %v5779
    %6547 = vmatmul.f32.gmra.mxu0 %v6529
    %v6548 = vpop.f32.mrf.mxu0
    %v6549 = vadd.f32 %v5799, %v6548
    %6550 = vdwg.mxu0
    %6551 = vmatpush.msra.mxu0 0.0
    %6552 = vmatpush.msra.mxu0 0.0
    %6553 = vmatpush.msra.mxu0 0.0
    %6554 = vmatpush.msra.mxu0 0.0
    %6555 = vmatpush.msra.mxu0 0.0
    %6556 = vmatpush.msra.mxu0 0.0
    %6557 = vmatpush.msra.mxu0 0.0
    %6558 = vmatpush.msra.mxu0 0.0
    %6559 = vmatpush.msra.mxu0 0.0
    %6560 = vmatpush.msra.mxu0 0.0
    %6561 = vmatpush.msra.mxu0 0.0
    %6562 = vmatpush.msra.mxu0 0.0
    %6563 = vmatpush.msra.mxu0 %v5787
    %6564 = vmatpush.msra.mxu0 %v5786
    %6565 = vmatpush.msra.mxu0 %v5785
    %6566 = vmatpush.msra.mxu0 %v5784
    %6567 = vmatmul.f32.gmra.mxu0 %v6529
    %v6568 = vpop.f32.mrf.mxu0
    %v6569 = vadd.f32 %v5825, %v6568
    %6570 = vdwg.mxu0
    %6571 = vmatpush.msra.mxu0 0.0
    %6572 = vmatpush.msra.mxu0 0.0
    %6573 = vmatpush.msra.mxu0 0.0
    %6574 = vmatpush.msra.mxu0 0.0
    %6575 = vmatpush.msra.mxu0 0.0
    %6576 = vmatpush.msra.mxu0 0.0
    %6577 = vmatpush.msra.mxu0 0.0
    %6578 = vmatpush.msra.mxu0 0.0
    %6579 = vmatpush.msra.mxu0 0.0
    %6580 = vmatpush.msra.mxu0 0.0
    %6581 = vmatpush.msra.mxu0 0.0
    %6582 = vmatpush.msra.mxu0 0.0
    %6583 = vmatpush.msra.mxu0 %v5792
    %6584 = vmatpush.msra.mxu0 %v5791
    %6585 = vmatpush.msra.mxu0 %v5790
    %6586 = vmatpush.msra.mxu0 %v5789
    %6587 = vmatmul.f32.gmra.mxu0 %v6529
    %v6588 = vpop.f32.mrf.mxu0
    %v6589 = vadd.f32 %v5848, %v6588
    %6590 = vdwg.mxu0
    %v6592 = vrot.slane %v6549, 6
    %v6594 = vadd.f32 %v5700, %v6592
    %v6595 = vxor.u32 %v6594, 2147483648
    %v6596 = vmul.f32 %v6595, 1.442695
    %v6597 = vpow.pop %v6596
    %v6598 = vadd.f32 %v6597, 1.0
    %v6599 = vrcp.pop %v6598
    %v6600 = vmul.f32 %v6598, %v6599
    %v6601 = vsub.f32 1.0, %v6600
    %v6602 = vmul.f32 %v6599, %v6601
    %v6603 = vadd.f32 %v6599, %v6602
    %vm6604 = vweird.f32 %v6598
    %vm6605 = vweird.f32 %v6599
    %vm6606 = vmor %vm6604, %vm6605
    %v6607 = vsel %vm6606, %v6599, %v6603
    %v6608 = vand.u32 2147483647, %v6598
    %vm6609 = vcmp.eq.f32.partialorder %v6608, 8.507059e+37
    %v6610 = vand.u32 %v6598, 2147483648
    %v6611 = vor.u32 1.1754944e-38, %v6610
    %v6612 = vsel %vm6609, %v6611, %v6607
    %v6613 = vmul.f32 1.0, %v6612
    %v6615 = vrot.slane %v6569, 6
    %v6617 = vadd.f32 %v5737, %v6615
    %v6618 = vxor.u32 %v6617, 2147483648
    %v6619 = vmul.f32 %v6618, 1.442695
    %v6620 = vpow.pop %v6619
    %v6621 = vadd.f32 %v6620, 1.0
    %v6622 = vrcp.pop %v6621
    %v6623 = vmul.f32 %v6621, %v6622
    %v6624 = vsub.f32 1.0, %v6623
    %v6625 = vmul.f32 %v6622, %v6624
    %v6626 = vadd.f32 %v6622, %v6625
    %vm6627 = vweird.f32 %v6621
    %vm6628 = vweird.f32 %v6622
    %vm6629 = vmor %vm6627, %vm6628
    %v6630 = vsel %vm6629, %v6622, %v6626
    %v6631 = vand.u32 2147483647, %v6621
    %vm6632 = vcmp.eq.f32.partialorder %v6631, 8.507059e+37
    %v6633 = vand.u32 %v6621, 2147483648
    %v6634 = vor.u32 1.1754944e-38, %v6633
    %v6635 = vsel %vm6632, %v6634, %v6630
    %v6636 = vmul.f32 1.0, %v6635
    %v6638 = vrot.slane %v6589, 6
    %v6640 = vmul.f32 %v6613, %v6638
    %v6641 = vadd.f32 %v5774, %v6640
    %v6642 = vtanh.pop %v6641
    %v6643 = vsub.f32 1.0, %v6636
    %v6644 = vmul.f32 %v6643, %v6642
    %v6645 = vrot.slane %v6526, 2
    %v6647 = vmul.f32 %v6636, %v6645
    %v6648 = vadd.f32 %v6644, %v6647
    %v6650 = vrot.slane %v6648, 2
    %v6651 = vsel %vm133, %v6650, 0
    %6653 = vmatpush.msra.mxu0 0.0
    %6654 = vmatpush.msra.mxu0 0.0
    %6655 = vmatpush.msra.mxu0 0.0
    %6656 = vmatpush.msra.mxu0 0.0
    %6657 = vmatpush.msra.mxu0 0.0
    %6658 = vmatpush.msra.mxu0 0.0
    %6659 = vmatpush.msra.mxu0 0.0
    %6660 = vmatpush.msra.mxu0 0.0
    %6661 = vmatpush.msra.mxu0 0.0
    %6662 = vmatpush.msra.mxu0 0.0
    %6663 = vmatpush.msra.mxu0 0.0
    %6664 = vmatpush.msra.mxu0 0.0
    %6665 = vmatpush.msra.mxu0 %v5782
    %6666 = vmatpush.msra.mxu0 %v5781
    %6667 = vmatpush.msra.mxu0 %v5780
    %6668 = vmatpush.msra.mxu0 %v5779
    %6669 = vmatmul.f32.gmra.mxu0 %v6651
    %v6670 = vpop.f32.mrf.mxu0
    %v6671 = vadd.f32 %v5799, %v6670
    %6672 = vdwg.mxu0
    %6673 = vmatpush.msra.mxu0 0.0
    %6674 = vmatpush.msra.mxu0 0.0
    %6675 = vmatpush.msra.mxu0 0.0
    %6676 = vmatpush.msra.mxu0 0.0
    %6677 = vmatpush.msra.mxu0 0.0
    %6678 = vmatpush.msra.mxu0 0.0
    %6679 = vmatpush.msra.mxu0 0.0
    %6680 = vmatpush.msra.mxu0 0.0
    %6681 = vmatpush.msra.mxu0 0.0
    %6682 = vmatpush.msra.mxu0 0.0
    %6683 = vmatpush.msra.mxu0 0.0
    %6684 = vmatpush.msra.mxu0 0.0
    %6685 = vmatpush.msra.mxu0 %v5787
    %6686 = vmatpush.msra.mxu0 %v5786
    %6687 = vmatpush.msra.mxu0 %v5785
    %6688 = vmatpush.msra.mxu0 %v5784
    %6689 = vmatmul.f32.gmra.mxu0 %v6651
    %v6690 = vpop.f32.mrf.mxu0
    %v6691 = vadd.f32 %v5825, %v6690
    %6692 = vdwg.mxu0
    %6693 = vmatpush.msra.mxu0 0.0
    %6694 = vmatpush.msra.mxu0 0.0
    %6695 = vmatpush.msra.mxu0 0.0
    %6696 = vmatpush.msra.mxu0 0.0
    %6697 = vmatpush.msra.mxu0 0.0
    %6698 = vmatpush.msra.mxu0 0.0
    %6699 = vmatpush.msra.mxu0 0.0
    %6700 = vmatpush.msra.mxu0 0.0
    %6701 = vmatpush.msra.mxu0 0.0
    %6702 = vmatpush.msra.mxu0 0.0
    %6703 = vmatpush.msra.mxu0 0.0
    %6704 = vmatpush.msra.mxu0 0.0
    %6705 = vmatpush.msra.mxu0 %v5792
    %6706 = vmatpush.msra.mxu0 %v5791
    %6707 = vmatpush.msra.mxu0 %v5790
    %6708 = vmatpush.msra.mxu0 %v5789
    %6709 = vmatmul.f32.gmra.mxu0 %v6651
    %v6710 = vpop.f32.mrf.mxu0
    %v6711 = vadd.f32 %v5848, %v6710
    %6712 = vdwg.mxu0
    %v6713 = vadd.f32 %v5700, %v6671
    %v6714 = vxor.u32 %v6713, 2147483648
    %v6715 = vmul.f32 %v6714, 1.442695
    %v6716 = vpow.pop %v6715
    %v6717 = vadd.f32 %v6716, 1.0
    %v6718 = vrcp.pop %v6717
    %v6719 = vmul.f32 %v6717, %v6718
    %v6720 = vsub.f32 1.0, %v6719
    %v6721 = vmul.f32 %v6718, %v6720
    %v6722 = vadd.f32 %v6718, %v6721
    %vm6723 = vweird.f32 %v6717
    %vm6724 = vweird.f32 %v6718
    %vm6725 = vmor %vm6723, %vm6724
    %v6726 = vsel %vm6725, %v6718, %v6722
    %v6727 = vand.u32 2147483647, %v6717
    %vm6728 = vcmp.eq.f32.partialorder %v6727, 8.507059e+37
    %v6729 = vand.u32 %v6717, 2147483648
    %v6730 = vor.u32 1.1754944e-38, %v6729
    %v6731 = vsel %vm6728, %v6730, %v6726
    %v6732 = vmul.f32 1.0, %v6731
    %v6733 = vadd.f32 %v5737, %v6691
    %v6734 = vxor.u32 %v6733, 2147483648
    %v6735 = vmul.f32 %v6734, 1.442695
    %v6736 = vpow.pop %v6735
    %v6737 = vadd.f32 %v6736, 1.0
    %v6738 = vrcp.pop %v6737
    %v6739 = vmul.f32 %v6737, %v6738
    %v6740 = vsub.f32 1.0, %v6739
    %v6741 = vmul.f32 %v6738, %v6740
    %v6742 = vadd.f32 %v6738, %v6741
    %vm6743 = vweird.f32 %v6737
    %vm6744 = vweird.f32 %v6738
    %vm6745 = vmor %vm6743, %vm6744
    %v6746 = vsel %vm6745, %v6738, %v6742
    %v6747 = vand.u32 2147483647, %v6737
    %vm6748 = vcmp.eq.f32.partialorder %v6747, 8.507059e+37
    %v6749 = vand.u32 %v6737, 2147483648
    %v6750 = vor.u32 1.1754944e-38, %v6749
    %v6751 = vsel %vm6748, %v6750, %v6746
    %v6752 = vmul.f32 1.0, %v6751
    %v6753 = vmul.f32 %v6732, %v6711
    %v6754 = vadd.f32 %v5774, %v6753
    %v6755 = vtanh.pop %v6754
    %v6756 = vsub.f32 1.0, %v6752
    %v6757 = vmul.f32 %v6756, %v6755
    %v6759 = vmul.f32 %v6752, %v6650
    %v6760 = vadd.f32 %v6757, %v6759
    %s6761 = scalar_lea.vmem [#allocation2], 8
    %6762 = vst.msk [vmem:[%s6761 - $0x6] sm:$0xc0] %vm2290, %v5667
    %s6763 = scalar_lea.vmem [#allocation2], 10
    %6764 = vst.msk [vmem:[%s6763] sm:$0x3] %vm2293, %v6760
    %v6766 = vrot.slane %v6760, 7
    %6767 = vrot.lane.b32.xlu0 %v6766, 32
    %v6768 = vpop.permute.xlu0 %6767
    %v6770 = vsel %vm133, %v4825, %v6768
    %v6771 = vrot.slane %v6648, 7
    %6772 = vrot.lane.b32.xlu0 %v6771, 32
    %v6773 = vpop.permute.xlu0 %6772
    %v6775 = vsel %vm133, %v4946, %v6773
    %v6776 = vrot.slane %v6526, 7
    %6777 = vrot.lane.b32.xlu0 %v6776, 32
    %v6778 = vpop.permute.xlu0 %6777
    %v6780 = vsel %vm133, %v5068, %v6778
    %v6781 = vrot.slane %v6404, 7
    %6782 = vrot.lane.b32.xlu0 %v6781, 32
    %v6783 = vpop.permute.xlu0 %6782
    %v6785 = vsel %vm133, %v5190, %v6783
    %v6786 = vrot.slane %v6283, 7
    %6787 = vrot.lane.b32.xlu0 %v6786, 32
    %v6788 = vpop.permute.xlu0 %6787
    %v6790 = vsel %vm133, %v5302, %v6788
    %v6791 = vrot.slane %v6171, 7
    %6792 = vrot.lane.b32.xlu0 %v6791, 32
    %v6793 = vpop.permute.xlu0 %6792
    %v6795 = vsel %vm133, %v5423, %v6793
    %v6796 = vrot.slane %v6049, 7
    %6797 = vrot.lane.b32.xlu0 %v6796, 32
    %v6798 = vpop.permute.xlu0 %6797
    %v6800 = vsel %vm133, %v5545, %v6798
    %v6801 = vrot.slane %v5927, 7
    %6802 = vrot.lane.b32.xlu0 %v6801, 32
    %v6803 = vpop.permute.xlu0 %6802
    %v6805 = vsel %vm133, %v5667, %v6803
    %v6807 = vrot.slane %v6770, 1
    %v6810 = vrot.slane %v6775, 2
    %v6813 = vrot.slane %v6780, 3
    %v6816 = vrot.slane %v6785, 4
    %v6819 = vrot.slane %v6790, 5
    %v6822 = vrot.slane %v6795, 6
    %v6825 = vrot.slane %v6800, 7
    %vm6827 = vcmask 1040384
    %v6828 = vsel %vm6827, %v6807, %v6810
    %v6829 = vsel %vm2328, %v6828, %v6813
    %vm6830 = vcmask 1042432
    %v6831 = vsel %vm6830, %v6829, %v6816
    %v6832 = vsel %vm2330, %v6831, %v6819
    %vm6833 = vcmask 1044480
    %v6834 = vsel %vm6833, %v6832, %v6822
    %v6835 = vsel %vm2332, %v6834, %v6825
    %vm6836 = vcmask 1046528
    %v6837 = vsel %vm6836, %v6835, %v6805
    %v6838 = vmax.f32 %v6837, 0.0
    %v6839 = vld [vmem:[%s53] sm:$0xff]
    %v6840 = vld [vmem:[%s53 + $0x8] sm:$0xff]
    %v6841 = vld [vmem:[%s53 + $0x10] sm:$0xff]
    %v6842 = vld [vmem:[%s53 + $0x18] sm:$0xff]
    %v6843 = vld [vmem:[%s53 + $0x20] sm:$0xff]
    %v6844 = vld [vmem:[%s53 + $0x28] sm:$0xff]
    %v6845 = vld [vmem:[%s53 + $0x30] sm:$0xff]
    %v6846 = vld [vmem:[%s53 + $0x38] sm:$0xff]
    %v6847 = vld [vmem:[%s55] sm:$0x1]
    %v6849 = vperm.slane %v6847, 0
    %v6852 = vsel %vm2351, %v6838, 0
    %6854 = vmatpush.msra.mxu0 0.0
    %6855 = vmatpush.msra.mxu0 0.0
    %6856 = vmatpush.msra.mxu0 0.0
    %6857 = vmatpush.msra.mxu0 0.0
    %6858 = vmatpush.msra.mxu0 0.0
    %6859 = vmatpush.msra.mxu0 0.0
    %6860 = vmatpush.msra.mxu0 0.0
    %6861 = vmatpush.msra.mxu0 0.0
    %6862 = vmatpush.msra.mxu0 %v6846
    %6863 = vmatpush.msra.mxu0 %v6845
    %6864 = vmatpush.msra.mxu0 %v6844
    %6865 = vmatpush.msra.mxu0 %v6843
    %6866 = vmatpush.msra.mxu0 %v6842
    %6867 = vmatpush.msra.mxu0 %v6841
    %6868 = vmatpush.msra.mxu0 %v6840
    %6869 = vmatpush.msra.mxu0 %v6839
    %6870 = vmatmul.f32.gmra.mxu0 %v6852
    %v6871 = vpop.f32.mrf.mxu0
    %v6872 = vadd.f32 %v6849, %v6871
    %6873 = vdwg.mxu0
    %vm6874 = vcmask 23552
    %v6875 = vsel %vm6874, %v6872, -inf
    %6876 = vmax.xlane.f32.xlu0 %v6875
    %v6877 = vpop.xlane.xlu0 %6876
    %v6878 = vsub.f32 %v6872, %v6877
    %v6879 = vmul.f32 %v6878, 1.442695
    %v6880 = vpow.pop %v6879
    %v6881 = vsel %vm6874, %v6880, 0.0
    %6882 = vadd.xlane.f32.xlu0 %v6881
    %v6883 = vpop.xlane.xlu0 %6882
    %v6884 = vlog2.pop %v6883
    %v6885 = vmul.f32 %v6884, 0.6931472
    %v6886 = vadd.f32 %v6885, %v6877
    %v6887 = vsub.f32 %v6872, %v6886
    %6888 = vst.msk [vmem:[%s57] sm:$0xff] %vm6874, %v6887
    // Predicated region
    $region114: #{tpu_custom_call.1} parent=1 // pred_check
      _
    $region115: #{tpu_custom_call.1} parent=1 // pred_check_branch
      %6890 = sbr.rel (0) target = $region117
    $region116: #{tpu_custom_call.1} parent=1 // pred_region
      _
    $region117: #{tpu_custom_call.1} parent=1 // pred_fallthru
      _
    // Predicated region
    $region118: #{tpu_custom_call.1} parent=1 // pred_check
      _
    $region119: #{tpu_custom_call.1} parent=1 // pred_check_branch
      %6892 = sbr.rel (0) target = $region121
    $region120: #{tpu_custom_call.1} parent=1 // pred_region
      %6894 = vsyncadd [#allocation3], 0
      %s6895 = sshll.u32 [#allocation2], 4
      %s6896 = int_to_ptr.vmem [resolvable:$true] %s6895
      %s6897 = sshll.u32 %s59, 4
      %s6898 = int_to_ptr.hbm [resolvable:$true] %s6897
      %6903 = dma.vmem_to_hbm [thread:$0]  %s6896, 192, %s6898, [#allocation3], 32, 32, 2
    $region121: #{tpu_custom_call.1} parent=1 // pred_fallthru
      _
    // Predicated region
    $region122: #{tpu_custom_call.1} parent=1 // pred_check
      _
    $region123: #{tpu_custom_call.1} parent=1 // pred_check_branch
      %6905 = sbr.rel (0) target = $region125
    $region124: #{tpu_custom_call.1} parent=1 // pred_region
      _
    $region125: #{tpu_custom_call.1} parent=1 // pred_fallthru
      _
    // Predicated region
    $region126: #{tpu_custom_call.1} parent=1 // pred_check
      _
    $region127: #{tpu_custom_call.1} parent=1 // pred_check_branch
      %6907 = sbr.rel (0) target = $region129
    $region128: #{tpu_custom_call.1} parent=1 // pred_region
      %6909 = dma.done [#allocation3], 192
    $region129: #{tpu_custom_call.1} parent=1 // pred_fallthru
      _
    %6910 = vsyncpa [#allocation3], 1

</llo_original>
